<compile_context>
chip_gen: v7x
topology: tpu7x:2x2x1
jax: 0.10.0
libtpu: 0.0.40
codegen_flags: <defaults>
</compile_context>

<pallas_src>
import functools

import jax
import jax.numpy as jnp
from jax import lax
from jax.experimental import pallas as pl
from jax.experimental.pallas import tpu as pltpu


# ----------------------------------------------------------------------------
# In-kernel helpers (pure tracing helpers, run inside the Pallas kernel)
# ----------------------------------------------------------------------------
def _conv_kxk_t(img_t, w_t, b, k):
    """KxK 'same' conv in channels-first layout: pad + im2col + ONE matmul + ReLU.

    img_t: (C, H, W)  f32 value computed in-kernel
    w_t:   (Cout, K*K*C) f32 (tap-major / channel-minor rows, transposed HWIO)
    b:     (Cout, 1)
    returns (Cout, H*W) f32
    """
    c, h, wdim = img_t.shape
    p = k // 2
    m = h * wdim
    colpad = jnp.zeros((c, h, p), jnp.float32)
    rowpad = jnp.zeros((c, p, wdim + 2 * p), jnp.float32)
    padded = jnp.concatenate(
        [rowpad, jnp.concatenate([colpad, img_t, colpad], axis=2), rowpad],
        axis=1)                                              # (C, H+2p, W+2p)
    taps = [padded[:, i:i + h, j:j + wdim] for i in range(k) for j in range(k)]
    col = jnp.concatenate(taps, axis=0).reshape(k * k * c, m)  # (K*K*C, M)
    y = jnp.dot(w_t, col, preferred_element_type=jnp.float32)  # (Cout, M)
    return jnp.maximum(y + b, 0.0)


def _maxpool3x3_t(img_t):
    """3x3 / stride-1 / pad-1 max-pool of a (C, H, W) value (VPU only)."""
    c, h, wdim = img_t.shape
    neg = jnp.float32(-1e30)
    colpad = jnp.full((c, h, 1), neg, jnp.float32)
    rowpad = jnp.full((c, 1, wdim + 2), neg, jnp.float32)
    padded = jnp.concatenate(
        [rowpad, jnp.concatenate([colpad, img_t, colpad], axis=2), rowpad],
        axis=1)                                              # (C, H+2, W+2)
    m = padded[:, 0:h, 0:wdim]
    for di in range(3):
        for dj in range(3):
            if di or dj:
                m = jnp.maximum(m, padded[:, di:di + h, dj:dj + wdim])
    return m


# ----------------------------------------------------------------------------
# The fused Inception kernel (one grid step == one image)
# ----------------------------------------------------------------------------
def _inception_kernel(x_ref, w_stem_ref, b_stem_ref, w_max_ref, b_max_ref,
                      w3_ref, b3_ref, w5_ref, b5_ref, o_ref,
                      *, c1, r3c, r5c):
    _, cin, h, wdim = x_ref.shape
    m = h * wdim

    x_img = x_ref[0]                                 # (Cin, H, W)  (NCHW slice)
    x_flat = x_img.reshape(cin, m)                   # (Cin, M)  lane dim = M

    # --- fused 1x1 stem: [1x1 branch | 3x3 reduce | 5x5 reduce] -------------
    z = jnp.dot(w_stem_ref[...], x_flat, preferred_element_type=jnp.float32)
    z = jnp.maximum(z + b_stem_ref[...], 0.0)        # (Cstem, M)
    y1 = z[0:c1, :]                                  # (c1, M)  -> output slice
    r3 = z[c1:c1 + r3c, :].reshape(r3c, h, wdim)     # feeds 3x3 conv
    r5 = z[c1 + r3c:c1 + r3c + r5c, :].reshape(r5c, h, wdim)  # feeds 5x5 conv

    # --- max branch: 3x3 max-pool on narrow x, then 1x1 conv ----------------
    pooled = _maxpool3x3_t(x_img).reshape(cin, m)
    ym = jnp.dot(w_max_ref[...], pooled, preferred_element_type=jnp.float32)
    ym = jnp.maximum(ym + b_max_ref[...], 0.0)       # (cmax, M)

    # --- 3x3 / 5x5 branches: in-VMEM im2col, single matmul each -------------
    y3 = _conv_kxk_t(r3, w3_ref[...], b3_ref[...], 3)   # (c3, M)
    y5 = _conv_kxk_t(r5, w5_ref[...], b5_ref[...], 5)   # (c5, M)

    # --- fused channel concat + single lane-dense store ---------------------
    o_ref[0] = jnp.concatenate([y1, y3, y5, ym], axis=0).astype(o_ref.dtype)


# ----------------------------------------------------------------------------
# Wrapper: weight packing + pallas_call (input/output NCHW, no HBM transposes)
# ----------------------------------------------------------------------------
def inception_block_forward(x_nchw, p):
    """Pallas implementation of InceptionBlock.forward (input/output NCHW)."""
    n, c_in, hh, ww = x_nchw.shape
    m = hh * ww

    c1 = p["1x1"]["w"].shape[-1]
    r3c = p["3x3_red"]["w"].shape[-1]
    c3 = p["3x3"]["w"].shape[-1]
    r5c = p["5x5_red"]["w"].shape[-1]
    c5 = p["5x5"]["w"].shape[-1]
    cmax = p["max"]["w"].shape[-1]
    ctot = c1 + c3 + c5 + cmax

    # Fuse the three 1x1 convs that read x into one (transposed) weight.
    w_stem_t = jnp.concatenate(
        [p["1x1"]["w"].reshape(c_in, c1),
         p["3x3_red"]["w"].reshape(c_in, r3c),
         p["5x5_red"]["w"].reshape(c_in, r5c)], axis=1).T     # (Cstem, Cin)
    b_stem = jnp.concatenate(
        [p["1x1"]["b"], p["3x3_red"]["b"], p["5x5_red"]["b"]]).reshape(-1, 1)
    w_max_t = p["max"]["w"].reshape(c_in, cmax).T             # (cmax, Cin)
    b_max = p["max"]["b"].reshape(cmax, 1)
    w3_t = p["3x3"]["w"].reshape(9 * r3c, c3).T               # (c3, 9*r3c)
    b3 = p["3x3"]["b"].reshape(c3, 1)
    w5_t = p["5x5"]["w"].reshape(25 * r5c, c5).T              # (c5, 25*r5c)
    b5 = p["5x5"]["b"].reshape(c5, 1)

    flops = 2 * n * m * (c_in * (c1 + r3c + r5c) + c_in * cmax
                         + 9 * r3c * c3 + 25 * r5c * c5)
    param_bytes = 4 * (w_stem_t.size + b_stem.size + w_max_t.size + b_max.size
                       + w3_t.size + b3.size + w5_t.size + b5.size)
    bytes_accessed = 4 * (x_nchw.size + n * m * ctot) + param_bytes

    kernel = functools.partial(_inception_kernel, c1=c1, r3c=r3c, r5c=r5c)

    out = pl.pallas_call(
        kernel,
        out_shape=jax.ShapeDtypeStruct((n, ctot, m), jnp.float32),
        grid=(n,),
        in_specs=[
            pl.BlockSpec((1, c_in, hh, ww), lambda i: (i, 0, 0, 0)),
            pl.BlockSpec(w_stem_t.shape, lambda i: (0, 0)),   # resident weights
            pl.BlockSpec(b_stem.shape, lambda i: (0, 0)),
            pl.BlockSpec(w_max_t.shape, lambda i: (0, 0)),
            pl.BlockSpec(b_max.shape, lambda i: (0, 0)),
            pl.BlockSpec(w3_t.shape, lambda i: (0, 0)),
            pl.BlockSpec(b3.shape, lambda i: (0, 0)),
            pl.BlockSpec(w5_t.shape, lambda i: (0, 0)),
            pl.BlockSpec(b5.shape, lambda i: (0, 0)),
        ],
        out_specs=pl.BlockSpec((1, ctot, m), lambda i: (i, 0, 0)),
        compiler_params=pltpu.CompilerParams(
            dimension_semantics=("parallel",)),
        cost_estimate=pl.CostEstimate(
            flops=int(flops), transcendentals=0,
            bytes_accessed=int(bytes_accessed)),
    )(x_nchw, w_stem_t, b_stem, w_max_t, b_max, w3_t, b3, w5_t, b5)

    # Pure metadata reshape -> NCHW (no HBM transpose needed).
    return out.reshape(n, ctot, hh, ww)


# ----------------------------------------------------------------------------
# Parameter construction (BatchNorm folded with inference statistics)
# ----------------------------------------------------------------------------
def _fold_bn(w, b, gamma, beta, mean, var, eps=1e-5):
    scale = gamma / jnp.sqrt(var + eps)                       # (Cout,)
    return w * scale, (b - mean) * scale + beta


def init_params(key, c_in, c_red, c_out):
    """Deterministic synthetic parameters; BN already folded into conv w/b."""

    def conv_bn(k, ksize, cin, cout):
        kw_, kb, kg, kbeta, km, kv = jax.random.split(k, 6)
        w = 0.1 * jax.random.normal(kw_, (ksize, ksize, cin, cout), jnp.float32)
        b = 0.05 * jax.random.normal(kb, (cout,), jnp.float32)
        gamma = 1.0 + 0.1 * jax.random.normal(kg, (cout,), jnp.float32)
        beta = 0.1 * jax.random.normal(kbeta, (cout,), jnp.float32)
        mean = 0.05 * jax.random.normal(km, (cout,), jnp.float32)
        var = 0.5 + jax.random.uniform(kv, (cout,), jnp.float32)
        wf, bf = _fold_bn(w, b, gamma, beta, mean, var)
        return {"w": wf, "b": bf}

    keys = jax.random.split(key, 6)
    return {
        "1x1": conv_bn(keys[0], 1, c_in, c_out["1x1"]),
        "3x3_red": conv_bn(keys[1], 1, c_in, c_red["3x3"]),
        "3x3": conv_bn(keys[2], 3, c_red["3x3"], c_out["3x3"]),
        "5x5_red": conv_bn(keys[3], 1, c_in, c_red["5x5"]),
        "5x5": conv_bn(keys[4], 5, c_red["5x5"], c_out["5x5"]),
        "max": conv_bn(keys[5], 1, c_in, c_out["max"]),
    }


# ----------------------------------------------------------------------------
# Pure-JAX reference (for correctness check)
# ----------------------------------------------------------------------------
def _ref_conv_bn_relu(x, w, b, pad):
    y = lax.conv_general_dilated(
        x, w, (1, 1), [(pad, pad), (pad, pad)],
        dimension_numbers=("NHWC", "HWIO", "NHWC"),
    )
    return jnp.maximum(y + b, 0.0)


def reference_forward(x_nchw, p):
    x = jnp.transpose(x_nchw, (0, 2, 3, 1))
    b11 = _ref_conv_bn_relu(x, p["1x1"]["w"], p["1x1"]["b"], 0)
    b33 = _ref_conv_bn_relu(
        _ref_conv_bn_relu(x, p["3x3_red"]["w"], p["3x3_red"]["b"], 0),
        p["3x3"]["w"], p["3x3"]["b"], 1,
    )
    b55 = _ref_conv_bn_relu(
        _ref_conv_bn_relu(x, p["5x5_red"]["w"], p["5x5_red"]["b"], 0),
        p["5x5"]["w"], p["5x5"]["b"], 2,
    )
    xm = lax.reduce_window(
        x, -jnp.inf, lax.max, (1, 3, 3, 1), (1, 1, 1, 1),
        [(0, 0), (1, 1), (1, 1), (0, 0)],
    )
    bmx = _ref_conv_bn_relu(xm, p["max"]["w"], p["max"]["b"], 0)
    out = jnp.concatenate([b11, b33, b55, bmx], axis=-1)
    return jnp.transpose(out, (0, 3, 1, 2))


if __name__ == "__main__":
    key = jax.random.PRNGKey(0)
    kx, kp = jax.random.split(key)

    N, C_IN, H, W = 2, 4, 16, 16
    c_red = {"3x3": 4, "5x5": 4}
    c_out = {"1x1": 8, "3x3": 8, "5x5": 8, "max": 8}

    x = jax.random.normal(kx, (N, C_IN, H, W), jnp.float32)
    params = init_params(kp, C_IN, c_red, c_out)

    out = jax.jit(lambda xx: inception_block_forward(xx, params))(x)
    out = jax.block_until_ready(out)

    assert out.shape == (N, sum(c_out.values()), H, W), out.shape

    ref = reference_forward(x, params)
    max_err = float(jnp.max(jnp.abs(out - ref)))
    if max_err > 1e-3:
        raise AssertionError(f"Pallas vs reference mismatch: max_err={max_err}")

    print("KERNEL_OK")
</pallas_src>

<mosaic_0001>
module attributes {stable_mosaic.version = 11 : i64} {
  func.func @_inception_kernel(%arg0: i32, %arg1: memref<1x4x16x16xf32, #tpu.memory_space<vmem>>, %arg2: memref<16x4xf32, #tpu.memory_space<vmem>>, %arg3: memref<16x1xf32, #tpu.memory_space<vmem>>, %arg4: memref<8x4xf32, #tpu.memory_space<vmem>>, %arg5: memref<8x1xf32, #tpu.memory_space<vmem>>, %arg6: memref<8x36xf32, #tpu.memory_space<vmem>>, %arg7: memref<8x1xf32, #tpu.memory_space<vmem>>, %arg8: memref<8x100xf32, #tpu.memory_space<vmem>>, %arg9: memref<8x1xf32, #tpu.memory_space<vmem>>, %arg10: memref<1x32x256xf32, #tpu.memory_space<vmem>>) attributes {dimension_semantics = [#tpu.dimension_semantics<parallel>], iteration_bounds = array<i64: 2>, scalar_prefetch = 0 : i64, scratch_operands = 0 : i64, tpu.core_type = #tpu.core_type<tc>, window_params = [{transform_indices = @transform_0, window_bounds = array<i64: 1, 4, 16, 16>}, {pipeline_mode = #tpu.pipeline_mode<synchronous>, transform_indices = @transform_1, window_bounds = array<i64: 16, 4>}, {pipeline_mode = #tpu.pipeline_mode<synchronous>, transform_indices = @transform_2, window_bounds = array<i64: 16, 1>}, {pipeline_mode = #tpu.pipeline_mode<synchronous>, transform_indices = @transform_3, window_bounds = array<i64: 8, 4>}, {pipeline_mode = #tpu.pipeline_mode<synchronous>, transform_indices = @transform_4, window_bounds = array<i64: 8, 1>}, {pipeline_mode = #tpu.pipeline_mode<synchronous>, transform_indices = @transform_5, window_bounds = array<i64: 8, 36>}, {pipeline_mode = #tpu.pipeline_mode<synchronous>, transform_indices = @transform_6, window_bounds = array<i64: 8, 1>}, {pipeline_mode = #tpu.pipeline_mode<synchronous>, transform_indices = @transform_7, window_bounds = array<i64: 8, 100>}, {pipeline_mode = #tpu.pipeline_mode<synchronous>, transform_indices = @transform_8, window_bounds = array<i64: 8, 1>}, {transform_indices = @transform_9, window_bounds = array<i64: 1, 32, 256>}]} {
    %c0 = arith.constant 0 : index
    %c0_0 = arith.constant 0 : index
    %c0_1 = arith.constant 0 : index
    %c0_2 = arith.constant 0 : index
    %0 = vector.load %arg1[%c0, %c0_0, %c0_1, %c0_2] : memref<1x4x16x16xf32, #tpu.memory_space<vmem>>, vector<1x4x16x16xf32>
    %1 = vector.shape_cast %0 : vector<1x4x16x16xf32> to vector<4x16x16xf32>
    %2 = vector.shape_cast %1 : vector<4x16x16xf32> to vector<4x256xf32>
    %c0_3 = arith.constant 0 : index
    %c0_4 = arith.constant 0 : index
    %3 = vector.load %arg2[%c0_3, %c0_4] : memref<16x4xf32, #tpu.memory_space<vmem>>, vector<16x4xf32>
    %cst = arith.constant dense<0.000000e+00> : vector<16x256xf32>
    %4 = tpu.matmul %3, %2, %cst {dimension_numbers = #tpu.dot_dimension_numbers<[1], [0], [0], [1], [0, 0, 1, 1], [], []>} : vector<16x4xf32>, vector<4x256xf32>, vector<16x256xf32> -> vector<16x256xf32>
    %c0_5 = arith.constant 0 : index
    %c0_6 = arith.constant 0 : index
    %5 = vector.load %arg3[%c0_5, %c0_6] : memref<16x1xf32, #tpu.memory_space<vmem>>, vector<16x1xf32>
    %6 = vector.broadcast %5 : vector<16x1xf32> to vector<16x256xf32>
    %7 = arith.addf %4, %6 : vector<16x256xf32>
    %cst_7 = arith.constant 0.000000e+00 : f32
    %8 = vector.broadcast %cst_7 : f32 to vector<16x256xf32>
    %9 = arith.maximumf %7, %8 : vector<16x256xf32>
    %10 = vector.extract_strided_slice %9 {offsets = [0, 0], sizes = [8, 256], strides = [1, 1]} : vector<16x256xf32> to vector<8x256xf32>
    %11 = vector.extract_strided_slice %9 {offsets = [8, 0], sizes = [4, 256], strides = [1, 1]} : vector<16x256xf32> to vector<4x256xf32>
    %12 = vector.shape_cast %11 : vector<4x256xf32> to vector<4x16x16xf32>
    %13 = vector.extract_strided_slice %9 {offsets = [12, 0], sizes = [4, 256], strides = [1, 1]} : vector<16x256xf32> to vector<4x256xf32>
    %14 = vector.shape_cast %13 : vector<4x256xf32> to vector<4x16x16xf32>
    %cst_8 = arith.constant -1.000000e+30 : f32
    %15 = vector.broadcast %cst_8 : f32 to vector<4x16x1xf32>
    %cst_9 = arith.constant -1.000000e+30 : f32
    %16 = vector.broadcast %cst_9 : f32 to vector<4x1x18xf32>
    %17 = tpu.concatenate %15, %1, %15 in 2 : vector<4x16x1xf32>, vector<4x16x16xf32>, vector<4x16x1xf32> -> vector<4x16x18xf32>
    %18 = tpu.concatenate %16, %17, %16 in 1 : vector<4x1x18xf32>, vector<4x16x18xf32>, vector<4x1x18xf32> -> vector<4x18x18xf32>
    %19 = vector.extract_strided_slice %18 {offsets = [0, 0, 0], sizes = [4, 16, 16], strides = [1, 1, 1]} : vector<4x18x18xf32> to vector<4x16x16xf32>
    %20 = vector.extract_strided_slice %18 {offsets = [0, 0, 1], sizes = [4, 16, 16], strides = [1, 1, 1]} : vector<4x18x18xf32> to vector<4x16x16xf32>
    %21 = arith.maximumf %19, %20 : vector<4x16x16xf32>
    %22 = vector.extract_strided_slice %18 {offsets = [0, 0, 2], sizes = [4, 16, 16], strides = [1, 1, 1]} : vector<4x18x18xf32> to vector<4x16x16xf32>
    %23 = arith.maximumf %21, %22 : vector<4x16x16xf32>
    %24 = vector.extract_strided_slice %18 {offsets = [0, 1, 0], sizes = [4, 16, 16], strides = [1, 1, 1]} : vector<4x18x18xf32> to vector<4x16x16xf32>
    %25 = arith.maximumf %23, %24 : vector<4x16x16xf32>
    %26 = vector.extract_strided_slice %18 {offsets = [0, 1, 1], sizes = [4, 16, 16], strides = [1, 1, 1]} : vector<4x18x18xf32> to vector<4x16x16xf32>
    %27 = arith.maximumf %25, %26 : vector<4x16x16xf32>
    %28 = vector.extract_strided_slice %18 {offsets = [0, 1, 2], sizes = [4, 16, 16], strides = [1, 1, 1]} : vector<4x18x18xf32> to vector<4x16x16xf32>
    %29 = arith.maximumf %27, %28 : vector<4x16x16xf32>
    %30 = vector.extract_strided_slice %18 {offsets = [0, 2, 0], sizes = [4, 16, 16], strides = [1, 1, 1]} : vector<4x18x18xf32> to vector<4x16x16xf32>
    %31 = arith.maximumf %29, %30 : vector<4x16x16xf32>
    %32 = vector.extract_strided_slice %18 {offsets = [0, 2, 1], sizes = [4, 16, 16], strides = [1, 1, 1]} : vector<4x18x18xf32> to vector<4x16x16xf32>
    %33 = arith.maximumf %31, %32 : vector<4x16x16xf32>
    %34 = vector.extract_strided_slice %18 {offsets = [0, 2, 2], sizes = [4, 16, 16], strides = [1, 1, 1]} : vector<4x18x18xf32> to vector<4x16x16xf32>
    %35 = arith.maximumf %33, %34 : vector<4x16x16xf32>
    %36 = vector.shape_cast %35 : vector<4x16x16xf32> to vector<4x256xf32>
    %c0_10 = arith.constant 0 : index
    %c0_11 = arith.constant 0 : index
    %37 = vector.load %arg4[%c0_10, %c0_11] : memref<8x4xf32, #tpu.memory_space<vmem>>, vector<8x4xf32>
    %cst_12 = arith.constant dense<0.000000e+00> : vector<8x256xf32>
    %38 = tpu.matmul %37, %36, %cst_12 {dimension_numbers = #tpu.dot_dimension_numbers<[1], [0], [0], [1], [0, 0, 1, 1], [], []>} : vector<8x4xf32>, vector<4x256xf32>, vector<8x256xf32> -> vector<8x256xf32>
    %c0_13 = arith.constant 0 : index
    %c0_14 = arith.constant 0 : index
    %39 = vector.load %arg5[%c0_13, %c0_14] : memref<8x1xf32, #tpu.memory_space<vmem>>, vector<8x1xf32>
    %40 = vector.broadcast %39 : vector<8x1xf32> to vector<8x256xf32>
    %41 = arith.addf %38, %40 : vector<8x256xf32>
    %cst_15 = arith.constant 0.000000e+00 : f32
    %42 = vector.broadcast %cst_15 : f32 to vector<8x256xf32>
    %43 = arith.maximumf %41, %42 : vector<8x256xf32>
    %c0_16 = arith.constant 0 : index
    %c0_17 = arith.constant 0 : index
    %44 = vector.load %arg6[%c0_16, %c0_17] : memref<8x36xf32, #tpu.memory_space<vmem>>, vector<8x36xf32>
    %c0_18 = arith.constant 0 : index
    %c0_19 = arith.constant 0 : index
    %45 = vector.load %arg7[%c0_18, %c0_19] : memref<8x1xf32, #tpu.memory_space<vmem>>, vector<8x1xf32>
    %cst_20 = arith.constant 0.000000e+00 : f32
    %46 = vector.broadcast %cst_20 : f32 to vector<4x16x1xf32>
    %cst_21 = arith.constant 0.000000e+00 : f32
    %47 = vector.broadcast %cst_21 : f32 to vector<4x1x18xf32>
    %48 = tpu.concatenate %46, %12, %46 in 2 : vector<4x16x1xf32>, vector<4x16x16xf32>, vector<4x16x1xf32> -> vector<4x16x18xf32>
    %49 = tpu.concatenate %47, %48, %47 in 1 : vector<4x1x18xf32>, vector<4x16x18xf32>, vector<4x1x18xf32> -> vector<4x18x18xf32>
    %50 = vector.extract_strided_slice %49 {offsets = [0, 0, 0], sizes = [4, 16, 16], strides = [1, 1, 1]} : vector<4x18x18xf32> to vector<4x16x16xf32>
    %51 = vector.extract_strided_slice %49 {offsets = [0, 0, 1], sizes = [4, 16, 16], strides = [1, 1, 1]} : vector<4x18x18xf32> to vector<4x16x16xf32>
    %52 = vector.extract_strided_slice %49 {offsets = [0, 0, 2], sizes = [4, 16, 16], strides = [1, 1, 1]} : vector<4x18x18xf32> to vector<4x16x16xf32>
    %53 = vector.extract_strided_slice %49 {offsets = [0, 1, 0], sizes = [4, 16, 16], strides = [1, 1, 1]} : vector<4x18x18xf32> to vector<4x16x16xf32>
    %54 = vector.extract_strided_slice %49 {offsets = [0, 1, 1], sizes = [4, 16, 16], strides = [1, 1, 1]} : vector<4x18x18xf32> to vector<4x16x16xf32>
    %55 = vector.extract_strided_slice %49 {offsets = [0, 1, 2], sizes = [4, 16, 16], strides = [1, 1, 1]} : vector<4x18x18xf32> to vector<4x16x16xf32>
    %56 = vector.extract_strided_slice %49 {offsets = [0, 2, 0], sizes = [4, 16, 16], strides = [1, 1, 1]} : vector<4x18x18xf32> to vector<4x16x16xf32>
    %57 = vector.extract_strided_slice %49 {offsets = [0, 2, 1], sizes = [4, 16, 16], strides = [1, 1, 1]} : vector<4x18x18xf32> to vector<4x16x16xf32>
    %58 = vector.extract_strided_slice %49 {offsets = [0, 2, 2], sizes = [4, 16, 16], strides = [1, 1, 1]} : vector<4x18x18xf32> to vector<4x16x16xf32>
    %59 = tpu.concatenate %50, %51, %52, %53, %54, %55, %56, %57, %58 in 0 : vector<4x16x16xf32>, vector<4x16x16xf32>, vector<4x16x16xf32>, vector<4x16x16xf32>, vector<4x16x16xf32>, vector<4x16x16xf32>, vector<4x16x16xf32>, vector<4x16x16xf32>, vector<4x16x16xf32> -> vector<36x16x16xf32>
    %60 = vector.shape_cast %59 : vector<36x16x16xf32> to vector<36x256xf32>
    %cst_22 = arith.constant dense<0.000000e+00> : vector<8x256xf32>
    %61 = tpu.matmul %44, %60, %cst_22 {dimension_numbers = #tpu.dot_dimension_numbers<[1], [0], [0], [1], [0, 0, 1, 1], [], []>} : vector<8x36xf32>, vector<36x256xf32>, vector<8x256xf32> -> vector<8x256xf32>
    %62 = vector.broadcast %45 : vector<8x1xf32> to vector<8x256xf32>
    %63 = arith.addf %61, %62 : vector<8x256xf32>
    %cst_23 = arith.constant 0.000000e+00 : f32
    %64 = vector.broadcast %cst_23 : f32 to vector<8x256xf32>
    %65 = arith.maximumf %63, %64 : vector<8x256xf32>
    %c0_24 = arith.constant 0 : index
    %c0_25 = arith.constant 0 : index
    %66 = vector.load %arg8[%c0_24, %c0_25] : memref<8x100xf32, #tpu.memory_space<vmem>>, vector<8x100xf32>
    %c0_26 = arith.constant 0 : index
    %c0_27 = arith.constant 0 : index
    %67 = vector.load %arg9[%c0_26, %c0_27] : memref<8x1xf32, #tpu.memory_space<vmem>>, vector<8x1xf32>
    %cst_28 = arith.constant 0.000000e+00 : f32
    %68 = vector.broadcast %cst_28 : f32 to vector<4x16x2xf32>
    %cst_29 = arith.constant 0.000000e+00 : f32
    %69 = vector.broadcast %cst_29 : f32 to vector<4x2x20xf32>
    %70 = tpu.concatenate %68, %14, %68 in 2 : vector<4x16x2xf32>, vector<4x16x16xf32>, vector<4x16x2xf32> -> vector<4x16x20xf32>
    %71 = tpu.concatenate %69, %70, %69 in 1 : vector<4x2x20xf32>, vector<4x16x20xf32>, vector<4x2x20xf32> -> vector<4x20x20xf32>
    %72 = vector.extract_strided_slice %71 {offsets = [0, 0, 0], sizes = [4, 16, 16], strides = [1, 1, 1]} : vector<4x20x20xf32> to vector<4x16x16xf32>
    %73 = vector.extract_strided_slice %71 {offsets = [0, 0, 1], sizes = [4, 16, 16], strides = [1, 1, 1]} : vector<4x20x20xf32> to vector<4x16x16xf32>
    %74 = vector.extract_strided_slice %71 {offsets = [0, 0, 2], sizes = [4, 16, 16], strides = [1, 1, 1]} : vector<4x20x20xf32> to vector<4x16x16xf32>
    %75 = vector.extract_strided_slice %71 {offsets = [0, 0, 3], sizes = [4, 16, 16], strides = [1, 1, 1]} : vector<4x20x20xf32> to vector<4x16x16xf32>
    %76 = vector.extract_strided_slice %71 {offsets = [0, 0, 4], sizes = [4, 16, 16], strides = [1, 1, 1]} : vector<4x20x20xf32> to vector<4x16x16xf32>
    %77 = vector.extract_strided_slice %71 {offsets = [0, 1, 0], sizes = [4, 16, 16], strides = [1, 1, 1]} : vector<4x20x20xf32> to vector<4x16x16xf32>
    %78 = vector.extract_strided_slice %71 {offsets = [0, 1, 1], sizes = [4, 16, 16], strides = [1, 1, 1]} : vector<4x20x20xf32> to vector<4x16x16xf32>
    %79 = vector.extract_strided_slice %71 {offsets = [0, 1, 2], sizes = [4, 16, 16], strides = [1, 1, 1]} : vector<4x20x20xf32> to vector<4x16x16xf32>
    %80 = vector.extract_strided_slice %71 {offsets = [0, 1, 3], sizes = [4, 16, 16], strides = [1, 1, 1]} : vector<4x20x20xf32> to vector<4x16x16xf32>
    %81 = vector.extract_strided_slice %71 {offsets = [0, 1, 4], sizes = [4, 16, 16], strides = [1, 1, 1]} : vector<4x20x20xf32> to vector<4x16x16xf32>
    %82 = vector.extract_strided_slice %71 {offsets = [0, 2, 0], sizes = [4, 16, 16], strides = [1, 1, 1]} : vector<4x20x20xf32> to vector<4x16x16xf32>
    %83 = vector.extract_strided_slice %71 {offsets = [0, 2, 1], sizes = [4, 16, 16], strides = [1, 1, 1]} : vector<4x20x20xf32> to vector<4x16x16xf32>
    %84 = vector.extract_strided_slice %71 {offsets = [0, 2, 2], sizes = [4, 16, 16], strides = [1, 1, 1]} : vector<4x20x20xf32> to vector<4x16x16xf32>
    %85 = vector.extract_strided_slice %71 {offsets = [0, 2, 3], sizes = [4, 16, 16], strides = [1, 1, 1]} : vector<4x20x20xf32> to vector<4x16x16xf32>
    %86 = vector.extract_strided_slice %71 {offsets = [0, 2, 4], sizes = [4, 16, 16], strides = [1, 1, 1]} : vector<4x20x20xf32> to vector<4x16x16xf32>
    %87 = vector.extract_strided_slice %71 {offsets = [0, 3, 0], sizes = [4, 16, 16], strides = [1, 1, 1]} : vector<4x20x20xf32> to vector<4x16x16xf32>
    %88 = vector.extract_strided_slice %71 {offsets = [0, 3, 1], sizes = [4, 16, 16], strides = [1, 1, 1]} : vector<4x20x20xf32> to vector<4x16x16xf32>
    %89 = vector.extract_strided_slice %71 {offsets = [0, 3, 2], sizes = [4, 16, 16], strides = [1, 1, 1]} : vector<4x20x20xf32> to vector<4x16x16xf32>
    %90 = vector.extract_strided_slice %71 {offsets = [0, 3, 3], sizes = [4, 16, 16], strides = [1, 1, 1]} : vector<4x20x20xf32> to vector<4x16x16xf32>
    %91 = vector.extract_strided_slice %71 {offsets = [0, 3, 4], sizes = [4, 16, 16], strides = [1, 1, 1]} : vector<4x20x20xf32> to vector<4x16x16xf32>
    %92 = vector.extract_strided_slice %71 {offsets = [0, 4, 0], sizes = [4, 16, 16], strides = [1, 1, 1]} : vector<4x20x20xf32> to vector<4x16x16xf32>
    %93 = vector.extract_strided_slice %71 {offsets = [0, 4, 1], sizes = [4, 16, 16], strides = [1, 1, 1]} : vector<4x20x20xf32> to vector<4x16x16xf32>
    %94 = vector.extract_strided_slice %71 {offsets = [0, 4, 2], sizes = [4, 16, 16], strides = [1, 1, 1]} : vector<4x20x20xf32> to vector<4x16x16xf32>
    %95 = vector.extract_strided_slice %71 {offsets = [0, 4, 3], sizes = [4, 16, 16], strides = [1, 1, 1]} : vector<4x20x20xf32> to vector<4x16x16xf32>
    %96 = vector.extract_strided_slice %71 {offsets = [0, 4, 4], sizes = [4, 16, 16], strides = [1, 1, 1]} : vector<4x20x20xf32> to vector<4x16x16xf32>
    %97 = tpu.concatenate %72, %73, %74, %75, %76, %77, %78, %79, %80, %81, %82, %83, %84, %85, %86, %87 in 0 : vector<4x16x16xf32>, vector<4x16x16xf32>, vector<4x16x16xf32>, vector<4x16x16xf32>, vector<4x16x16xf32>, vector<4x16x16xf32>, vector<4x16x16xf32>, vector<4x16x16xf32>, vector<4x16x16xf32>, vector<4x16x16xf32>, vector<4x16x16xf32>, vector<4x16x16xf32>, vector<4x16x16xf32>, vector<4x16x16xf32>, vector<4x16x16xf32>, vector<4x16x16xf32> -> vector<64x16x16xf32>
    %98 = tpu.concatenate %88, %89, %90, %91, %92, %93, %94, %95, %96 in 0 : vector<4x16x16xf32>, vector<4x16x16xf32>, vector<4x16x16xf32>, vector<4x16x16xf32>, vector<4x16x16xf32>, vector<4x16x16xf32>, vector<4x16x16xf32>, vector<4x16x16xf32>, vector<4x16x16xf32> -> vector<36x16x16xf32>
    %99 = tpu.concatenate %97, %98 in 0 : vector<64x16x16xf32>, vector<36x16x16xf32> -> vector<100x16x16xf32>
    %100 = vector.shape_cast %99 : vector<100x16x16xf32> to vector<100x256xf32>
    %cst_30 = arith.constant dense<0.000000e+00> : vector<8x256xf32>
    %101 = tpu.matmul %66, %100, %cst_30 {dimension_numbers = #tpu.dot_dimension_numbers<[1], [0], [0], [1], [0, 0, 1, 1], [], []>} : vector<8x100xf32>, vector<100x256xf32>, vector<8x256xf32> -> vector<8x256xf32>
    %102 = vector.broadcast %67 : vector<8x1xf32> to vector<8x256xf32>
    %103 = arith.addf %101, %102 : vector<8x256xf32>
    %cst_31 = arith.constant 0.000000e+00 : f32
    %104 = vector.broadcast %cst_31 : f32 to vector<8x256xf32>
    %105 = arith.maximumf %103, %104 : vector<8x256xf32>
    %106 = tpu.concatenate %10, %65, %105, %43 in 0 : vector<8x256xf32>, vector<8x256xf32>, vector<8x256xf32>, vector<8x256xf32> -> vector<32x256xf32>
    %c0_32 = arith.constant 0 : index
    %c0_33 = arith.constant 0 : index
    %c0_34 = arith.constant 0 : index
    %107 = vector.load %arg10[%c0_32, %c0_33, %c0_34] : memref<1x32x256xf32, #tpu.memory_space<vmem>>, vector<1x32x256xf32>
    %108 = vector.shape_cast %107 : vector<1x32x256xf32> to vector<32x256xf32>
    %109 = vector.shape_cast %106 : vector<32x256xf32> to vector<1x32x256xf32>
    tpu.vector_store %arg10[%c0_32, %c0_33, %c0_34], %109 {strides = array<i32>} : memref<1x32x256xf32, #tpu.memory_space<vmem>>, vector<1x32x256xf32>,
    return
  }
  func.func @transform_0(%arg0: i32) -> (i32, i32, i32, i32) {
    %c0_i32 = arith.constant 0 : i32
    %c0_i32_0 = arith.constant 0 : i32
    %c0_i32_1 = arith.constant 0 : i32
    %c0_i32_2 = arith.constant 0 : i32
    return %arg0, %c0_i32, %c0_i32_0, %c0_i32_1 : i32, i32, i32, i32
  }
  func.func @transform_1(%arg0: i32) -> (i32, i32) {
    %c0_i32 = arith.constant 0 : i32
    %c0_i32_0 = arith.constant 0 : i32
    %c0_i32_1 = arith.constant 0 : i32
    return %c0_i32, %c0_i32_0 : i32, i32
  }
  func.func @transform_2(%arg0: i32) -> (i32, i32) {
    %c0_i32 = arith.constant 0 : i32
    %c0_i32_0 = arith.constant 0 : i32
    %c0_i32_1 = arith.constant 0 : i32
    return %c0_i32, %c0_i32_0 : i32, i32
  }
  func.func @transform_3(%arg0: i32) -> (i32, i32) {
    %c0_i32 = arith.constant 0 : i32
    %c0_i32_0 = arith.constant 0 : i32
    %c0_i32_1 = arith.constant 0 : i32
    return %c0_i32, %c0_i32_0 : i32, i32
  }
  func.func @transform_4(%arg0: i32) -> (i32, i32) {
    %c0_i32 = arith.constant 0 : i32
    %c0_i32_0 = arith.constant 0 : i32
    %c0_i32_1 = arith.constant 0 : i32
    return %c0_i32, %c0_i32_0 : i32, i32
  }
  func.func @transform_5(%arg0: i32) -> (i32, i32) {
    %c0_i32 = arith.constant 0 : i32
    %c0_i32_0 = arith.constant 0 : i32
    %c0_i32_1 = arith.constant 0 : i32
    return %c0_i32, %c0_i32_0 : i32, i32
  }
  func.func @transform_6(%arg0: i32) -> (i32, i32) {
    %c0_i32 = arith.constant 0 : i32
    %c0_i32_0 = arith.constant 0 : i32
    %c0_i32_1 = arith.constant 0 : i32
    return %c0_i32, %c0_i32_0 : i32, i32
  }
  func.func @transform_7(%arg0: i32) -> (i32, i32) {
    %c0_i32 = arith.constant 0 : i32
    %c0_i32_0 = arith.constant 0 : i32
    %c0_i32_1 = arith.constant 0 : i32
    return %c0_i32, %c0_i32_0 : i32, i32
  }
  func.func @transform_8(%arg0: i32) -> (i32, i32) {
    %c0_i32 = arith.constant 0 : i32
    %c0_i32_0 = arith.constant 0 : i32
    %c0_i32_1 = arith.constant 0 : i32
    return %c0_i32, %c0_i32_0 : i32, i32
  }
  func.func @transform_9(%arg0: i32) -> (i32, i32, i32) {
    %c0_i32 = arith.constant 0 : i32
    %c0_i32_0 = arith.constant 0 : i32
    %c0_i32_1 = arith.constant 0 : i32
    return %arg0, %c0_i32, %c0_i32_0 : i32, i32, i32
  }
}

</mosaic_0001>

<llo_original>
// kernel: _lambda_.1
$region0: #{_lambda_.1}
  #allocation0 [shape = 'u32[]', space=smem, size = 0x4, offset = 0x4, fixed_abs, tag = 'smem constant byte address 0x4 - core index']
  #allocation1 [shape = 'u32[144,128]{1,0:T(1,128)}', space=vmem, size = 0x12000, scoped, tag = 'internal scratch']
  %s0 = inlined_call_operand.hbm [shape: f32[2,4,16,16], index: 0, kind: input, shape index: {}]
  %s1 = inlined_call_operand.hbm [shape: f32[16,4], index: 1, kind: input, shape index: {}]
  %s2 = inlined_call_operand.hbm [shape: f32[16,1], index: 2, kind: input, shape index: {}]
  %s3 = inlined_call_operand.hbm [shape: f32[8,4], index: 3, kind: input, shape index: {}]
  %s4 = inlined_call_operand.hbm [shape: f32[8,1], index: 4, kind: input, shape index: {}]
  %s5 = inlined_call_operand.hbm [shape: f32[8,36], index: 5, kind: input, shape index: {}]
  %s6 = inlined_call_operand.hbm [shape: f32[8,1], index: 6, kind: input, shape index: {}]
  %s7 = inlined_call_operand.vmem [shape: f32[8,100], index: 7, kind: input, shape index: {}]
  %s8 = inlined_call_operand.vmem [shape: f32[8,1], index: 8, kind: input, shape index: {}]
  %s9 = inlined_call_operand.vmem [shape: f32[2,32,256], index: 9, kind: output, shape index: {}]
  %s10 = sld [smem:[#allocation0]]
  $region97: #{_lambda_.1} parent=0
    _
  %s12 = ssub.s32 1, %s10
  %s13 = scalar_select 0, %s12, %s10
  $region1: #{_lambda_.1} parent=0
    #allocation2 [shape = 'u8[65536]{0}', space=vmem, size = 0x10000, scoped, tag = 'input window, operand 0']
    #allocation3 [shape = 's32[2]{0}', space=sflag, size = 0x8, scoped, tag = 'scoped memory for _lambda_.1']
    #allocation4 [shape = 'u8[8192]{0}', space=vmem, size = 0x2000, scoped, tag = 'input window, operand 1, single buffered']
    #allocation5 [shape = 's32[1]{0}', space=sflag, size = 0x4, scoped, tag = 'scoped memory for _lambda_.1']
    #allocation6 [shape = 'u8[8192]{0}', space=vmem, size = 0x2000, scoped, tag = 'input window, operand 2, single buffered']
    #allocation7 [shape = 'u8[4096]{0}', space=vmem, size = 0x1000, scoped, tag = 'input window, operand 3, single buffered']
    #allocation8 [shape = 's32[1]{0}', space=sflag, size = 0x4, scoped, tag = 'scoped memory for _lambda_.1']
    #allocation9 [shape = 'u8[4096]{0}', space=vmem, size = 0x1000, scoped, tag = 'input window, operand 4, single buffered']
    #allocation10 [shape = 'u8[4096]{0}', space=vmem, size = 0x1000, scoped, tag = 'input window, operand 5, single buffered']
    #allocation11 [shape = 's32[1]{0}', space=sflag, size = 0x4, scoped, tag = 'scoped memory for _lambda_.1']
    #allocation12 [shape = 'u8[4096]{0}', space=vmem, size = 0x1000, scoped, tag = 'input window, operand 6, single buffered']
    %14 = vsyncpa [#allocation3], 0
    %s15 = scalar_lea.sflag [#allocation3], 1
    %16 = vsyncpa %s15, 0
    %17 = vsyncpa [#allocation5], 0
    %18 = vsyncpa [#allocation8], 0
    %19 = vsyncpa [#allocation11], 0
    loop: start=0, step=1, limit=4
    $region2: #{_lambda_.1} parent=1 // loop_pre_header
      _
    $region3: #{_lambda_.1} parent=1 // loop_header
      %s21 = sphi 0, %s25
      %p22 = scmp.ge.s32.totalorder %s21, 4
      %s31 = sphi 0, %s33
      %s34 = sphi 0, %s31
      %s35 = sphi 0, %s34
      %s51 = sphi 0, %s35
      %s55 = sphi 0, %s55
      %s57 = sphi 0, %s55
      %s58 = sphi 0, %s57
      %s72 = sphi 0, %s58
      %s76 = sphi 0, %s76
      %s78 = sphi 0, %s76
      %s79 = sphi 0, %s78
      %s93 = sphi 0, %s79
      %s97 = sphi 0, %s97
      %s99 = sphi 0, %s97
      %s100 = sphi 0, %s99
      %s114 = sphi 0, %s100
      %s118 = sphi 0, %s118
      %s120 = sphi 0, %s118
      %s121 = sphi 0, %s120
      %s135 = sphi 0, %s121
      %s139 = sphi 0, %s139
      %s141 = sphi 0, %s139
      %s142 = sphi 0, %s141
      %s156 = sphi 0, %s142
      %s160 = sphi 0, %s160
      %s162 = sphi 0, %s160
      %s163 = sphi 0, %s162
      %s177 = sphi 0, %s163
      %s181 = sphi 0, %s181
      %s183 = sphi 0, %s181
      %s184 = sphi 0, %s183
      %s198 = sphi 0, %s184
      %s202 = sphi 0, %s202
      %s204 = sphi 0, %s202
      %s205 = sphi 0, %s204
      %s219 = sphi 0, %s205
      %s225 = sphi 0, %s227
      %s228 = sphi 0, %s225
      %s229 = sphi 0, %s228
      %s245 = sphi 0, %s229
    $region4: #{_lambda_.1} parent=1 // loop_header_branch
      %24 = sbr.rel (%p22) target = $region8
    $region5: #{_lambda_.1} parent=1 // loop_body
      %s26 = ssub.s32 %s21, 1
      %s27 = ssub.s32 %s21, 2
      %s28 = sadd.s32 %s21, 1
      %s29 = ssub.s32 %s21, %s28
      %p30 = scmp.eq.s32.totalorder %s29, 0
      %s32 = sadd.s32 %s31, 1
      %s33 = scalar_select %p30, %s31, %s32
      %p36 = pneg %p30
      %p37 = scmp.eq.s32.totalorder %s21, 1
      %p38 = por %p36, %p37
      %p39 = scmp.ne.s32.totalorder %s31, %s34
      %p40 = scmp.eq.s32.totalorder %s21, 0
      %p41 = por %p39, %p40
      %p42 = scmp.ne.s32.totalorder %s31, %s34
      %p43 = scmp.eq.s32.totalorder %s26, 1
      %p44 = por %p42, %p43
      %p45 = scmp.ne.s32.totalorder %s34, %s35
      %p46 = scmp.eq.s32.totalorder %s26, 0
      %p47 = por %p45, %p46
      %p48 = scmp.ne.s32.totalorder %s34, %s35
      %p49 = scmp.eq.s32.totalorder %s27, 1
      %p50 = por %p48, %p49
      %p52 = scmp.ne.s32.totalorder %s35, %s51
      %p53 = scmp.eq.s32.totalorder %s27, 0
      %p54 = por %p52, %p53
      %s56 = sadd.s32 %s55, 1
      %p59 = scmp.eq.s32.totalorder %s21, 1
      %p60 = scmp.ne.s32.totalorder %s55, %s57
      %p61 = scmp.eq.s32.totalorder %s21, 0
      %p62 = por %p60, %p61
      %p63 = scmp.ne.s32.totalorder %s55, %s57
      %p64 = scmp.eq.s32.totalorder %s26, 1
      %p65 = por %p63, %p64
      %p66 = scmp.ne.s32.totalorder %s57, %s58
      %p67 = scmp.eq.s32.totalorder %s26, 0
      %p68 = por %p66, %p67
      %p69 = scmp.ne.s32.totalorder %s57, %s58
      %p70 = scmp.eq.s32.totalorder %s27, 1
      %p71 = por %p69, %p70
      %p73 = scmp.ne.s32.totalorder %s58, %s72
      %p74 = scmp.eq.s32.totalorder %s27, 0
      %p75 = por %p73, %p74
      %s77 = sadd.s32 %s76, 1
      %p80 = scmp.eq.s32.totalorder %s21, 1
      %p81 = scmp.ne.s32.totalorder %s76, %s78
      %p82 = scmp.eq.s32.totalorder %s21, 0
      %p83 = por %p81, %p82
      %p84 = scmp.ne.s32.totalorder %s76, %s78
      %p85 = scmp.eq.s32.totalorder %s26, 1
      %p86 = por %p84, %p85
      %p87 = scmp.ne.s32.totalorder %s78, %s79
      %p88 = scmp.eq.s32.totalorder %s26, 0
      %p89 = por %p87, %p88
      %p90 = scmp.ne.s32.totalorder %s78, %s79
      %p91 = scmp.eq.s32.totalorder %s27, 1
      %p92 = por %p90, %p91
      %p94 = scmp.ne.s32.totalorder %s79, %s93
      %p95 = scmp.eq.s32.totalorder %s27, 0
      %p96 = por %p94, %p95
      %s98 = sadd.s32 %s97, 1
      %p101 = scmp.eq.s32.totalorder %s21, 1
      %p102 = scmp.ne.s32.totalorder %s97, %s99
      %p103 = scmp.eq.s32.totalorder %s21, 0
      %p104 = por %p102, %p103
      %p105 = scmp.ne.s32.totalorder %s97, %s99
      %p106 = scmp.eq.s32.totalorder %s26, 1
      %p107 = por %p105, %p106
      %p108 = scmp.ne.s32.totalorder %s99, %s100
      %p109 = scmp.eq.s32.totalorder %s26, 0
      %p110 = por %p108, %p109
      %p111 = scmp.ne.s32.totalorder %s99, %s100
      %p112 = scmp.eq.s32.totalorder %s27, 1
      %p113 = por %p111, %p112
      %p115 = scmp.ne.s32.totalorder %s100, %s114
      %p116 = scmp.eq.s32.totalorder %s27, 0
      %p117 = por %p115, %p116
      %s119 = sadd.s32 %s118, 1
      %p122 = scmp.eq.s32.totalorder %s21, 1
      %p123 = scmp.ne.s32.totalorder %s118, %s120
      %p124 = scmp.eq.s32.totalorder %s21, 0
      %p125 = por %p123, %p124
      %p126 = scmp.ne.s32.totalorder %s118, %s120
      %p127 = scmp.eq.s32.totalorder %s26, 1
      %p128 = por %p126, %p127
      %p129 = scmp.ne.s32.totalorder %s120, %s121
      %p130 = scmp.eq.s32.totalorder %s26, 0
      %p131 = por %p129, %p130
      %p132 = scmp.ne.s32.totalorder %s120, %s121
      %p133 = scmp.eq.s32.totalorder %s27, 1
      %p134 = por %p132, %p133
      %p136 = scmp.ne.s32.totalorder %s121, %s135
      %p137 = scmp.eq.s32.totalorder %s27, 0
      %p138 = por %p136, %p137
      %s140 = sadd.s32 %s139, 1
      %p143 = scmp.eq.s32.totalorder %s21, 1
      %p144 = scmp.ne.s32.totalorder %s139, %s141
      %p145 = scmp.eq.s32.totalorder %s21, 0
      %p146 = por %p144, %p145
      %p147 = scmp.ne.s32.totalorder %s139, %s141
      %p148 = scmp.eq.s32.totalorder %s26, 1
      %p149 = por %p147, %p148
      %p150 = scmp.ne.s32.totalorder %s141, %s142
      %p151 = scmp.eq.s32.totalorder %s26, 0
      %p152 = por %p150, %p151
      %p153 = scmp.ne.s32.totalorder %s141, %s142
      %p154 = scmp.eq.s32.totalorder %s27, 1
      %p155 = por %p153, %p154
      %p157 = scmp.ne.s32.totalorder %s142, %s156
      %p158 = scmp.eq.s32.totalorder %s27, 0
      %p159 = por %p157, %p158
      %s161 = sadd.s32 %s160, 1
      %p164 = scmp.eq.s32.totalorder %s21, 1
      %p165 = scmp.ne.s32.totalorder %s160, %s162
      %p166 = scmp.eq.s32.totalorder %s21, 0
      %p167 = por %p165, %p166
      %p168 = scmp.ne.s32.totalorder %s160, %s162
      %p169 = scmp.eq.s32.totalorder %s26, 1
      %p170 = por %p168, %p169
      %p171 = scmp.ne.s32.totalorder %s162, %s163
      %p172 = scmp.eq.s32.totalorder %s26, 0
      %p173 = por %p171, %p172
      %p174 = scmp.ne.s32.totalorder %s162, %s163
      %p175 = scmp.eq.s32.totalorder %s27, 1
      %p176 = por %p174, %p175
      %p178 = scmp.ne.s32.totalorder %s163, %s177
      %p179 = scmp.eq.s32.totalorder %s27, 0
      %p180 = por %p178, %p179
      %s182 = sadd.s32 %s181, 1
      %p185 = scmp.eq.s32.totalorder %s21, 1
      %p186 = scmp.ne.s32.totalorder %s181, %s183
      %p187 = scmp.eq.s32.totalorder %s21, 0
      %p188 = por %p186, %p187
      %p189 = scmp.ne.s32.totalorder %s181, %s183
      %p190 = scmp.eq.s32.totalorder %s26, 1
      %p191 = por %p189, %p190
      %p192 = scmp.ne.s32.totalorder %s183, %s184
      %p193 = scmp.eq.s32.totalorder %s26, 0
      %p194 = por %p192, %p193
      %p195 = scmp.ne.s32.totalorder %s183, %s184
      %p196 = scmp.eq.s32.totalorder %s27, 1
      %p197 = por %p195, %p196
      %p199 = scmp.ne.s32.totalorder %s184, %s198
      %p200 = scmp.eq.s32.totalorder %s27, 0
      %p201 = por %p199, %p200
      %s203 = sadd.s32 %s202, 1
      %p206 = scmp.eq.s32.totalorder %s21, 1
      %p207 = scmp.ne.s32.totalorder %s202, %s204
      %p208 = scmp.eq.s32.totalorder %s21, 0
      %p209 = por %p207, %p208
      %p210 = scmp.ne.s32.totalorder %s202, %s204
      %p211 = scmp.eq.s32.totalorder %s26, 1
      %p212 = por %p210, %p211
      %p213 = scmp.ne.s32.totalorder %s204, %s205
      %p214 = scmp.eq.s32.totalorder %s26, 0
      %p215 = por %p213, %p214
      %p216 = scmp.ne.s32.totalorder %s204, %s205
      %p217 = scmp.eq.s32.totalorder %s27, 1
      %p218 = por %p216, %p217
      %p220 = scmp.ne.s32.totalorder %s205, %s219
      %p221 = scmp.eq.s32.totalorder %s27, 0
      %p222 = por %p220, %p221
      %s223 = ssub.s32 %s21, %s28
      %p224 = scmp.eq.s32.totalorder %s223, 0
      %s226 = sadd.s32 %s225, 1
      %s227 = scalar_select %p224, %s225, %s226
      %p230 = pneg %p224
      %p231 = scmp.eq.s32.totalorder %s21, 1
      %p232 = por %p230, %p231
      %p233 = scmp.ne.s32.totalorder %s225, %s228
      %p234 = scmp.eq.s32.totalorder %s21, 0
      %p235 = por %p233, %p234
      %p236 = scmp.ne.s32.totalorder %s225, %s228
      %p237 = scmp.eq.s32.totalorder %s26, 1
      %p238 = por %p236, %p237
      %p239 = scmp.ne.s32.totalorder %s228, %s229
      %p240 = scmp.eq.s32.totalorder %s26, 0
      %p241 = por %p239, %p240
      %p242 = scmp.ne.s32.totalorder %s228, %s229
      %p243 = scmp.eq.s32.totalorder %s27, 1
      %p244 = por %p242, %p243
      %p246 = scmp.ne.s32.totalorder %s229, %s245
      %p247 = scmp.eq.s32.totalorder %s27, 0
      %p248 = por %p246, %p247
      %p249 = scmp.le.s32.totalorder 1, %s21
      %p250 = scmp.lt.s32.totalorder %s21, 3
      %p251 = pnand %p249, %p250
      %p252 = pneg %p251
      // Predicated region
      $region9: #{_lambda_.1} parent=5 // pred_check
        _
      $region10: #{_lambda_.1} parent=5 // pred_check_branch
        %254 = sbr.rel (%p251) target = $region12
      $region11: #{_lambda_.1} parent=5 // pred_region
        %s255 = ssub.s32 %s21, 1
        // Predicated region
        $region13: #{_lambda_.1} parent=11 // pred_check
          %p256 = pneg %p68
        $region14: #{_lambda_.1} parent=11 // pred_check_branch
          %258 = sbr.rel (%p256) target = $region16
        $region15: #{_lambda_.1} parent=11 // pred_region
          %s260 = ssub.s32 256, 256
          %261 = vsyncadd [#allocation5], %s260
          %s262 = sshll.u32 [#allocation4], 4
          %s263 = int_to_ptr.vmem [resolvable:$true] %s262
          %268 = dma.hbm_to_vmem [thread:$0]  %s1, 256, %s263, [#allocation5], 128, 128, 8
        $region16: #{_lambda_.1} parent=11 // pred_fallthru
          _
        // Predicated region
        $region17: #{_lambda_.1} parent=11 // pred_check
          %p269 = pneg %p89
        $region18: #{_lambda_.1} parent=11 // pred_check_branch
          %271 = sbr.rel (%p269) target = $region20
        $region19: #{_lambda_.1} parent=11 // pred_region
          %s273 = ssub.s32 256, 256
          %274 = vsyncadd [#allocation5], %s273
          %s275 = sshll.u32 [#allocation6], 4
          %s276 = int_to_ptr.vmem [resolvable:$true] %s275
          %281 = dma.hbm_to_vmem [thread:$0]  %s2, 256, %s276, [#allocation5], 128, 128, 8
        $region20: #{_lambda_.1} parent=11 // pred_fallthru
          _
        // Predicated region
        $region21: #{_lambda_.1} parent=11 // pred_check
          %p282 = pneg %p110
        $region22: #{_lambda_.1} parent=11 // pred_check_branch
          %284 = sbr.rel (%p282) target = $region24
        $region23: #{_lambda_.1} parent=11 // pred_region
          %s286 = ssub.s32 128, 128
          %287 = vsyncadd [#allocation8], %s286
          %s289 = sshll.u32 [#allocation7], 4
          %s290 = int_to_ptr.vmem [resolvable:$true] %s289
          %292 = dma.hbm_to_vmem [thread:$0]  %s3, 128, %s290, [#allocation8]
        $region24: #{_lambda_.1} parent=11 // pred_fallthru
          _
        // Predicated region
        $region25: #{_lambda_.1} parent=11 // pred_check
          %p293 = pneg %p131
        $region26: #{_lambda_.1} parent=11 // pred_check_branch
          %295 = sbr.rel (%p293) target = $region28
        $region27: #{_lambda_.1} parent=11 // pred_region
          %s297 = ssub.s32 128, 128
          %298 = vsyncadd [#allocation8], %s297
          %s300 = sshll.u32 [#allocation9], 4
          %s301 = int_to_ptr.vmem [resolvable:$true] %s300
          %303 = dma.hbm_to_vmem [thread:$0]  %s4, 128, %s301, [#allocation8]
        $region28: #{_lambda_.1} parent=11 // pred_fallthru
          _
        // Predicated region
        $region29: #{_lambda_.1} parent=11 // pred_check
          %p304 = pneg %p152
        $region30: #{_lambda_.1} parent=11 // pred_check_branch
          %306 = sbr.rel (%p304) target = $region32
        $region31: #{_lambda_.1} parent=11 // pred_region
          %s308 = ssub.s32 128, 128
          %309 = vsyncadd [#allocation11], %s308
          %s311 = sshll.u32 [#allocation10], 4
          %s312 = int_to_ptr.vmem [resolvable:$true] %s311
          %314 = dma.hbm_to_vmem [thread:$0]  %s5, 128, %s312, [#allocation11]
        $region32: #{_lambda_.1} parent=11 // pred_fallthru
          _
        // Predicated region
        $region33: #{_lambda_.1} parent=11 // pred_check
          %p315 = pneg %p173
        $region34: #{_lambda_.1} parent=11 // pred_check_branch
          %317 = sbr.rel (%p315) target = $region36
        $region35: #{_lambda_.1} parent=11 // pred_region
          %s319 = ssub.s32 128, 128
          %320 = vsyncadd [#allocation11], %s319
          %s322 = sshll.u32 [#allocation12], 4
          %s323 = int_to_ptr.vmem [resolvable:$true] %s322
          %325 = dma.hbm_to_vmem [thread:$0]  %s6, 128, %s323, [#allocation11]
        $region36: #{_lambda_.1} parent=11 // pred_fallthru
          _
        // Predicated region
        $region37: #{_lambda_.1} parent=11 // pred_check
          %p326 = pneg %p194
        $region38: #{_lambda_.1} parent=11 // pred_check_branch
          %328 = sbr.rel (%p326) target = $region40
        $region39: #{_lambda_.1} parent=11 // pred_region
          _
        $region40: #{_lambda_.1} parent=11 // pred_fallthru
          _
        // Predicated region
        $region41: #{_lambda_.1} parent=11 // pred_check
          %p329 = pneg %p215
        $region42: #{_lambda_.1} parent=11 // pred_check_branch
          %331 = sbr.rel (%p329) target = $region44
        $region43: #{_lambda_.1} parent=11 // pred_region
          _
        $region44: #{_lambda_.1} parent=11 // pred_fallthru
          _
      $region12: #{_lambda_.1} parent=5 // pred_fallthru
        _
      %p332 = scmp.lt.s32.totalorder %s21, 2
      // Predicated region
      $region45: #{_lambda_.1} parent=5 // pred_check
        %p333 = pneg %p332
      $region46: #{_lambda_.1} parent=5 // pred_check_branch
        %335 = sbr.rel (%p333) target = $region48
      $region47: #{_lambda_.1} parent=5 // pred_region
        // Predicated region
        $region49: #{_lambda_.1} parent=47 // pred_check
          %p336 = pneg %p41
        $region50: #{_lambda_.1} parent=47 // pred_check_branch
          %338 = sbr.rel (%p336) target = $region52
        $region51: #{_lambda_.1} parent=47 // pred_region
          %s339 = sand.u32 %s31, 1
          %s340 = scalar_lea.sflag [#allocation3], %s339
          %s341 = sand.u32 %s31, 1
          %s342 = smul.addr %s341, 64
          %s343 = scalar_lea.vmem [#allocation2], %s342
          %s345 = ssub.s32 1024, 1024
          %346 = vsyncadd %s340, %s345
          %s347 = smul.addr %s21, 8
          %s348 = smul.addr %s347, 128
          %s349 = scalar_lea.hbm %s0, %s348
          %s350 = sshll.u32 %s343, 4
          %s351 = int_to_ptr.vmem [resolvable:$true] %s350
          %356 = dma.hbm_to_vmem [thread:$0]  %s349, 1024, %s351, %s340, 128, 128, 8
        $region52: #{_lambda_.1} parent=47 // pred_fallthru
          _
      $region48: #{_lambda_.1} parent=5 // pred_fallthru
        _
      %p357 = scmp.le.s32.totalorder 1, %s21
      %p358 = scmp.lt.s32.totalorder %s21, 3
      %p359 = pnand %p357, %p358
      %p360 = pneg %p359
      // Predicated region
      $region53: #{_lambda_.1} parent=5 // pred_check
        _
      $region54: #{_lambda_.1} parent=5 // pred_check_branch
        %362 = sbr.rel (%p359) target = $region56
      $region55: #{_lambda_.1} parent=5 // pred_region
        %s363 = ssub.s32 %s21, 1
        %s364 = sand.u32 %s34, 1
        %s365 = scalar_lea.sflag [#allocation3], %s364
        %s366 = sand.u32 %s34, 1
        %s367 = smul.addr %s366, 64
        %s368 = scalar_lea.vmem [#allocation2], %s367
        // Predicated region
        $region57: #{_lambda_.1} parent=55 // pred_check
          %p369 = pneg %p47
        $region58: #{_lambda_.1} parent=55 // pred_check_branch
          %371 = sbr.rel (%p369) target = $region60
        $region59: #{_lambda_.1} parent=55 // pred_region
          %372 = dma.done %s365, 1024
        $region60: #{_lambda_.1} parent=55 // pred_fallthru
          _
        // Predicated region
        $region61: #{_lambda_.1} parent=55 // pred_check
          %p373 = pneg %p68
        $region62: #{_lambda_.1} parent=55 // pred_check_branch
          %375 = sbr.rel (%p373) target = $region64
        $region63: #{_lambda_.1} parent=55 // pred_region
          %376 = dma.done [#allocation5], 256
        $region64: #{_lambda_.1} parent=55 // pred_fallthru
          _
        // Predicated region
        $region65: #{_lambda_.1} parent=55 // pred_check
          %p377 = pneg %p89
        $region66: #{_lambda_.1} parent=55 // pred_check_branch
          %379 = sbr.rel (%p377) target = $region68
        $region67: #{_lambda_.1} parent=55 // pred_region
          %380 = dma.done [#allocation5], 256
        $region68: #{_lambda_.1} parent=55 // pred_fallthru
          _
        // Predicated region
        $region69: #{_lambda_.1} parent=55 // pred_check
          %p381 = pneg %p110
        $region70: #{_lambda_.1} parent=55 // pred_check_branch
          %383 = sbr.rel (%p381) target = $region72
        $region71: #{_lambda_.1} parent=55 // pred_region
          %384 = dma.done [#allocation8], 128
        $region72: #{_lambda_.1} parent=55 // pred_fallthru
          _
        // Predicated region
        $region73: #{_lambda_.1} parent=55 // pred_check
          %p385 = pneg %p131
        $region74: #{_lambda_.1} parent=55 // pred_check_branch
          %387 = sbr.rel (%p385) target = $region76
        $region75: #{_lambda_.1} parent=55 // pred_region
          %388 = dma.done [#allocation8], 128
        $region76: #{_lambda_.1} parent=55 // pred_fallthru
          _
        // Predicated region
        $region77: #{_lambda_.1} parent=55 // pred_check
          %p389 = pneg %p152
        $region78: #{_lambda_.1} parent=55 // pred_check_branch
          %391 = sbr.rel (%p389) target = $region80
        $region79: #{_lambda_.1} parent=55 // pred_region
          %392 = dma.done [#allocation11], 128
        $region80: #{_lambda_.1} parent=55 // pred_fallthru
          _
        // Predicated region
        $region81: #{_lambda_.1} parent=55 // pred_check
          %p393 = pneg %p173
        $region82: #{_lambda_.1} parent=55 // pred_check_branch
          %395 = sbr.rel (%p393) target = $region84
        $region83: #{_lambda_.1} parent=55 // pred_region
          %396 = dma.done [#allocation11], 128
        $region84: #{_lambda_.1} parent=55 // pred_fallthru
          _
        %s397 = sand.u32 %s34, 1
        %s398 = scalar_lea.sflag [#allocation3], %s397
        %s399 = sand.u32 %s34, 1
        %s400 = smul.addr %s399, 64
        %s401 = scalar_lea.vmem [#allocation2], %s400
        %p402 = pneg %p47
        %p403 = pneg %p44
        %p404 = pneg %p68
        %p405 = pneg %p65
        %p406 = pneg %p89
        %p407 = pneg %p86
        %p408 = pneg %p110
        %p409 = pneg %p107
        %p410 = pneg %p131
        %p411 = pneg %p128
        %p412 = pneg %p152
        %p413 = pneg %p149
        %p414 = pneg %p173
        %p415 = pneg %p170
        %p416 = pneg %p194
        %p417 = pneg %p191
        %p418 = pneg %p215
        %p419 = pneg %p212
        %p420 = pneg %p241
        %p421 = pneg %p238
        %p422 = scmp.lt.s32.totalorder %s26, 1
        %s423 = scalar_select %p422, %s26, 1
        %s424 = smul.addr %s423, 8
        %s425 = smul.addr %s424, 8
        %s426 = scalar_lea.vmem %s9, %s425
        %p427 = scmp.lt.s32.totalorder %s26, 1
        %s428 = scalar_select %p427, %s26, 1
        %s429 = smul.addr %s428, 8
        %s430 = smul.addr %s429, 8
        %s431 = scalar_lea.vmem %s9, %s430
        %v432 = vld [vmem:[%s368] sm:$0xff]
        %v433 = vld [vmem:[%s368 + $0x8] sm:$0xff]
        %v434 = vld [vmem:[%s368 + $0x10] sm:$0xff]
        %v435 = vld [vmem:[%s368 + $0x18] sm:$0xff]
        %v436 = vld [vmem:[%s368 + $0x20] sm:$0xff]
        %v437 = vld [vmem:[%s368 + $0x28] sm:$0xff]
        %v438 = vld [vmem:[%s368 + $0x30] sm:$0xff]
        %v439 = vld [vmem:[%s368 + $0x38] sm:$0xff]
        %v440 = vcombine.low %v432, %v436
        %v441 = vcombine.high %v432, %v436
        %v443 = vunpack.c.l.s4 1983009808
        %v444 = vunpack.c.0.s8 %v443
        %v445 = vlaneseq
        %v446 = vshrl.u32 %v445, 7
        %v447 = vsub.s32 %v444, %v446
        %v448 = vrot.slane %v440, %v447
        %v450 = vunpack.c.l.s4 1983009808
        %v451 = vunpack.c.0.s8 %v450
        %v452 = vlaneseq
        %v453 = vshrl.u32 %v452, 7
        %v454 = vsub.s32 %v451, %v453
        %v455 = vrot.slane %v441, %v454
        %v456 = vcombine.low %v434, %v438
        %v457 = vcombine.high %v434, %v438
        %v459 = vunpack.c.l.s4 1983009808
        %v460 = vunpack.c.0.s8 %v459
        %v461 = vlaneseq
        %v462 = vshrl.u32 %v461, 7
        %v463 = vsub.s32 %v460, %v462
        %v464 = vrot.slane %v456, %v463
        %v466 = vunpack.c.l.s4 1983009808
        %v467 = vunpack.c.0.s8 %v466
        %v468 = vlaneseq
        %v469 = vshrl.u32 %v468, 7
        %v470 = vsub.s32 %v467, %v469
        %v471 = vrot.slane %v457, %v470
        %v472 = vcombine.low %v448, %v464
        %v473 = vcombine.high %v448, %v464
        %v475 = vunpack.c.l.s4 1934713408
        %v476 = vunpack.c.0.s8 %v475
        %v477 = vlaneseq
        %v478 = vshrl.u32 %v477, 7
        %v479 = vsub.s32 %v476, %v478
        %v480 = vrot.slane %v472, %v479
        %v482 = vunpack.c.l.s4 1934713408
        %v483 = vunpack.c.0.s8 %v482
        %v484 = vlaneseq
        %v485 = vshrl.u32 %v484, 7
        %v486 = vsub.s32 %v483, %v485
        %v487 = vrot.slane %v473, %v486
        %v488 = vcombine.low %v455, %v471
        %v489 = vcombine.high %v455, %v471
        %v491 = vunpack.c.l.s4 1934713408
        %v492 = vunpack.c.0.s8 %v491
        %v493 = vlaneseq
        %v494 = vshrl.u32 %v493, 7
        %v495 = vsub.s32 %v492, %v494
        %v496 = vrot.slane %v488, %v495
        %v498 = vunpack.c.l.s4 1934713408
        %v499 = vunpack.c.0.s8 %v498
        %v500 = vlaneseq
        %v501 = vshrl.u32 %v500, 7
        %v502 = vsub.s32 %v499, %v501
        %v503 = vrot.slane %v489, %v502
        %v504 = vcombine.high %v480, 0.0
        %v505 = vcombine.high %v487, 0.0
        %v506 = vcombine.high %v496, 0.0
        %v507 = vcombine.high %v503, 0.0
        %v508 = vcombine.low %v433, %v437
        %v509 = vcombine.high %v433, %v437
        %v511 = vunpack.c.l.s4 1983009808
        %v512 = vunpack.c.0.s8 %v511
        %v513 = vlaneseq
        %v514 = vshrl.u32 %v513, 7
        %v515 = vsub.s32 %v512, %v514
        %v516 = vrot.slane %v508, %v515
        %v518 = vunpack.c.l.s4 1983009808
        %v519 = vunpack.c.0.s8 %v518
        %v520 = vlaneseq
        %v521 = vshrl.u32 %v520, 7
        %v522 = vsub.s32 %v519, %v521
        %v523 = vrot.slane %v509, %v522
        %v524 = vcombine.low %v435, %v439
        %v525 = vcombine.high %v435, %v439
        %v527 = vunpack.c.l.s4 1983009808
        %v528 = vunpack.c.0.s8 %v527
        %v529 = vlaneseq
        %v530 = vshrl.u32 %v529, 7
        %v531 = vsub.s32 %v528, %v530
        %v532 = vrot.slane %v524, %v531
        %v534 = vunpack.c.l.s4 1983009808
        %v535 = vunpack.c.0.s8 %v534
        %v536 = vlaneseq
        %v537 = vshrl.u32 %v536, 7
        %v538 = vsub.s32 %v535, %v537
        %v539 = vrot.slane %v525, %v538
        %v540 = vcombine.low %v516, %v532
        %v541 = vcombine.high %v516, %v532
        %v543 = vunpack.c.l.s4 1934713408
        %v544 = vunpack.c.0.s8 %v543
        %v545 = vlaneseq
        %v546 = vshrl.u32 %v545, 7
        %v547 = vsub.s32 %v544, %v546
        %v548 = vrot.slane %v540, %v547
        %v550 = vunpack.c.l.s4 1934713408
        %v551 = vunpack.c.0.s8 %v550
        %v552 = vlaneseq
        %v553 = vshrl.u32 %v552, 7
        %v554 = vsub.s32 %v551, %v553
        %v555 = vrot.slane %v541, %v554
        %v556 = vcombine.low %v523, %v539
        %v557 = vcombine.high %v523, %v539
        %v559 = vunpack.c.l.s4 1934713408
        %v560 = vunpack.c.0.s8 %v559
        %v561 = vlaneseq
        %v562 = vshrl.u32 %v561, 7
        %v563 = vsub.s32 %v560, %v562
        %v564 = vrot.slane %v556, %v563
        %v566 = vunpack.c.l.s4 1934713408
        %v567 = vunpack.c.0.s8 %v566
        %v568 = vlaneseq
        %v569 = vshrl.u32 %v568, 7
        %v570 = vsub.s32 %v567, %v569
        %v571 = vrot.slane %v557, %v570
        %v572 = vcombine.high %v548, 0.0
        %v573 = vcombine.high %v555, 0.0
        %v574 = vcombine.high %v564, 0.0
        %v575 = vcombine.high %v571, 0.0
        %577 = vrot.lane.b32.xlu0 %v504, 16
        %v578 = vpop.permute.xlu0 %577
        %581 = vrot.lane.b32.xlu0 %v487, 32
        %v582 = vpop.permute.xlu0 %581
        %585 = vrot.lane.b32.xlu0 %v505, 48
        %v586 = vpop.permute.xlu0 %585
        %589 = vrot.lane.b32.xlu0 %v496, 64
        %v590 = vpop.permute.xlu0 %589
        %593 = vrot.lane.b32.xlu0 %v506, 80
        %v594 = vpop.permute.xlu0 %593
        %597 = vrot.lane.b32.xlu0 %v503, 96
        %v598 = vpop.permute.xlu0 %597
        %601 = vrot.lane.b32.xlu0 %v507, 112
        %v602 = vpop.permute.xlu0 %601
        %605 = vrot.lane.b32.xlu0 %v572, 16
        %v606 = vpop.permute.xlu0 %605
        %609 = vrot.lane.b32.xlu0 %v555, 32
        %v610 = vpop.permute.xlu0 %609
        %613 = vrot.lane.b32.xlu0 %v573, 48
        %v614 = vpop.permute.xlu0 %613
        %617 = vrot.lane.b32.xlu0 %v564, 64
        %v618 = vpop.permute.xlu0 %617
        %621 = vrot.lane.b32.xlu0 %v574, 80
        %v622 = vpop.permute.xlu0 %621
        %625 = vrot.lane.b32.xlu0 %v571, 96
        %v626 = vpop.permute.xlu0 %625
        %629 = vrot.lane.b32.xlu0 %v575, 112
        %v630 = vpop.permute.xlu0 %629
        %vm632 = vcmask 130048
        %v633 = vsel %vm632, %v480, %v578
        %vm634 = vcmask 261120
        %v635 = vsel %vm634, %v633, %v582
        %vm636 = vcmask 392192
        %v637 = vsel %vm636, %v635, %v586
        %vm638 = vcmask 523264
        %v639 = vsel %vm638, %v637, %v590
        %vm640 = vcmask 654336
        %v641 = vsel %vm640, %v639, %v594
        %vm642 = vcmask 785408
        %v643 = vsel %vm642, %v641, %v598
        %vm644 = vcmask 916480
        %v645 = vsel %vm644, %v643, %v602
        %v646 = vsel %vm632, %v548, %v606
        %v647 = vsel %vm634, %v646, %v610
        %v648 = vsel %vm636, %v647, %v614
        %v649 = vsel %vm638, %v648, %v618
        %v650 = vsel %vm640, %v649, %v622
        %v651 = vsel %vm642, %v650, %v626
        %v652 = vsel %vm644, %v651, %v630
        %v653 = vld [vmem:[#allocation4] sm:$0xff]
        %v654 = vld [vmem:[#allocation4 + $0x8] sm:$0xff]
        %v655 = vld [vmem:[#allocation6] sm:$0xff]
        %v656 = vld [vmem:[#allocation6 + $0x8] sm:$0xff]
        %658 = vset.pattern.permute.xlu0 0
        %659 = vperm.xlu0 %658, %v655
        %v660 = vpop.permute.xlu0 %659
        %663 = vset.pattern.permute.xlu0 0
        %664 = vperm.xlu0 %663, %v656
        %v665 = vpop.permute.xlu0 %664
        %vm667 = vcmask 31744
        %v669 = vsel %vm667, %v653, 0
        %v672 = vsel %vm667, %v654, 0
        %vm674 = vcmask 1043456
        %v676 = vsel %vm674, %v645, 0
        %v679 = vsel %vm674, %v652, 0
        %681 = vmatprep.subr.mxu0 %v679
        %682 = vmatpush1.msra.mxu0 %v676
        %683 = vmatprep.subr.mxu0 0.0
        %684 = vmatpush1.msra.mxu0 0.0
        %685 = vmatprep.subr.mxu0 0.0
        %686 = vmatpush1.msra.mxu0 0.0
        %687 = vmatprep.subr.mxu0 0.0
        %688 = vmatpush1.msra.mxu0 0.0
        %689 = vmatprep.subr.mxu0 0.0
        %690 = vmatpush1.msra.mxu0 0.0
        %691 = vmatprep.subr.mxu0 0.0
        %692 = vmatpush1.msra.mxu0 0.0
        %693 = vmatprep.subr.mxu0 0.0
        %694 = vmatpush1.msra.mxu0 0.0
        %695 = vmatprep.subr.mxu0 0.0
        %696 = vmatpush1.msra.mxu0 0.0
        %697 = vmatprep.subr.mxu0 0.0
        %698 = vmatpush1.msra.mxu0 0.0
        %699 = vmatprep.subr.mxu0 0.0
        %700 = vmatpush1.msra.mxu0 0.0
        %701 = vmatprep.subr.mxu0 0.0
        %702 = vmatpush1.msra.mxu0 0.0
        %703 = vmatprep.subr.mxu0 0.0
        %704 = vmatpush1.msra.mxu0 0.0
        %705 = vmatprep.subr.mxu0 0.0
        %706 = vmatpush1.msra.mxu0 0.0
        %707 = vmatprep.subr.mxu0 0.0
        %708 = vmatpush1.msra.mxu0 0.0
        %709 = vmatprep.subr.mxu0 0.0
        %710 = vmatpush1.msra.mxu0 0.0
        %711 = vmatprep.subr.mxu0 0.0
        %712 = vmatpush1.msra.mxu0 0.0
        %713 = vmatprep.subr.mxu0 0.0
        %714 = vmatpush1.msra.mxu0 0.0
        %715 = vmatprep.subr.mxu0 0.0
        %716 = vmatpush1.msra.mxu0 0.0
        %717 = vmatprep.subr.mxu0 0.0
        %718 = vmatpush1.msra.mxu0 0.0
        %719 = vmatprep.subr.mxu0 0.0
        %720 = vmatpush1.msra.mxu0 0.0
        %721 = vmatprep.subr.mxu0 0.0
        %722 = vmatpush1.msra.mxu0 0.0
        %723 = vmatprep.subr.mxu0 0.0
        %724 = vmatpush1.msra.mxu0 0.0
        %725 = vmatprep.subr.mxu0 0.0
        %726 = vmatpush1.msra.mxu0 0.0
        %727 = vmatprep.subr.mxu0 0.0
        %728 = vmatpush1.msra.mxu0 0.0
        %729 = vmatprep.subr.mxu0 0.0
        %730 = vmatpush1.msra.mxu0 0.0
        %731 = vmatprep.subr.mxu0 0.0
        %732 = vmatpush1.msra.mxu0 0.0
        %733 = vmatprep.subr.mxu0 0.0
        %734 = vmatpush1.msra.mxu0 0.0
        %735 = vmatprep.subr.mxu0 0.0
        %736 = vmatpush1.msra.mxu0 0.0
        %737 = vmatprep.subr.mxu0 0.0
        %738 = vmatpush1.msra.mxu0 0.0
        %739 = vmatprep.subr.mxu0 0.0
        %740 = vmatpush1.msra.mxu0 0.0
        %741 = vmatprep.subr.mxu0 0.0
        %742 = vmatpush1.msra.mxu0 0.0
        %743 = vmatprep.subr.mxu0 0.0
        %744 = vmatpush1.msra.mxu0 0.0
        %745 = vmatprep.mubr.f32.mxu0 0.0
        %746 = vmatmul.mubr.f32.gmra.mrb[0].mxu0 %v669
        %v747 = vpop.f32.mrb[0].mxu0
        %v748 = vadd.f32 %v660, %v747
        %v749 = vpop.f32.mrb[0].mxu0
        %v750 = vadd.f32 %v660, %v749
        %751 = vmatprep.mubr.f32.mxu0 0.0
        %752 = vmatmul.mubr.f32.gmra.mrb[0].mxu0 %v672
        %v753 = vpop.f32.mrb[0].mxu0
        %v754 = vadd.f32 %v665, %v753
        %v755 = vpop.f32.mrb[0].mxu0
        %v756 = vadd.f32 %v665, %v755
        %757 = vdwg.mxu0
        %v758 = vmax.f32 %v748, 0.0
        %v759 = vmax.f32 %v750, 0.0
        %v760 = vmax.f32 %v754, 0.0
        %v761 = vmax.f32 %v756, 0.0
        %763 = vrot.lane.b32.xlu0 %v760, 112
        %v764 = vpop.permute.xlu0 %763
        %766 = vrot.lane.b32.xlu0 %v760, 96
        %v767 = vpop.permute.xlu0 %766
        %769 = vrot.lane.b32.xlu0 %v760, 80
        %v770 = vpop.permute.xlu0 %769
        %772 = vrot.lane.b32.xlu0 %v760, 64
        %v773 = vpop.permute.xlu0 %772
        %775 = vrot.lane.b32.xlu0 %v760, 48
        %v776 = vpop.permute.xlu0 %775
        %778 = vrot.lane.b32.xlu0 %v760, 32
        %v779 = vpop.permute.xlu0 %778
        %781 = vrot.lane.b32.xlu0 %v760, 16
        %v782 = vpop.permute.xlu0 %781
        %785 = vrot.lane.b32.xlu0 %v761, 112
        %v786 = vpop.permute.xlu0 %785
        %788 = vrot.lane.b32.xlu0 %v761, 96
        %v789 = vpop.permute.xlu0 %788
        %791 = vrot.lane.b32.xlu0 %v761, 80
        %v792 = vpop.permute.xlu0 %791
        %794 = vrot.lane.b32.xlu0 %v761, 64
        %v795 = vpop.permute.xlu0 %794
        %797 = vrot.lane.b32.xlu0 %v761, 48
        %v798 = vpop.permute.xlu0 %797
        %800 = vrot.lane.b32.xlu0 %v761, 32
        %v801 = vpop.permute.xlu0 %800
        %803 = vrot.lane.b32.xlu0 %v761, 16
        %v804 = vpop.permute.xlu0 %803
        %v806 = vcombine.low %v760, %v767
        %v808 = vunpack.c.l.s4 1983009808
        %v809 = vunpack.c.0.s8 %v808
        %v810 = vlaneseq
        %v811 = vshrl.u32 %v810, 7
        %v812 = vsub.s32 %v809, %v811
        %v813 = vrot.slane %v806, %v812
        %v814 = vcombine.low %v764, %v770
        %v816 = vunpack.c.l.s4 1983009808
        %v817 = vunpack.c.0.s8 %v816
        %v818 = vlaneseq
        %v819 = vshrl.u32 %v818, 7
        %v820 = vsub.s32 %v817, %v819
        %v821 = vrot.slane %v814, %v820
        %v822 = vcombine.low %v773, %v779
        %v824 = vunpack.c.l.s4 1983009808
        %v825 = vunpack.c.0.s8 %v824
        %v826 = vlaneseq
        %v827 = vshrl.u32 %v826, 7
        %v828 = vsub.s32 %v825, %v827
        %v829 = vrot.slane %v822, %v828
        %v830 = vcombine.low %v776, %v782
        %v832 = vunpack.c.l.s4 1983009808
        %v833 = vunpack.c.0.s8 %v832
        %v834 = vlaneseq
        %v835 = vshrl.u32 %v834, 7
        %v836 = vsub.s32 %v833, %v835
        %v837 = vrot.slane %v830, %v836
        %v838 = vcombine.low %v813, %v821
        %v839 = vcombine.high %v813, %v821
        %v841 = vunpack.c.l.s4 1934713408
        %v842 = vunpack.c.0.s8 %v841
        %v843 = vlaneseq
        %v844 = vshrl.u32 %v843, 7
        %v845 = vsub.s32 %v842, %v844
        %v846 = vrot.slane %v838, %v845
        %v848 = vunpack.c.l.s4 1934713408
        %v849 = vunpack.c.0.s8 %v848
        %v850 = vlaneseq
        %v851 = vshrl.u32 %v850, 7
        %v852 = vsub.s32 %v849, %v851
        %v853 = vrot.slane %v839, %v852
        %v854 = vcombine.low %v829, %v837
        %v855 = vcombine.high %v829, %v837
        %v857 = vunpack.c.l.s4 1934713408
        %v858 = vunpack.c.0.s8 %v857
        %v859 = vlaneseq
        %v860 = vshrl.u32 %v859, 7
        %v861 = vsub.s32 %v858, %v860
        %v862 = vrot.slane %v854, %v861
        %v864 = vunpack.c.l.s4 1934713408
        %v865 = vunpack.c.0.s8 %v864
        %v866 = vlaneseq
        %v867 = vshrl.u32 %v866, 7
        %v868 = vsub.s32 %v865, %v867
        %v869 = vrot.slane %v855, %v868
        %v870 = vcombine.low %v846, %v862
        %v871 = vcombine.high %v846, %v862
        %v872 = vcombine.low %v853, %v869
        %v873 = vcombine.high %v853, %v869
        %v874 = vcombine.low %v761, %v789
        %v876 = vunpack.c.l.s4 1983009808
        %v877 = vunpack.c.0.s8 %v876
        %v878 = vlaneseq
        %v879 = vshrl.u32 %v878, 7
        %v880 = vsub.s32 %v877, %v879
        %v881 = vrot.slane %v874, %v880
        %v882 = vcombine.low %v786, %v792
        %v884 = vunpack.c.l.s4 1983009808
        %v885 = vunpack.c.0.s8 %v884
        %v886 = vlaneseq
        %v887 = vshrl.u32 %v886, 7
        %v888 = vsub.s32 %v885, %v887
        %v889 = vrot.slane %v882, %v888
        %v890 = vcombine.low %v795, %v801
        %v892 = vunpack.c.l.s4 1983009808
        %v893 = vunpack.c.0.s8 %v892
        %v894 = vlaneseq
        %v895 = vshrl.u32 %v894, 7
        %v896 = vsub.s32 %v893, %v895
        %v897 = vrot.slane %v890, %v896
        %v898 = vcombine.low %v798, %v804
        %v900 = vunpack.c.l.s4 1983009808
        %v901 = vunpack.c.0.s8 %v900
        %v902 = vlaneseq
        %v903 = vshrl.u32 %v902, 7
        %v904 = vsub.s32 %v901, %v903
        %v905 = vrot.slane %v898, %v904
        %v906 = vcombine.low %v881, %v889
        %v907 = vcombine.high %v881, %v889
        %v909 = vunpack.c.l.s4 1934713408
        %v910 = vunpack.c.0.s8 %v909
        %v911 = vlaneseq
        %v912 = vshrl.u32 %v911, 7
        %v913 = vsub.s32 %v910, %v912
        %v914 = vrot.slane %v906, %v913
        %v916 = vunpack.c.l.s4 1934713408
        %v917 = vunpack.c.0.s8 %v916
        %v918 = vlaneseq
        %v919 = vshrl.u32 %v918, 7
        %v920 = vsub.s32 %v917, %v919
        %v921 = vrot.slane %v907, %v920
        %v922 = vcombine.low %v897, %v905
        %v923 = vcombine.high %v897, %v905
        %v925 = vunpack.c.l.s4 1934713408
        %v926 = vunpack.c.0.s8 %v925
        %v927 = vlaneseq
        %v928 = vshrl.u32 %v927, 7
        %v929 = vsub.s32 %v926, %v928
        %v930 = vrot.slane %v922, %v929
        %v932 = vunpack.c.l.s4 1934713408
        %v933 = vunpack.c.0.s8 %v932
        %v934 = vlaneseq
        %v935 = vshrl.u32 %v934, 7
        %v936 = vsub.s32 %v933, %v935
        %v937 = vrot.slane %v923, %v936
        %v938 = vcombine.low %v914, %v930
        %v939 = vcombine.high %v914, %v930
        %v940 = vcombine.low %v921, %v937
        %v941 = vcombine.high %v921, %v937
        %v942 = vrot.slane %v760, 4
        %v943 = vrot.slane %v764, 4
        %v944 = vrot.slane %v767, 4
        %v945 = vrot.slane %v770, 4
        %v946 = vrot.slane %v773, 4
        %v947 = vrot.slane %v776, 4
        %v948 = vrot.slane %v779, 4
        %v949 = vrot.slane %v782, 4
        %v950 = vrot.slane %v761, 4
        %v951 = vrot.slane %v786, 4
        %v952 = vrot.slane %v789, 4
        %v953 = vrot.slane %v792, 4
        %v954 = vrot.slane %v795, 4
        %v955 = vrot.slane %v798, 4
        %v956 = vrot.slane %v801, 4
        %v957 = vrot.slane %v804, 4
        %v974 = vcombine.low %v942, %v944
        %v976 = vunpack.c.l.s4 1983009808
        %v977 = vunpack.c.0.s8 %v976
        %v978 = vlaneseq
        %v979 = vshrl.u32 %v978, 7
        %v980 = vsub.s32 %v977, %v979
        %v981 = vrot.slane %v974, %v980
        %v982 = vcombine.low %v943, %v945
        %v984 = vunpack.c.l.s4 1983009808
        %v985 = vunpack.c.0.s8 %v984
        %v986 = vlaneseq
        %v987 = vshrl.u32 %v986, 7
        %v988 = vsub.s32 %v985, %v987
        %v989 = vrot.slane %v982, %v988
        %v990 = vcombine.low %v946, %v948
        %v992 = vunpack.c.l.s4 1983009808
        %v993 = vunpack.c.0.s8 %v992
        %v994 = vlaneseq
        %v995 = vshrl.u32 %v994, 7
        %v996 = vsub.s32 %v993, %v995
        %v997 = vrot.slane %v990, %v996
        %v998 = vcombine.low %v947, %v949
        %v1000 = vunpack.c.l.s4 1983009808
        %v1001 = vunpack.c.0.s8 %v1000
        %v1002 = vlaneseq
        %v1003 = vshrl.u32 %v1002, 7
        %v1004 = vsub.s32 %v1001, %v1003
        %v1005 = vrot.slane %v998, %v1004
        %v1006 = vcombine.low %v981, %v989
        %v1007 = vcombine.high %v981, %v989
        %v1009 = vunpack.c.l.s4 1934713408
        %v1010 = vunpack.c.0.s8 %v1009
        %v1011 = vlaneseq
        %v1012 = vshrl.u32 %v1011, 7
        %v1013 = vsub.s32 %v1010, %v1012
        %v1014 = vrot.slane %v1006, %v1013
        %v1016 = vunpack.c.l.s4 1934713408
        %v1017 = vunpack.c.0.s8 %v1016
        %v1018 = vlaneseq
        %v1019 = vshrl.u32 %v1018, 7
        %v1020 = vsub.s32 %v1017, %v1019
        %v1021 = vrot.slane %v1007, %v1020
        %v1022 = vcombine.low %v997, %v1005
        %v1023 = vcombine.high %v997, %v1005
        %v1025 = vunpack.c.l.s4 1934713408
        %v1026 = vunpack.c.0.s8 %v1025
        %v1027 = vlaneseq
        %v1028 = vshrl.u32 %v1027, 7
        %v1029 = vsub.s32 %v1026, %v1028
        %v1030 = vrot.slane %v1022, %v1029
        %v1032 = vunpack.c.l.s4 1934713408
        %v1033 = vunpack.c.0.s8 %v1032
        %v1034 = vlaneseq
        %v1035 = vshrl.u32 %v1034, 7
        %v1036 = vsub.s32 %v1033, %v1035
        %v1037 = vrot.slane %v1023, %v1036
        %v1038 = vcombine.low %v1014, %v1030
        %v1039 = vcombine.high %v1014, %v1030
        %v1040 = vcombine.low %v1021, %v1037
        %v1041 = vcombine.high %v1021, %v1037
        %v1042 = vcombine.low %v950, %v952
        %v1044 = vunpack.c.l.s4 1983009808
        %v1045 = vunpack.c.0.s8 %v1044
        %v1046 = vlaneseq
        %v1047 = vshrl.u32 %v1046, 7
        %v1048 = vsub.s32 %v1045, %v1047
        %v1049 = vrot.slane %v1042, %v1048
        %v1050 = vcombine.low %v951, %v953
        %v1052 = vunpack.c.l.s4 1983009808
        %v1053 = vunpack.c.0.s8 %v1052
        %v1054 = vlaneseq
        %v1055 = vshrl.u32 %v1054, 7
        %v1056 = vsub.s32 %v1053, %v1055
        %v1057 = vrot.slane %v1050, %v1056
        %v1058 = vcombine.low %v954, %v956
        %v1060 = vunpack.c.l.s4 1983009808
        %v1061 = vunpack.c.0.s8 %v1060
        %v1062 = vlaneseq
        %v1063 = vshrl.u32 %v1062, 7
        %v1064 = vsub.s32 %v1061, %v1063
        %v1065 = vrot.slane %v1058, %v1064
        %v1066 = vcombine.low %v955, %v957
        %v1068 = vunpack.c.l.s4 1983009808
        %v1069 = vunpack.c.0.s8 %v1068
        %v1070 = vlaneseq
        %v1071 = vshrl.u32 %v1070, 7
        %v1072 = vsub.s32 %v1069, %v1071
        %v1073 = vrot.slane %v1066, %v1072
        %v1074 = vcombine.low %v1049, %v1057
        %v1075 = vcombine.high %v1049, %v1057
        %v1077 = vunpack.c.l.s4 1934713408
        %v1078 = vunpack.c.0.s8 %v1077
        %v1079 = vlaneseq
        %v1080 = vshrl.u32 %v1079, 7
        %v1081 = vsub.s32 %v1078, %v1080
        %v1082 = vrot.slane %v1074, %v1081
        %v1084 = vunpack.c.l.s4 1934713408
        %v1085 = vunpack.c.0.s8 %v1084
        %v1086 = vlaneseq
        %v1087 = vshrl.u32 %v1086, 7
        %v1088 = vsub.s32 %v1085, %v1087
        %v1089 = vrot.slane %v1075, %v1088
        %v1090 = vcombine.low %v1065, %v1073
        %v1091 = vcombine.high %v1065, %v1073
        %v1093 = vunpack.c.l.s4 1934713408
        %v1094 = vunpack.c.0.s8 %v1093
        %v1095 = vlaneseq
        %v1096 = vshrl.u32 %v1095, 7
        %v1097 = vsub.s32 %v1094, %v1096
        %v1098 = vrot.slane %v1090, %v1097
        %v1100 = vunpack.c.l.s4 1934713408
        %v1101 = vunpack.c.0.s8 %v1100
        %v1102 = vlaneseq
        %v1103 = vshrl.u32 %v1102, 7
        %v1104 = vsub.s32 %v1101, %v1103
        %v1105 = vrot.slane %v1091, %v1104
        %v1106 = vcombine.low %v1082, %v1098
        %v1107 = vcombine.high %v1082, %v1098
        %v1108 = vcombine.low %v1089, %v1105
        %v1109 = vcombine.high %v1089, %v1105
        %1118 = vrot.lane.b32.xlu0 %v432, 1
        %v1119 = vpop.permute.xlu0 %1118
        %1120 = vrot.lane.b32.xlu0 %v433, 1
        %v1121 = vpop.permute.xlu0 %1120
        %1122 = vrot.lane.b32.xlu0 %v434, 1
        %v1123 = vpop.permute.xlu0 %1122
        %1124 = vrot.lane.b32.xlu0 %v435, 1
        %v1125 = vpop.permute.xlu0 %1124
        %1126 = vrot.lane.b32.xlu0 %v436, 1
        %v1127 = vpop.permute.xlu0 %1126
        %1128 = vrot.lane.b32.xlu0 %v437, 1
        %v1129 = vpop.permute.xlu0 %1128
        %1130 = vrot.lane.b32.xlu0 %v438, 1
        %v1131 = vpop.permute.xlu0 %1130
        %1132 = vrot.lane.b32.xlu0 %v439, 1
        %v1133 = vpop.permute.xlu0 %1132
        %vm1142 = vcmask 7168
        %v1143 = vsel %vm1142, -1e+30, %v1119
        %v1144 = vsel %vm1142, -1e+30, %v1121
        %v1145 = vsel %vm1142, -1e+30, %v1123
        %v1146 = vsel %vm1142, -1e+30, %v1125
        %v1147 = vsel %vm1142, -1e+30, %v1127
        %v1148 = vsel %vm1142, -1e+30, %v1129
        %v1149 = vsel %vm1142, -1e+30, %v1131
        %v1150 = vsel %vm1142, -1e+30, %v1133
        %vm1151 = vcmask 138240
        %v1152 = vsel %vm1151, %v1143, -1e+30
        %v1153 = vsel %vm1151, %v1144, -1e+30
        %v1154 = vsel %vm1151, %v1145, -1e+30
        %v1155 = vsel %vm1151, %v1146, -1e+30
        %v1156 = vsel %vm1151, %v1147, -1e+30
        %v1157 = vsel %vm1151, %v1148, -1e+30
        %v1158 = vsel %vm1151, %v1149, -1e+30
        %v1159 = vsel %vm1151, %v1150, -1e+30
        %vm1168 = vcmask 1040384
        %v1169 = vrot.slane %v1152, 7
        %v1170 = vrot.slane %v1153, 7
        %v1171 = vsel %vm1168, %v1169, %v1170
        %v1172 = vrot.slane %v1154, 7
        %v1173 = vrot.slane %v1155, 7
        %v1174 = vsel %vm1168, %v1172, %v1173
        %v1175 = vrot.slane %v1156, 7
        %v1176 = vrot.slane %v1157, 7
        %v1177 = vsel %vm1168, %v1175, %v1176
        %v1178 = vrot.slane %v1158, 7
        %v1179 = vrot.slane %v1159, 7
        %v1180 = vsel %vm1168, %v1178, %v1179
        %v1193 = vsel %vm1168, -1e+30, %v1169
        %v1194 = vsel %vm1168, -1e+30, %v1172
        %v1195 = vsel %vm1168, -1e+30, %v1175
        %v1196 = vsel %vm1168, -1e+30, %v1178
        %v1197 = vsel %vm1168, %v1170, -1e+30
        %v1198 = vsel %vm1168, %v1173, -1e+30
        %v1199 = vsel %vm1168, %v1176, -1e+30
        %v1200 = vsel %vm1168, %v1179, -1e+30
        %1205 = vrot.lane.b32.xlu0 %v1193, 127
        %v1206 = vpop.permute.xlu0 %1205
        %1207 = vrot.lane.b32.xlu0 %v1171, 127
        %v1208 = vpop.permute.xlu0 %1207
        %1209 = vrot.lane.b32.xlu0 %v1194, 127
        %v1210 = vpop.permute.xlu0 %1209
        %1211 = vrot.lane.b32.xlu0 %v1174, 127
        %v1212 = vpop.permute.xlu0 %1211
        %1213 = vrot.lane.b32.xlu0 %v1195, 127
        %v1214 = vpop.permute.xlu0 %1213
        %1215 = vrot.lane.b32.xlu0 %v1177, 127
        %v1216 = vpop.permute.xlu0 %1215
        %1217 = vrot.lane.b32.xlu0 %v1196, 127
        %v1218 = vpop.permute.xlu0 %1217
        %1219 = vrot.lane.b32.xlu0 %v1180, 127
        %v1220 = vpop.permute.xlu0 %1219
        %v1229 = vmax.f32 %v1193, %v1206
        %v1230 = vmax.f32 %v1171, %v1208
        %v1231 = vmax.f32 %v1194, %v1210
        %v1232 = vmax.f32 %v1174, %v1212
        %v1233 = vmax.f32 %v1195, %v1214
        %v1234 = vmax.f32 %v1177, %v1216
        %v1235 = vmax.f32 %v1196, %v1218
        %v1236 = vmax.f32 %v1180, %v1220
        %1237 = vrot.lane.b32.xlu0 %v1193, 126
        %v1238 = vpop.permute.xlu0 %1237
        %1239 = vrot.lane.b32.xlu0 %v1171, 126
        %v1240 = vpop.permute.xlu0 %1239
        %1241 = vrot.lane.b32.xlu0 %v1194, 126
        %v1242 = vpop.permute.xlu0 %1241
        %1243 = vrot.lane.b32.xlu0 %v1174, 126
        %v1244 = vpop.permute.xlu0 %1243
        %1245 = vrot.lane.b32.xlu0 %v1195, 126
        %v1246 = vpop.permute.xlu0 %1245
        %1247 = vrot.lane.b32.xlu0 %v1177, 126
        %v1248 = vpop.permute.xlu0 %1247
        %1249 = vrot.lane.b32.xlu0 %v1196, 126
        %v1250 = vpop.permute.xlu0 %1249
        %1251 = vrot.lane.b32.xlu0 %v1180, 126
        %v1252 = vpop.permute.xlu0 %1251
        %v1261 = vmax.f32 %v1229, %v1238
        %v1262 = vmax.f32 %v1230, %v1240
        %v1263 = vmax.f32 %v1231, %v1242
        %v1264 = vmax.f32 %v1232, %v1244
        %v1265 = vmax.f32 %v1233, %v1246
        %v1266 = vmax.f32 %v1234, %v1248
        %v1267 = vmax.f32 %v1235, %v1250
        %v1268 = vmax.f32 %v1236, %v1252
        %vm1273 = vcmask 1046528
        %v1274 = vrot.slane %v1193, 1
        %v1275 = vrot.slane %v1171, 1
        %v1276 = vsel %vm1273, %v1274, %v1275
        %v1277 = vrot.slane %v1197, 1
        %v1278 = vsel %vm1273, %v1275, %v1277
        %v1279 = vrot.slane %v1194, 1
        %v1280 = vrot.slane %v1174, 1
        %v1281 = vsel %vm1273, %v1279, %v1280
        %v1282 = vrot.slane %v1198, 1
        %v1283 = vsel %vm1273, %v1280, %v1282
        %v1284 = vrot.slane %v1195, 1
        %v1285 = vrot.slane %v1177, 1
        %v1286 = vsel %vm1273, %v1284, %v1285
        %v1287 = vrot.slane %v1199, 1
        %v1288 = vsel %vm1273, %v1285, %v1287
        %v1289 = vrot.slane %v1196, 1
        %v1290 = vrot.slane %v1180, 1
        %v1291 = vsel %vm1273, %v1289, %v1290
        %v1292 = vrot.slane %v1200, 1
        %v1293 = vsel %vm1273, %v1290, %v1292
        %v1302 = vmax.f32 %v1261, %v1276
        %v1303 = vmax.f32 %v1262, %v1278
        %v1304 = vmax.f32 %v1263, %v1281
        %v1305 = vmax.f32 %v1264, %v1283
        %v1306 = vmax.f32 %v1265, %v1286
        %v1307 = vmax.f32 %v1266, %v1288
        %v1308 = vmax.f32 %v1267, %v1291
        %v1309 = vmax.f32 %v1268, %v1293
        %1310 = vrot.lane.b32.xlu0 %v1276, 127
        %v1311 = vpop.permute.xlu0 %1310
        %1312 = vrot.lane.b32.xlu0 %v1278, 127
        %v1313 = vpop.permute.xlu0 %1312
        %1314 = vrot.lane.b32.xlu0 %v1281, 127
        %v1315 = vpop.permute.xlu0 %1314
        %1316 = vrot.lane.b32.xlu0 %v1283, 127
        %v1317 = vpop.permute.xlu0 %1316
        %1318 = vrot.lane.b32.xlu0 %v1286, 127
        %v1319 = vpop.permute.xlu0 %1318
        %1320 = vrot.lane.b32.xlu0 %v1288, 127
        %v1321 = vpop.permute.xlu0 %1320
        %1322 = vrot.lane.b32.xlu0 %v1291, 127
        %v1323 = vpop.permute.xlu0 %1322
        %1324 = vrot.lane.b32.xlu0 %v1293, 127
        %v1325 = vpop.permute.xlu0 %1324
        %v1334 = vmax.f32 %v1302, %v1311
        %v1335 = vmax.f32 %v1303, %v1313
        %v1336 = vmax.f32 %v1304, %v1315
        %v1337 = vmax.f32 %v1305, %v1317
        %v1338 = vmax.f32 %v1306, %v1319
        %v1339 = vmax.f32 %v1307, %v1321
        %v1340 = vmax.f32 %v1308, %v1323
        %v1341 = vmax.f32 %v1309, %v1325
        %1342 = vrot.lane.b32.xlu0 %v1276, 126
        %v1343 = vpop.permute.xlu0 %1342
        %1344 = vrot.lane.b32.xlu0 %v1278, 126
        %v1345 = vpop.permute.xlu0 %1344
        %1346 = vrot.lane.b32.xlu0 %v1281, 126
        %v1347 = vpop.permute.xlu0 %1346
        %1348 = vrot.lane.b32.xlu0 %v1283, 126
        %v1349 = vpop.permute.xlu0 %1348
        %1350 = vrot.lane.b32.xlu0 %v1286, 126
        %v1351 = vpop.permute.xlu0 %1350
        %1352 = vrot.lane.b32.xlu0 %v1288, 126
        %v1353 = vpop.permute.xlu0 %1352
        %1354 = vrot.lane.b32.xlu0 %v1291, 126
        %v1355 = vpop.permute.xlu0 %1354
        %1356 = vrot.lane.b32.xlu0 %v1293, 126
        %v1357 = vpop.permute.xlu0 %1356
        %v1366 = vmax.f32 %v1334, %v1343
        %v1367 = vmax.f32 %v1335, %v1345
        %v1368 = vmax.f32 %v1336, %v1347
        %v1369 = vmax.f32 %v1337, %v1349
        %v1370 = vmax.f32 %v1338, %v1351
        %v1371 = vmax.f32 %v1339, %v1353
        %v1372 = vmax.f32 %v1340, %v1355
        %v1373 = vmax.f32 %v1341, %v1357
        %vm1374 = vcmask 1045504
        %v1375 = vrot.slane %v1193, 2
        %v1376 = vrot.slane %v1171, 2
        %v1377 = vsel %vm1374, %v1375, %v1376
        %v1378 = vrot.slane %v1197, 2
        %v1379 = vsel %vm1374, %v1376, %v1378
        %v1380 = vrot.slane %v1194, 2
        %v1381 = vrot.slane %v1174, 2
        %v1382 = vsel %vm1374, %v1380, %v1381
        %v1383 = vrot.slane %v1198, 2
        %v1384 = vsel %vm1374, %v1381, %v1383
        %v1385 = vrot.slane %v1195, 2
        %v1386 = vrot.slane %v1177, 2
        %v1387 = vsel %vm1374, %v1385, %v1386
        %v1388 = vrot.slane %v1199, 2
        %v1389 = vsel %vm1374, %v1386, %v1388
        %v1390 = vrot.slane %v1196, 2
        %v1391 = vrot.slane %v1180, 2
        %v1392 = vsel %vm1374, %v1390, %v1391
        %v1393 = vrot.slane %v1200, 2
        %v1394 = vsel %vm1374, %v1391, %v1393
        %v1403 = vmax.f32 %v1366, %v1377
        %v1404 = vmax.f32 %v1367, %v1379
        %v1405 = vmax.f32 %v1368, %v1382
        %v1406 = vmax.f32 %v1369, %v1384
        %v1407 = vmax.f32 %v1370, %v1387
        %v1408 = vmax.f32 %v1371, %v1389
        %v1409 = vmax.f32 %v1372, %v1392
        %v1410 = vmax.f32 %v1373, %v1394
        %1411 = vrot.lane.b32.xlu0 %v1377, 127
        %v1412 = vpop.permute.xlu0 %1411
        %1413 = vrot.lane.b32.xlu0 %v1379, 127
        %v1414 = vpop.permute.xlu0 %1413
        %1415 = vrot.lane.b32.xlu0 %v1382, 127
        %v1416 = vpop.permute.xlu0 %1415
        %1417 = vrot.lane.b32.xlu0 %v1384, 127
        %v1418 = vpop.permute.xlu0 %1417
        %1419 = vrot.lane.b32.xlu0 %v1387, 127
        %v1420 = vpop.permute.xlu0 %1419
        %1421 = vrot.lane.b32.xlu0 %v1389, 127
        %v1422 = vpop.permute.xlu0 %1421
        %1423 = vrot.lane.b32.xlu0 %v1392, 127
        %v1424 = vpop.permute.xlu0 %1423
        %1425 = vrot.lane.b32.xlu0 %v1394, 127
        %v1426 = vpop.permute.xlu0 %1425
        %v1435 = vmax.f32 %v1403, %v1412
        %v1436 = vmax.f32 %v1404, %v1414
        %v1437 = vmax.f32 %v1405, %v1416
        %v1438 = vmax.f32 %v1406, %v1418
        %v1439 = vmax.f32 %v1407, %v1420
        %v1440 = vmax.f32 %v1408, %v1422
        %v1441 = vmax.f32 %v1409, %v1424
        %v1442 = vmax.f32 %v1410, %v1426
        %1443 = vrot.lane.b32.xlu0 %v1377, 126
        %v1444 = vpop.permute.xlu0 %1443
        %1445 = vrot.lane.b32.xlu0 %v1379, 126
        %v1446 = vpop.permute.xlu0 %1445
        %1447 = vrot.lane.b32.xlu0 %v1382, 126
        %v1448 = vpop.permute.xlu0 %1447
        %1449 = vrot.lane.b32.xlu0 %v1384, 126
        %v1450 = vpop.permute.xlu0 %1449
        %1451 = vrot.lane.b32.xlu0 %v1387, 126
        %v1452 = vpop.permute.xlu0 %1451
        %1453 = vrot.lane.b32.xlu0 %v1389, 126
        %v1454 = vpop.permute.xlu0 %1453
        %1455 = vrot.lane.b32.xlu0 %v1392, 126
        %v1456 = vpop.permute.xlu0 %1455
        %1457 = vrot.lane.b32.xlu0 %v1394, 126
        %v1458 = vpop.permute.xlu0 %1457
        %v1467 = vmax.f32 %v1435, %v1444
        %v1468 = vmax.f32 %v1436, %v1446
        %v1469 = vmax.f32 %v1437, %v1448
        %v1470 = vmax.f32 %v1438, %v1450
        %v1471 = vmax.f32 %v1439, %v1452
        %v1472 = vmax.f32 %v1440, %v1454
        %v1473 = vmax.f32 %v1441, %v1456
        %v1474 = vmax.f32 %v1442, %v1458
        %v1475 = vcombine.low %v1467, %v1471
        %v1476 = vcombine.high %v1467, %v1471
        %v1478 = vunpack.c.l.s4 1983009808
        %v1479 = vunpack.c.0.s8 %v1478
        %v1480 = vlaneseq
        %v1481 = vshrl.u32 %v1480, 7
        %v1482 = vsub.s32 %v1479, %v1481
        %v1483 = vrot.slane %v1475, %v1482
        %v1485 = vunpack.c.l.s4 1983009808
        %v1486 = vunpack.c.0.s8 %v1485
        %v1487 = vlaneseq
        %v1488 = vshrl.u32 %v1487, 7
        %v1489 = vsub.s32 %v1486, %v1488
        %v1490 = vrot.slane %v1476, %v1489
        %v1491 = vcombine.low %v1469, %v1473
        %v1492 = vcombine.high %v1469, %v1473
        %v1494 = vunpack.c.l.s4 1983009808
        %v1495 = vunpack.c.0.s8 %v1494
        %v1496 = vlaneseq
        %v1497 = vshrl.u32 %v1496, 7
        %v1498 = vsub.s32 %v1495, %v1497
        %v1499 = vrot.slane %v1491, %v1498
        %v1501 = vunpack.c.l.s4 1983009808
        %v1502 = vunpack.c.0.s8 %v1501
        %v1503 = vlaneseq
        %v1504 = vshrl.u32 %v1503, 7
        %v1505 = vsub.s32 %v1502, %v1504
        %v1506 = vrot.slane %v1492, %v1505
        %v1507 = vcombine.low %v1483, %v1499
        %v1508 = vcombine.high %v1483, %v1499
        %v1510 = vunpack.c.l.s4 1934713408
        %v1511 = vunpack.c.0.s8 %v1510
        %v1512 = vlaneseq
        %v1513 = vshrl.u32 %v1512, 7
        %v1514 = vsub.s32 %v1511, %v1513
        %v1515 = vrot.slane %v1507, %v1514
        %v1517 = vunpack.c.l.s4 1934713408
        %v1518 = vunpack.c.0.s8 %v1517
        %v1519 = vlaneseq
        %v1520 = vshrl.u32 %v1519, 7
        %v1521 = vsub.s32 %v1518, %v1520
        %v1522 = vrot.slane %v1508, %v1521
        %v1523 = vcombine.low %v1490, %v1506
        %v1524 = vcombine.high %v1490, %v1506
        %v1526 = vunpack.c.l.s4 1934713408
        %v1527 = vunpack.c.0.s8 %v1526
        %v1528 = vlaneseq
        %v1529 = vshrl.u32 %v1528, 7
        %v1530 = vsub.s32 %v1527, %v1529
        %v1531 = vrot.slane %v1523, %v1530
        %v1533 = vunpack.c.l.s4 1934713408
        %v1534 = vunpack.c.0.s8 %v1533
        %v1535 = vlaneseq
        %v1536 = vshrl.u32 %v1535, 7
        %v1537 = vsub.s32 %v1534, %v1536
        %v1538 = vrot.slane %v1524, %v1537
        %v1539 = vcombine.high %v1515, 0.0
        %v1540 = vcombine.high %v1522, 0.0
        %v1541 = vcombine.high %v1531, 0.0
        %v1542 = vcombine.high %v1538, 0.0
        %v1543 = vcombine.low %v1468, %v1472
        %v1544 = vcombine.high %v1468, %v1472
        %v1546 = vunpack.c.l.s4 1983009808
        %v1547 = vunpack.c.0.s8 %v1546
        %v1548 = vlaneseq
        %v1549 = vshrl.u32 %v1548, 7
        %v1550 = vsub.s32 %v1547, %v1549
        %v1551 = vrot.slane %v1543, %v1550
        %v1553 = vunpack.c.l.s4 1983009808
        %v1554 = vunpack.c.0.s8 %v1553
        %v1555 = vlaneseq
        %v1556 = vshrl.u32 %v1555, 7
        %v1557 = vsub.s32 %v1554, %v1556
        %v1558 = vrot.slane %v1544, %v1557
        %v1559 = vcombine.low %v1470, %v1474
        %v1560 = vcombine.high %v1470, %v1474
        %v1562 = vunpack.c.l.s4 1983009808
        %v1563 = vunpack.c.0.s8 %v1562
        %v1564 = vlaneseq
        %v1565 = vshrl.u32 %v1564, 7
        %v1566 = vsub.s32 %v1563, %v1565
        %v1567 = vrot.slane %v1559, %v1566
        %v1569 = vunpack.c.l.s4 1983009808
        %v1570 = vunpack.c.0.s8 %v1569
        %v1571 = vlaneseq
        %v1572 = vshrl.u32 %v1571, 7
        %v1573 = vsub.s32 %v1570, %v1572
        %v1574 = vrot.slane %v1560, %v1573
        %v1575 = vcombine.low %v1551, %v1567
        %v1576 = vcombine.high %v1551, %v1567
        %v1578 = vunpack.c.l.s4 1934713408
        %v1579 = vunpack.c.0.s8 %v1578
        %v1580 = vlaneseq
        %v1581 = vshrl.u32 %v1580, 7
        %v1582 = vsub.s32 %v1579, %v1581
        %v1583 = vrot.slane %v1575, %v1582
        %v1585 = vunpack.c.l.s4 1934713408
        %v1586 = vunpack.c.0.s8 %v1585
        %v1587 = vlaneseq
        %v1588 = vshrl.u32 %v1587, 7
        %v1589 = vsub.s32 %v1586, %v1588
        %v1590 = vrot.slane %v1576, %v1589
        %v1591 = vcombine.low %v1558, %v1574
        %v1592 = vcombine.high %v1558, %v1574
        %v1594 = vunpack.c.l.s4 1934713408
        %v1595 = vunpack.c.0.s8 %v1594
        %v1596 = vlaneseq
        %v1597 = vshrl.u32 %v1596, 7
        %v1598 = vsub.s32 %v1595, %v1597
        %v1599 = vrot.slane %v1591, %v1598
        %v1601 = vunpack.c.l.s4 1934713408
        %v1602 = vunpack.c.0.s8 %v1601
        %v1603 = vlaneseq
        %v1604 = vshrl.u32 %v1603, 7
        %v1605 = vsub.s32 %v1602, %v1604
        %v1606 = vrot.slane %v1592, %v1605
        %v1607 = vcombine.high %v1583, 0.0
        %v1608 = vcombine.high %v1590, 0.0
        %v1609 = vcombine.high %v1599, 0.0
        %v1610 = vcombine.high %v1606, 0.0
        %1612 = vrot.lane.b32.xlu0 %v1539, 16
        %v1613 = vpop.permute.xlu0 %1612
        %1616 = vrot.lane.b32.xlu0 %v1522, 32
        %v1617 = vpop.permute.xlu0 %1616
        %1620 = vrot.lane.b32.xlu0 %v1540, 48
        %v1621 = vpop.permute.xlu0 %1620
        %1624 = vrot.lane.b32.xlu0 %v1531, 64
        %v1625 = vpop.permute.xlu0 %1624
        %1628 = vrot.lane.b32.xlu0 %v1541, 80
        %v1629 = vpop.permute.xlu0 %1628
        %1632 = vrot.lane.b32.xlu0 %v1538, 96
        %v1633 = vpop.permute.xlu0 %1632
        %1636 = vrot.lane.b32.xlu0 %v1542, 112
        %v1637 = vpop.permute.xlu0 %1636
        %1640 = vrot.lane.b32.xlu0 %v1607, 16
        %v1641 = vpop.permute.xlu0 %1640
        %1644 = vrot.lane.b32.xlu0 %v1590, 32
        %v1645 = vpop.permute.xlu0 %1644
        %1648 = vrot.lane.b32.xlu0 %v1608, 48
        %v1649 = vpop.permute.xlu0 %1648
        %1652 = vrot.lane.b32.xlu0 %v1599, 64
        %v1653 = vpop.permute.xlu0 %1652
        %1656 = vrot.lane.b32.xlu0 %v1609, 80
        %v1657 = vpop.permute.xlu0 %1656
        %1660 = vrot.lane.b32.xlu0 %v1606, 96
        %v1661 = vpop.permute.xlu0 %1660
        %1664 = vrot.lane.b32.xlu0 %v1610, 112
        %v1665 = vpop.permute.xlu0 %1664
        %v1667 = vsel %vm632, %v1515, %v1613
        %v1668 = vsel %vm634, %v1667, %v1617
        %v1669 = vsel %vm636, %v1668, %v1621
        %v1670 = vsel %vm638, %v1669, %v1625
        %v1671 = vsel %vm640, %v1670, %v1629
        %v1672 = vsel %vm642, %v1671, %v1633
        %v1673 = vsel %vm644, %v1672, %v1637
        %v1674 = vsel %vm632, %v1583, %v1641
        %v1675 = vsel %vm634, %v1674, %v1645
        %v1676 = vsel %vm636, %v1675, %v1649
        %v1677 = vsel %vm638, %v1676, %v1653
        %v1678 = vsel %vm640, %v1677, %v1657
        %v1679 = vsel %vm642, %v1678, %v1661
        %v1680 = vsel %vm644, %v1679, %v1665
        %v1681 = vld [vmem:[#allocation7] sm:$0xff]
        %v1682 = vld [vmem:[#allocation9] sm:$0xff]
        %1684 = vset.pattern.permute.xlu0 0
        %1685 = vperm.xlu0 %1684, %v1682
        %v1686 = vpop.permute.xlu0 %1685
        %v1689 = vsel %vm667, %v1681, 0
        %v1692 = vsel %vm674, %v1673, 0
        %v1695 = vsel %vm674, %v1680, 0
        %1697 = vmatprep.subr.mxu0 %v1695
        %1698 = vmatpush1.msra.mxu0 %v1692
        %1699 = vmatprep.subr.mxu0 0.0
        %1700 = vmatpush1.msra.mxu0 0.0
        %1701 = vmatprep.subr.mxu0 0.0
        %1702 = vmatpush1.msra.mxu0 0.0
        %1703 = vmatprep.subr.mxu0 0.0
        %1704 = vmatpush1.msra.mxu0 0.0
        %1705 = vmatprep.subr.mxu0 0.0
        %1706 = vmatpush1.msra.mxu0 0.0
        %1707 = vmatprep.subr.mxu0 0.0
        %1708 = vmatpush1.msra.mxu0 0.0
        %1709 = vmatprep.subr.mxu0 0.0
        %1710 = vmatpush1.msra.mxu0 0.0
        %1711 = vmatprep.subr.mxu0 0.0
        %1712 = vmatpush1.msra.mxu0 0.0
        %1713 = vmatprep.subr.mxu0 0.0
        %1714 = vmatpush1.msra.mxu0 0.0
        %1715 = vmatprep.subr.mxu0 0.0
        %1716 = vmatpush1.msra.mxu0 0.0
        %1717 = vmatprep.subr.mxu0 0.0
        %1718 = vmatpush1.msra.mxu0 0.0
        %1719 = vmatprep.subr.mxu0 0.0
        %1720 = vmatpush1.msra.mxu0 0.0
        %1721 = vmatprep.subr.mxu0 0.0
        %1722 = vmatpush1.msra.mxu0 0.0
        %1723 = vmatprep.subr.mxu0 0.0
        %1724 = vmatpush1.msra.mxu0 0.0
        %1725 = vmatprep.subr.mxu0 0.0
        %1726 = vmatpush1.msra.mxu0 0.0
        %1727 = vmatprep.subr.mxu0 0.0
        %1728 = vmatpush1.msra.mxu0 0.0
        %1729 = vmatprep.subr.mxu0 0.0
        %1730 = vmatpush1.msra.mxu0 0.0
        %1731 = vmatprep.subr.mxu0 0.0
        %1732 = vmatpush1.msra.mxu0 0.0
        %1733 = vmatprep.subr.mxu0 0.0
        %1734 = vmatpush1.msra.mxu0 0.0
        %1735 = vmatprep.subr.mxu0 0.0
        %1736 = vmatpush1.msra.mxu0 0.0
        %1737 = vmatprep.subr.mxu0 0.0
        %1738 = vmatpush1.msra.mxu0 0.0
        %1739 = vmatprep.subr.mxu0 0.0
        %1740 = vmatpush1.msra.mxu0 0.0
        %1741 = vmatprep.subr.mxu0 0.0
        %1742 = vmatpush1.msra.mxu0 0.0
        %1743 = vmatprep.subr.mxu0 0.0
        %1744 = vmatpush1.msra.mxu0 0.0
        %1745 = vmatprep.subr.mxu0 0.0
        %1746 = vmatpush1.msra.mxu0 0.0
        %1747 = vmatprep.subr.mxu0 0.0
        %1748 = vmatpush1.msra.mxu0 0.0
        %1749 = vmatprep.subr.mxu0 0.0
        %1750 = vmatpush1.msra.mxu0 0.0
        %1751 = vmatprep.subr.mxu0 0.0
        %1752 = vmatpush1.msra.mxu0 0.0
        %1753 = vmatprep.subr.mxu0 0.0
        %1754 = vmatpush1.msra.mxu0 0.0
        %1755 = vmatprep.subr.mxu0 0.0
        %1756 = vmatpush1.msra.mxu0 0.0
        %1757 = vmatprep.subr.mxu0 0.0
        %1758 = vmatpush1.msra.mxu0 0.0
        %1759 = vmatprep.subr.mxu0 0.0
        %1760 = vmatpush1.msra.mxu0 0.0
        %1761 = vmatprep.mubr.f32.mxu0 0.0
        %1762 = vmatmul.mubr.f32.gmra.mrb[0].mxu0 %v1689
        %v1763 = vpop.f32.mrb[0].mxu0
        %v1764 = vadd.f32 %v1686, %v1763
        %v1765 = vpop.f32.mrb[0].mxu0
        %v1766 = vadd.f32 %v1686, %v1765
        %1767 = vdwg.mxu0
        %v1768 = vmax.f32 %v1764, 0.0
        %v1769 = vmax.f32 %v1766, 0.0
        %v1770 = vld [vmem:[#allocation10] sm:$0xff]
        %v1771 = vld [vmem:[#allocation12] sm:$0xff]
        %1780 = vrot.lane.b32.xlu0 %v870, 1
        %v1781 = vpop.permute.xlu0 %1780
        %1782 = vrot.lane.b32.xlu0 %v938, 1
        %v1783 = vpop.permute.xlu0 %1782
        %1784 = vrot.lane.b32.xlu0 %v871, 1
        %v1785 = vpop.permute.xlu0 %1784
        %1786 = vrot.lane.b32.xlu0 %v939, 1
        %v1787 = vpop.permute.xlu0 %1786
        %1788 = vrot.lane.b32.xlu0 %v872, 1
        %v1789 = vpop.permute.xlu0 %1788
        %1790 = vrot.lane.b32.xlu0 %v940, 1
        %v1791 = vpop.permute.xlu0 %1790
        %1792 = vrot.lane.b32.xlu0 %v873, 1
        %v1793 = vpop.permute.xlu0 %1792
        %1794 = vrot.lane.b32.xlu0 %v941, 1
        %v1795 = vpop.permute.xlu0 %1794
        %v1804 = vsel %vm1142, 0.0, %v1781
        %v1805 = vsel %vm1142, 0.0, %v1783
        %v1806 = vsel %vm1142, 0.0, %v1785
        %v1807 = vsel %vm1142, 0.0, %v1787
        %v1808 = vsel %vm1142, 0.0, %v1789
        %v1809 = vsel %vm1142, 0.0, %v1791
        %v1810 = vsel %vm1142, 0.0, %v1793
        %v1811 = vsel %vm1142, 0.0, %v1795
        %v1812 = vsel %vm1151, %v1804, 0.0
        %v1813 = vsel %vm1151, %v1805, 0.0
        %v1814 = vsel %vm1151, %v1806, 0.0
        %v1815 = vsel %vm1151, %v1807, 0.0
        %v1816 = vsel %vm1151, %v1808, 0.0
        %v1817 = vsel %vm1151, %v1809, 0.0
        %v1818 = vsel %vm1151, %v1810, 0.0
        %v1819 = vsel %vm1151, %v1811, 0.0
        %v1828 = vrot.slane %v1812, 7
        %v1829 = vrot.slane %v1813, 7
        %v1830 = vsel %vm1168, %v1828, %v1829
        %v1831 = vrot.slane %v1814, 7
        %v1832 = vrot.slane %v1815, 7
        %v1833 = vsel %vm1168, %v1831, %v1832
        %v1834 = vrot.slane %v1816, 7
        %v1835 = vrot.slane %v1817, 7
        %v1836 = vsel %vm1168, %v1834, %v1835
        %v1837 = vrot.slane %v1818, 7
        %v1838 = vrot.slane %v1819, 7
        %v1839 = vsel %vm1168, %v1837, %v1838
        %v1852 = vsel %vm1168, 0.0, %v1828
        %v1853 = vsel %vm1168, 0.0, %v1831
        %v1854 = vsel %vm1168, 0.0, %v1834
        %v1855 = vsel %vm1168, 0.0, %v1837
        %v1856 = vsel %vm1168, %v1829, 0.0
        %v1857 = vsel %vm1168, %v1832, 0.0
        %v1858 = vsel %vm1168, %v1835, 0.0
        %v1859 = vsel %vm1168, %v1838, 0.0
        %1864 = vrot.lane.b32.xlu0 %v1852, 127
        %v1865 = vpop.permute.xlu0 %1864
        %1866 = vrot.lane.b32.xlu0 %v1830, 127
        %v1867 = vpop.permute.xlu0 %1866
        %1868 = vrot.lane.b32.xlu0 %v1853, 127
        %v1869 = vpop.permute.xlu0 %1868
        %1870 = vrot.lane.b32.xlu0 %v1833, 127
        %v1871 = vpop.permute.xlu0 %1870
        %1872 = vrot.lane.b32.xlu0 %v1854, 127
        %v1873 = vpop.permute.xlu0 %1872
        %1874 = vrot.lane.b32.xlu0 %v1836, 127
        %v1875 = vpop.permute.xlu0 %1874
        %1876 = vrot.lane.b32.xlu0 %v1855, 127
        %v1877 = vpop.permute.xlu0 %1876
        %1878 = vrot.lane.b32.xlu0 %v1839, 127
        %v1879 = vpop.permute.xlu0 %1878
        %1888 = vrot.lane.b32.xlu0 %v1852, 126
        %v1889 = vpop.permute.xlu0 %1888
        %1890 = vrot.lane.b32.xlu0 %v1830, 126
        %v1891 = vpop.permute.xlu0 %1890
        %1892 = vrot.lane.b32.xlu0 %v1853, 126
        %v1893 = vpop.permute.xlu0 %1892
        %1894 = vrot.lane.b32.xlu0 %v1833, 126
        %v1895 = vpop.permute.xlu0 %1894
        %1896 = vrot.lane.b32.xlu0 %v1854, 126
        %v1897 = vpop.permute.xlu0 %1896
        %1898 = vrot.lane.b32.xlu0 %v1836, 126
        %v1899 = vpop.permute.xlu0 %1898
        %1900 = vrot.lane.b32.xlu0 %v1855, 126
        %v1901 = vpop.permute.xlu0 %1900
        %1902 = vrot.lane.b32.xlu0 %v1839, 126
        %v1903 = vpop.permute.xlu0 %1902
        %v1916 = vrot.slane %v1852, 1
        %v1917 = vrot.slane %v1830, 1
        %v1918 = vsel %vm1273, %v1916, %v1917
        %v1919 = vrot.slane %v1856, 1
        %v1920 = vsel %vm1273, %v1917, %v1919
        %v1921 = vrot.slane %v1853, 1
        %v1922 = vrot.slane %v1833, 1
        %v1923 = vsel %vm1273, %v1921, %v1922
        %v1924 = vrot.slane %v1857, 1
        %v1925 = vsel %vm1273, %v1922, %v1924
        %v1926 = vrot.slane %v1854, 1
        %v1927 = vrot.slane %v1836, 1
        %v1928 = vsel %vm1273, %v1926, %v1927
        %v1929 = vrot.slane %v1858, 1
        %v1930 = vsel %vm1273, %v1927, %v1929
        %v1931 = vrot.slane %v1855, 1
        %v1932 = vrot.slane %v1839, 1
        %v1933 = vsel %vm1273, %v1931, %v1932
        %v1934 = vrot.slane %v1859, 1
        %v1935 = vsel %vm1273, %v1932, %v1934
        %1944 = vrot.lane.b32.xlu0 %v1918, 127
        %v1945 = vpop.permute.xlu0 %1944
        %1946 = vrot.lane.b32.xlu0 %v1920, 127
        %v1947 = vpop.permute.xlu0 %1946
        %1948 = vrot.lane.b32.xlu0 %v1923, 127
        %v1949 = vpop.permute.xlu0 %1948
        %1950 = vrot.lane.b32.xlu0 %v1925, 127
        %v1951 = vpop.permute.xlu0 %1950
        %1952 = vrot.lane.b32.xlu0 %v1928, 127
        %v1953 = vpop.permute.xlu0 %1952
        %1954 = vrot.lane.b32.xlu0 %v1930, 127
        %v1955 = vpop.permute.xlu0 %1954
        %1956 = vrot.lane.b32.xlu0 %v1933, 127
        %v1957 = vpop.permute.xlu0 %1956
        %1958 = vrot.lane.b32.xlu0 %v1935, 127
        %v1959 = vpop.permute.xlu0 %1958
        %1968 = vrot.lane.b32.xlu0 %v1918, 126
        %v1969 = vpop.permute.xlu0 %1968
        %1970 = vrot.lane.b32.xlu0 %v1920, 126
        %v1971 = vpop.permute.xlu0 %1970
        %1972 = vrot.lane.b32.xlu0 %v1923, 126
        %v1973 = vpop.permute.xlu0 %1972
        %1974 = vrot.lane.b32.xlu0 %v1925, 126
        %v1975 = vpop.permute.xlu0 %1974
        %1976 = vrot.lane.b32.xlu0 %v1928, 126
        %v1977 = vpop.permute.xlu0 %1976
        %1978 = vrot.lane.b32.xlu0 %v1930, 126
        %v1979 = vpop.permute.xlu0 %1978
        %1980 = vrot.lane.b32.xlu0 %v1933, 126
        %v1981 = vpop.permute.xlu0 %1980
        %1982 = vrot.lane.b32.xlu0 %v1935, 126
        %v1983 = vpop.permute.xlu0 %1982
        %v1992 = vrot.slane %v1852, 2
        %v1993 = vrot.slane %v1830, 2
        %v1994 = vsel %vm1374, %v1992, %v1993
        %v1995 = vrot.slane %v1856, 2
        %v1996 = vsel %vm1374, %v1993, %v1995
        %v1997 = vrot.slane %v1853, 2
        %v1998 = vrot.slane %v1833, 2
        %v1999 = vsel %vm1374, %v1997, %v1998
        %v2000 = vrot.slane %v1857, 2
        %v2001 = vsel %vm1374, %v1998, %v2000
        %v2002 = vrot.slane %v1854, 2
        %v2003 = vrot.slane %v1836, 2
        %v2004 = vsel %vm1374, %v2002, %v2003
        %v2005 = vrot.slane %v1858, 2
        %v2006 = vsel %vm1374, %v2003, %v2005
        %v2007 = vrot.slane %v1855, 2
        %v2008 = vrot.slane %v1839, 2
        %v2009 = vsel %vm1374, %v2007, %v2008
        %v2010 = vrot.slane %v1859, 2
        %v2011 = vsel %vm1374, %v2008, %v2010
        %2020 = vrot.lane.b32.xlu0 %v1994, 127
        %v2021 = vpop.permute.xlu0 %2020
        %2022 = vrot.lane.b32.xlu0 %v1996, 127
        %v2023 = vpop.permute.xlu0 %2022
        %2024 = vrot.lane.b32.xlu0 %v1999, 127
        %v2025 = vpop.permute.xlu0 %2024
        %2026 = vrot.lane.b32.xlu0 %v2001, 127
        %v2027 = vpop.permute.xlu0 %2026
        %2028 = vrot.lane.b32.xlu0 %v2004, 127
        %v2029 = vpop.permute.xlu0 %2028
        %2030 = vrot.lane.b32.xlu0 %v2006, 127
        %v2031 = vpop.permute.xlu0 %2030
        %2032 = vrot.lane.b32.xlu0 %v2009, 127
        %v2033 = vpop.permute.xlu0 %2032
        %2034 = vrot.lane.b32.xlu0 %v2011, 127
        %v2035 = vpop.permute.xlu0 %2034
        %2044 = vrot.lane.b32.xlu0 %v1994, 126
        %v2045 = vpop.permute.xlu0 %2044
        %2046 = vrot.lane.b32.xlu0 %v1996, 126
        %v2047 = vpop.permute.xlu0 %2046
        %2048 = vrot.lane.b32.xlu0 %v1999, 126
        %v2049 = vpop.permute.xlu0 %2048
        %2050 = vrot.lane.b32.xlu0 %v2001, 126
        %v2051 = vpop.permute.xlu0 %2050
        %2052 = vrot.lane.b32.xlu0 %v2004, 126
        %v2053 = vpop.permute.xlu0 %2052
        %2054 = vrot.lane.b32.xlu0 %v2006, 126
        %v2055 = vpop.permute.xlu0 %2054
        %2056 = vrot.lane.b32.xlu0 %v2009, 126
        %v2057 = vpop.permute.xlu0 %2056
        %2058 = vrot.lane.b32.xlu0 %v2011, 126
        %v2059 = vpop.permute.xlu0 %2058
        %v2068 = vcombine.low %v1852, %v1854
        %v2069 = vcombine.high %v1852, %v1854
        %v2071 = vunpack.c.l.s4 1983009808
        %v2072 = vunpack.c.0.s8 %v2071
        %v2073 = vlaneseq
        %v2074 = vshrl.u32 %v2073, 7
        %v2075 = vsub.s32 %v2072, %v2074
        %v2076 = vrot.slane %v2068, %v2075
        %v2078 = vunpack.c.l.s4 1983009808
        %v2079 = vunpack.c.0.s8 %v2078
        %v2080 = vlaneseq
        %v2081 = vshrl.u32 %v2080, 7
        %v2082 = vsub.s32 %v2079, %v2081
        %v2083 = vrot.slane %v2069, %v2082
        %v2084 = vcombine.low %v1853, %v1855
        %v2085 = vcombine.high %v1853, %v1855
        %v2087 = vunpack.c.l.s4 1983009808
        %v2088 = vunpack.c.0.s8 %v2087
        %v2089 = vlaneseq
        %v2090 = vshrl.u32 %v2089, 7
        %v2091 = vsub.s32 %v2088, %v2090
        %v2092 = vrot.slane %v2084, %v2091
        %v2094 = vunpack.c.l.s4 1983009808
        %v2095 = vunpack.c.0.s8 %v2094
        %v2096 = vlaneseq
        %v2097 = vshrl.u32 %v2096, 7
        %v2098 = vsub.s32 %v2095, %v2097
        %v2099 = vrot.slane %v2085, %v2098
        %v2100 = vcombine.low %v1865, %v1873
        %v2101 = vcombine.high %v1865, %v1873
        %v2103 = vunpack.c.l.s4 1983009808
        %v2104 = vunpack.c.0.s8 %v2103
        %v2105 = vlaneseq
        %v2106 = vshrl.u32 %v2105, 7
        %v2107 = vsub.s32 %v2104, %v2106
        %v2108 = vrot.slane %v2100, %v2107
        %v2110 = vunpack.c.l.s4 1983009808
        %v2111 = vunpack.c.0.s8 %v2110
        %v2112 = vlaneseq
        %v2113 = vshrl.u32 %v2112, 7
        %v2114 = vsub.s32 %v2111, %v2113
        %v2115 = vrot.slane %v2101, %v2114
        %v2116 = vcombine.low %v1869, %v1877
        %v2117 = vcombine.high %v1869, %v1877
        %v2119 = vunpack.c.l.s4 1983009808
        %v2120 = vunpack.c.0.s8 %v2119
        %v2121 = vlaneseq
        %v2122 = vshrl.u32 %v2121, 7
        %v2123 = vsub.s32 %v2120, %v2122
        %v2124 = vrot.slane %v2116, %v2123
        %v2126 = vunpack.c.l.s4 1983009808
        %v2127 = vunpack.c.0.s8 %v2126
        %v2128 = vlaneseq
        %v2129 = vshrl.u32 %v2128, 7
        %v2130 = vsub.s32 %v2127, %v2129
        %v2131 = vrot.slane %v2117, %v2130
        %v2132 = vcombine.low %v2076, %v2092
        %v2133 = vcombine.high %v2076, %v2092
        %v2135 = vunpack.c.l.s4 1934713408
        %v2136 = vunpack.c.0.s8 %v2135
        %v2137 = vlaneseq
        %v2138 = vshrl.u32 %v2137, 7
        %v2139 = vsub.s32 %v2136, %v2138
        %v2140 = vrot.slane %v2132, %v2139
        %v2142 = vunpack.c.l.s4 1934713408
        %v2143 = vunpack.c.0.s8 %v2142
        %v2144 = vlaneseq
        %v2145 = vshrl.u32 %v2144, 7
        %v2146 = vsub.s32 %v2143, %v2145
        %v2147 = vrot.slane %v2133, %v2146
        %v2148 = vcombine.low %v2083, %v2099
        %v2149 = vcombine.high %v2083, %v2099
        %v2151 = vunpack.c.l.s4 1934713408
        %v2152 = vunpack.c.0.s8 %v2151
        %v2153 = vlaneseq
        %v2154 = vshrl.u32 %v2153, 7
        %v2155 = vsub.s32 %v2152, %v2154
        %v2156 = vrot.slane %v2148, %v2155
        %v2158 = vunpack.c.l.s4 1934713408
        %v2159 = vunpack.c.0.s8 %v2158
        %v2160 = vlaneseq
        %v2161 = vshrl.u32 %v2160, 7
        %v2162 = vsub.s32 %v2159, %v2161
        %v2163 = vrot.slane %v2149, %v2162
        %v2164 = vcombine.low %v2108, %v2124
        %v2165 = vcombine.high %v2108, %v2124
        %v2167 = vunpack.c.l.s4 1934713408
        %v2168 = vunpack.c.0.s8 %v2167
        %v2169 = vlaneseq
        %v2170 = vshrl.u32 %v2169, 7
        %v2171 = vsub.s32 %v2168, %v2170
        %v2172 = vrot.slane %v2164, %v2171
        %v2174 = vunpack.c.l.s4 1934713408
        %v2175 = vunpack.c.0.s8 %v2174
        %v2176 = vlaneseq
        %v2177 = vshrl.u32 %v2176, 7
        %v2178 = vsub.s32 %v2175, %v2177
        %v2179 = vrot.slane %v2165, %v2178
        %v2180 = vcombine.low %v2115, %v2131
        %v2181 = vcombine.high %v2115, %v2131
        %v2183 = vunpack.c.l.s4 1934713408
        %v2184 = vunpack.c.0.s8 %v2183
        %v2185 = vlaneseq
        %v2186 = vshrl.u32 %v2185, 7
        %v2187 = vsub.s32 %v2184, %v2186
        %v2188 = vrot.slane %v2180, %v2187
        %v2190 = vunpack.c.l.s4 1934713408
        %v2191 = vunpack.c.0.s8 %v2190
        %v2192 = vlaneseq
        %v2193 = vshrl.u32 %v2192, 7
        %v2194 = vsub.s32 %v2191, %v2193
        %v2195 = vrot.slane %v2181, %v2194
        %v2196 = vcombine.low %v2140, %v2172
        %v2197 = vcombine.high %v2140, %v2172
        %v2198 = vcombine.low %v2147, %v2179
        %v2199 = vcombine.high %v2147, %v2179
        %v2200 = vcombine.low %v2156, %v2188
        %v2201 = vcombine.high %v2156, %v2188
        %v2202 = vcombine.low %v2163, %v2195
        %v2203 = vcombine.high %v2163, %v2195
        %v2204 = vcombine.low %v1889, %v1897
        %v2205 = vcombine.high %v1889, %v1897
        %v2207 = vunpack.c.l.s4 1983009808
        %v2208 = vunpack.c.0.s8 %v2207
        %v2209 = vlaneseq
        %v2210 = vshrl.u32 %v2209, 7
        %v2211 = vsub.s32 %v2208, %v2210
        %v2212 = vrot.slane %v2204, %v2211
        %v2214 = vunpack.c.l.s4 1983009808
        %v2215 = vunpack.c.0.s8 %v2214
        %v2216 = vlaneseq
        %v2217 = vshrl.u32 %v2216, 7
        %v2218 = vsub.s32 %v2215, %v2217
        %v2219 = vrot.slane %v2205, %v2218
        %v2220 = vcombine.low %v1893, %v1901
        %v2221 = vcombine.high %v1893, %v1901
        %v2223 = vunpack.c.l.s4 1983009808
        %v2224 = vunpack.c.0.s8 %v2223
        %v2225 = vlaneseq
        %v2226 = vshrl.u32 %v2225, 7
        %v2227 = vsub.s32 %v2224, %v2226
        %v2228 = vrot.slane %v2220, %v2227
        %v2230 = vunpack.c.l.s4 1983009808
        %v2231 = vunpack.c.0.s8 %v2230
        %v2232 = vlaneseq
        %v2233 = vshrl.u32 %v2232, 7
        %v2234 = vsub.s32 %v2231, %v2233
        %v2235 = vrot.slane %v2221, %v2234
        %v2236 = vcombine.low %v1918, %v1928
        %v2237 = vcombine.high %v1918, %v1928
        %v2239 = vunpack.c.l.s4 1983009808
        %v2240 = vunpack.c.0.s8 %v2239
        %v2241 = vlaneseq
        %v2242 = vshrl.u32 %v2241, 7
        %v2243 = vsub.s32 %v2240, %v2242
        %v2244 = vrot.slane %v2236, %v2243
        %v2246 = vunpack.c.l.s4 1983009808
        %v2247 = vunpack.c.0.s8 %v2246
        %v2248 = vlaneseq
        %v2249 = vshrl.u32 %v2248, 7
        %v2250 = vsub.s32 %v2247, %v2249
        %v2251 = vrot.slane %v2237, %v2250
        %v2252 = vcombine.low %v1923, %v1933
        %v2253 = vcombine.high %v1923, %v1933
        %v2255 = vunpack.c.l.s4 1983009808
        %v2256 = vunpack.c.0.s8 %v2255
        %v2257 = vlaneseq
        %v2258 = vshrl.u32 %v2257, 7
        %v2259 = vsub.s32 %v2256, %v2258
        %v2260 = vrot.slane %v2252, %v2259
        %v2262 = vunpack.c.l.s4 1983009808
        %v2263 = vunpack.c.0.s8 %v2262
        %v2264 = vlaneseq
        %v2265 = vshrl.u32 %v2264, 7
        %v2266 = vsub.s32 %v2263, %v2265
        %v2267 = vrot.slane %v2253, %v2266
        %v2268 = vcombine.low %v2212, %v2228
        %v2269 = vcombine.high %v2212, %v2228
        %v2271 = vunpack.c.l.s4 1934713408
        %v2272 = vunpack.c.0.s8 %v2271
        %v2273 = vlaneseq
        %v2274 = vshrl.u32 %v2273, 7
        %v2275 = vsub.s32 %v2272, %v2274
        %v2276 = vrot.slane %v2268, %v2275
        %v2278 = vunpack.c.l.s4 1934713408
        %v2279 = vunpack.c.0.s8 %v2278
        %v2280 = vlaneseq
        %v2281 = vshrl.u32 %v2280, 7
        %v2282 = vsub.s32 %v2279, %v2281
        %v2283 = vrot.slane %v2269, %v2282
        %v2284 = vcombine.low %v2219, %v2235
        %v2285 = vcombine.high %v2219, %v2235
        %v2287 = vunpack.c.l.s4 1934713408
        %v2288 = vunpack.c.0.s8 %v2287
        %v2289 = vlaneseq
        %v2290 = vshrl.u32 %v2289, 7
        %v2291 = vsub.s32 %v2288, %v2290
        %v2292 = vrot.slane %v2284, %v2291
        %v2294 = vunpack.c.l.s4 1934713408
        %v2295 = vunpack.c.0.s8 %v2294
        %v2296 = vlaneseq
        %v2297 = vshrl.u32 %v2296, 7
        %v2298 = vsub.s32 %v2295, %v2297
        %v2299 = vrot.slane %v2285, %v2298
        %v2300 = vcombine.low %v2244, %v2260
        %v2301 = vcombine.high %v2244, %v2260
        %v2303 = vunpack.c.l.s4 1934713408
        %v2304 = vunpack.c.0.s8 %v2303
        %v2305 = vlaneseq
        %v2306 = vshrl.u32 %v2305, 7
        %v2307 = vsub.s32 %v2304, %v2306
        %v2308 = vrot.slane %v2300, %v2307
        %v2310 = vunpack.c.l.s4 1934713408
        %v2311 = vunpack.c.0.s8 %v2310
        %v2312 = vlaneseq
        %v2313 = vshrl.u32 %v2312, 7
        %v2314 = vsub.s32 %v2311, %v2313
        %v2315 = vrot.slane %v2301, %v2314
        %v2316 = vcombine.low %v2251, %v2267
        %v2317 = vcombine.high %v2251, %v2267
        %v2319 = vunpack.c.l.s4 1934713408
        %v2320 = vunpack.c.0.s8 %v2319
        %v2321 = vlaneseq
        %v2322 = vshrl.u32 %v2321, 7
        %v2323 = vsub.s32 %v2320, %v2322
        %v2324 = vrot.slane %v2316, %v2323
        %v2326 = vunpack.c.l.s4 1934713408
        %v2327 = vunpack.c.0.s8 %v2326
        %v2328 = vlaneseq
        %v2329 = vshrl.u32 %v2328, 7
        %v2330 = vsub.s32 %v2327, %v2329
        %v2331 = vrot.slane %v2317, %v2330
        %v2332 = vcombine.low %v2276, %v2308
        %v2333 = vcombine.high %v2276, %v2308
        %v2334 = vcombine.low %v2283, %v2315
        %v2335 = vcombine.high %v2283, %v2315
        %v2336 = vcombine.low %v2292, %v2324
        %v2337 = vcombine.high %v2292, %v2324
        %v2338 = vcombine.low %v2299, %v2331
        %v2339 = vcombine.high %v2299, %v2331
        %v2340 = vcombine.low %v1945, %v1953
        %v2341 = vcombine.high %v1945, %v1953
        %v2343 = vunpack.c.l.s4 1983009808
        %v2344 = vunpack.c.0.s8 %v2343
        %v2345 = vlaneseq
        %v2346 = vshrl.u32 %v2345, 7
        %v2347 = vsub.s32 %v2344, %v2346
        %v2348 = vrot.slane %v2340, %v2347
        %v2350 = vunpack.c.l.s4 1983009808
        %v2351 = vunpack.c.0.s8 %v2350
        %v2352 = vlaneseq
        %v2353 = vshrl.u32 %v2352, 7
        %v2354 = vsub.s32 %v2351, %v2353
        %v2355 = vrot.slane %v2341, %v2354
        %v2356 = vcombine.low %v1949, %v1957
        %v2357 = vcombine.high %v1949, %v1957
        %v2359 = vunpack.c.l.s4 1983009808
        %v2360 = vunpack.c.0.s8 %v2359
        %v2361 = vlaneseq
        %v2362 = vshrl.u32 %v2361, 7
        %v2363 = vsub.s32 %v2360, %v2362
        %v2364 = vrot.slane %v2356, %v2363
        %v2366 = vunpack.c.l.s4 1983009808
        %v2367 = vunpack.c.0.s8 %v2366
        %v2368 = vlaneseq
        %v2369 = vshrl.u32 %v2368, 7
        %v2370 = vsub.s32 %v2367, %v2369
        %v2371 = vrot.slane %v2357, %v2370
        %v2372 = vcombine.low %v1969, %v1977
        %v2373 = vcombine.high %v1969, %v1977
        %v2375 = vunpack.c.l.s4 1983009808
        %v2376 = vunpack.c.0.s8 %v2375
        %v2377 = vlaneseq
        %v2378 = vshrl.u32 %v2377, 7
        %v2379 = vsub.s32 %v2376, %v2378
        %v2380 = vrot.slane %v2372, %v2379
        %v2382 = vunpack.c.l.s4 1983009808
        %v2383 = vunpack.c.0.s8 %v2382
        %v2384 = vlaneseq
        %v2385 = vshrl.u32 %v2384, 7
        %v2386 = vsub.s32 %v2383, %v2385
        %v2387 = vrot.slane %v2373, %v2386
        %v2388 = vcombine.low %v1973, %v1981
        %v2389 = vcombine.high %v1973, %v1981
        %v2391 = vunpack.c.l.s4 1983009808
        %v2392 = vunpack.c.0.s8 %v2391
        %v2393 = vlaneseq
        %v2394 = vshrl.u32 %v2393, 7
        %v2395 = vsub.s32 %v2392, %v2394
        %v2396 = vrot.slane %v2388, %v2395
        %v2398 = vunpack.c.l.s4 1983009808
        %v2399 = vunpack.c.0.s8 %v2398
        %v2400 = vlaneseq
        %v2401 = vshrl.u32 %v2400, 7
        %v2402 = vsub.s32 %v2399, %v2401
        %v2403 = vrot.slane %v2389, %v2402
        %v2404 = vcombine.low %v2348, %v2364
        %v2405 = vcombine.high %v2348, %v2364
        %v2407 = vunpack.c.l.s4 1934713408
        %v2408 = vunpack.c.0.s8 %v2407
        %v2409 = vlaneseq
        %v2410 = vshrl.u32 %v2409, 7
        %v2411 = vsub.s32 %v2408, %v2410
        %v2412 = vrot.slane %v2404, %v2411
        %v2414 = vunpack.c.l.s4 1934713408
        %v2415 = vunpack.c.0.s8 %v2414
        %v2416 = vlaneseq
        %v2417 = vshrl.u32 %v2416, 7
        %v2418 = vsub.s32 %v2415, %v2417
        %v2419 = vrot.slane %v2405, %v2418
        %v2420 = vcombine.low %v2355, %v2371
        %v2421 = vcombine.high %v2355, %v2371
        %v2423 = vunpack.c.l.s4 1934713408
        %v2424 = vunpack.c.0.s8 %v2423
        %v2425 = vlaneseq
        %v2426 = vshrl.u32 %v2425, 7
        %v2427 = vsub.s32 %v2424, %v2426
        %v2428 = vrot.slane %v2420, %v2427
        %v2430 = vunpack.c.l.s4 1934713408
        %v2431 = vunpack.c.0.s8 %v2430
        %v2432 = vlaneseq
        %v2433 = vshrl.u32 %v2432, 7
        %v2434 = vsub.s32 %v2431, %v2433
        %v2435 = vrot.slane %v2421, %v2434
        %v2436 = vcombine.low %v2380, %v2396
        %v2437 = vcombine.high %v2380, %v2396
        %v2439 = vunpack.c.l.s4 1934713408
        %v2440 = vunpack.c.0.s8 %v2439
        %v2441 = vlaneseq
        %v2442 = vshrl.u32 %v2441, 7
        %v2443 = vsub.s32 %v2440, %v2442
        %v2444 = vrot.slane %v2436, %v2443
        %v2446 = vunpack.c.l.s4 1934713408
        %v2447 = vunpack.c.0.s8 %v2446
        %v2448 = vlaneseq
        %v2449 = vshrl.u32 %v2448, 7
        %v2450 = vsub.s32 %v2447, %v2449
        %v2451 = vrot.slane %v2437, %v2450
        %v2452 = vcombine.low %v2387, %v2403
        %v2453 = vcombine.high %v2387, %v2403
        %v2455 = vunpack.c.l.s4 1934713408
        %v2456 = vunpack.c.0.s8 %v2455
        %v2457 = vlaneseq
        %v2458 = vshrl.u32 %v2457, 7
        %v2459 = vsub.s32 %v2456, %v2458
        %v2460 = vrot.slane %v2452, %v2459
        %v2462 = vunpack.c.l.s4 1934713408
        %v2463 = vunpack.c.0.s8 %v2462
        %v2464 = vlaneseq
        %v2465 = vshrl.u32 %v2464, 7
        %v2466 = vsub.s32 %v2463, %v2465
        %v2467 = vrot.slane %v2453, %v2466
        %v2468 = vcombine.low %v2412, %v2444
        %v2469 = vcombine.high %v2412, %v2444
        %v2470 = vcombine.low %v2419, %v2451
        %v2471 = vcombine.high %v2419, %v2451
        %v2472 = vcombine.low %v2428, %v2460
        %v2473 = vcombine.high %v2428, %v2460
        %v2474 = vcombine.low %v2435, %v2467
        %v2475 = vcombine.high %v2435, %v2467
        %v2476 = vcombine.low %v1994, %v2004
        %v2477 = vcombine.high %v1994, %v2004
        %v2479 = vunpack.c.l.s4 1983009808
        %v2480 = vunpack.c.0.s8 %v2479
        %v2481 = vlaneseq
        %v2482 = vshrl.u32 %v2481, 7
        %v2483 = vsub.s32 %v2480, %v2482
        %v2484 = vrot.slane %v2476, %v2483
        %v2486 = vunpack.c.l.s4 1983009808
        %v2487 = vunpack.c.0.s8 %v2486
        %v2488 = vlaneseq
        %v2489 = vshrl.u32 %v2488, 7
        %v2490 = vsub.s32 %v2487, %v2489
        %v2491 = vrot.slane %v2477, %v2490
        %v2492 = vcombine.low %v1999, %v2009
        %v2493 = vcombine.high %v1999, %v2009
        %v2495 = vunpack.c.l.s4 1983009808
        %v2496 = vunpack.c.0.s8 %v2495
        %v2497 = vlaneseq
        %v2498 = vshrl.u32 %v2497, 7
        %v2499 = vsub.s32 %v2496, %v2498
        %v2500 = vrot.slane %v2492, %v2499
        %v2502 = vunpack.c.l.s4 1983009808
        %v2503 = vunpack.c.0.s8 %v2502
        %v2504 = vlaneseq
        %v2505 = vshrl.u32 %v2504, 7
        %v2506 = vsub.s32 %v2503, %v2505
        %v2507 = vrot.slane %v2493, %v2506
        %v2508 = vcombine.low %v2021, %v2029
        %v2509 = vcombine.high %v2021, %v2029
        %v2511 = vunpack.c.l.s4 1983009808
        %v2512 = vunpack.c.0.s8 %v2511
        %v2513 = vlaneseq
        %v2514 = vshrl.u32 %v2513, 7
        %v2515 = vsub.s32 %v2512, %v2514
        %v2516 = vrot.slane %v2508, %v2515
        %v2518 = vunpack.c.l.s4 1983009808
        %v2519 = vunpack.c.0.s8 %v2518
        %v2520 = vlaneseq
        %v2521 = vshrl.u32 %v2520, 7
        %v2522 = vsub.s32 %v2519, %v2521
        %v2523 = vrot.slane %v2509, %v2522
        %v2524 = vcombine.low %v2025, %v2033
        %v2525 = vcombine.high %v2025, %v2033
        %v2527 = vunpack.c.l.s4 1983009808
        %v2528 = vunpack.c.0.s8 %v2527
        %v2529 = vlaneseq
        %v2530 = vshrl.u32 %v2529, 7
        %v2531 = vsub.s32 %v2528, %v2530
        %v2532 = vrot.slane %v2524, %v2531
        %v2534 = vunpack.c.l.s4 1983009808
        %v2535 = vunpack.c.0.s8 %v2534
        %v2536 = vlaneseq
        %v2537 = vshrl.u32 %v2536, 7
        %v2538 = vsub.s32 %v2535, %v2537
        %v2539 = vrot.slane %v2525, %v2538
        %v2540 = vcombine.low %v2484, %v2500
        %v2541 = vcombine.high %v2484, %v2500
        %v2543 = vunpack.c.l.s4 1934713408
        %v2544 = vunpack.c.0.s8 %v2543
        %v2545 = vlaneseq
        %v2546 = vshrl.u32 %v2545, 7
        %v2547 = vsub.s32 %v2544, %v2546
        %v2548 = vrot.slane %v2540, %v2547
        %v2550 = vunpack.c.l.s4 1934713408
        %v2551 = vunpack.c.0.s8 %v2550
        %v2552 = vlaneseq
        %v2553 = vshrl.u32 %v2552, 7
        %v2554 = vsub.s32 %v2551, %v2553
        %v2555 = vrot.slane %v2541, %v2554
        %v2556 = vcombine.low %v2491, %v2507
        %v2557 = vcombine.high %v2491, %v2507
        %v2559 = vunpack.c.l.s4 1934713408
        %v2560 = vunpack.c.0.s8 %v2559
        %v2561 = vlaneseq
        %v2562 = vshrl.u32 %v2561, 7
        %v2563 = vsub.s32 %v2560, %v2562
        %v2564 = vrot.slane %v2556, %v2563
        %v2566 = vunpack.c.l.s4 1934713408
        %v2567 = vunpack.c.0.s8 %v2566
        %v2568 = vlaneseq
        %v2569 = vshrl.u32 %v2568, 7
        %v2570 = vsub.s32 %v2567, %v2569
        %v2571 = vrot.slane %v2557, %v2570
        %v2572 = vcombine.low %v2516, %v2532
        %v2573 = vcombine.high %v2516, %v2532
        %v2575 = vunpack.c.l.s4 1934713408
        %v2576 = vunpack.c.0.s8 %v2575
        %v2577 = vlaneseq
        %v2578 = vshrl.u32 %v2577, 7
        %v2579 = vsub.s32 %v2576, %v2578
        %v2580 = vrot.slane %v2572, %v2579
        %v2582 = vunpack.c.l.s4 1934713408
        %v2583 = vunpack.c.0.s8 %v2582
        %v2584 = vlaneseq
        %v2585 = vshrl.u32 %v2584, 7
        %v2586 = vsub.s32 %v2583, %v2585
        %v2587 = vrot.slane %v2573, %v2586
        %v2588 = vcombine.low %v2523, %v2539
        %v2589 = vcombine.high %v2523, %v2539
        %v2591 = vunpack.c.l.s4 1934713408
        %v2592 = vunpack.c.0.s8 %v2591
        %v2593 = vlaneseq
        %v2594 = vshrl.u32 %v2593, 7
        %v2595 = vsub.s32 %v2592, %v2594
        %v2596 = vrot.slane %v2588, %v2595
        %v2598 = vunpack.c.l.s4 1934713408
        %v2599 = vunpack.c.0.s8 %v2598
        %v2600 = vlaneseq
        %v2601 = vshrl.u32 %v2600, 7
        %v2602 = vsub.s32 %v2599, %v2601
        %v2603 = vrot.slane %v2589, %v2602
        %v2604 = vcombine.low %v2548, %v2580
        %v2605 = vcombine.high %v2548, %v2580
        %v2606 = vcombine.low %v2555, %v2587
        %v2607 = vcombine.high %v2555, %v2587
        %v2608 = vcombine.low %v2564, %v2596
        %v2609 = vcombine.high %v2564, %v2596
        %v2610 = vcombine.low %v2571, %v2603
        %v2611 = vcombine.high %v2571, %v2603
        %v2612 = vcombine.low %v2045, %v2053
        %v2613 = vcombine.high %v2045, %v2053
        %v2615 = vunpack.c.l.s4 1983009808
        %v2616 = vunpack.c.0.s8 %v2615
        %v2617 = vlaneseq
        %v2618 = vshrl.u32 %v2617, 7
        %v2619 = vsub.s32 %v2616, %v2618
        %v2620 = vrot.slane %v2612, %v2619
        %v2622 = vunpack.c.l.s4 1983009808
        %v2623 = vunpack.c.0.s8 %v2622
        %v2624 = vlaneseq
        %v2625 = vshrl.u32 %v2624, 7
        %v2626 = vsub.s32 %v2623, %v2625
        %v2627 = vrot.slane %v2613, %v2626
        %v2628 = vcombine.low %v2049, %v2057
        %v2629 = vcombine.high %v2049, %v2057
        %v2631 = vunpack.c.l.s4 1983009808
        %v2632 = vunpack.c.0.s8 %v2631
        %v2633 = vlaneseq
        %v2634 = vshrl.u32 %v2633, 7
        %v2635 = vsub.s32 %v2632, %v2634
        %v2636 = vrot.slane %v2628, %v2635
        %v2638 = vunpack.c.l.s4 1983009808
        %v2639 = vunpack.c.0.s8 %v2638
        %v2640 = vlaneseq
        %v2641 = vshrl.u32 %v2640, 7
        %v2642 = vsub.s32 %v2639, %v2641
        %v2643 = vrot.slane %v2629, %v2642
        %v2644 = vcombine.low %v2620, %v2636
        %v2645 = vcombine.high %v2620, %v2636
        %v2647 = vunpack.c.l.s4 1934713408
        %v2648 = vunpack.c.0.s8 %v2647
        %v2649 = vlaneseq
        %v2650 = vshrl.u32 %v2649, 7
        %v2651 = vsub.s32 %v2648, %v2650
        %v2652 = vrot.slane %v2644, %v2651
        %v2654 = vunpack.c.l.s4 1934713408
        %v2655 = vunpack.c.0.s8 %v2654
        %v2656 = vlaneseq
        %v2657 = vshrl.u32 %v2656, 7
        %v2658 = vsub.s32 %v2655, %v2657
        %v2659 = vrot.slane %v2645, %v2658
        %v2660 = vcombine.low %v2627, %v2643
        %v2661 = vcombine.high %v2627, %v2643
        %v2663 = vunpack.c.l.s4 1934713408
        %v2664 = vunpack.c.0.s8 %v2663
        %v2665 = vlaneseq
        %v2666 = vshrl.u32 %v2665, 7
        %v2667 = vsub.s32 %v2664, %v2666
        %v2668 = vrot.slane %v2660, %v2667
        %v2670 = vunpack.c.l.s4 1934713408
        %v2671 = vunpack.c.0.s8 %v2670
        %v2672 = vlaneseq
        %v2673 = vshrl.u32 %v2672, 7
        %v2674 = vsub.s32 %v2671, %v2673
        %v2675 = vrot.slane %v2661, %v2674
        %v2676 = vcombine.high %v2652, 0.0
        %v2677 = vcombine.high %v2659, 0.0
        %v2678 = vcombine.high %v2668, 0.0
        %v2679 = vcombine.high %v2675, 0.0
        %v2680 = vcombine.low %v1830, %v1836
        %v2681 = vcombine.high %v1830, %v1836
        %v2683 = vunpack.c.l.s4 1983009808
        %v2684 = vunpack.c.0.s8 %v2683
        %v2685 = vlaneseq
        %v2686 = vshrl.u32 %v2685, 7
        %v2687 = vsub.s32 %v2684, %v2686
        %v2688 = vrot.slane %v2680, %v2687
        %v2690 = vunpack.c.l.s4 1983009808
        %v2691 = vunpack.c.0.s8 %v2690
        %v2692 = vlaneseq
        %v2693 = vshrl.u32 %v2692, 7
        %v2694 = vsub.s32 %v2691, %v2693
        %v2695 = vrot.slane %v2681, %v2694
        %v2696 = vcombine.low %v1833, %v1839
        %v2697 = vcombine.high %v1833, %v1839
        %v2699 = vunpack.c.l.s4 1983009808
        %v2700 = vunpack.c.0.s8 %v2699
        %v2701 = vlaneseq
        %v2702 = vshrl.u32 %v2701, 7
        %v2703 = vsub.s32 %v2700, %v2702
        %v2704 = vrot.slane %v2696, %v2703
        %v2706 = vunpack.c.l.s4 1983009808
        %v2707 = vunpack.c.0.s8 %v2706
        %v2708 = vlaneseq
        %v2709 = vshrl.u32 %v2708, 7
        %v2710 = vsub.s32 %v2707, %v2709
        %v2711 = vrot.slane %v2697, %v2710
        %v2712 = vcombine.low %v1867, %v1875
        %v2713 = vcombine.high %v1867, %v1875
        %v2715 = vunpack.c.l.s4 1983009808
        %v2716 = vunpack.c.0.s8 %v2715
        %v2717 = vlaneseq
        %v2718 = vshrl.u32 %v2717, 7
        %v2719 = vsub.s32 %v2716, %v2718
        %v2720 = vrot.slane %v2712, %v2719
        %v2722 = vunpack.c.l.s4 1983009808
        %v2723 = vunpack.c.0.s8 %v2722
        %v2724 = vlaneseq
        %v2725 = vshrl.u32 %v2724, 7
        %v2726 = vsub.s32 %v2723, %v2725
        %v2727 = vrot.slane %v2713, %v2726
        %v2728 = vcombine.low %v1871, %v1879
        %v2729 = vcombine.high %v1871, %v1879
        %v2731 = vunpack.c.l.s4 1983009808
        %v2732 = vunpack.c.0.s8 %v2731
        %v2733 = vlaneseq
        %v2734 = vshrl.u32 %v2733, 7
        %v2735 = vsub.s32 %v2732, %v2734
        %v2736 = vrot.slane %v2728, %v2735
        %v2738 = vunpack.c.l.s4 1983009808
        %v2739 = vunpack.c.0.s8 %v2738
        %v2740 = vlaneseq
        %v2741 = vshrl.u32 %v2740, 7
        %v2742 = vsub.s32 %v2739, %v2741
        %v2743 = vrot.slane %v2729, %v2742
        %v2744 = vcombine.low %v2688, %v2704
        %v2745 = vcombine.high %v2688, %v2704
        %v2747 = vunpack.c.l.s4 1934713408
        %v2748 = vunpack.c.0.s8 %v2747
        %v2749 = vlaneseq
        %v2750 = vshrl.u32 %v2749, 7
        %v2751 = vsub.s32 %v2748, %v2750
        %v2752 = vrot.slane %v2744, %v2751
        %v2754 = vunpack.c.l.s4 1934713408
        %v2755 = vunpack.c.0.s8 %v2754
        %v2756 = vlaneseq
        %v2757 = vshrl.u32 %v2756, 7
        %v2758 = vsub.s32 %v2755, %v2757
        %v2759 = vrot.slane %v2745, %v2758
        %v2760 = vcombine.low %v2695, %v2711
        %v2761 = vcombine.high %v2695, %v2711
        %v2763 = vunpack.c.l.s4 1934713408
        %v2764 = vunpack.c.0.s8 %v2763
        %v2765 = vlaneseq
        %v2766 = vshrl.u32 %v2765, 7
        %v2767 = vsub.s32 %v2764, %v2766
        %v2768 = vrot.slane %v2760, %v2767
        %v2770 = vunpack.c.l.s4 1934713408
        %v2771 = vunpack.c.0.s8 %v2770
        %v2772 = vlaneseq
        %v2773 = vshrl.u32 %v2772, 7
        %v2774 = vsub.s32 %v2771, %v2773
        %v2775 = vrot.slane %v2761, %v2774
        %v2776 = vcombine.low %v2720, %v2736
        %v2777 = vcombine.high %v2720, %v2736
        %v2779 = vunpack.c.l.s4 1934713408
        %v2780 = vunpack.c.0.s8 %v2779
        %v2781 = vlaneseq
        %v2782 = vshrl.u32 %v2781, 7
        %v2783 = vsub.s32 %v2780, %v2782
        %v2784 = vrot.slane %v2776, %v2783
        %v2786 = vunpack.c.l.s4 1934713408
        %v2787 = vunpack.c.0.s8 %v2786
        %v2788 = vlaneseq
        %v2789 = vshrl.u32 %v2788, 7
        %v2790 = vsub.s32 %v2787, %v2789
        %v2791 = vrot.slane %v2777, %v2790
        %v2792 = vcombine.low %v2727, %v2743
        %v2793 = vcombine.high %v2727, %v2743
        %v2795 = vunpack.c.l.s4 1934713408
        %v2796 = vunpack.c.0.s8 %v2795
        %v2797 = vlaneseq
        %v2798 = vshrl.u32 %v2797, 7
        %v2799 = vsub.s32 %v2796, %v2798
        %v2800 = vrot.slane %v2792, %v2799
        %v2802 = vunpack.c.l.s4 1934713408
        %v2803 = vunpack.c.0.s8 %v2802
        %v2804 = vlaneseq
        %v2805 = vshrl.u32 %v2804, 7
        %v2806 = vsub.s32 %v2803, %v2805
        %v2807 = vrot.slane %v2793, %v2806
        %v2808 = vcombine.low %v2752, %v2784
        %v2809 = vcombine.high %v2752, %v2784
        %v2810 = vcombine.low %v2759, %v2791
        %v2811 = vcombine.high %v2759, %v2791
        %v2812 = vcombine.low %v2768, %v2800
        %v2813 = vcombine.high %v2768, %v2800
        %v2814 = vcombine.low %v2775, %v2807
        %v2815 = vcombine.high %v2775, %v2807
        %v2816 = vcombine.low %v1891, %v1899
        %v2817 = vcombine.high %v1891, %v1899
        %v2819 = vunpack.c.l.s4 1983009808
        %v2820 = vunpack.c.0.s8 %v2819
        %v2821 = vlaneseq
        %v2822 = vshrl.u32 %v2821, 7
        %v2823 = vsub.s32 %v2820, %v2822
        %v2824 = vrot.slane %v2816, %v2823
        %v2826 = vunpack.c.l.s4 1983009808
        %v2827 = vunpack.c.0.s8 %v2826
        %v2828 = vlaneseq
        %v2829 = vshrl.u32 %v2828, 7
        %v2830 = vsub.s32 %v2827, %v2829
        %v2831 = vrot.slane %v2817, %v2830
        %v2832 = vcombine.low %v1895, %v1903
        %v2833 = vcombine.high %v1895, %v1903
        %v2835 = vunpack.c.l.s4 1983009808
        %v2836 = vunpack.c.0.s8 %v2835
        %v2837 = vlaneseq
        %v2838 = vshrl.u32 %v2837, 7
        %v2839 = vsub.s32 %v2836, %v2838
        %v2840 = vrot.slane %v2832, %v2839
        %v2842 = vunpack.c.l.s4 1983009808
        %v2843 = vunpack.c.0.s8 %v2842
        %v2844 = vlaneseq
        %v2845 = vshrl.u32 %v2844, 7
        %v2846 = vsub.s32 %v2843, %v2845
        %v2847 = vrot.slane %v2833, %v2846
        %v2848 = vcombine.low %v1920, %v1930
        %v2849 = vcombine.high %v1920, %v1930
        %v2851 = vunpack.c.l.s4 1983009808
        %v2852 = vunpack.c.0.s8 %v2851
        %v2853 = vlaneseq
        %v2854 = vshrl.u32 %v2853, 7
        %v2855 = vsub.s32 %v2852, %v2854
        %v2856 = vrot.slane %v2848, %v2855
        %v2858 = vunpack.c.l.s4 1983009808
        %v2859 = vunpack.c.0.s8 %v2858
        %v2860 = vlaneseq
        %v2861 = vshrl.u32 %v2860, 7
        %v2862 = vsub.s32 %v2859, %v2861
        %v2863 = vrot.slane %v2849, %v2862
        %v2864 = vcombine.low %v1925, %v1935
        %v2865 = vcombine.high %v1925, %v1935
        %v2867 = vunpack.c.l.s4 1983009808
        %v2868 = vunpack.c.0.s8 %v2867
        %v2869 = vlaneseq
        %v2870 = vshrl.u32 %v2869, 7
        %v2871 = vsub.s32 %v2868, %v2870
        %v2872 = vrot.slane %v2864, %v2871
        %v2874 = vunpack.c.l.s4 1983009808
        %v2875 = vunpack.c.0.s8 %v2874
        %v2876 = vlaneseq
        %v2877 = vshrl.u32 %v2876, 7
        %v2878 = vsub.s32 %v2875, %v2877
        %v2879 = vrot.slane %v2865, %v2878
        %v2880 = vcombine.low %v2824, %v2840
        %v2881 = vcombine.high %v2824, %v2840
        %v2883 = vunpack.c.l.s4 1934713408
        %v2884 = vunpack.c.0.s8 %v2883
        %v2885 = vlaneseq
        %v2886 = vshrl.u32 %v2885, 7
        %v2887 = vsub.s32 %v2884, %v2886
        %v2888 = vrot.slane %v2880, %v2887
        %v2890 = vunpack.c.l.s4 1934713408
        %v2891 = vunpack.c.0.s8 %v2890
        %v2892 = vlaneseq
        %v2893 = vshrl.u32 %v2892, 7
        %v2894 = vsub.s32 %v2891, %v2893
        %v2895 = vrot.slane %v2881, %v2894
        %v2896 = vcombine.low %v2831, %v2847
        %v2897 = vcombine.high %v2831, %v2847
        %v2899 = vunpack.c.l.s4 1934713408
        %v2900 = vunpack.c.0.s8 %v2899
        %v2901 = vlaneseq
        %v2902 = vshrl.u32 %v2901, 7
        %v2903 = vsub.s32 %v2900, %v2902
        %v2904 = vrot.slane %v2896, %v2903
        %v2906 = vunpack.c.l.s4 1934713408
        %v2907 = vunpack.c.0.s8 %v2906
        %v2908 = vlaneseq
        %v2909 = vshrl.u32 %v2908, 7
        %v2910 = vsub.s32 %v2907, %v2909
        %v2911 = vrot.slane %v2897, %v2910
        %v2912 = vcombine.low %v2856, %v2872
        %v2913 = vcombine.high %v2856, %v2872
        %v2915 = vunpack.c.l.s4 1934713408
        %v2916 = vunpack.c.0.s8 %v2915
        %v2917 = vlaneseq
        %v2918 = vshrl.u32 %v2917, 7
        %v2919 = vsub.s32 %v2916, %v2918
        %v2920 = vrot.slane %v2912, %v2919
        %v2922 = vunpack.c.l.s4 1934713408
        %v2923 = vunpack.c.0.s8 %v2922
        %v2924 = vlaneseq
        %v2925 = vshrl.u32 %v2924, 7
        %v2926 = vsub.s32 %v2923, %v2925
        %v2927 = vrot.slane %v2913, %v2926
        %v2928 = vcombine.low %v2863, %v2879
        %v2929 = vcombine.high %v2863, %v2879
        %v2931 = vunpack.c.l.s4 1934713408
        %v2932 = vunpack.c.0.s8 %v2931
        %v2933 = vlaneseq
        %v2934 = vshrl.u32 %v2933, 7
        %v2935 = vsub.s32 %v2932, %v2934
        %v2936 = vrot.slane %v2928, %v2935
        %v2938 = vunpack.c.l.s4 1934713408
        %v2939 = vunpack.c.0.s8 %v2938
        %v2940 = vlaneseq
        %v2941 = vshrl.u32 %v2940, 7
        %v2942 = vsub.s32 %v2939, %v2941
        %v2943 = vrot.slane %v2929, %v2942
        %v2944 = vcombine.low %v2888, %v2920
        %v2945 = vcombine.high %v2888, %v2920
        %v2946 = vcombine.low %v2895, %v2927
        %v2947 = vcombine.high %v2895, %v2927
        %v2948 = vcombine.low %v2904, %v2936
        %v2949 = vcombine.high %v2904, %v2936
        %v2950 = vcombine.low %v2911, %v2943
        %v2951 = vcombine.high %v2911, %v2943
        %v2952 = vcombine.low %v1947, %v1955
        %v2953 = vcombine.high %v1947, %v1955
        %v2955 = vunpack.c.l.s4 1983009808
        %v2956 = vunpack.c.0.s8 %v2955
        %v2957 = vlaneseq
        %v2958 = vshrl.u32 %v2957, 7
        %v2959 = vsub.s32 %v2956, %v2958
        %v2960 = vrot.slane %v2952, %v2959
        %v2962 = vunpack.c.l.s4 1983009808
        %v2963 = vunpack.c.0.s8 %v2962
        %v2964 = vlaneseq
        %v2965 = vshrl.u32 %v2964, 7
        %v2966 = vsub.s32 %v2963, %v2965
        %v2967 = vrot.slane %v2953, %v2966
        %v2968 = vcombine.low %v1951, %v1959
        %v2969 = vcombine.high %v1951, %v1959
        %v2971 = vunpack.c.l.s4 1983009808
        %v2972 = vunpack.c.0.s8 %v2971
        %v2973 = vlaneseq
        %v2974 = vshrl.u32 %v2973, 7
        %v2975 = vsub.s32 %v2972, %v2974
        %v2976 = vrot.slane %v2968, %v2975
        %v2978 = vunpack.c.l.s4 1983009808
        %v2979 = vunpack.c.0.s8 %v2978
        %v2980 = vlaneseq
        %v2981 = vshrl.u32 %v2980, 7
        %v2982 = vsub.s32 %v2979, %v2981
        %v2983 = vrot.slane %v2969, %v2982
        %v2984 = vcombine.low %v1971, %v1979
        %v2985 = vcombine.high %v1971, %v1979
        %v2987 = vunpack.c.l.s4 1983009808
        %v2988 = vunpack.c.0.s8 %v2987
        %v2989 = vlaneseq
        %v2990 = vshrl.u32 %v2989, 7
        %v2991 = vsub.s32 %v2988, %v2990
        %v2992 = vrot.slane %v2984, %v2991
        %v2994 = vunpack.c.l.s4 1983009808
        %v2995 = vunpack.c.0.s8 %v2994
        %v2996 = vlaneseq
        %v2997 = vshrl.u32 %v2996, 7
        %v2998 = vsub.s32 %v2995, %v2997
        %v2999 = vrot.slane %v2985, %v2998
        %v3000 = vcombine.low %v1975, %v1983
        %v3001 = vcombine.high %v1975, %v1983
        %v3003 = vunpack.c.l.s4 1983009808
        %v3004 = vunpack.c.0.s8 %v3003
        %v3005 = vlaneseq
        %v3006 = vshrl.u32 %v3005, 7
        %v3007 = vsub.s32 %v3004, %v3006
        %v3008 = vrot.slane %v3000, %v3007
        %v3010 = vunpack.c.l.s4 1983009808
        %v3011 = vunpack.c.0.s8 %v3010
        %v3012 = vlaneseq
        %v3013 = vshrl.u32 %v3012, 7
        %v3014 = vsub.s32 %v3011, %v3013
        %v3015 = vrot.slane %v3001, %v3014
        %v3016 = vcombine.low %v2960, %v2976
        %v3017 = vcombine.high %v2960, %v2976
        %v3019 = vunpack.c.l.s4 1934713408
        %v3020 = vunpack.c.0.s8 %v3019
        %v3021 = vlaneseq
        %v3022 = vshrl.u32 %v3021, 7
        %v3023 = vsub.s32 %v3020, %v3022
        %v3024 = vrot.slane %v3016, %v3023
        %v3026 = vunpack.c.l.s4 1934713408
        %v3027 = vunpack.c.0.s8 %v3026
        %v3028 = vlaneseq
        %v3029 = vshrl.u32 %v3028, 7
        %v3030 = vsub.s32 %v3027, %v3029
        %v3031 = vrot.slane %v3017, %v3030
        %v3032 = vcombine.low %v2967, %v2983
        %v3033 = vcombine.high %v2967, %v2983
        %v3035 = vunpack.c.l.s4 1934713408
        %v3036 = vunpack.c.0.s8 %v3035
        %v3037 = vlaneseq
        %v3038 = vshrl.u32 %v3037, 7
        %v3039 = vsub.s32 %v3036, %v3038
        %v3040 = vrot.slane %v3032, %v3039
        %v3042 = vunpack.c.l.s4 1934713408
        %v3043 = vunpack.c.0.s8 %v3042
        %v3044 = vlaneseq
        %v3045 = vshrl.u32 %v3044, 7
        %v3046 = vsub.s32 %v3043, %v3045
        %v3047 = vrot.slane %v3033, %v3046
        %v3048 = vcombine.low %v2992, %v3008
        %v3049 = vcombine.high %v2992, %v3008
        %v3051 = vunpack.c.l.s4 1934713408
        %v3052 = vunpack.c.0.s8 %v3051
        %v3053 = vlaneseq
        %v3054 = vshrl.u32 %v3053, 7
        %v3055 = vsub.s32 %v3052, %v3054
        %v3056 = vrot.slane %v3048, %v3055
        %v3058 = vunpack.c.l.s4 1934713408
        %v3059 = vunpack.c.0.s8 %v3058
        %v3060 = vlaneseq
        %v3061 = vshrl.u32 %v3060, 7
        %v3062 = vsub.s32 %v3059, %v3061
        %v3063 = vrot.slane %v3049, %v3062
        %v3064 = vcombine.low %v2999, %v3015
        %v3065 = vcombine.high %v2999, %v3015
        %v3067 = vunpack.c.l.s4 1934713408
        %v3068 = vunpack.c.0.s8 %v3067
        %v3069 = vlaneseq
        %v3070 = vshrl.u32 %v3069, 7
        %v3071 = vsub.s32 %v3068, %v3070
        %v3072 = vrot.slane %v3064, %v3071
        %v3074 = vunpack.c.l.s4 1934713408
        %v3075 = vunpack.c.0.s8 %v3074
        %v3076 = vlaneseq
        %v3077 = vshrl.u32 %v3076, 7
        %v3078 = vsub.s32 %v3075, %v3077
        %v3079 = vrot.slane %v3065, %v3078
        %v3080 = vcombine.low %v3024, %v3056
        %v3081 = vcombine.high %v3024, %v3056
        %v3082 = vcombine.low %v3031, %v3063
        %v3083 = vcombine.high %v3031, %v3063
        %v3084 = vcombine.low %v3040, %v3072
        %v3085 = vcombine.high %v3040, %v3072
        %v3086 = vcombine.low %v3047, %v3079
        %v3087 = vcombine.high %v3047, %v3079
        %v3088 = vcombine.low %v1996, %v2006
        %v3089 = vcombine.high %v1996, %v2006
        %v3091 = vunpack.c.l.s4 1983009808
        %v3092 = vunpack.c.0.s8 %v3091
        %v3093 = vlaneseq
        %v3094 = vshrl.u32 %v3093, 7
        %v3095 = vsub.s32 %v3092, %v3094
        %v3096 = vrot.slane %v3088, %v3095
        %v3098 = vunpack.c.l.s4 1983009808
        %v3099 = vunpack.c.0.s8 %v3098
        %v3100 = vlaneseq
        %v3101 = vshrl.u32 %v3100, 7
        %v3102 = vsub.s32 %v3099, %v3101
        %v3103 = vrot.slane %v3089, %v3102
        %v3104 = vcombine.low %v2001, %v2011
        %v3105 = vcombine.high %v2001, %v2011
        %v3107 = vunpack.c.l.s4 1983009808
        %v3108 = vunpack.c.0.s8 %v3107
        %v3109 = vlaneseq
        %v3110 = vshrl.u32 %v3109, 7
        %v3111 = vsub.s32 %v3108, %v3110
        %v3112 = vrot.slane %v3104, %v3111
        %v3114 = vunpack.c.l.s4 1983009808
        %v3115 = vunpack.c.0.s8 %v3114
        %v3116 = vlaneseq
        %v3117 = vshrl.u32 %v3116, 7
        %v3118 = vsub.s32 %v3115, %v3117
        %v3119 = vrot.slane %v3105, %v3118
        %v3120 = vcombine.low %v2023, %v2031
        %v3121 = vcombine.high %v2023, %v2031
        %v3123 = vunpack.c.l.s4 1983009808
        %v3124 = vunpack.c.0.s8 %v3123
        %v3125 = vlaneseq
        %v3126 = vshrl.u32 %v3125, 7
        %v3127 = vsub.s32 %v3124, %v3126
        %v3128 = vrot.slane %v3120, %v3127
        %v3130 = vunpack.c.l.s4 1983009808
        %v3131 = vunpack.c.0.s8 %v3130
        %v3132 = vlaneseq
        %v3133 = vshrl.u32 %v3132, 7
        %v3134 = vsub.s32 %v3131, %v3133
        %v3135 = vrot.slane %v3121, %v3134
        %v3136 = vcombine.low %v2027, %v2035
        %v3137 = vcombine.high %v2027, %v2035
        %v3139 = vunpack.c.l.s4 1983009808
        %v3140 = vunpack.c.0.s8 %v3139
        %v3141 = vlaneseq
        %v3142 = vshrl.u32 %v3141, 7
        %v3143 = vsub.s32 %v3140, %v3142
        %v3144 = vrot.slane %v3136, %v3143
        %v3146 = vunpack.c.l.s4 1983009808
        %v3147 = vunpack.c.0.s8 %v3146
        %v3148 = vlaneseq
        %v3149 = vshrl.u32 %v3148, 7
        %v3150 = vsub.s32 %v3147, %v3149
        %v3151 = vrot.slane %v3137, %v3150
        %v3152 = vcombine.low %v3096, %v3112
        %v3153 = vcombine.high %v3096, %v3112
        %v3155 = vunpack.c.l.s4 1934713408
        %v3156 = vunpack.c.0.s8 %v3155
        %v3157 = vlaneseq
        %v3158 = vshrl.u32 %v3157, 7
        %v3159 = vsub.s32 %v3156, %v3158
        %v3160 = vrot.slane %v3152, %v3159
        %v3162 = vunpack.c.l.s4 1934713408
        %v3163 = vunpack.c.0.s8 %v3162
        %v3164 = vlaneseq
        %v3165 = vshrl.u32 %v3164, 7
        %v3166 = vsub.s32 %v3163, %v3165
        %v3167 = vrot.slane %v3153, %v3166
        %v3168 = vcombine.low %v3103, %v3119
        %v3169 = vcombine.high %v3103, %v3119
        %v3171 = vunpack.c.l.s4 1934713408
        %v3172 = vunpack.c.0.s8 %v3171
        %v3173 = vlaneseq
        %v3174 = vshrl.u32 %v3173, 7
        %v3175 = vsub.s32 %v3172, %v3174
        %v3176 = vrot.slane %v3168, %v3175
        %v3178 = vunpack.c.l.s4 1934713408
        %v3179 = vunpack.c.0.s8 %v3178
        %v3180 = vlaneseq
        %v3181 = vshrl.u32 %v3180, 7
        %v3182 = vsub.s32 %v3179, %v3181
        %v3183 = vrot.slane %v3169, %v3182
        %v3184 = vcombine.low %v3128, %v3144
        %v3185 = vcombine.high %v3128, %v3144
        %v3187 = vunpack.c.l.s4 1934713408
        %v3188 = vunpack.c.0.s8 %v3187
        %v3189 = vlaneseq
        %v3190 = vshrl.u32 %v3189, 7
        %v3191 = vsub.s32 %v3188, %v3190
        %v3192 = vrot.slane %v3184, %v3191
        %v3194 = vunpack.c.l.s4 1934713408
        %v3195 = vunpack.c.0.s8 %v3194
        %v3196 = vlaneseq
        %v3197 = vshrl.u32 %v3196, 7
        %v3198 = vsub.s32 %v3195, %v3197
        %v3199 = vrot.slane %v3185, %v3198
        %v3200 = vcombine.low %v3135, %v3151
        %v3201 = vcombine.high %v3135, %v3151
        %v3203 = vunpack.c.l.s4 1934713408
        %v3204 = vunpack.c.0.s8 %v3203
        %v3205 = vlaneseq
        %v3206 = vshrl.u32 %v3205, 7
        %v3207 = vsub.s32 %v3204, %v3206
        %v3208 = vrot.slane %v3200, %v3207
        %v3210 = vunpack.c.l.s4 1934713408
        %v3211 = vunpack.c.0.s8 %v3210
        %v3212 = vlaneseq
        %v3213 = vshrl.u32 %v3212, 7
        %v3214 = vsub.s32 %v3211, %v3213
        %v3215 = vrot.slane %v3201, %v3214
        %v3216 = vcombine.low %v3160, %v3192
        %v3217 = vcombine.high %v3160, %v3192
        %v3218 = vcombine.low %v3167, %v3199
        %v3219 = vcombine.high %v3167, %v3199
        %v3220 = vcombine.low %v3176, %v3208
        %v3221 = vcombine.high %v3176, %v3208
        %v3222 = vcombine.low %v3183, %v3215
        %v3223 = vcombine.high %v3183, %v3215
        %v3224 = vcombine.low %v2047, %v2055
        %v3225 = vcombine.high %v2047, %v2055
        %v3227 = vunpack.c.l.s4 1983009808
        %v3228 = vunpack.c.0.s8 %v3227
        %v3229 = vlaneseq
        %v3230 = vshrl.u32 %v3229, 7
        %v3231 = vsub.s32 %v3228, %v3230
        %v3232 = vrot.slane %v3224, %v3231
        %v3234 = vunpack.c.l.s4 1983009808
        %v3235 = vunpack.c.0.s8 %v3234
        %v3236 = vlaneseq
        %v3237 = vshrl.u32 %v3236, 7
        %v3238 = vsub.s32 %v3235, %v3237
        %v3239 = vrot.slane %v3225, %v3238
        %v3240 = vcombine.low %v2051, %v2059
        %v3241 = vcombine.high %v2051, %v2059
        %v3243 = vunpack.c.l.s4 1983009808
        %v3244 = vunpack.c.0.s8 %v3243
        %v3245 = vlaneseq
        %v3246 = vshrl.u32 %v3245, 7
        %v3247 = vsub.s32 %v3244, %v3246
        %v3248 = vrot.slane %v3240, %v3247
        %v3250 = vunpack.c.l.s4 1983009808
        %v3251 = vunpack.c.0.s8 %v3250
        %v3252 = vlaneseq
        %v3253 = vshrl.u32 %v3252, 7
        %v3254 = vsub.s32 %v3251, %v3253
        %v3255 = vrot.slane %v3241, %v3254
        %v3256 = vcombine.low %v3232, %v3248
        %v3257 = vcombine.high %v3232, %v3248
        %v3259 = vunpack.c.l.s4 1934713408
        %v3260 = vunpack.c.0.s8 %v3259
        %v3261 = vlaneseq
        %v3262 = vshrl.u32 %v3261, 7
        %v3263 = vsub.s32 %v3260, %v3262
        %v3264 = vrot.slane %v3256, %v3263
        %v3266 = vunpack.c.l.s4 1934713408
        %v3267 = vunpack.c.0.s8 %v3266
        %v3268 = vlaneseq
        %v3269 = vshrl.u32 %v3268, 7
        %v3270 = vsub.s32 %v3267, %v3269
        %v3271 = vrot.slane %v3257, %v3270
        %v3272 = vcombine.low %v3239, %v3255
        %v3273 = vcombine.high %v3239, %v3255
        %v3275 = vunpack.c.l.s4 1934713408
        %v3276 = vunpack.c.0.s8 %v3275
        %v3277 = vlaneseq
        %v3278 = vshrl.u32 %v3277, 7
        %v3279 = vsub.s32 %v3276, %v3278
        %v3280 = vrot.slane %v3272, %v3279
        %v3282 = vunpack.c.l.s4 1934713408
        %v3283 = vunpack.c.0.s8 %v3282
        %v3284 = vlaneseq
        %v3285 = vshrl.u32 %v3284, 7
        %v3286 = vsub.s32 %v3283, %v3285
        %v3287 = vrot.slane %v3273, %v3286
        %v3288 = vcombine.high %v3264, 0.0
        %v3289 = vcombine.high %v3271, 0.0
        %v3290 = vcombine.high %v3280, 0.0
        %v3291 = vcombine.high %v3287, 0.0
        %3297 = vrot.lane.b32.xlu0 %v2197, 16
        %v3298 = vpop.permute.xlu0 %3297
        %3299 = vrot.lane.b32.xlu0 %v2333, 16
        %v3300 = vpop.permute.xlu0 %3299
        %3301 = vrot.lane.b32.xlu0 %v2469, 16
        %v3302 = vpop.permute.xlu0 %3301
        %3303 = vrot.lane.b32.xlu0 %v2605, 16
        %v3304 = vpop.permute.xlu0 %3303
        %3305 = vrot.lane.b32.xlu0 %v2676, 16
        %v3306 = vpop.permute.xlu0 %3305
        %3317 = vrot.lane.b32.xlu0 %v2198, 32
        %v3318 = vpop.permute.xlu0 %3317
        %3319 = vrot.lane.b32.xlu0 %v2334, 32
        %v3320 = vpop.permute.xlu0 %3319
        %3321 = vrot.lane.b32.xlu0 %v2470, 32
        %v3322 = vpop.permute.xlu0 %3321
        %3323 = vrot.lane.b32.xlu0 %v2606, 32
        %v3324 = vpop.permute.xlu0 %3323
        %3325 = vrot.lane.b32.xlu0 %v2659, 32
        %v3326 = vpop.permute.xlu0 %3325
        %3337 = vrot.lane.b32.xlu0 %v2199, 48
        %v3338 = vpop.permute.xlu0 %3337
        %3339 = vrot.lane.b32.xlu0 %v2335, 48
        %v3340 = vpop.permute.xlu0 %3339
        %3341 = vrot.lane.b32.xlu0 %v2471, 48
        %v3342 = vpop.permute.xlu0 %3341
        %3343 = vrot.lane.b32.xlu0 %v2607, 48
        %v3344 = vpop.permute.xlu0 %3343
        %3345 = vrot.lane.b32.xlu0 %v2677, 48
        %v3346 = vpop.permute.xlu0 %3345
        %3357 = vrot.lane.b32.xlu0 %v2200, 64
        %v3358 = vpop.permute.xlu0 %3357
        %3359 = vrot.lane.b32.xlu0 %v2336, 64
        %v3360 = vpop.permute.xlu0 %3359
        %3361 = vrot.lane.b32.xlu0 %v2472, 64
        %v3362 = vpop.permute.xlu0 %3361
        %3363 = vrot.lane.b32.xlu0 %v2608, 64
        %v3364 = vpop.permute.xlu0 %3363
        %3365 = vrot.lane.b32.xlu0 %v2668, 64
        %v3366 = vpop.permute.xlu0 %3365
        %3377 = vrot.lane.b32.xlu0 %v2201, 80
        %v3378 = vpop.permute.xlu0 %3377
        %3379 = vrot.lane.b32.xlu0 %v2337, 80
        %v3380 = vpop.permute.xlu0 %3379
        %3381 = vrot.lane.b32.xlu0 %v2473, 80
        %v3382 = vpop.permute.xlu0 %3381
        %3383 = vrot.lane.b32.xlu0 %v2609, 80
        %v3384 = vpop.permute.xlu0 %3383
        %3385 = vrot.lane.b32.xlu0 %v2678, 80
        %v3386 = vpop.permute.xlu0 %3385
        %3397 = vrot.lane.b32.xlu0 %v2202, 96
        %v3398 = vpop.permute.xlu0 %3397
        %3399 = vrot.lane.b32.xlu0 %v2338, 96
        %v3400 = vpop.permute.xlu0 %3399
        %3401 = vrot.lane.b32.xlu0 %v2474, 96
        %v3402 = vpop.permute.xlu0 %3401
        %3403 = vrot.lane.b32.xlu0 %v2610, 96
        %v3404 = vpop.permute.xlu0 %3403
        %3405 = vrot.lane.b32.xlu0 %v2675, 96
        %v3406 = vpop.permute.xlu0 %3405
        %3417 = vrot.lane.b32.xlu0 %v2203, 112
        %v3418 = vpop.permute.xlu0 %3417
        %3419 = vrot.lane.b32.xlu0 %v2339, 112
        %v3420 = vpop.permute.xlu0 %3419
        %3421 = vrot.lane.b32.xlu0 %v2475, 112
        %v3422 = vpop.permute.xlu0 %3421
        %3423 = vrot.lane.b32.xlu0 %v2611, 112
        %v3424 = vpop.permute.xlu0 %3423
        %3425 = vrot.lane.b32.xlu0 %v2679, 112
        %v3426 = vpop.permute.xlu0 %3425
        %3437 = vrot.lane.b32.xlu0 %v2809, 16
        %v3438 = vpop.permute.xlu0 %3437
        %3439 = vrot.lane.b32.xlu0 %v2945, 16
        %v3440 = vpop.permute.xlu0 %3439
        %3441 = vrot.lane.b32.xlu0 %v3081, 16
        %v3442 = vpop.permute.xlu0 %3441
        %3443 = vrot.lane.b32.xlu0 %v3217, 16
        %v3444 = vpop.permute.xlu0 %3443
        %3445 = vrot.lane.b32.xlu0 %v3288, 16
        %v3446 = vpop.permute.xlu0 %3445
        %3457 = vrot.lane.b32.xlu0 %v2810, 32
        %v3458 = vpop.permute.xlu0 %3457
        %3459 = vrot.lane.b32.xlu0 %v2946, 32
        %v3460 = vpop.permute.xlu0 %3459
        %3461 = vrot.lane.b32.xlu0 %v3082, 32
        %v3462 = vpop.permute.xlu0 %3461
        %3463 = vrot.lane.b32.xlu0 %v3218, 32
        %v3464 = vpop.permute.xlu0 %3463
        %3465 = vrot.lane.b32.xlu0 %v3271, 32
        %v3466 = vpop.permute.xlu0 %3465
        %3477 = vrot.lane.b32.xlu0 %v2811, 48
        %v3478 = vpop.permute.xlu0 %3477
        %3479 = vrot.lane.b32.xlu0 %v2947, 48
        %v3480 = vpop.permute.xlu0 %3479
        %3481 = vrot.lane.b32.xlu0 %v3083, 48
        %v3482 = vpop.permute.xlu0 %3481
        %3483 = vrot.lane.b32.xlu0 %v3219, 48
        %v3484 = vpop.permute.xlu0 %3483
        %3485 = vrot.lane.b32.xlu0 %v3289, 48
        %v3486 = vpop.permute.xlu0 %3485
        %3497 = vrot.lane.b32.xlu0 %v2812, 64
        %v3498 = vpop.permute.xlu0 %3497
        %3499 = vrot.lane.b32.xlu0 %v2948, 64
        %v3500 = vpop.permute.xlu0 %3499
        %3501 = vrot.lane.b32.xlu0 %v3084, 64
        %v3502 = vpop.permute.xlu0 %3501
        %3503 = vrot.lane.b32.xlu0 %v3220, 64
        %v3504 = vpop.permute.xlu0 %3503
        %3505 = vrot.lane.b32.xlu0 %v3280, 64
        %v3506 = vpop.permute.xlu0 %3505
        %3517 = vrot.lane.b32.xlu0 %v2813, 80
        %v3518 = vpop.permute.xlu0 %3517
        %3519 = vrot.lane.b32.xlu0 %v2949, 80
        %v3520 = vpop.permute.xlu0 %3519
        %3521 = vrot.lane.b32.xlu0 %v3085, 80
        %v3522 = vpop.permute.xlu0 %3521
        %3523 = vrot.lane.b32.xlu0 %v3221, 80
        %v3524 = vpop.permute.xlu0 %3523
        %3525 = vrot.lane.b32.xlu0 %v3290, 80
        %v3526 = vpop.permute.xlu0 %3525
        %3537 = vrot.lane.b32.xlu0 %v2814, 96
        %v3538 = vpop.permute.xlu0 %3537
        %3539 = vrot.lane.b32.xlu0 %v2950, 96
        %v3540 = vpop.permute.xlu0 %3539
        %3541 = vrot.lane.b32.xlu0 %v3086, 96
        %v3542 = vpop.permute.xlu0 %3541
        %3543 = vrot.lane.b32.xlu0 %v3222, 96
        %v3544 = vpop.permute.xlu0 %3543
        %3545 = vrot.lane.b32.xlu0 %v3287, 96
        %v3546 = vpop.permute.xlu0 %3545
        %3557 = vrot.lane.b32.xlu0 %v2815, 112
        %v3558 = vpop.permute.xlu0 %3557
        %3559 = vrot.lane.b32.xlu0 %v2951, 112
        %v3560 = vpop.permute.xlu0 %3559
        %3561 = vrot.lane.b32.xlu0 %v3087, 112
        %v3562 = vpop.permute.xlu0 %3561
        %3563 = vrot.lane.b32.xlu0 %v3223, 112
        %v3564 = vpop.permute.xlu0 %3563
        %3565 = vrot.lane.b32.xlu0 %v3291, 112
        %v3566 = vpop.permute.xlu0 %3565
        %v3572 = vsel %vm632, %v2196, %v3298
        %v3573 = vsel %vm632, %v2332, %v3300
        %v3574 = vsel %vm632, %v2468, %v3302
        %v3575 = vsel %vm632, %v2604, %v3304
        %v3576 = vsel %vm632, %v2652, %v3306
        %v3577 = vsel %vm634, %v3572, %v3318
        %v3578 = vsel %vm634, %v3573, %v3320
        %v3579 = vsel %vm634, %v3574, %v3322
        %v3580 = vsel %vm634, %v3575, %v3324
        %v3581 = vsel %vm634, %v3576, %v3326
        %v3582 = vsel %vm636, %v3577, %v3338
        %v3583 = vsel %vm636, %v3578, %v3340
        %v3584 = vsel %vm636, %v3579, %v3342
        %v3585 = vsel %vm636, %v3580, %v3344
        %v3586 = vsel %vm636, %v3581, %v3346
        %v3587 = vsel %vm638, %v3582, %v3358
        %v3588 = vsel %vm638, %v3583, %v3360
        %v3589 = vsel %vm638, %v3584, %v3362
        %v3590 = vsel %vm638, %v3585, %v3364
        %v3591 = vsel %vm638, %v3586, %v3366
        %v3592 = vsel %vm640, %v3587, %v3378
        %v3593 = vsel %vm640, %v3588, %v3380
        %v3594 = vsel %vm640, %v3589, %v3382
        %v3595 = vsel %vm640, %v3590, %v3384
        %v3596 = vsel %vm640, %v3591, %v3386
        %v3597 = vsel %vm642, %v3592, %v3398
        %v3598 = vsel %vm642, %v3593, %v3400
        %v3599 = vsel %vm642, %v3594, %v3402
        %v3600 = vsel %vm642, %v3595, %v3404
        %v3601 = vsel %vm642, %v3596, %v3406
        %v3602 = vsel %vm644, %v3597, %v3418
        %v3603 = vsel %vm644, %v3598, %v3420
        %v3604 = vsel %vm644, %v3599, %v3422
        %v3605 = vsel %vm644, %v3600, %v3424
        %v3606 = vsel %vm644, %v3601, %v3426
        %v3607 = vsel %vm632, %v2808, %v3438
        %v3608 = vsel %vm632, %v2944, %v3440
        %v3609 = vsel %vm632, %v3080, %v3442
        %v3610 = vsel %vm632, %v3216, %v3444
        %v3611 = vsel %vm632, %v3264, %v3446
        %v3612 = vsel %vm634, %v3607, %v3458
        %v3613 = vsel %vm634, %v3608, %v3460
        %v3614 = vsel %vm634, %v3609, %v3462
        %v3615 = vsel %vm634, %v3610, %v3464
        %v3616 = vsel %vm634, %v3611, %v3466
        %v3617 = vsel %vm636, %v3612, %v3478
        %v3618 = vsel %vm636, %v3613, %v3480
        %v3619 = vsel %vm636, %v3614, %v3482
        %v3620 = vsel %vm636, %v3615, %v3484
        %v3621 = vsel %vm636, %v3616, %v3486
        %v3622 = vsel %vm638, %v3617, %v3498
        %v3623 = vsel %vm638, %v3618, %v3500
        %v3624 = vsel %vm638, %v3619, %v3502
        %v3625 = vsel %vm638, %v3620, %v3504
        %v3626 = vsel %vm638, %v3621, %v3506
        %v3627 = vsel %vm640, %v3622, %v3518
        %v3628 = vsel %vm640, %v3623, %v3520
        %v3629 = vsel %vm640, %v3624, %v3522
        %v3630 = vsel %vm640, %v3625, %v3524
        %v3631 = vsel %vm640, %v3626, %v3526
        %v3632 = vsel %vm642, %v3627, %v3538
        %v3633 = vsel %vm642, %v3628, %v3540
        %v3634 = vsel %vm642, %v3629, %v3542
        %v3635 = vsel %vm642, %v3630, %v3544
        %v3636 = vsel %vm642, %v3631, %v3546
        %v3637 = vsel %vm644, %v3632, %v3558
        %v3638 = vsel %vm644, %v3633, %v3560
        %v3639 = vsel %vm644, %v3634, %v3562
        %v3640 = vsel %vm644, %v3635, %v3564
        %v3641 = vsel %vm644, %v3636, %v3566
        %3643 = vset.pattern.permute.xlu0 0
        %3644 = vperm.xlu0 %3643, %v1771
        %v3645 = vpop.permute.xlu0 %3644
        %vm3647 = vcmask 293888
        %v3649 = vsel %vm3647, %v1770, 0
        %v3652 = vsel %vm674, %v3606, 0
        %v3655 = vsel %vm674, %v3641, 0
        %3657 = vmatprep.subr.mxu0 %v3637
        %3658 = vmatpush1.msra.mxu0 %v3602
        %3659 = vmatprep.subr.mxu0 %v3638
        %3660 = vmatpush1.msra.mxu0 %v3603
        %3661 = vmatprep.subr.mxu0 %v3639
        %3662 = vmatpush1.msra.mxu0 %v3604
        %3663 = vmatprep.subr.mxu0 %v3640
        %3664 = vmatpush1.msra.mxu0 %v3605
        %3665 = vmatprep.subr.mxu0 %v3655
        %3666 = vmatpush1.msra.mxu0 %v3652
        %3667 = vmatprep.subr.mxu0 0.0
        %3668 = vmatpush1.msra.mxu0 0.0
        %3669 = vmatprep.subr.mxu0 0.0
        %3670 = vmatpush1.msra.mxu0 0.0
        %3671 = vmatprep.subr.mxu0 0.0
        %3672 = vmatpush1.msra.mxu0 0.0
        %3673 = vmatprep.subr.mxu0 0.0
        %3674 = vmatpush1.msra.mxu0 0.0
        %3675 = vmatprep.subr.mxu0 0.0
        %3676 = vmatpush1.msra.mxu0 0.0
        %3677 = vmatprep.subr.mxu0 0.0
        %3678 = vmatpush1.msra.mxu0 0.0
        %3679 = vmatprep.subr.mxu0 0.0
        %3680 = vmatpush1.msra.mxu0 0.0
        %3681 = vmatprep.subr.mxu0 0.0
        %3682 = vmatpush1.msra.mxu0 0.0
        %3683 = vmatprep.subr.mxu0 0.0
        %3684 = vmatpush1.msra.mxu0 0.0
        %3685 = vmatprep.subr.mxu0 0.0
        %3686 = vmatpush1.msra.mxu0 0.0
        %3687 = vmatprep.subr.mxu0 0.0
        %3688 = vmatpush1.msra.mxu0 0.0
        %3689 = vmatprep.subr.mxu0 0.0
        %3690 = vmatpush1.msra.mxu0 0.0
        %3691 = vmatprep.subr.mxu0 0.0
        %3692 = vmatpush1.msra.mxu0 0.0
        %3693 = vmatprep.subr.mxu0 0.0
        %3694 = vmatpush1.msra.mxu0 0.0
        %3695 = vmatprep.subr.mxu0 0.0
        %3696 = vmatpush1.msra.mxu0 0.0
        %3697 = vmatprep.subr.mxu0 0.0
        %3698 = vmatpush1.msra.mxu0 0.0
        %3699 = vmatprep.subr.mxu0 0.0
        %3700 = vmatpush1.msra.mxu0 0.0
        %3701 = vmatprep.subr.mxu0 0.0
        %3702 = vmatpush1.msra.mxu0 0.0
        %3703 = vmatprep.subr.mxu0 0.0
        %3704 = vmatpush1.msra.mxu0 0.0
        %3705 = vmatprep.subr.mxu0 0.0
        %3706 = vmatpush1.msra.mxu0 0.0
        %3707 = vmatprep.subr.mxu0 0.0
        %3708 = vmatpush1.msra.mxu0 0.0
        %3709 = vmatprep.subr.mxu0 0.0
        %3710 = vmatpush1.msra.mxu0 0.0
        %3711 = vmatprep.subr.mxu0 0.0
        %3712 = vmatpush1.msra.mxu0 0.0
        %3713 = vmatprep.subr.mxu0 0.0
        %3714 = vmatpush1.msra.mxu0 0.0
        %3715 = vmatprep.subr.mxu0 0.0
        %3716 = vmatpush1.msra.mxu0 0.0
        %3717 = vmatprep.subr.mxu0 0.0
        %3718 = vmatpush1.msra.mxu0 0.0
        %3719 = vmatprep.subr.mxu0 0.0
        %3720 = vmatpush1.msra.mxu0 0.0
        %3721 = vmatprep.mubr.f32.mxu0 0.0
        %3722 = vmatmul.mubr.f32.gmra.mrb[0].mxu0 %v3649
        %v3723 = vpop.f32.mrb[0].mxu0
        %v3724 = vadd.f32 %v3645, %v3723
        %v3725 = vpop.f32.mrb[0].mxu0
        %v3726 = vadd.f32 %v3645, %v3725
        %3727 = vdwg.mxu0
        %v3728 = vmax.f32 %v3724, 0.0
        %v3729 = vmax.f32 %v3726, 0.0
        %v3730 = vld [vmem:[%s7] sm:$0xff]
        %v3731 = vld [vmem:[%s8] sm:$0xff]
        %3740 = vrot.lane.b32.xlu0 %v1038, 2
        %v3741 = vpop.permute.xlu0 %3740
        %3742 = vrot.lane.b32.xlu0 %v1106, 2
        %v3743 = vpop.permute.xlu0 %3742
        %3744 = vrot.lane.b32.xlu0 %v1039, 2
        %v3745 = vpop.permute.xlu0 %3744
        %3746 = vrot.lane.b32.xlu0 %v1107, 2
        %v3747 = vpop.permute.xlu0 %3746
        %3748 = vrot.lane.b32.xlu0 %v1040, 2
        %v3749 = vpop.permute.xlu0 %3748
        %3750 = vrot.lane.b32.xlu0 %v1108, 2
        %v3751 = vpop.permute.xlu0 %3750
        %3752 = vrot.lane.b32.xlu0 %v1041, 2
        %v3753 = vpop.permute.xlu0 %3752
        %3754 = vrot.lane.b32.xlu0 %v1109, 2
        %v3755 = vpop.permute.xlu0 %3754
        %vm3764 = vcmask 15360
        %v3765 = vsel %vm3764, 0.0, %v3741
        %v3766 = vsel %vm3764, 0.0, %v3743
        %v3767 = vsel %vm3764, 0.0, %v3745
        %v3768 = vsel %vm3764, 0.0, %v3747
        %v3769 = vsel %vm3764, 0.0, %v3749
        %v3770 = vsel %vm3764, 0.0, %v3751
        %v3771 = vsel %vm3764, 0.0, %v3753
        %v3772 = vsel %vm3764, 0.0, %v3755
        %vm3773 = vcmask 146432
        %v3774 = vsel %vm3773, %v3765, 0.0
        %v3775 = vsel %vm3773, %v3766, 0.0
        %v3776 = vsel %vm3773, %v3767, 0.0
        %v3777 = vsel %vm3773, %v3768, 0.0
        %v3778 = vsel %vm3773, %v3769, 0.0
        %v3779 = vsel %vm3773, %v3770, 0.0
        %v3780 = vsel %vm3773, %v3771, 0.0
        %v3781 = vsel %vm3773, %v3772, 0.0
        %vm3790 = vcmask 1041408
        %v3791 = vrot.slane %v3774, 6
        %v3792 = vrot.slane %v3775, 6
        %v3793 = vsel %vm3790, %v3791, %v3792
        %v3794 = vrot.slane %v3776, 6
        %v3795 = vrot.slane %v3777, 6
        %v3796 = vsel %vm3790, %v3794, %v3795
        %v3797 = vrot.slane %v3778, 6
        %v3798 = vrot.slane %v3779, 6
        %v3799 = vsel %vm3790, %v3797, %v3798
        %v3800 = vrot.slane %v3780, 6
        %v3801 = vrot.slane %v3781, 6
        %v3802 = vsel %vm3790, %v3800, %v3801
        %v3815 = vsel %vm3790, 0.0, %v3791
        %v3816 = vsel %vm3790, 0.0, %v3794
        %v3817 = vsel %vm3790, 0.0, %v3797
        %v3818 = vsel %vm3790, 0.0, %v3800
        %v3819 = vsel %vm3790, %v3792, 0.0
        %v3820 = vsel %vm3790, %v3795, 0.0
        %v3821 = vsel %vm3790, %v3798, 0.0
        %v3822 = vsel %vm3790, %v3801, 0.0
        %3827 = vrot.lane.b32.xlu0 %v3815, 127
        %v3828 = vpop.permute.xlu0 %3827
        %3829 = vrot.lane.b32.xlu0 %v3793, 127
        %v3830 = vpop.permute.xlu0 %3829
        %3831 = vrot.lane.b32.xlu0 %v3816, 127
        %v3832 = vpop.permute.xlu0 %3831
        %3833 = vrot.lane.b32.xlu0 %v3796, 127
        %v3834 = vpop.permute.xlu0 %3833
        %3835 = vrot.lane.b32.xlu0 %v3817, 127
        %v3836 = vpop.permute.xlu0 %3835
        %3837 = vrot.lane.b32.xlu0 %v3799, 127
        %v3838 = vpop.permute.xlu0 %3837
        %3839 = vrot.lane.b32.xlu0 %v3818, 127
        %v3840 = vpop.permute.xlu0 %3839
        %3841 = vrot.lane.b32.xlu0 %v3802, 127
        %v3842 = vpop.permute.xlu0 %3841
        %3851 = vrot.lane.b32.xlu0 %v3815, 126
        %v3852 = vpop.permute.xlu0 %3851
        %3853 = vrot.lane.b32.xlu0 %v3793, 126
        %v3854 = vpop.permute.xlu0 %3853
        %3855 = vrot.lane.b32.xlu0 %v3816, 126
        %v3856 = vpop.permute.xlu0 %3855
        %3857 = vrot.lane.b32.xlu0 %v3796, 126
        %v3858 = vpop.permute.xlu0 %3857
        %3859 = vrot.lane.b32.xlu0 %v3817, 126
        %v3860 = vpop.permute.xlu0 %3859
        %3861 = vrot.lane.b32.xlu0 %v3799, 126
        %v3862 = vpop.permute.xlu0 %3861
        %3863 = vrot.lane.b32.xlu0 %v3818, 126
        %v3864 = vpop.permute.xlu0 %3863
        %3865 = vrot.lane.b32.xlu0 %v3802, 126
        %v3866 = vpop.permute.xlu0 %3865
        %3875 = vrot.lane.b32.xlu0 %v3815, 125
        %v3876 = vpop.permute.xlu0 %3875
        %3877 = vrot.lane.b32.xlu0 %v3793, 125
        %v3878 = vpop.permute.xlu0 %3877
        %3879 = vrot.lane.b32.xlu0 %v3816, 125
        %v3880 = vpop.permute.xlu0 %3879
        %3881 = vrot.lane.b32.xlu0 %v3796, 125
        %v3882 = vpop.permute.xlu0 %3881
        %3883 = vrot.lane.b32.xlu0 %v3817, 125
        %v3884 = vpop.permute.xlu0 %3883
        %3885 = vrot.lane.b32.xlu0 %v3799, 125
        %v3886 = vpop.permute.xlu0 %3885
        %3887 = vrot.lane.b32.xlu0 %v3818, 125
        %v3888 = vpop.permute.xlu0 %3887
        %3889 = vrot.lane.b32.xlu0 %v3802, 125
        %v3890 = vpop.permute.xlu0 %3889
        %3899 = vrot.lane.b32.xlu0 %v3815, 124
        %v3900 = vpop.permute.xlu0 %3899
        %3901 = vrot.lane.b32.xlu0 %v3793, 124
        %v3902 = vpop.permute.xlu0 %3901
        %3903 = vrot.lane.b32.xlu0 %v3816, 124
        %v3904 = vpop.permute.xlu0 %3903
        %3905 = vrot.lane.b32.xlu0 %v3796, 124
        %v3906 = vpop.permute.xlu0 %3905
        %3907 = vrot.lane.b32.xlu0 %v3817, 124
        %v3908 = vpop.permute.xlu0 %3907
        %3909 = vrot.lane.b32.xlu0 %v3799, 124
        %v3910 = vpop.permute.xlu0 %3909
        %3911 = vrot.lane.b32.xlu0 %v3818, 124
        %v3912 = vpop.permute.xlu0 %3911
        %3913 = vrot.lane.b32.xlu0 %v3802, 124
        %v3914 = vpop.permute.xlu0 %3913
        %v3927 = vrot.slane %v3815, 1
        %v3928 = vrot.slane %v3793, 1
        %v3929 = vsel %vm1273, %v3927, %v3928
        %v3930 = vrot.slane %v3819, 1
        %v3931 = vsel %vm1273, %v3928, %v3930
        %v3932 = vrot.slane %v3816, 1
        %v3933 = vrot.slane %v3796, 1
        %v3934 = vsel %vm1273, %v3932, %v3933
        %v3935 = vrot.slane %v3820, 1
        %v3936 = vsel %vm1273, %v3933, %v3935
        %v3937 = vrot.slane %v3817, 1
        %v3938 = vrot.slane %v3799, 1
        %v3939 = vsel %vm1273, %v3937, %v3938
        %v3940 = vrot.slane %v3821, 1
        %v3941 = vsel %vm1273, %v3938, %v3940
        %v3942 = vrot.slane %v3818, 1
        %v3943 = vrot.slane %v3802, 1
        %v3944 = vsel %vm1273, %v3942, %v3943
        %v3945 = vrot.slane %v3822, 1
        %v3946 = vsel %vm1273, %v3943, %v3945
        %3955 = vrot.lane.b32.xlu0 %v3929, 127
        %v3956 = vpop.permute.xlu0 %3955
        %3957 = vrot.lane.b32.xlu0 %v3931, 127
        %v3958 = vpop.permute.xlu0 %3957
        %3959 = vrot.lane.b32.xlu0 %v3934, 127
        %v3960 = vpop.permute.xlu0 %3959
        %3961 = vrot.lane.b32.xlu0 %v3936, 127
        %v3962 = vpop.permute.xlu0 %3961
        %3963 = vrot.lane.b32.xlu0 %v3939, 127
        %v3964 = vpop.permute.xlu0 %3963
        %3965 = vrot.lane.b32.xlu0 %v3941, 127
        %v3966 = vpop.permute.xlu0 %3965
        %3967 = vrot.lane.b32.xlu0 %v3944, 127
        %v3968 = vpop.permute.xlu0 %3967
        %3969 = vrot.lane.b32.xlu0 %v3946, 127
        %v3970 = vpop.permute.xlu0 %3969
        %3979 = vrot.lane.b32.xlu0 %v3929, 126
        %v3980 = vpop.permute.xlu0 %3979
        %3981 = vrot.lane.b32.xlu0 %v3931, 126
        %v3982 = vpop.permute.xlu0 %3981
        %3983 = vrot.lane.b32.xlu0 %v3934, 126
        %v3984 = vpop.permute.xlu0 %3983
        %3985 = vrot.lane.b32.xlu0 %v3936, 126
        %v3986 = vpop.permute.xlu0 %3985
        %3987 = vrot.lane.b32.xlu0 %v3939, 126
        %v3988 = vpop.permute.xlu0 %3987
        %3989 = vrot.lane.b32.xlu0 %v3941, 126
        %v3990 = vpop.permute.xlu0 %3989
        %3991 = vrot.lane.b32.xlu0 %v3944, 126
        %v3992 = vpop.permute.xlu0 %3991
        %3993 = vrot.lane.b32.xlu0 %v3946, 126
        %v3994 = vpop.permute.xlu0 %3993
        %4003 = vrot.lane.b32.xlu0 %v3929, 125
        %v4004 = vpop.permute.xlu0 %4003
        %4005 = vrot.lane.b32.xlu0 %v3931, 125
        %v4006 = vpop.permute.xlu0 %4005
        %4007 = vrot.lane.b32.xlu0 %v3934, 125
        %v4008 = vpop.permute.xlu0 %4007
        %4009 = vrot.lane.b32.xlu0 %v3936, 125
        %v4010 = vpop.permute.xlu0 %4009
        %4011 = vrot.lane.b32.xlu0 %v3939, 125
        %v4012 = vpop.permute.xlu0 %4011
        %4013 = vrot.lane.b32.xlu0 %v3941, 125
        %v4014 = vpop.permute.xlu0 %4013
        %4015 = vrot.lane.b32.xlu0 %v3944, 125
        %v4016 = vpop.permute.xlu0 %4015
        %4017 = vrot.lane.b32.xlu0 %v3946, 125
        %v4018 = vpop.permute.xlu0 %4017
        %4027 = vrot.lane.b32.xlu0 %v3929, 124
        %v4028 = vpop.permute.xlu0 %4027
        %4029 = vrot.lane.b32.xlu0 %v3931, 124
        %v4030 = vpop.permute.xlu0 %4029
        %4031 = vrot.lane.b32.xlu0 %v3934, 124
        %v4032 = vpop.permute.xlu0 %4031
        %4033 = vrot.lane.b32.xlu0 %v3936, 124
        %v4034 = vpop.permute.xlu0 %4033
        %4035 = vrot.lane.b32.xlu0 %v3939, 124
        %v4036 = vpop.permute.xlu0 %4035
        %4037 = vrot.lane.b32.xlu0 %v3941, 124
        %v4038 = vpop.permute.xlu0 %4037
        %4039 = vrot.lane.b32.xlu0 %v3944, 124
        %v4040 = vpop.permute.xlu0 %4039
        %4041 = vrot.lane.b32.xlu0 %v3946, 124
        %v4042 = vpop.permute.xlu0 %4041
        %v4051 = vrot.slane %v3815, 2
        %v4052 = vrot.slane %v3793, 2
        %v4053 = vsel %vm1374, %v4051, %v4052
        %v4054 = vrot.slane %v3819, 2
        %v4055 = vsel %vm1374, %v4052, %v4054
        %v4056 = vrot.slane %v3816, 2
        %v4057 = vrot.slane %v3796, 2
        %v4058 = vsel %vm1374, %v4056, %v4057
        %v4059 = vrot.slane %v3820, 2
        %v4060 = vsel %vm1374, %v4057, %v4059
        %v4061 = vrot.slane %v3817, 2
        %v4062 = vrot.slane %v3799, 2
        %v4063 = vsel %vm1374, %v4061, %v4062
        %v4064 = vrot.slane %v3821, 2
        %v4065 = vsel %vm1374, %v4062, %v4064
        %v4066 = vrot.slane %v3818, 2
        %v4067 = vrot.slane %v3802, 2
        %v4068 = vsel %vm1374, %v4066, %v4067
        %v4069 = vrot.slane %v3822, 2
        %v4070 = vsel %vm1374, %v4067, %v4069
        %4079 = vrot.lane.b32.xlu0 %v4053, 127
        %v4080 = vpop.permute.xlu0 %4079
        %4081 = vrot.lane.b32.xlu0 %v4055, 127
        %v4082 = vpop.permute.xlu0 %4081
        %4083 = vrot.lane.b32.xlu0 %v4058, 127
        %v4084 = vpop.permute.xlu0 %4083
        %4085 = vrot.lane.b32.xlu0 %v4060, 127
        %v4086 = vpop.permute.xlu0 %4085
        %4087 = vrot.lane.b32.xlu0 %v4063, 127
        %v4088 = vpop.permute.xlu0 %4087
        %4089 = vrot.lane.b32.xlu0 %v4065, 127
        %v4090 = vpop.permute.xlu0 %4089
        %4091 = vrot.lane.b32.xlu0 %v4068, 127
        %v4092 = vpop.permute.xlu0 %4091
        %4093 = vrot.lane.b32.xlu0 %v4070, 127
        %v4094 = vpop.permute.xlu0 %4093
        %4103 = vrot.lane.b32.xlu0 %v4053, 126
        %v4104 = vpop.permute.xlu0 %4103
        %4105 = vrot.lane.b32.xlu0 %v4055, 126
        %v4106 = vpop.permute.xlu0 %4105
        %4107 = vrot.lane.b32.xlu0 %v4058, 126
        %v4108 = vpop.permute.xlu0 %4107
        %4109 = vrot.lane.b32.xlu0 %v4060, 126
        %v4110 = vpop.permute.xlu0 %4109
        %4111 = vrot.lane.b32.xlu0 %v4063, 126
        %v4112 = vpop.permute.xlu0 %4111
        %4113 = vrot.lane.b32.xlu0 %v4065, 126
        %v4114 = vpop.permute.xlu0 %4113
        %4115 = vrot.lane.b32.xlu0 %v4068, 126
        %v4116 = vpop.permute.xlu0 %4115
        %4117 = vrot.lane.b32.xlu0 %v4070, 126
        %v4118 = vpop.permute.xlu0 %4117
        %4127 = vrot.lane.b32.xlu0 %v4053, 125
        %v4128 = vpop.permute.xlu0 %4127
        %4129 = vrot.lane.b32.xlu0 %v4055, 125
        %v4130 = vpop.permute.xlu0 %4129
        %4131 = vrot.lane.b32.xlu0 %v4058, 125
        %v4132 = vpop.permute.xlu0 %4131
        %4133 = vrot.lane.b32.xlu0 %v4060, 125
        %v4134 = vpop.permute.xlu0 %4133
        %4135 = vrot.lane.b32.xlu0 %v4063, 125
        %v4136 = vpop.permute.xlu0 %4135
        %4137 = vrot.lane.b32.xlu0 %v4065, 125
        %v4138 = vpop.permute.xlu0 %4137
        %4139 = vrot.lane.b32.xlu0 %v4068, 125
        %v4140 = vpop.permute.xlu0 %4139
        %4141 = vrot.lane.b32.xlu0 %v4070, 125
        %v4142 = vpop.permute.xlu0 %4141
        %4151 = vrot.lane.b32.xlu0 %v4053, 124
        %v4152 = vpop.permute.xlu0 %4151
        %4153 = vrot.lane.b32.xlu0 %v4055, 124
        %v4154 = vpop.permute.xlu0 %4153
        %4155 = vrot.lane.b32.xlu0 %v4058, 124
        %v4156 = vpop.permute.xlu0 %4155
        %4157 = vrot.lane.b32.xlu0 %v4060, 124
        %v4158 = vpop.permute.xlu0 %4157
        %4159 = vrot.lane.b32.xlu0 %v4063, 124
        %v4160 = vpop.permute.xlu0 %4159
        %4161 = vrot.lane.b32.xlu0 %v4065, 124
        %v4162 = vpop.permute.xlu0 %4161
        %4163 = vrot.lane.b32.xlu0 %v4068, 124
        %v4164 = vpop.permute.xlu0 %4163
        %4165 = vrot.lane.b32.xlu0 %v4070, 124
        %v4166 = vpop.permute.xlu0 %4165
        %vm4175 = vcmask 1044480
        %v4176 = vrot.slane %v3815, 3
        %v4177 = vrot.slane %v3793, 3
        %v4178 = vsel %vm4175, %v4176, %v4177
        %v4179 = vrot.slane %v3819, 3
        %v4180 = vsel %vm4175, %v4177, %v4179
        %v4181 = vrot.slane %v3816, 3
        %v4182 = vrot.slane %v3796, 3
        %v4183 = vsel %vm4175, %v4181, %v4182
        %v4184 = vrot.slane %v3820, 3
        %v4185 = vsel %vm4175, %v4182, %v4184
        %v4186 = vrot.slane %v3817, 3
        %v4187 = vrot.slane %v3799, 3
        %v4188 = vsel %vm4175, %v4186, %v4187
        %v4189 = vrot.slane %v3821, 3
        %v4190 = vsel %vm4175, %v4187, %v4189
        %v4191 = vrot.slane %v3818, 3
        %v4192 = vrot.slane %v3802, 3
        %v4193 = vsel %vm4175, %v4191, %v4192
        %v4194 = vrot.slane %v3822, 3
        %v4195 = vsel %vm4175, %v4192, %v4194
        %4204 = vrot.lane.b32.xlu0 %v3819, 127
        %v4205 = vpop.permute.xlu0 %4204
        %4206 = vrot.lane.b32.xlu0 %v3820, 127
        %v4207 = vpop.permute.xlu0 %4206
        %4208 = vrot.lane.b32.xlu0 %v3821, 127
        %v4209 = vpop.permute.xlu0 %4208
        %4210 = vrot.lane.b32.xlu0 %v3822, 127
        %v4211 = vpop.permute.xlu0 %4210
        %4212 = vrot.lane.b32.xlu0 %v3819, 126
        %v4213 = vpop.permute.xlu0 %4212
        %4214 = vrot.lane.b32.xlu0 %v3820, 126
        %v4215 = vpop.permute.xlu0 %4214
        %4216 = vrot.lane.b32.xlu0 %v3821, 126
        %v4217 = vpop.permute.xlu0 %4216
        %4218 = vrot.lane.b32.xlu0 %v3822, 126
        %v4219 = vpop.permute.xlu0 %4218
        %4220 = vrot.lane.b32.xlu0 %v3819, 125
        %v4221 = vpop.permute.xlu0 %4220
        %4222 = vrot.lane.b32.xlu0 %v3820, 125
        %v4223 = vpop.permute.xlu0 %4222
        %4224 = vrot.lane.b32.xlu0 %v3821, 125
        %v4225 = vpop.permute.xlu0 %4224
        %4226 = vrot.lane.b32.xlu0 %v3822, 125
        %v4227 = vpop.permute.xlu0 %4226
        %4228 = vrot.lane.b32.xlu0 %v3929, 1
        %v4229 = vpop.permute.xlu0 %4228
        %4230 = vrot.lane.b32.xlu0 %v3931, 1
        %v4231 = vpop.permute.xlu0 %4230
        %4232 = vrot.lane.b32.xlu0 %v3930, 1
        %v4233 = vpop.permute.xlu0 %4232
        %4234 = vrot.lane.b32.xlu0 %v3934, 1
        %v4235 = vpop.permute.xlu0 %4234
        %4236 = vrot.lane.b32.xlu0 %v3936, 1
        %v4237 = vpop.permute.xlu0 %4236
        %4238 = vrot.lane.b32.xlu0 %v3935, 1
        %v4239 = vpop.permute.xlu0 %4238
        %4240 = vrot.lane.b32.xlu0 %v3939, 1
        %v4241 = vpop.permute.xlu0 %4240
        %4242 = vrot.lane.b32.xlu0 %v3941, 1
        %v4243 = vpop.permute.xlu0 %4242
        %4244 = vrot.lane.b32.xlu0 %v3940, 1
        %v4245 = vpop.permute.xlu0 %4244
        %4246 = vrot.lane.b32.xlu0 %v3944, 1
        %v4247 = vpop.permute.xlu0 %4246
        %4248 = vrot.lane.b32.xlu0 %v3946, 1
        %v4249 = vpop.permute.xlu0 %4248
        %4250 = vrot.lane.b32.xlu0 %v3945, 1
        %v4251 = vpop.permute.xlu0 %4250
        %4252 = vrot.lane.b32.xlu0 %v3930, 127
        %v4253 = vpop.permute.xlu0 %4252
        %4254 = vrot.lane.b32.xlu0 %v3935, 127
        %v4255 = vpop.permute.xlu0 %4254
        %4256 = vrot.lane.b32.xlu0 %v3940, 127
        %v4257 = vpop.permute.xlu0 %4256
        %4258 = vrot.lane.b32.xlu0 %v3945, 127
        %v4259 = vpop.permute.xlu0 %4258
        %4260 = vrot.lane.b32.xlu0 %v3930, 126
        %v4261 = vpop.permute.xlu0 %4260
        %4262 = vrot.lane.b32.xlu0 %v3935, 126
        %v4263 = vpop.permute.xlu0 %4262
        %4264 = vrot.lane.b32.xlu0 %v3940, 126
        %v4265 = vpop.permute.xlu0 %4264
        %4266 = vrot.lane.b32.xlu0 %v3945, 126
        %v4267 = vpop.permute.xlu0 %4266
        %4268 = vrot.lane.b32.xlu0 %v3930, 125
        %v4269 = vpop.permute.xlu0 %4268
        %4270 = vrot.lane.b32.xlu0 %v3935, 125
        %v4271 = vpop.permute.xlu0 %4270
        %4272 = vrot.lane.b32.xlu0 %v3940, 125
        %v4273 = vpop.permute.xlu0 %4272
        %4274 = vrot.lane.b32.xlu0 %v3945, 125
        %v4275 = vpop.permute.xlu0 %4274
        %v4276 = vrot.slane %v3828, 3
        %v4277 = vrot.slane %v3830, 3
        %v4278 = vsel %vm4175, %v4276, %v4277
        %v4279 = vrot.slane %v4205, 3
        %v4280 = vsel %vm4175, %v4277, %v4279
        %v4281 = vrot.slane %v3832, 3
        %v4282 = vrot.slane %v3834, 3
        %v4283 = vsel %vm4175, %v4281, %v4282
        %v4284 = vrot.slane %v4207, 3
        %v4285 = vsel %vm4175, %v4282, %v4284
        %v4286 = vrot.slane %v3836, 3
        %v4287 = vrot.slane %v3838, 3
        %v4288 = vsel %vm4175, %v4286, %v4287
        %v4289 = vrot.slane %v4209, 3
        %v4290 = vsel %vm4175, %v4287, %v4289
        %v4291 = vrot.slane %v3840, 3
        %v4292 = vrot.slane %v3842, 3
        %v4293 = vsel %vm4175, %v4291, %v4292
        %v4294 = vrot.slane %v4211, 3
        %v4295 = vsel %vm4175, %v4292, %v4294
        %v4296 = vrot.slane %v3852, 3
        %v4297 = vrot.slane %v3854, 3
        %v4298 = vsel %vm4175, %v4296, %v4297
        %v4299 = vrot.slane %v4213, 3
        %v4300 = vsel %vm4175, %v4297, %v4299
        %v4301 = vrot.slane %v3856, 3
        %v4302 = vrot.slane %v3858, 3
        %v4303 = vsel %vm4175, %v4301, %v4302
        %v4304 = vrot.slane %v4215, 3
        %v4305 = vsel %vm4175, %v4302, %v4304
        %v4306 = vrot.slane %v3860, 3
        %v4307 = vrot.slane %v3862, 3
        %v4308 = vsel %vm4175, %v4306, %v4307
        %v4309 = vrot.slane %v4217, 3
        %v4310 = vsel %vm4175, %v4307, %v4309
        %v4311 = vrot.slane %v3864, 3
        %v4312 = vrot.slane %v3866, 3
        %v4313 = vsel %vm4175, %v4311, %v4312
        %v4314 = vrot.slane %v4219, 3
        %v4315 = vsel %vm4175, %v4312, %v4314
        %v4316 = vrot.slane %v3876, 3
        %v4317 = vrot.slane %v3878, 3
        %v4318 = vsel %vm4175, %v4316, %v4317
        %v4319 = vrot.slane %v4221, 3
        %v4320 = vsel %vm4175, %v4317, %v4319
        %v4321 = vrot.slane %v3880, 3
        %v4322 = vrot.slane %v3882, 3
        %v4323 = vsel %vm4175, %v4321, %v4322
        %v4324 = vrot.slane %v4223, 3
        %v4325 = vsel %vm4175, %v4322, %v4324
        %v4326 = vrot.slane %v3884, 3
        %v4327 = vrot.slane %v3886, 3
        %v4328 = vsel %vm4175, %v4326, %v4327
        %v4329 = vrot.slane %v4225, 3
        %v4330 = vsel %vm4175, %v4327, %v4329
        %v4331 = vrot.slane %v3888, 3
        %v4332 = vrot.slane %v3890, 3
        %v4333 = vsel %vm4175, %v4331, %v4332
        %v4334 = vrot.slane %v4227, 3
        %v4335 = vsel %vm4175, %v4332, %v4334
        %v4336 = vrot.slane %v4229, 3
        %v4337 = vrot.slane %v4231, 3
        %v4338 = vsel %vm4175, %v4336, %v4337
        %v4339 = vrot.slane %v4233, 3
        %v4340 = vsel %vm4175, %v4337, %v4339
        %v4341 = vrot.slane %v4235, 3
        %v4342 = vrot.slane %v4237, 3
        %v4343 = vsel %vm4175, %v4341, %v4342
        %v4344 = vrot.slane %v4239, 3
        %v4345 = vsel %vm4175, %v4342, %v4344
        %v4346 = vrot.slane %v4241, 3
        %v4347 = vrot.slane %v4243, 3
        %v4348 = vsel %vm4175, %v4346, %v4347
        %v4349 = vrot.slane %v4245, 3
        %v4350 = vsel %vm4175, %v4347, %v4349
        %v4351 = vrot.slane %v4247, 3
        %v4352 = vrot.slane %v4249, 3
        %v4353 = vsel %vm4175, %v4351, %v4352
        %v4354 = vrot.slane %v4251, 3
        %v4355 = vsel %vm4175, %v4352, %v4354
        %v4356 = vrot.slane %v3929, 3
        %v4357 = vrot.slane %v3931, 3
        %v4358 = vsel %vm4175, %v4356, %v4357
        %v4359 = vrot.slane %v3930, 3
        %v4360 = vsel %vm4175, %v4357, %v4359
        %v4361 = vrot.slane %v3934, 3
        %v4362 = vrot.slane %v3936, 3
        %v4363 = vsel %vm4175, %v4361, %v4362
        %v4364 = vrot.slane %v3935, 3
        %v4365 = vsel %vm4175, %v4362, %v4364
        %v4366 = vrot.slane %v3939, 3
        %v4367 = vrot.slane %v3941, 3
        %v4368 = vsel %vm4175, %v4366, %v4367
        %v4369 = vrot.slane %v3940, 3
        %v4370 = vsel %vm4175, %v4367, %v4369
        %v4371 = vrot.slane %v3944, 3
        %v4372 = vrot.slane %v3946, 3
        %v4373 = vsel %vm4175, %v4371, %v4372
        %v4374 = vrot.slane %v3945, 3
        %v4375 = vsel %vm4175, %v4372, %v4374
        %v4376 = vrot.slane %v3956, 3
        %v4377 = vrot.slane %v3958, 3
        %v4378 = vsel %vm4175, %v4376, %v4377
        %v4379 = vrot.slane %v4253, 3
        %v4380 = vsel %vm4175, %v4377, %v4379
        %v4381 = vrot.slane %v3960, 3
        %v4382 = vrot.slane %v3962, 3
        %v4383 = vsel %vm4175, %v4381, %v4382
        %v4384 = vrot.slane %v4255, 3
        %v4385 = vsel %vm4175, %v4382, %v4384
        %v4386 = vrot.slane %v3964, 3
        %v4387 = vrot.slane %v3966, 3
        %v4388 = vsel %vm4175, %v4386, %v4387
        %v4389 = vrot.slane %v4257, 3
        %v4390 = vsel %vm4175, %v4387, %v4389
        %v4391 = vrot.slane %v3968, 3
        %v4392 = vrot.slane %v3970, 3
        %v4393 = vsel %vm4175, %v4391, %v4392
        %v4394 = vrot.slane %v4259, 3
        %v4395 = vsel %vm4175, %v4392, %v4394
        %v4396 = vrot.slane %v3980, 3
        %v4397 = vrot.slane %v3982, 3
        %v4398 = vsel %vm4175, %v4396, %v4397
        %v4399 = vrot.slane %v4261, 3
        %v4400 = vsel %vm4175, %v4397, %v4399
        %v4401 = vrot.slane %v3984, 3
        %v4402 = vrot.slane %v3986, 3
        %v4403 = vsel %vm4175, %v4401, %v4402
        %v4404 = vrot.slane %v4263, 3
        %v4405 = vsel %vm4175, %v4402, %v4404
        %v4406 = vrot.slane %v3988, 3
        %v4407 = vrot.slane %v3990, 3
        %v4408 = vsel %vm4175, %v4406, %v4407
        %v4409 = vrot.slane %v4265, 3
        %v4410 = vsel %vm4175, %v4407, %v4409
        %v4411 = vrot.slane %v3992, 3
        %v4412 = vrot.slane %v3994, 3
        %v4413 = vsel %vm4175, %v4411, %v4412
        %v4414 = vrot.slane %v4267, 3
        %v4415 = vsel %vm4175, %v4412, %v4414
        %v4416 = vrot.slane %v4004, 3
        %v4417 = vrot.slane %v4006, 3
        %v4418 = vsel %vm4175, %v4416, %v4417
        %v4419 = vrot.slane %v4269, 3
        %v4420 = vsel %vm4175, %v4417, %v4419
        %v4421 = vrot.slane %v4008, 3
        %v4422 = vrot.slane %v4010, 3
        %v4423 = vsel %vm4175, %v4421, %v4422
        %v4424 = vrot.slane %v4271, 3
        %v4425 = vsel %vm4175, %v4422, %v4424
        %v4426 = vrot.slane %v4012, 3
        %v4427 = vrot.slane %v4014, 3
        %v4428 = vsel %vm4175, %v4426, %v4427
        %v4429 = vrot.slane %v4273, 3
        %v4430 = vsel %vm4175, %v4427, %v4429
        %v4431 = vrot.slane %v4016, 3
        %v4432 = vrot.slane %v4018, 3
        %v4433 = vsel %vm4175, %v4431, %v4432
        %v4434 = vrot.slane %v4275, 3
        %v4435 = vsel %vm4175, %v4432, %v4434
        %4436 = vrot.lane.b32.xlu0 %v4178, 127
        %v4437 = vpop.permute.xlu0 %4436
        %4438 = vrot.lane.b32.xlu0 %v4180, 127
        %v4439 = vpop.permute.xlu0 %4438
        %4440 = vrot.lane.b32.xlu0 %v4183, 127
        %v4441 = vpop.permute.xlu0 %4440
        %4442 = vrot.lane.b32.xlu0 %v4185, 127
        %v4443 = vpop.permute.xlu0 %4442
        %4444 = vrot.lane.b32.xlu0 %v4188, 127
        %v4445 = vpop.permute.xlu0 %4444
        %4446 = vrot.lane.b32.xlu0 %v4190, 127
        %v4447 = vpop.permute.xlu0 %4446
        %4448 = vrot.lane.b32.xlu0 %v4193, 127
        %v4449 = vpop.permute.xlu0 %4448
        %4450 = vrot.lane.b32.xlu0 %v4195, 127
        %v4451 = vpop.permute.xlu0 %4450
        %4452 = vrot.lane.b32.xlu0 %v4278, 127
        %v4453 = vpop.permute.xlu0 %4452
        %4454 = vrot.lane.b32.xlu0 %v4280, 127
        %v4455 = vpop.permute.xlu0 %4454
        %4456 = vrot.lane.b32.xlu0 %v4283, 127
        %v4457 = vpop.permute.xlu0 %4456
        %4458 = vrot.lane.b32.xlu0 %v4285, 127
        %v4459 = vpop.permute.xlu0 %4458
        %4460 = vrot.lane.b32.xlu0 %v4288, 127
        %v4461 = vpop.permute.xlu0 %4460
        %4462 = vrot.lane.b32.xlu0 %v4290, 127
        %v4463 = vpop.permute.xlu0 %4462
        %4464 = vrot.lane.b32.xlu0 %v4293, 127
        %v4465 = vpop.permute.xlu0 %4464
        %4466 = vrot.lane.b32.xlu0 %v4295, 127
        %v4467 = vpop.permute.xlu0 %4466
        %4468 = vrot.lane.b32.xlu0 %v4298, 127
        %v4469 = vpop.permute.xlu0 %4468
        %4470 = vrot.lane.b32.xlu0 %v4300, 127
        %v4471 = vpop.permute.xlu0 %4470
        %4472 = vrot.lane.b32.xlu0 %v4303, 127
        %v4473 = vpop.permute.xlu0 %4472
        %4474 = vrot.lane.b32.xlu0 %v4305, 127
        %v4475 = vpop.permute.xlu0 %4474
        %4476 = vrot.lane.b32.xlu0 %v4308, 127
        %v4477 = vpop.permute.xlu0 %4476
        %4478 = vrot.lane.b32.xlu0 %v4310, 127
        %v4479 = vpop.permute.xlu0 %4478
        %4480 = vrot.lane.b32.xlu0 %v4313, 127
        %v4481 = vpop.permute.xlu0 %4480
        %4482 = vrot.lane.b32.xlu0 %v4315, 127
        %v4483 = vpop.permute.xlu0 %4482
        %4484 = vrot.lane.b32.xlu0 %v4318, 127
        %v4485 = vpop.permute.xlu0 %4484
        %4486 = vrot.lane.b32.xlu0 %v4320, 127
        %v4487 = vpop.permute.xlu0 %4486
        %4488 = vrot.lane.b32.xlu0 %v4323, 127
        %v4489 = vpop.permute.xlu0 %4488
        %4490 = vrot.lane.b32.xlu0 %v4325, 127
        %v4491 = vpop.permute.xlu0 %4490
        %4492 = vrot.lane.b32.xlu0 %v4328, 127
        %v4493 = vpop.permute.xlu0 %4492
        %4494 = vrot.lane.b32.xlu0 %v4330, 127
        %v4495 = vpop.permute.xlu0 %4494
        %4496 = vrot.lane.b32.xlu0 %v4333, 127
        %v4497 = vpop.permute.xlu0 %4496
        %4498 = vrot.lane.b32.xlu0 %v4335, 127
        %v4499 = vpop.permute.xlu0 %4498
        %4500 = vrot.lane.b32.xlu0 %v4338, 127
        %v4501 = vpop.permute.xlu0 %4500
        %4502 = vrot.lane.b32.xlu0 %v4340, 127
        %v4503 = vpop.permute.xlu0 %4502
        %4504 = vrot.lane.b32.xlu0 %v4343, 127
        %v4505 = vpop.permute.xlu0 %4504
        %4506 = vrot.lane.b32.xlu0 %v4345, 127
        %v4507 = vpop.permute.xlu0 %4506
        %4508 = vrot.lane.b32.xlu0 %v4348, 127
        %v4509 = vpop.permute.xlu0 %4508
        %4510 = vrot.lane.b32.xlu0 %v4350, 127
        %v4511 = vpop.permute.xlu0 %4510
        %4512 = vrot.lane.b32.xlu0 %v4353, 127
        %v4513 = vpop.permute.xlu0 %4512
        %4514 = vrot.lane.b32.xlu0 %v4355, 127
        %v4515 = vpop.permute.xlu0 %4514
        %4516 = vrot.lane.b32.xlu0 %v4358, 127
        %v4517 = vpop.permute.xlu0 %4516
        %4518 = vrot.lane.b32.xlu0 %v4360, 127
        %v4519 = vpop.permute.xlu0 %4518
        %4520 = vrot.lane.b32.xlu0 %v4363, 127
        %v4521 = vpop.permute.xlu0 %4520
        %4522 = vrot.lane.b32.xlu0 %v4365, 127
        %v4523 = vpop.permute.xlu0 %4522
        %4524 = vrot.lane.b32.xlu0 %v4368, 127
        %v4525 = vpop.permute.xlu0 %4524
        %4526 = vrot.lane.b32.xlu0 %v4370, 127
        %v4527 = vpop.permute.xlu0 %4526
        %4528 = vrot.lane.b32.xlu0 %v4373, 127
        %v4529 = vpop.permute.xlu0 %4528
        %4530 = vrot.lane.b32.xlu0 %v4375, 127
        %v4531 = vpop.permute.xlu0 %4530
        %4532 = vrot.lane.b32.xlu0 %v4378, 127
        %v4533 = vpop.permute.xlu0 %4532
        %4534 = vrot.lane.b32.xlu0 %v4380, 127
        %v4535 = vpop.permute.xlu0 %4534
        %4536 = vrot.lane.b32.xlu0 %v4383, 127
        %v4537 = vpop.permute.xlu0 %4536
        %4538 = vrot.lane.b32.xlu0 %v4385, 127
        %v4539 = vpop.permute.xlu0 %4538
        %4540 = vrot.lane.b32.xlu0 %v4388, 127
        %v4541 = vpop.permute.xlu0 %4540
        %4542 = vrot.lane.b32.xlu0 %v4390, 127
        %v4543 = vpop.permute.xlu0 %4542
        %4544 = vrot.lane.b32.xlu0 %v4393, 127
        %v4545 = vpop.permute.xlu0 %4544
        %4546 = vrot.lane.b32.xlu0 %v4395, 127
        %v4547 = vpop.permute.xlu0 %4546
        %4548 = vrot.lane.b32.xlu0 %v4398, 127
        %v4549 = vpop.permute.xlu0 %4548
        %4550 = vrot.lane.b32.xlu0 %v4400, 127
        %v4551 = vpop.permute.xlu0 %4550
        %4552 = vrot.lane.b32.xlu0 %v4403, 127
        %v4553 = vpop.permute.xlu0 %4552
        %4554 = vrot.lane.b32.xlu0 %v4405, 127
        %v4555 = vpop.permute.xlu0 %4554
        %4556 = vrot.lane.b32.xlu0 %v4408, 127
        %v4557 = vpop.permute.xlu0 %4556
        %4558 = vrot.lane.b32.xlu0 %v4410, 127
        %v4559 = vpop.permute.xlu0 %4558
        %4560 = vrot.lane.b32.xlu0 %v4413, 127
        %v4561 = vpop.permute.xlu0 %4560
        %4562 = vrot.lane.b32.xlu0 %v4415, 127
        %v4563 = vpop.permute.xlu0 %4562
        %4564 = vrot.lane.b32.xlu0 %v4418, 127
        %v4565 = vpop.permute.xlu0 %4564
        %4566 = vrot.lane.b32.xlu0 %v4420, 127
        %v4567 = vpop.permute.xlu0 %4566
        %4568 = vrot.lane.b32.xlu0 %v4423, 127
        %v4569 = vpop.permute.xlu0 %4568
        %4570 = vrot.lane.b32.xlu0 %v4425, 127
        %v4571 = vpop.permute.xlu0 %4570
        %4572 = vrot.lane.b32.xlu0 %v4428, 127
        %v4573 = vpop.permute.xlu0 %4572
        %4574 = vrot.lane.b32.xlu0 %v4430, 127
        %v4575 = vpop.permute.xlu0 %4574
        %4576 = vrot.lane.b32.xlu0 %v4433, 127
        %v4577 = vpop.permute.xlu0 %4576
        %4578 = vrot.lane.b32.xlu0 %v4435, 127
        %v4579 = vpop.permute.xlu0 %4578
        %v4652 = vcombine.low %v3815, %v3817
        %v4653 = vcombine.high %v3815, %v3817
        %v4655 = vunpack.c.l.s4 1983009808
        %v4656 = vunpack.c.0.s8 %v4655
        %v4657 = vlaneseq
        %v4658 = vshrl.u32 %v4657, 7
        %v4659 = vsub.s32 %v4656, %v4658
        %v4660 = vrot.slane %v4652, %v4659
        %v4662 = vunpack.c.l.s4 1983009808
        %v4663 = vunpack.c.0.s8 %v4662
        %v4664 = vlaneseq
        %v4665 = vshrl.u32 %v4664, 7
        %v4666 = vsub.s32 %v4663, %v4665
        %v4667 = vrot.slane %v4653, %v4666
        %v4668 = vcombine.low %v3816, %v3818
        %v4669 = vcombine.high %v3816, %v3818
        %v4671 = vunpack.c.l.s4 1983009808
        %v4672 = vunpack.c.0.s8 %v4671
        %v4673 = vlaneseq
        %v4674 = vshrl.u32 %v4673, 7
        %v4675 = vsub.s32 %v4672, %v4674
        %v4676 = vrot.slane %v4668, %v4675
        %v4678 = vunpack.c.l.s4 1983009808
        %v4679 = vunpack.c.0.s8 %v4678
        %v4680 = vlaneseq
        %v4681 = vshrl.u32 %v4680, 7
        %v4682 = vsub.s32 %v4679, %v4681
        %v4683 = vrot.slane %v4669, %v4682
        %v4684 = vcombine.low %v3828, %v3836
        %v4685 = vcombine.high %v3828, %v3836
        %v4687 = vunpack.c.l.s4 1983009808
        %v4688 = vunpack.c.0.s8 %v4687
        %v4689 = vlaneseq
        %v4690 = vshrl.u32 %v4689, 7
        %v4691 = vsub.s32 %v4688, %v4690
        %v4692 = vrot.slane %v4684, %v4691
        %v4694 = vunpack.c.l.s4 1983009808
        %v4695 = vunpack.c.0.s8 %v4694
        %v4696 = vlaneseq
        %v4697 = vshrl.u32 %v4696, 7
        %v4698 = vsub.s32 %v4695, %v4697
        %v4699 = vrot.slane %v4685, %v4698
        %v4700 = vcombine.low %v3832, %v3840
        %v4701 = vcombine.high %v3832, %v3840
        %v4703 = vunpack.c.l.s4 1983009808
        %v4704 = vunpack.c.0.s8 %v4703
        %v4705 = vlaneseq
        %v4706 = vshrl.u32 %v4705, 7
        %v4707 = vsub.s32 %v4704, %v4706
        %v4708 = vrot.slane %v4700, %v4707
        %v4710 = vunpack.c.l.s4 1983009808
        %v4711 = vunpack.c.0.s8 %v4710
        %v4712 = vlaneseq
        %v4713 = vshrl.u32 %v4712, 7
        %v4714 = vsub.s32 %v4711, %v4713
        %v4715 = vrot.slane %v4701, %v4714
        %v4716 = vcombine.low %v4660, %v4676
        %v4717 = vcombine.high %v4660, %v4676
        %v4719 = vunpack.c.l.s4 1934713408
        %v4720 = vunpack.c.0.s8 %v4719
        %v4721 = vlaneseq
        %v4722 = vshrl.u32 %v4721, 7
        %v4723 = vsub.s32 %v4720, %v4722
        %v4724 = vrot.slane %v4716, %v4723
        %v4726 = vunpack.c.l.s4 1934713408
        %v4727 = vunpack.c.0.s8 %v4726
        %v4728 = vlaneseq
        %v4729 = vshrl.u32 %v4728, 7
        %v4730 = vsub.s32 %v4727, %v4729
        %v4731 = vrot.slane %v4717, %v4730
        %v4732 = vcombine.low %v4667, %v4683
        %v4733 = vcombine.high %v4667, %v4683
        %v4735 = vunpack.c.l.s4 1934713408
        %v4736 = vunpack.c.0.s8 %v4735
        %v4737 = vlaneseq
        %v4738 = vshrl.u32 %v4737, 7
        %v4739 = vsub.s32 %v4736, %v4738
        %v4740 = vrot.slane %v4732, %v4739
        %v4742 = vunpack.c.l.s4 1934713408
        %v4743 = vunpack.c.0.s8 %v4742
        %v4744 = vlaneseq
        %v4745 = vshrl.u32 %v4744, 7
        %v4746 = vsub.s32 %v4743, %v4745
        %v4747 = vrot.slane %v4733, %v4746
        %v4748 = vcombine.low %v4692, %v4708
        %v4749 = vcombine.high %v4692, %v4708
        %v4751 = vunpack.c.l.s4 1934713408
        %v4752 = vunpack.c.0.s8 %v4751
        %v4753 = vlaneseq
        %v4754 = vshrl.u32 %v4753, 7
        %v4755 = vsub.s32 %v4752, %v4754
        %v4756 = vrot.slane %v4748, %v4755
        %v4758 = vunpack.c.l.s4 1934713408
        %v4759 = vunpack.c.0.s8 %v4758
        %v4760 = vlaneseq
        %v4761 = vshrl.u32 %v4760, 7
        %v4762 = vsub.s32 %v4759, %v4761
        %v4763 = vrot.slane %v4749, %v4762
        %v4764 = vcombine.low %v4699, %v4715
        %v4765 = vcombine.high %v4699, %v4715
        %v4767 = vunpack.c.l.s4 1934713408
        %v4768 = vunpack.c.0.s8 %v4767
        %v4769 = vlaneseq
        %v4770 = vshrl.u32 %v4769, 7
        %v4771 = vsub.s32 %v4768, %v4770
        %v4772 = vrot.slane %v4764, %v4771
        %v4774 = vunpack.c.l.s4 1934713408
        %v4775 = vunpack.c.0.s8 %v4774
        %v4776 = vlaneseq
        %v4777 = vshrl.u32 %v4776, 7
        %v4778 = vsub.s32 %v4775, %v4777
        %v4779 = vrot.slane %v4765, %v4778
        %v4780 = vcombine.low %v4724, %v4756
        %v4781 = vcombine.high %v4724, %v4756
        %v4782 = vcombine.low %v4731, %v4763
        %v4783 = vcombine.high %v4731, %v4763
        %v4784 = vcombine.low %v4740, %v4772
        %v4785 = vcombine.high %v4740, %v4772
        %v4786 = vcombine.low %v4747, %v4779
        %v4787 = vcombine.high %v4747, %v4779
        %v4788 = vcombine.low %v3852, %v3860
        %v4789 = vcombine.high %v3852, %v3860
        %v4791 = vunpack.c.l.s4 1983009808
        %v4792 = vunpack.c.0.s8 %v4791
        %v4793 = vlaneseq
        %v4794 = vshrl.u32 %v4793, 7
        %v4795 = vsub.s32 %v4792, %v4794
        %v4796 = vrot.slane %v4788, %v4795
        %v4798 = vunpack.c.l.s4 1983009808
        %v4799 = vunpack.c.0.s8 %v4798
        %v4800 = vlaneseq
        %v4801 = vshrl.u32 %v4800, 7
        %v4802 = vsub.s32 %v4799, %v4801
        %v4803 = vrot.slane %v4789, %v4802
        %v4804 = vcombine.low %v3856, %v3864
        %v4805 = vcombine.high %v3856, %v3864
        %v4807 = vunpack.c.l.s4 1983009808
        %v4808 = vunpack.c.0.s8 %v4807
        %v4809 = vlaneseq
        %v4810 = vshrl.u32 %v4809, 7
        %v4811 = vsub.s32 %v4808, %v4810
        %v4812 = vrot.slane %v4804, %v4811
        %v4814 = vunpack.c.l.s4 1983009808
        %v4815 = vunpack.c.0.s8 %v4814
        %v4816 = vlaneseq
        %v4817 = vshrl.u32 %v4816, 7
        %v4818 = vsub.s32 %v4815, %v4817
        %v4819 = vrot.slane %v4805, %v4818
        %v4820 = vcombine.low %v3876, %v3884
        %v4821 = vcombine.high %v3876, %v3884
        %v4823 = vunpack.c.l.s4 1983009808
        %v4824 = vunpack.c.0.s8 %v4823
        %v4825 = vlaneseq
        %v4826 = vshrl.u32 %v4825, 7
        %v4827 = vsub.s32 %v4824, %v4826
        %v4828 = vrot.slane %v4820, %v4827
        %v4830 = vunpack.c.l.s4 1983009808
        %v4831 = vunpack.c.0.s8 %v4830
        %v4832 = vlaneseq
        %v4833 = vshrl.u32 %v4832, 7
        %v4834 = vsub.s32 %v4831, %v4833
        %v4835 = vrot.slane %v4821, %v4834
        %v4836 = vcombine.low %v3880, %v3888
        %v4837 = vcombine.high %v3880, %v3888
        %v4839 = vunpack.c.l.s4 1983009808
        %v4840 = vunpack.c.0.s8 %v4839
        %v4841 = vlaneseq
        %v4842 = vshrl.u32 %v4841, 7
        %v4843 = vsub.s32 %v4840, %v4842
        %v4844 = vrot.slane %v4836, %v4843
        %v4846 = vunpack.c.l.s4 1983009808
        %v4847 = vunpack.c.0.s8 %v4846
        %v4848 = vlaneseq
        %v4849 = vshrl.u32 %v4848, 7
        %v4850 = vsub.s32 %v4847, %v4849
        %v4851 = vrot.slane %v4837, %v4850
        %v4852 = vcombine.low %v4796, %v4812
        %v4853 = vcombine.high %v4796, %v4812
        %v4855 = vunpack.c.l.s4 1934713408
        %v4856 = vunpack.c.0.s8 %v4855
        %v4857 = vlaneseq
        %v4858 = vshrl.u32 %v4857, 7
        %v4859 = vsub.s32 %v4856, %v4858
        %v4860 = vrot.slane %v4852, %v4859
        %v4862 = vunpack.c.l.s4 1934713408
        %v4863 = vunpack.c.0.s8 %v4862
        %v4864 = vlaneseq
        %v4865 = vshrl.u32 %v4864, 7
        %v4866 = vsub.s32 %v4863, %v4865
        %v4867 = vrot.slane %v4853, %v4866
        %v4868 = vcombine.low %v4803, %v4819
        %v4869 = vcombine.high %v4803, %v4819
        %v4871 = vunpack.c.l.s4 1934713408
        %v4872 = vunpack.c.0.s8 %v4871
        %v4873 = vlaneseq
        %v4874 = vshrl.u32 %v4873, 7
        %v4875 = vsub.s32 %v4872, %v4874
        %v4876 = vrot.slane %v4868, %v4875
        %v4878 = vunpack.c.l.s4 1934713408
        %v4879 = vunpack.c.0.s8 %v4878
        %v4880 = vlaneseq
        %v4881 = vshrl.u32 %v4880, 7
        %v4882 = vsub.s32 %v4879, %v4881
        %v4883 = vrot.slane %v4869, %v4882
        %v4884 = vcombine.low %v4828, %v4844
        %v4885 = vcombine.high %v4828, %v4844
        %v4887 = vunpack.c.l.s4 1934713408
        %v4888 = vunpack.c.0.s8 %v4887
        %v4889 = vlaneseq
        %v4890 = vshrl.u32 %v4889, 7
        %v4891 = vsub.s32 %v4888, %v4890
        %v4892 = vrot.slane %v4884, %v4891
        %v4894 = vunpack.c.l.s4 1934713408
        %v4895 = vunpack.c.0.s8 %v4894
        %v4896 = vlaneseq
        %v4897 = vshrl.u32 %v4896, 7
        %v4898 = vsub.s32 %v4895, %v4897
        %v4899 = vrot.slane %v4885, %v4898
        %v4900 = vcombine.low %v4835, %v4851
        %v4901 = vcombine.high %v4835, %v4851
        %v4903 = vunpack.c.l.s4 1934713408
        %v4904 = vunpack.c.0.s8 %v4903
        %v4905 = vlaneseq
        %v4906 = vshrl.u32 %v4905, 7
        %v4907 = vsub.s32 %v4904, %v4906
        %v4908 = vrot.slane %v4900, %v4907
        %v4910 = vunpack.c.l.s4 1934713408
        %v4911 = vunpack.c.0.s8 %v4910
        %v4912 = vlaneseq
        %v4913 = vshrl.u32 %v4912, 7
        %v4914 = vsub.s32 %v4911, %v4913
        %v4915 = vrot.slane %v4901, %v4914
        %v4916 = vcombine.low %v4860, %v4892
        %v4917 = vcombine.high %v4860, %v4892
        %v4918 = vcombine.low %v4867, %v4899
        %v4919 = vcombine.high %v4867, %v4899
        %v4920 = vcombine.low %v4876, %v4908
        %v4921 = vcombine.high %v4876, %v4908
        %v4922 = vcombine.low %v4883, %v4915
        %v4923 = vcombine.high %v4883, %v4915
        %v4924 = vcombine.low %v3900, %v3908
        %v4925 = vcombine.high %v3900, %v3908
        %v4927 = vunpack.c.l.s4 1983009808
        %v4928 = vunpack.c.0.s8 %v4927
        %v4929 = vlaneseq
        %v4930 = vshrl.u32 %v4929, 7
        %v4931 = vsub.s32 %v4928, %v4930
        %v4932 = vrot.slane %v4924, %v4931
        %v4934 = vunpack.c.l.s4 1983009808
        %v4935 = vunpack.c.0.s8 %v4934
        %v4936 = vlaneseq
        %v4937 = vshrl.u32 %v4936, 7
        %v4938 = vsub.s32 %v4935, %v4937
        %v4939 = vrot.slane %v4925, %v4938
        %v4940 = vcombine.low %v3904, %v3912
        %v4941 = vcombine.high %v3904, %v3912
        %v4943 = vunpack.c.l.s4 1983009808
        %v4944 = vunpack.c.0.s8 %v4943
        %v4945 = vlaneseq
        %v4946 = vshrl.u32 %v4945, 7
        %v4947 = vsub.s32 %v4944, %v4946
        %v4948 = vrot.slane %v4940, %v4947
        %v4950 = vunpack.c.l.s4 1983009808
        %v4951 = vunpack.c.0.s8 %v4950
        %v4952 = vlaneseq
        %v4953 = vshrl.u32 %v4952, 7
        %v4954 = vsub.s32 %v4951, %v4953
        %v4955 = vrot.slane %v4941, %v4954
        %v4956 = vcombine.low %v3929, %v3939
        %v4957 = vcombine.high %v3929, %v3939
        %v4959 = vunpack.c.l.s4 1983009808
        %v4960 = vunpack.c.0.s8 %v4959
        %v4961 = vlaneseq
        %v4962 = vshrl.u32 %v4961, 7
        %v4963 = vsub.s32 %v4960, %v4962
        %v4964 = vrot.slane %v4956, %v4963
        %v4966 = vunpack.c.l.s4 1983009808
        %v4967 = vunpack.c.0.s8 %v4966
        %v4968 = vlaneseq
        %v4969 = vshrl.u32 %v4968, 7
        %v4970 = vsub.s32 %v4967, %v4969
        %v4971 = vrot.slane %v4957, %v4970
        %v4972 = vcombine.low %v3934, %v3944
        %v4973 = vcombine.high %v3934, %v3944
        %v4975 = vunpack.c.l.s4 1983009808
        %v4976 = vunpack.c.0.s8 %v4975
        %v4977 = vlaneseq
        %v4978 = vshrl.u32 %v4977, 7
        %v4979 = vsub.s32 %v4976, %v4978
        %v4980 = vrot.slane %v4972, %v4979
        %v4982 = vunpack.c.l.s4 1983009808
        %v4983 = vunpack.c.0.s8 %v4982
        %v4984 = vlaneseq
        %v4985 = vshrl.u32 %v4984, 7
        %v4986 = vsub.s32 %v4983, %v4985
        %v4987 = vrot.slane %v4973, %v4986
        %v4988 = vcombine.low %v4932, %v4948
        %v4989 = vcombine.high %v4932, %v4948
        %v4991 = vunpack.c.l.s4 1934713408
        %v4992 = vunpack.c.0.s8 %v4991
        %v4993 = vlaneseq
        %v4994 = vshrl.u32 %v4993, 7
        %v4995 = vsub.s32 %v4992, %v4994
        %v4996 = vrot.slane %v4988, %v4995
        %v4998 = vunpack.c.l.s4 1934713408
        %v4999 = vunpack.c.0.s8 %v4998
        %v5000 = vlaneseq
        %v5001 = vshrl.u32 %v5000, 7
        %v5002 = vsub.s32 %v4999, %v5001
        %v5003 = vrot.slane %v4989, %v5002
        %v5004 = vcombine.low %v4939, %v4955
        %v5005 = vcombine.high %v4939, %v4955
        %v5007 = vunpack.c.l.s4 1934713408
        %v5008 = vunpack.c.0.s8 %v5007
        %v5009 = vlaneseq
        %v5010 = vshrl.u32 %v5009, 7
        %v5011 = vsub.s32 %v5008, %v5010
        %v5012 = vrot.slane %v5004, %v5011
        %v5014 = vunpack.c.l.s4 1934713408
        %v5015 = vunpack.c.0.s8 %v5014
        %v5016 = vlaneseq
        %v5017 = vshrl.u32 %v5016, 7
        %v5018 = vsub.s32 %v5015, %v5017
        %v5019 = vrot.slane %v5005, %v5018
        %v5020 = vcombine.low %v4964, %v4980
        %v5021 = vcombine.high %v4964, %v4980
        %v5023 = vunpack.c.l.s4 1934713408
        %v5024 = vunpack.c.0.s8 %v5023
        %v5025 = vlaneseq
        %v5026 = vshrl.u32 %v5025, 7
        %v5027 = vsub.s32 %v5024, %v5026
        %v5028 = vrot.slane %v5020, %v5027
        %v5030 = vunpack.c.l.s4 1934713408
        %v5031 = vunpack.c.0.s8 %v5030
        %v5032 = vlaneseq
        %v5033 = vshrl.u32 %v5032, 7
        %v5034 = vsub.s32 %v5031, %v5033
        %v5035 = vrot.slane %v5021, %v5034
        %v5036 = vcombine.low %v4971, %v4987
        %v5037 = vcombine.high %v4971, %v4987
        %v5039 = vunpack.c.l.s4 1934713408
        %v5040 = vunpack.c.0.s8 %v5039
        %v5041 = vlaneseq
        %v5042 = vshrl.u32 %v5041, 7
        %v5043 = vsub.s32 %v5040, %v5042
        %v5044 = vrot.slane %v5036, %v5043
        %v5046 = vunpack.c.l.s4 1934713408
        %v5047 = vunpack.c.0.s8 %v5046
        %v5048 = vlaneseq
        %v5049 = vshrl.u32 %v5048, 7
        %v5050 = vsub.s32 %v5047, %v5049
        %v5051 = vrot.slane %v5037, %v5050
        %v5052 = vcombine.low %v4996, %v5028
        %v5053 = vcombine.high %v4996, %v5028
        %v5054 = vcombine.low %v5003, %v5035
        %v5055 = vcombine.high %v5003, %v5035
        %v5056 = vcombine.low %v5012, %v5044
        %v5057 = vcombine.high %v5012, %v5044
        %v5058 = vcombine.low %v5019, %v5051
        %v5059 = vcombine.high %v5019, %v5051
        %v5060 = vcombine.low %v3956, %v3964
        %v5061 = vcombine.high %v3956, %v3964
        %v5063 = vunpack.c.l.s4 1983009808
        %v5064 = vunpack.c.0.s8 %v5063
        %v5065 = vlaneseq
        %v5066 = vshrl.u32 %v5065, 7
        %v5067 = vsub.s32 %v5064, %v5066
        %v5068 = vrot.slane %v5060, %v5067
        %v5070 = vunpack.c.l.s4 1983009808
        %v5071 = vunpack.c.0.s8 %v5070
        %v5072 = vlaneseq
        %v5073 = vshrl.u32 %v5072, 7
        %v5074 = vsub.s32 %v5071, %v5073
        %v5075 = vrot.slane %v5061, %v5074
        %v5076 = vcombine.low %v3960, %v3968
        %v5077 = vcombine.high %v3960, %v3968
        %v5079 = vunpack.c.l.s4 1983009808
        %v5080 = vunpack.c.0.s8 %v5079
        %v5081 = vlaneseq
        %v5082 = vshrl.u32 %v5081, 7
        %v5083 = vsub.s32 %v5080, %v5082
        %v5084 = vrot.slane %v5076, %v5083
        %v5086 = vunpack.c.l.s4 1983009808
        %v5087 = vunpack.c.0.s8 %v5086
        %v5088 = vlaneseq
        %v5089 = vshrl.u32 %v5088, 7
        %v5090 = vsub.s32 %v5087, %v5089
        %v5091 = vrot.slane %v5077, %v5090
        %v5092 = vcombine.low %v3980, %v3988
        %v5093 = vcombine.high %v3980, %v3988
        %v5095 = vunpack.c.l.s4 1983009808
        %v5096 = vunpack.c.0.s8 %v5095
        %v5097 = vlaneseq
        %v5098 = vshrl.u32 %v5097, 7
        %v5099 = vsub.s32 %v5096, %v5098
        %v5100 = vrot.slane %v5092, %v5099
        %v5102 = vunpack.c.l.s4 1983009808
        %v5103 = vunpack.c.0.s8 %v5102
        %v5104 = vlaneseq
        %v5105 = vshrl.u32 %v5104, 7
        %v5106 = vsub.s32 %v5103, %v5105
        %v5107 = vrot.slane %v5093, %v5106
        %v5108 = vcombine.low %v3984, %v3992
        %v5109 = vcombine.high %v3984, %v3992
        %v5111 = vunpack.c.l.s4 1983009808
        %v5112 = vunpack.c.0.s8 %v5111
        %v5113 = vlaneseq
        %v5114 = vshrl.u32 %v5113, 7
        %v5115 = vsub.s32 %v5112, %v5114
        %v5116 = vrot.slane %v5108, %v5115
        %v5118 = vunpack.c.l.s4 1983009808
        %v5119 = vunpack.c.0.s8 %v5118
        %v5120 = vlaneseq
        %v5121 = vshrl.u32 %v5120, 7
        %v5122 = vsub.s32 %v5119, %v5121
        %v5123 = vrot.slane %v5109, %v5122
        %v5124 = vcombine.low %v5068, %v5084
        %v5125 = vcombine.high %v5068, %v5084
        %v5127 = vunpack.c.l.s4 1934713408
        %v5128 = vunpack.c.0.s8 %v5127
        %v5129 = vlaneseq
        %v5130 = vshrl.u32 %v5129, 7
        %v5131 = vsub.s32 %v5128, %v5130
        %v5132 = vrot.slane %v5124, %v5131
        %v5134 = vunpack.c.l.s4 1934713408
        %v5135 = vunpack.c.0.s8 %v5134
        %v5136 = vlaneseq
        %v5137 = vshrl.u32 %v5136, 7
        %v5138 = vsub.s32 %v5135, %v5137
        %v5139 = vrot.slane %v5125, %v5138
        %v5140 = vcombine.low %v5075, %v5091
        %v5141 = vcombine.high %v5075, %v5091
        %v5143 = vunpack.c.l.s4 1934713408
        %v5144 = vunpack.c.0.s8 %v5143
        %v5145 = vlaneseq
        %v5146 = vshrl.u32 %v5145, 7
        %v5147 = vsub.s32 %v5144, %v5146
        %v5148 = vrot.slane %v5140, %v5147
        %v5150 = vunpack.c.l.s4 1934713408
        %v5151 = vunpack.c.0.s8 %v5150
        %v5152 = vlaneseq
        %v5153 = vshrl.u32 %v5152, 7
        %v5154 = vsub.s32 %v5151, %v5153
        %v5155 = vrot.slane %v5141, %v5154
        %v5156 = vcombine.low %v5100, %v5116
        %v5157 = vcombine.high %v5100, %v5116
        %v5159 = vunpack.c.l.s4 1934713408
        %v5160 = vunpack.c.0.s8 %v5159
        %v5161 = vlaneseq
        %v5162 = vshrl.u32 %v5161, 7
        %v5163 = vsub.s32 %v5160, %v5162
        %v5164 = vrot.slane %v5156, %v5163
        %v5166 = vunpack.c.l.s4 1934713408
        %v5167 = vunpack.c.0.s8 %v5166
        %v5168 = vlaneseq
        %v5169 = vshrl.u32 %v5168, 7
        %v5170 = vsub.s32 %v5167, %v5169
        %v5171 = vrot.slane %v5157, %v5170
        %v5172 = vcombine.low %v5107, %v5123
        %v5173 = vcombine.high %v5107, %v5123
        %v5175 = vunpack.c.l.s4 1934713408
        %v5176 = vunpack.c.0.s8 %v5175
        %v5177 = vlaneseq
        %v5178 = vshrl.u32 %v5177, 7
        %v5179 = vsub.s32 %v5176, %v5178
        %v5180 = vrot.slane %v5172, %v5179
        %v5182 = vunpack.c.l.s4 1934713408
        %v5183 = vunpack.c.0.s8 %v5182
        %v5184 = vlaneseq
        %v5185 = vshrl.u32 %v5184, 7
        %v5186 = vsub.s32 %v5183, %v5185
        %v5187 = vrot.slane %v5173, %v5186
        %v5188 = vcombine.low %v5132, %v5164
        %v5189 = vcombine.high %v5132, %v5164
        %v5190 = vcombine.low %v5139, %v5171
        %v5191 = vcombine.high %v5139, %v5171
        %v5192 = vcombine.low %v5148, %v5180
        %v5193 = vcombine.high %v5148, %v5180
        %v5194 = vcombine.low %v5155, %v5187
        %v5195 = vcombine.high %v5155, %v5187
        %v5196 = vcombine.low %v4004, %v4012
        %v5197 = vcombine.high %v4004, %v4012
        %v5199 = vunpack.c.l.s4 1983009808
        %v5200 = vunpack.c.0.s8 %v5199
        %v5201 = vlaneseq
        %v5202 = vshrl.u32 %v5201, 7
        %v5203 = vsub.s32 %v5200, %v5202
        %v5204 = vrot.slane %v5196, %v5203
        %v5206 = vunpack.c.l.s4 1983009808
        %v5207 = vunpack.c.0.s8 %v5206
        %v5208 = vlaneseq
        %v5209 = vshrl.u32 %v5208, 7
        %v5210 = vsub.s32 %v5207, %v5209
        %v5211 = vrot.slane %v5197, %v5210
        %v5212 = vcombine.low %v4008, %v4016
        %v5213 = vcombine.high %v4008, %v4016
        %v5215 = vunpack.c.l.s4 1983009808
        %v5216 = vunpack.c.0.s8 %v5215
        %v5217 = vlaneseq
        %v5218 = vshrl.u32 %v5217, 7
        %v5219 = vsub.s32 %v5216, %v5218
        %v5220 = vrot.slane %v5212, %v5219
        %v5222 = vunpack.c.l.s4 1983009808
        %v5223 = vunpack.c.0.s8 %v5222
        %v5224 = vlaneseq
        %v5225 = vshrl.u32 %v5224, 7
        %v5226 = vsub.s32 %v5223, %v5225
        %v5227 = vrot.slane %v5213, %v5226
        %v5228 = vcombine.low %v4028, %v4036
        %v5229 = vcombine.high %v4028, %v4036
        %v5231 = vunpack.c.l.s4 1983009808
        %v5232 = vunpack.c.0.s8 %v5231
        %v5233 = vlaneseq
        %v5234 = vshrl.u32 %v5233, 7
        %v5235 = vsub.s32 %v5232, %v5234
        %v5236 = vrot.slane %v5228, %v5235
        %v5238 = vunpack.c.l.s4 1983009808
        %v5239 = vunpack.c.0.s8 %v5238
        %v5240 = vlaneseq
        %v5241 = vshrl.u32 %v5240, 7
        %v5242 = vsub.s32 %v5239, %v5241
        %v5243 = vrot.slane %v5229, %v5242
        %v5244 = vcombine.low %v4032, %v4040
        %v5245 = vcombine.high %v4032, %v4040
        %v5247 = vunpack.c.l.s4 1983009808
        %v5248 = vunpack.c.0.s8 %v5247
        %v5249 = vlaneseq
        %v5250 = vshrl.u32 %v5249, 7
        %v5251 = vsub.s32 %v5248, %v5250
        %v5252 = vrot.slane %v5244, %v5251
        %v5254 = vunpack.c.l.s4 1983009808
        %v5255 = vunpack.c.0.s8 %v5254
        %v5256 = vlaneseq
        %v5257 = vshrl.u32 %v5256, 7
        %v5258 = vsub.s32 %v5255, %v5257
        %v5259 = vrot.slane %v5245, %v5258
        %v5260 = vcombine.low %v5204, %v5220
        %v5261 = vcombine.high %v5204, %v5220
        %v5263 = vunpack.c.l.s4 1934713408
        %v5264 = vunpack.c.0.s8 %v5263
        %v5265 = vlaneseq
        %v5266 = vshrl.u32 %v5265, 7
        %v5267 = vsub.s32 %v5264, %v5266
        %v5268 = vrot.slane %v5260, %v5267
        %v5270 = vunpack.c.l.s4 1934713408
        %v5271 = vunpack.c.0.s8 %v5270
        %v5272 = vlaneseq
        %v5273 = vshrl.u32 %v5272, 7
        %v5274 = vsub.s32 %v5271, %v5273
        %v5275 = vrot.slane %v5261, %v5274
        %v5276 = vcombine.low %v5211, %v5227
        %v5277 = vcombine.high %v5211, %v5227
        %v5279 = vunpack.c.l.s4 1934713408
        %v5280 = vunpack.c.0.s8 %v5279
        %v5281 = vlaneseq
        %v5282 = vshrl.u32 %v5281, 7
        %v5283 = vsub.s32 %v5280, %v5282
        %v5284 = vrot.slane %v5276, %v5283
        %v5286 = vunpack.c.l.s4 1934713408
        %v5287 = vunpack.c.0.s8 %v5286
        %v5288 = vlaneseq
        %v5289 = vshrl.u32 %v5288, 7
        %v5290 = vsub.s32 %v5287, %v5289
        %v5291 = vrot.slane %v5277, %v5290
        %v5292 = vcombine.low %v5236, %v5252
        %v5293 = vcombine.high %v5236, %v5252
        %v5295 = vunpack.c.l.s4 1934713408
        %v5296 = vunpack.c.0.s8 %v5295
        %v5297 = vlaneseq
        %v5298 = vshrl.u32 %v5297, 7
        %v5299 = vsub.s32 %v5296, %v5298
        %v5300 = vrot.slane %v5292, %v5299
        %v5302 = vunpack.c.l.s4 1934713408
        %v5303 = vunpack.c.0.s8 %v5302
        %v5304 = vlaneseq
        %v5305 = vshrl.u32 %v5304, 7
        %v5306 = vsub.s32 %v5303, %v5305
        %v5307 = vrot.slane %v5293, %v5306
        %v5308 = vcombine.low %v5243, %v5259
        %v5309 = vcombine.high %v5243, %v5259
        %v5311 = vunpack.c.l.s4 1934713408
        %v5312 = vunpack.c.0.s8 %v5311
        %v5313 = vlaneseq
        %v5314 = vshrl.u32 %v5313, 7
        %v5315 = vsub.s32 %v5312, %v5314
        %v5316 = vrot.slane %v5308, %v5315
        %v5318 = vunpack.c.l.s4 1934713408
        %v5319 = vunpack.c.0.s8 %v5318
        %v5320 = vlaneseq
        %v5321 = vshrl.u32 %v5320, 7
        %v5322 = vsub.s32 %v5319, %v5321
        %v5323 = vrot.slane %v5309, %v5322
        %v5324 = vcombine.low %v5268, %v5300
        %v5325 = vcombine.high %v5268, %v5300
        %v5326 = vcombine.low %v5275, %v5307
        %v5327 = vcombine.high %v5275, %v5307
        %v5328 = vcombine.low %v5284, %v5316
        %v5329 = vcombine.high %v5284, %v5316
        %v5330 = vcombine.low %v5291, %v5323
        %v5331 = vcombine.high %v5291, %v5323
        %v5332 = vcombine.low %v4053, %v4063
        %v5333 = vcombine.high %v4053, %v4063
        %v5335 = vunpack.c.l.s4 1983009808
        %v5336 = vunpack.c.0.s8 %v5335
        %v5337 = vlaneseq
        %v5338 = vshrl.u32 %v5337, 7
        %v5339 = vsub.s32 %v5336, %v5338
        %v5340 = vrot.slane %v5332, %v5339
        %v5342 = vunpack.c.l.s4 1983009808
        %v5343 = vunpack.c.0.s8 %v5342
        %v5344 = vlaneseq
        %v5345 = vshrl.u32 %v5344, 7
        %v5346 = vsub.s32 %v5343, %v5345
        %v5347 = vrot.slane %v5333, %v5346
        %v5348 = vcombine.low %v4058, %v4068
        %v5349 = vcombine.high %v4058, %v4068
        %v5351 = vunpack.c.l.s4 1983009808
        %v5352 = vunpack.c.0.s8 %v5351
        %v5353 = vlaneseq
        %v5354 = vshrl.u32 %v5353, 7
        %v5355 = vsub.s32 %v5352, %v5354
        %v5356 = vrot.slane %v5348, %v5355
        %v5358 = vunpack.c.l.s4 1983009808
        %v5359 = vunpack.c.0.s8 %v5358
        %v5360 = vlaneseq
        %v5361 = vshrl.u32 %v5360, 7
        %v5362 = vsub.s32 %v5359, %v5361
        %v5363 = vrot.slane %v5349, %v5362
        %v5364 = vcombine.low %v4080, %v4088
        %v5365 = vcombine.high %v4080, %v4088
        %v5367 = vunpack.c.l.s4 1983009808
        %v5368 = vunpack.c.0.s8 %v5367
        %v5369 = vlaneseq
        %v5370 = vshrl.u32 %v5369, 7
        %v5371 = vsub.s32 %v5368, %v5370
        %v5372 = vrot.slane %v5364, %v5371
        %v5374 = vunpack.c.l.s4 1983009808
        %v5375 = vunpack.c.0.s8 %v5374
        %v5376 = vlaneseq
        %v5377 = vshrl.u32 %v5376, 7
        %v5378 = vsub.s32 %v5375, %v5377
        %v5379 = vrot.slane %v5365, %v5378
        %v5380 = vcombine.low %v4084, %v4092
        %v5381 = vcombine.high %v4084, %v4092
        %v5383 = vunpack.c.l.s4 1983009808
        %v5384 = vunpack.c.0.s8 %v5383
        %v5385 = vlaneseq
        %v5386 = vshrl.u32 %v5385, 7
        %v5387 = vsub.s32 %v5384, %v5386
        %v5388 = vrot.slane %v5380, %v5387
        %v5390 = vunpack.c.l.s4 1983009808
        %v5391 = vunpack.c.0.s8 %v5390
        %v5392 = vlaneseq
        %v5393 = vshrl.u32 %v5392, 7
        %v5394 = vsub.s32 %v5391, %v5393
        %v5395 = vrot.slane %v5381, %v5394
        %v5396 = vcombine.low %v5340, %v5356
        %v5397 = vcombine.high %v5340, %v5356
        %v5399 = vunpack.c.l.s4 1934713408
        %v5400 = vunpack.c.0.s8 %v5399
        %v5401 = vlaneseq
        %v5402 = vshrl.u32 %v5401, 7
        %v5403 = vsub.s32 %v5400, %v5402
        %v5404 = vrot.slane %v5396, %v5403
        %v5406 = vunpack.c.l.s4 1934713408
        %v5407 = vunpack.c.0.s8 %v5406
        %v5408 = vlaneseq
        %v5409 = vshrl.u32 %v5408, 7
        %v5410 = vsub.s32 %v5407, %v5409
        %v5411 = vrot.slane %v5397, %v5410
        %v5412 = vcombine.low %v5347, %v5363
        %v5413 = vcombine.high %v5347, %v5363
        %v5415 = vunpack.c.l.s4 1934713408
        %v5416 = vunpack.c.0.s8 %v5415
        %v5417 = vlaneseq
        %v5418 = vshrl.u32 %v5417, 7
        %v5419 = vsub.s32 %v5416, %v5418
        %v5420 = vrot.slane %v5412, %v5419
        %v5422 = vunpack.c.l.s4 1934713408
        %v5423 = vunpack.c.0.s8 %v5422
        %v5424 = vlaneseq
        %v5425 = vshrl.u32 %v5424, 7
        %v5426 = vsub.s32 %v5423, %v5425
        %v5427 = vrot.slane %v5413, %v5426
        %v5428 = vcombine.low %v5372, %v5388
        %v5429 = vcombine.high %v5372, %v5388
        %v5431 = vunpack.c.l.s4 1934713408
        %v5432 = vunpack.c.0.s8 %v5431
        %v5433 = vlaneseq
        %v5434 = vshrl.u32 %v5433, 7
        %v5435 = vsub.s32 %v5432, %v5434
        %v5436 = vrot.slane %v5428, %v5435
        %v5438 = vunpack.c.l.s4 1934713408
        %v5439 = vunpack.c.0.s8 %v5438
        %v5440 = vlaneseq
        %v5441 = vshrl.u32 %v5440, 7
        %v5442 = vsub.s32 %v5439, %v5441
        %v5443 = vrot.slane %v5429, %v5442
        %v5444 = vcombine.low %v5379, %v5395
        %v5445 = vcombine.high %v5379, %v5395
        %v5447 = vunpack.c.l.s4 1934713408
        %v5448 = vunpack.c.0.s8 %v5447
        %v5449 = vlaneseq
        %v5450 = vshrl.u32 %v5449, 7
        %v5451 = vsub.s32 %v5448, %v5450
        %v5452 = vrot.slane %v5444, %v5451
        %v5454 = vunpack.c.l.s4 1934713408
        %v5455 = vunpack.c.0.s8 %v5454
        %v5456 = vlaneseq
        %v5457 = vshrl.u32 %v5456, 7
        %v5458 = vsub.s32 %v5455, %v5457
        %v5459 = vrot.slane %v5445, %v5458
        %v5460 = vcombine.low %v5404, %v5436
        %v5461 = vcombine.high %v5404, %v5436
        %v5462 = vcombine.low %v5411, %v5443
        %v5463 = vcombine.high %v5411, %v5443
        %v5464 = vcombine.low %v5420, %v5452
        %v5465 = vcombine.high %v5420, %v5452
        %v5466 = vcombine.low %v5427, %v5459
        %v5467 = vcombine.high %v5427, %v5459
        %v5468 = vcombine.low %v4104, %v4112
        %v5469 = vcombine.high %v4104, %v4112
        %v5471 = vunpack.c.l.s4 1983009808
        %v5472 = vunpack.c.0.s8 %v5471
        %v5473 = vlaneseq
        %v5474 = vshrl.u32 %v5473, 7
        %v5475 = vsub.s32 %v5472, %v5474
        %v5476 = vrot.slane %v5468, %v5475
        %v5478 = vunpack.c.l.s4 1983009808
        %v5479 = vunpack.c.0.s8 %v5478
        %v5480 = vlaneseq
        %v5481 = vshrl.u32 %v5480, 7
        %v5482 = vsub.s32 %v5479, %v5481
        %v5483 = vrot.slane %v5469, %v5482
        %v5484 = vcombine.low %v4108, %v4116
        %v5485 = vcombine.high %v4108, %v4116
        %v5487 = vunpack.c.l.s4 1983009808
        %v5488 = vunpack.c.0.s8 %v5487
        %v5489 = vlaneseq
        %v5490 = vshrl.u32 %v5489, 7
        %v5491 = vsub.s32 %v5488, %v5490
        %v5492 = vrot.slane %v5484, %v5491
        %v5494 = vunpack.c.l.s4 1983009808
        %v5495 = vunpack.c.0.s8 %v5494
        %v5496 = vlaneseq
        %v5497 = vshrl.u32 %v5496, 7
        %v5498 = vsub.s32 %v5495, %v5497
        %v5499 = vrot.slane %v5485, %v5498
        %v5500 = vcombine.low %v4128, %v4136
        %v5501 = vcombine.high %v4128, %v4136
        %v5503 = vunpack.c.l.s4 1983009808
        %v5504 = vunpack.c.0.s8 %v5503
        %v5505 = vlaneseq
        %v5506 = vshrl.u32 %v5505, 7
        %v5507 = vsub.s32 %v5504, %v5506
        %v5508 = vrot.slane %v5500, %v5507
        %v5510 = vunpack.c.l.s4 1983009808
        %v5511 = vunpack.c.0.s8 %v5510
        %v5512 = vlaneseq
        %v5513 = vshrl.u32 %v5512, 7
        %v5514 = vsub.s32 %v5511, %v5513
        %v5515 = vrot.slane %v5501, %v5514
        %v5516 = vcombine.low %v4132, %v4140
        %v5517 = vcombine.high %v4132, %v4140
        %v5519 = vunpack.c.l.s4 1983009808
        %v5520 = vunpack.c.0.s8 %v5519
        %v5521 = vlaneseq
        %v5522 = vshrl.u32 %v5521, 7
        %v5523 = vsub.s32 %v5520, %v5522
        %v5524 = vrot.slane %v5516, %v5523
        %v5526 = vunpack.c.l.s4 1983009808
        %v5527 = vunpack.c.0.s8 %v5526
        %v5528 = vlaneseq
        %v5529 = vshrl.u32 %v5528, 7
        %v5530 = vsub.s32 %v5527, %v5529
        %v5531 = vrot.slane %v5517, %v5530
        %v5532 = vcombine.low %v5476, %v5492
        %v5533 = vcombine.high %v5476, %v5492
        %v5535 = vunpack.c.l.s4 1934713408
        %v5536 = vunpack.c.0.s8 %v5535
        %v5537 = vlaneseq
        %v5538 = vshrl.u32 %v5537, 7
        %v5539 = vsub.s32 %v5536, %v5538
        %v5540 = vrot.slane %v5532, %v5539
        %v5542 = vunpack.c.l.s4 1934713408
        %v5543 = vunpack.c.0.s8 %v5542
        %v5544 = vlaneseq
        %v5545 = vshrl.u32 %v5544, 7
        %v5546 = vsub.s32 %v5543, %v5545
        %v5547 = vrot.slane %v5533, %v5546
        %v5548 = vcombine.low %v5483, %v5499
        %v5549 = vcombine.high %v5483, %v5499
        %v5551 = vunpack.c.l.s4 1934713408
        %v5552 = vunpack.c.0.s8 %v5551
        %v5553 = vlaneseq
        %v5554 = vshrl.u32 %v5553, 7
        %v5555 = vsub.s32 %v5552, %v5554
        %v5556 = vrot.slane %v5548, %v5555
        %v5558 = vunpack.c.l.s4 1934713408
        %v5559 = vunpack.c.0.s8 %v5558
        %v5560 = vlaneseq
        %v5561 = vshrl.u32 %v5560, 7
        %v5562 = vsub.s32 %v5559, %v5561
        %v5563 = vrot.slane %v5549, %v5562
        %v5564 = vcombine.low %v5508, %v5524
        %v5565 = vcombine.high %v5508, %v5524
        %v5567 = vunpack.c.l.s4 1934713408
        %v5568 = vunpack.c.0.s8 %v5567
        %v5569 = vlaneseq
        %v5570 = vshrl.u32 %v5569, 7
        %v5571 = vsub.s32 %v5568, %v5570
        %v5572 = vrot.slane %v5564, %v5571
        %v5574 = vunpack.c.l.s4 1934713408
        %v5575 = vunpack.c.0.s8 %v5574
        %v5576 = vlaneseq
        %v5577 = vshrl.u32 %v5576, 7
        %v5578 = vsub.s32 %v5575, %v5577
        %v5579 = vrot.slane %v5565, %v5578
        %v5580 = vcombine.low %v5515, %v5531
        %v5581 = vcombine.high %v5515, %v5531
        %v5583 = vunpack.c.l.s4 1934713408
        %v5584 = vunpack.c.0.s8 %v5583
        %v5585 = vlaneseq
        %v5586 = vshrl.u32 %v5585, 7
        %v5587 = vsub.s32 %v5584, %v5586
        %v5588 = vrot.slane %v5580, %v5587
        %v5590 = vunpack.c.l.s4 1934713408
        %v5591 = vunpack.c.0.s8 %v5590
        %v5592 = vlaneseq
        %v5593 = vshrl.u32 %v5592, 7
        %v5594 = vsub.s32 %v5591, %v5593
        %v5595 = vrot.slane %v5581, %v5594
        %v5596 = vcombine.low %v5540, %v5572
        %v5597 = vcombine.high %v5540, %v5572
        %v5598 = vcombine.low %v5547, %v5579
        %v5599 = vcombine.high %v5547, %v5579
        %v5600 = vcombine.low %v5556, %v5588
        %v5601 = vcombine.high %v5556, %v5588
        %v5602 = vcombine.low %v5563, %v5595
        %v5603 = vcombine.high %v5563, %v5595
        %v5604 = vcombine.low %v4152, %v4160
        %v5605 = vcombine.high %v4152, %v4160
        %v5607 = vunpack.c.l.s4 1983009808
        %v5608 = vunpack.c.0.s8 %v5607
        %v5609 = vlaneseq
        %v5610 = vshrl.u32 %v5609, 7
        %v5611 = vsub.s32 %v5608, %v5610
        %v5612 = vrot.slane %v5604, %v5611
        %v5614 = vunpack.c.l.s4 1983009808
        %v5615 = vunpack.c.0.s8 %v5614
        %v5616 = vlaneseq
        %v5617 = vshrl.u32 %v5616, 7
        %v5618 = vsub.s32 %v5615, %v5617
        %v5619 = vrot.slane %v5605, %v5618
        %v5620 = vcombine.low %v4156, %v4164
        %v5621 = vcombine.high %v4156, %v4164
        %v5623 = vunpack.c.l.s4 1983009808
        %v5624 = vunpack.c.0.s8 %v5623
        %v5625 = vlaneseq
        %v5626 = vshrl.u32 %v5625, 7
        %v5627 = vsub.s32 %v5624, %v5626
        %v5628 = vrot.slane %v5620, %v5627
        %v5630 = vunpack.c.l.s4 1983009808
        %v5631 = vunpack.c.0.s8 %v5630
        %v5632 = vlaneseq
        %v5633 = vshrl.u32 %v5632, 7
        %v5634 = vsub.s32 %v5631, %v5633
        %v5635 = vrot.slane %v5621, %v5634
        %v5636 = vcombine.low %v4178, %v4188
        %v5637 = vcombine.high %v4178, %v4188
        %v5639 = vunpack.c.l.s4 1983009808
        %v5640 = vunpack.c.0.s8 %v5639
        %v5641 = vlaneseq
        %v5642 = vshrl.u32 %v5641, 7
        %v5643 = vsub.s32 %v5640, %v5642
        %v5644 = vrot.slane %v5636, %v5643
        %v5646 = vunpack.c.l.s4 1983009808
        %v5647 = vunpack.c.0.s8 %v5646
        %v5648 = vlaneseq
        %v5649 = vshrl.u32 %v5648, 7
        %v5650 = vsub.s32 %v5647, %v5649
        %v5651 = vrot.slane %v5637, %v5650
        %v5652 = vcombine.low %v4183, %v4193
        %v5653 = vcombine.high %v4183, %v4193
        %v5655 = vunpack.c.l.s4 1983009808
        %v5656 = vunpack.c.0.s8 %v5655
        %v5657 = vlaneseq
        %v5658 = vshrl.u32 %v5657, 7
        %v5659 = vsub.s32 %v5656, %v5658
        %v5660 = vrot.slane %v5652, %v5659
        %v5662 = vunpack.c.l.s4 1983009808
        %v5663 = vunpack.c.0.s8 %v5662
        %v5664 = vlaneseq
        %v5665 = vshrl.u32 %v5664, 7
        %v5666 = vsub.s32 %v5663, %v5665
        %v5667 = vrot.slane %v5653, %v5666
        %v5668 = vcombine.low %v5612, %v5628
        %v5669 = vcombine.high %v5612, %v5628
        %v5671 = vunpack.c.l.s4 1934713408
        %v5672 = vunpack.c.0.s8 %v5671
        %v5673 = vlaneseq
        %v5674 = vshrl.u32 %v5673, 7
        %v5675 = vsub.s32 %v5672, %v5674
        %v5676 = vrot.slane %v5668, %v5675
        %v5678 = vunpack.c.l.s4 1934713408
        %v5679 = vunpack.c.0.s8 %v5678
        %v5680 = vlaneseq
        %v5681 = vshrl.u32 %v5680, 7
        %v5682 = vsub.s32 %v5679, %v5681
        %v5683 = vrot.slane %v5669, %v5682
        %v5684 = vcombine.low %v5619, %v5635
        %v5685 = vcombine.high %v5619, %v5635
        %v5687 = vunpack.c.l.s4 1934713408
        %v5688 = vunpack.c.0.s8 %v5687
        %v5689 = vlaneseq
        %v5690 = vshrl.u32 %v5689, 7
        %v5691 = vsub.s32 %v5688, %v5690
        %v5692 = vrot.slane %v5684, %v5691
        %v5694 = vunpack.c.l.s4 1934713408
        %v5695 = vunpack.c.0.s8 %v5694
        %v5696 = vlaneseq
        %v5697 = vshrl.u32 %v5696, 7
        %v5698 = vsub.s32 %v5695, %v5697
        %v5699 = vrot.slane %v5685, %v5698
        %v5700 = vcombine.low %v5644, %v5660
        %v5701 = vcombine.high %v5644, %v5660
        %v5703 = vunpack.c.l.s4 1934713408
        %v5704 = vunpack.c.0.s8 %v5703
        %v5705 = vlaneseq
        %v5706 = vshrl.u32 %v5705, 7
        %v5707 = vsub.s32 %v5704, %v5706
        %v5708 = vrot.slane %v5700, %v5707
        %v5710 = vunpack.c.l.s4 1934713408
        %v5711 = vunpack.c.0.s8 %v5710
        %v5712 = vlaneseq
        %v5713 = vshrl.u32 %v5712, 7
        %v5714 = vsub.s32 %v5711, %v5713
        %v5715 = vrot.slane %v5701, %v5714
        %v5716 = vcombine.low %v5651, %v5667
        %v5717 = vcombine.high %v5651, %v5667
        %v5719 = vunpack.c.l.s4 1934713408
        %v5720 = vunpack.c.0.s8 %v5719
        %v5721 = vlaneseq
        %v5722 = vshrl.u32 %v5721, 7
        %v5723 = vsub.s32 %v5720, %v5722
        %v5724 = vrot.slane %v5716, %v5723
        %v5726 = vunpack.c.l.s4 1934713408
        %v5727 = vunpack.c.0.s8 %v5726
        %v5728 = vlaneseq
        %v5729 = vshrl.u32 %v5728, 7
        %v5730 = vsub.s32 %v5727, %v5729
        %v5731 = vrot.slane %v5717, %v5730
        %v5732 = vcombine.low %v5676, %v5708
        %v5733 = vcombine.high %v5676, %v5708
        %v5734 = vcombine.low %v5683, %v5715
        %v5735 = vcombine.high %v5683, %v5715
        %v5736 = vcombine.low %v5692, %v5724
        %v5737 = vcombine.high %v5692, %v5724
        %v5738 = vcombine.low %v5699, %v5731
        %v5739 = vcombine.high %v5699, %v5731
        %v5740 = vcombine.low %v4437, %v4445
        %v5741 = vcombine.high %v4437, %v4445
        %v5743 = vunpack.c.l.s4 1983009808
        %v5744 = vunpack.c.0.s8 %v5743
        %v5745 = vlaneseq
        %v5746 = vshrl.u32 %v5745, 7
        %v5747 = vsub.s32 %v5744, %v5746
        %v5748 = vrot.slane %v5740, %v5747
        %v5750 = vunpack.c.l.s4 1983009808
        %v5751 = vunpack.c.0.s8 %v5750
        %v5752 = vlaneseq
        %v5753 = vshrl.u32 %v5752, 7
        %v5754 = vsub.s32 %v5751, %v5753
        %v5755 = vrot.slane %v5741, %v5754
        %v5756 = vcombine.low %v4441, %v4449
        %v5757 = vcombine.high %v4441, %v4449
        %v5759 = vunpack.c.l.s4 1983009808
        %v5760 = vunpack.c.0.s8 %v5759
        %v5761 = vlaneseq
        %v5762 = vshrl.u32 %v5761, 7
        %v5763 = vsub.s32 %v5760, %v5762
        %v5764 = vrot.slane %v5756, %v5763
        %v5766 = vunpack.c.l.s4 1983009808
        %v5767 = vunpack.c.0.s8 %v5766
        %v5768 = vlaneseq
        %v5769 = vshrl.u32 %v5768, 7
        %v5770 = vsub.s32 %v5767, %v5769
        %v5771 = vrot.slane %v5757, %v5770
        %v5772 = vcombine.low %v4453, %v4461
        %v5773 = vcombine.high %v4453, %v4461
        %v5775 = vunpack.c.l.s4 1983009808
        %v5776 = vunpack.c.0.s8 %v5775
        %v5777 = vlaneseq
        %v5778 = vshrl.u32 %v5777, 7
        %v5779 = vsub.s32 %v5776, %v5778
        %v5780 = vrot.slane %v5772, %v5779
        %v5782 = vunpack.c.l.s4 1983009808
        %v5783 = vunpack.c.0.s8 %v5782
        %v5784 = vlaneseq
        %v5785 = vshrl.u32 %v5784, 7
        %v5786 = vsub.s32 %v5783, %v5785
        %v5787 = vrot.slane %v5773, %v5786
        %v5788 = vcombine.low %v4457, %v4465
        %v5789 = vcombine.high %v4457, %v4465
        %v5791 = vunpack.c.l.s4 1983009808
        %v5792 = vunpack.c.0.s8 %v5791
        %v5793 = vlaneseq
        %v5794 = vshrl.u32 %v5793, 7
        %v5795 = vsub.s32 %v5792, %v5794
        %v5796 = vrot.slane %v5788, %v5795
        %v5798 = vunpack.c.l.s4 1983009808
        %v5799 = vunpack.c.0.s8 %v5798
        %v5800 = vlaneseq
        %v5801 = vshrl.u32 %v5800, 7
        %v5802 = vsub.s32 %v5799, %v5801
        %v5803 = vrot.slane %v5789, %v5802
        %v5804 = vcombine.low %v5748, %v5764
        %v5805 = vcombine.high %v5748, %v5764
        %v5807 = vunpack.c.l.s4 1934713408
        %v5808 = vunpack.c.0.s8 %v5807
        %v5809 = vlaneseq
        %v5810 = vshrl.u32 %v5809, 7
        %v5811 = vsub.s32 %v5808, %v5810
        %v5812 = vrot.slane %v5804, %v5811
        %v5814 = vunpack.c.l.s4 1934713408
        %v5815 = vunpack.c.0.s8 %v5814
        %v5816 = vlaneseq
        %v5817 = vshrl.u32 %v5816, 7
        %v5818 = vsub.s32 %v5815, %v5817
        %v5819 = vrot.slane %v5805, %v5818
        %v5820 = vcombine.low %v5755, %v5771
        %v5821 = vcombine.high %v5755, %v5771
        %v5823 = vunpack.c.l.s4 1934713408
        %v5824 = vunpack.c.0.s8 %v5823
        %v5825 = vlaneseq
        %v5826 = vshrl.u32 %v5825, 7
        %v5827 = vsub.s32 %v5824, %v5826
        %v5828 = vrot.slane %v5820, %v5827
        %v5830 = vunpack.c.l.s4 1934713408
        %v5831 = vunpack.c.0.s8 %v5830
        %v5832 = vlaneseq
        %v5833 = vshrl.u32 %v5832, 7
        %v5834 = vsub.s32 %v5831, %v5833
        %v5835 = vrot.slane %v5821, %v5834
        %v5836 = vcombine.low %v5780, %v5796
        %v5837 = vcombine.high %v5780, %v5796
        %v5839 = vunpack.c.l.s4 1934713408
        %v5840 = vunpack.c.0.s8 %v5839
        %v5841 = vlaneseq
        %v5842 = vshrl.u32 %v5841, 7
        %v5843 = vsub.s32 %v5840, %v5842
        %v5844 = vrot.slane %v5836, %v5843
        %v5846 = vunpack.c.l.s4 1934713408
        %v5847 = vunpack.c.0.s8 %v5846
        %v5848 = vlaneseq
        %v5849 = vshrl.u32 %v5848, 7
        %v5850 = vsub.s32 %v5847, %v5849
        %v5851 = vrot.slane %v5837, %v5850
        %v5852 = vcombine.low %v5787, %v5803
        %v5853 = vcombine.high %v5787, %v5803
        %v5855 = vunpack.c.l.s4 1934713408
        %v5856 = vunpack.c.0.s8 %v5855
        %v5857 = vlaneseq
        %v5858 = vshrl.u32 %v5857, 7
        %v5859 = vsub.s32 %v5856, %v5858
        %v5860 = vrot.slane %v5852, %v5859
        %v5862 = vunpack.c.l.s4 1934713408
        %v5863 = vunpack.c.0.s8 %v5862
        %v5864 = vlaneseq
        %v5865 = vshrl.u32 %v5864, 7
        %v5866 = vsub.s32 %v5863, %v5865
        %v5867 = vrot.slane %v5853, %v5866
        %v5868 = vcombine.low %v5812, %v5844
        %v5869 = vcombine.high %v5812, %v5844
        %v5870 = vcombine.low %v5819, %v5851
        %v5871 = vcombine.high %v5819, %v5851
        %v5872 = vcombine.low %v5828, %v5860
        %v5873 = vcombine.high %v5828, %v5860
        %v5874 = vcombine.low %v5835, %v5867
        %v5875 = vcombine.high %v5835, %v5867
        %v5876 = vcombine.low %v4469, %v4477
        %v5877 = vcombine.high %v4469, %v4477
        %v5879 = vunpack.c.l.s4 1983009808
        %v5880 = vunpack.c.0.s8 %v5879
        %v5881 = vlaneseq
        %v5882 = vshrl.u32 %v5881, 7
        %v5883 = vsub.s32 %v5880, %v5882
        %v5884 = vrot.slane %v5876, %v5883
        %v5886 = vunpack.c.l.s4 1983009808
        %v5887 = vunpack.c.0.s8 %v5886
        %v5888 = vlaneseq
        %v5889 = vshrl.u32 %v5888, 7
        %v5890 = vsub.s32 %v5887, %v5889
        %v5891 = vrot.slane %v5877, %v5890
        %v5892 = vcombine.low %v4473, %v4481
        %v5893 = vcombine.high %v4473, %v4481
        %v5895 = vunpack.c.l.s4 1983009808
        %v5896 = vunpack.c.0.s8 %v5895
        %v5897 = vlaneseq
        %v5898 = vshrl.u32 %v5897, 7
        %v5899 = vsub.s32 %v5896, %v5898
        %v5900 = vrot.slane %v5892, %v5899
        %v5902 = vunpack.c.l.s4 1983009808
        %v5903 = vunpack.c.0.s8 %v5902
        %v5904 = vlaneseq
        %v5905 = vshrl.u32 %v5904, 7
        %v5906 = vsub.s32 %v5903, %v5905
        %v5907 = vrot.slane %v5893, %v5906
        %v5908 = vcombine.low %v4485, %v4493
        %v5909 = vcombine.high %v4485, %v4493
        %v5911 = vunpack.c.l.s4 1983009808
        %v5912 = vunpack.c.0.s8 %v5911
        %v5913 = vlaneseq
        %v5914 = vshrl.u32 %v5913, 7
        %v5915 = vsub.s32 %v5912, %v5914
        %v5916 = vrot.slane %v5908, %v5915
        %v5918 = vunpack.c.l.s4 1983009808
        %v5919 = vunpack.c.0.s8 %v5918
        %v5920 = vlaneseq
        %v5921 = vshrl.u32 %v5920, 7
        %v5922 = vsub.s32 %v5919, %v5921
        %v5923 = vrot.slane %v5909, %v5922
        %v5924 = vcombine.low %v4489, %v4497
        %v5925 = vcombine.high %v4489, %v4497
        %v5927 = vunpack.c.l.s4 1983009808
        %v5928 = vunpack.c.0.s8 %v5927
        %v5929 = vlaneseq
        %v5930 = vshrl.u32 %v5929, 7
        %v5931 = vsub.s32 %v5928, %v5930
        %v5932 = vrot.slane %v5924, %v5931
        %v5934 = vunpack.c.l.s4 1983009808
        %v5935 = vunpack.c.0.s8 %v5934
        %v5936 = vlaneseq
        %v5937 = vshrl.u32 %v5936, 7
        %v5938 = vsub.s32 %v5935, %v5937
        %v5939 = vrot.slane %v5925, %v5938
        %v5940 = vcombine.low %v5884, %v5900
        %v5941 = vcombine.high %v5884, %v5900
        %v5943 = vunpack.c.l.s4 1934713408
        %v5944 = vunpack.c.0.s8 %v5943
        %v5945 = vlaneseq
        %v5946 = vshrl.u32 %v5945, 7
        %v5947 = vsub.s32 %v5944, %v5946
        %v5948 = vrot.slane %v5940, %v5947
        %v5950 = vunpack.c.l.s4 1934713408
        %v5951 = vunpack.c.0.s8 %v5950
        %v5952 = vlaneseq
        %v5953 = vshrl.u32 %v5952, 7
        %v5954 = vsub.s32 %v5951, %v5953
        %v5955 = vrot.slane %v5941, %v5954
        %v5956 = vcombine.low %v5891, %v5907
        %v5957 = vcombine.high %v5891, %v5907
        %v5959 = vunpack.c.l.s4 1934713408
        %v5960 = vunpack.c.0.s8 %v5959
        %v5961 = vlaneseq
        %v5962 = vshrl.u32 %v5961, 7
        %v5963 = vsub.s32 %v5960, %v5962
        %v5964 = vrot.slane %v5956, %v5963
        %v5966 = vunpack.c.l.s4 1934713408
        %v5967 = vunpack.c.0.s8 %v5966
        %v5968 = vlaneseq
        %v5969 = vshrl.u32 %v5968, 7
        %v5970 = vsub.s32 %v5967, %v5969
        %v5971 = vrot.slane %v5957, %v5970
        %v5972 = vcombine.low %v5916, %v5932
        %v5973 = vcombine.high %v5916, %v5932
        %v5975 = vunpack.c.l.s4 1934713408
        %v5976 = vunpack.c.0.s8 %v5975
        %v5977 = vlaneseq
        %v5978 = vshrl.u32 %v5977, 7
        %v5979 = vsub.s32 %v5976, %v5978
        %v5980 = vrot.slane %v5972, %v5979
        %v5982 = vunpack.c.l.s4 1934713408
        %v5983 = vunpack.c.0.s8 %v5982
        %v5984 = vlaneseq
        %v5985 = vshrl.u32 %v5984, 7
        %v5986 = vsub.s32 %v5983, %v5985
        %v5987 = vrot.slane %v5973, %v5986
        %v5988 = vcombine.low %v5923, %v5939
        %v5989 = vcombine.high %v5923, %v5939
        %v5991 = vunpack.c.l.s4 1934713408
        %v5992 = vunpack.c.0.s8 %v5991
        %v5993 = vlaneseq
        %v5994 = vshrl.u32 %v5993, 7
        %v5995 = vsub.s32 %v5992, %v5994
        %v5996 = vrot.slane %v5988, %v5995
        %v5998 = vunpack.c.l.s4 1934713408
        %v5999 = vunpack.c.0.s8 %v5998
        %v6000 = vlaneseq
        %v6001 = vshrl.u32 %v6000, 7
        %v6002 = vsub.s32 %v5999, %v6001
        %v6003 = vrot.slane %v5989, %v6002
        %v6004 = vcombine.low %v5948, %v5980
        %v6005 = vcombine.high %v5948, %v5980
        %v6006 = vcombine.low %v5955, %v5987
        %v6007 = vcombine.high %v5955, %v5987
        %v6008 = vcombine.low %v5964, %v5996
        %v6009 = vcombine.high %v5964, %v5996
        %v6010 = vcombine.low %v5971, %v6003
        %v6011 = vcombine.high %v5971, %v6003
        %v6012 = vcombine.low %v4501, %v4509
        %v6013 = vcombine.high %v4501, %v4509
        %v6015 = vunpack.c.l.s4 1983009808
        %v6016 = vunpack.c.0.s8 %v6015
        %v6017 = vlaneseq
        %v6018 = vshrl.u32 %v6017, 7
        %v6019 = vsub.s32 %v6016, %v6018
        %v6020 = vrot.slane %v6012, %v6019
        %v6022 = vunpack.c.l.s4 1983009808
        %v6023 = vunpack.c.0.s8 %v6022
        %v6024 = vlaneseq
        %v6025 = vshrl.u32 %v6024, 7
        %v6026 = vsub.s32 %v6023, %v6025
        %v6027 = vrot.slane %v6013, %v6026
        %v6028 = vcombine.low %v4505, %v4513
        %v6029 = vcombine.high %v4505, %v4513
        %v6031 = vunpack.c.l.s4 1983009808
        %v6032 = vunpack.c.0.s8 %v6031
        %v6033 = vlaneseq
        %v6034 = vshrl.u32 %v6033, 7
        %v6035 = vsub.s32 %v6032, %v6034
        %v6036 = vrot.slane %v6028, %v6035
        %v6038 = vunpack.c.l.s4 1983009808
        %v6039 = vunpack.c.0.s8 %v6038
        %v6040 = vlaneseq
        %v6041 = vshrl.u32 %v6040, 7
        %v6042 = vsub.s32 %v6039, %v6041
        %v6043 = vrot.slane %v6029, %v6042
        %v6044 = vcombine.low %v4517, %v4525
        %v6045 = vcombine.high %v4517, %v4525
        %v6047 = vunpack.c.l.s4 1983009808
        %v6048 = vunpack.c.0.s8 %v6047
        %v6049 = vlaneseq
        %v6050 = vshrl.u32 %v6049, 7
        %v6051 = vsub.s32 %v6048, %v6050
        %v6052 = vrot.slane %v6044, %v6051
        %v6054 = vunpack.c.l.s4 1983009808
        %v6055 = vunpack.c.0.s8 %v6054
        %v6056 = vlaneseq
        %v6057 = vshrl.u32 %v6056, 7
        %v6058 = vsub.s32 %v6055, %v6057
        %v6059 = vrot.slane %v6045, %v6058
        %v6060 = vcombine.low %v4521, %v4529
        %v6061 = vcombine.high %v4521, %v4529
        %v6063 = vunpack.c.l.s4 1983009808
        %v6064 = vunpack.c.0.s8 %v6063
        %v6065 = vlaneseq
        %v6066 = vshrl.u32 %v6065, 7
        %v6067 = vsub.s32 %v6064, %v6066
        %v6068 = vrot.slane %v6060, %v6067
        %v6070 = vunpack.c.l.s4 1983009808
        %v6071 = vunpack.c.0.s8 %v6070
        %v6072 = vlaneseq
        %v6073 = vshrl.u32 %v6072, 7
        %v6074 = vsub.s32 %v6071, %v6073
        %v6075 = vrot.slane %v6061, %v6074
        %v6076 = vcombine.low %v6020, %v6036
        %v6077 = vcombine.high %v6020, %v6036
        %v6079 = vunpack.c.l.s4 1934713408
        %v6080 = vunpack.c.0.s8 %v6079
        %v6081 = vlaneseq
        %v6082 = vshrl.u32 %v6081, 7
        %v6083 = vsub.s32 %v6080, %v6082
        %v6084 = vrot.slane %v6076, %v6083
        %v6086 = vunpack.c.l.s4 1934713408
        %v6087 = vunpack.c.0.s8 %v6086
        %v6088 = vlaneseq
        %v6089 = vshrl.u32 %v6088, 7
        %v6090 = vsub.s32 %v6087, %v6089
        %v6091 = vrot.slane %v6077, %v6090
        %v6092 = vcombine.low %v6027, %v6043
        %v6093 = vcombine.high %v6027, %v6043
        %v6095 = vunpack.c.l.s4 1934713408
        %v6096 = vunpack.c.0.s8 %v6095
        %v6097 = vlaneseq
        %v6098 = vshrl.u32 %v6097, 7
        %v6099 = vsub.s32 %v6096, %v6098
        %v6100 = vrot.slane %v6092, %v6099
        %v6102 = vunpack.c.l.s4 1934713408
        %v6103 = vunpack.c.0.s8 %v6102
        %v6104 = vlaneseq
        %v6105 = vshrl.u32 %v6104, 7
        %v6106 = vsub.s32 %v6103, %v6105
        %v6107 = vrot.slane %v6093, %v6106
        %v6108 = vcombine.low %v6052, %v6068
        %v6109 = vcombine.high %v6052, %v6068
        %v6111 = vunpack.c.l.s4 1934713408
        %v6112 = vunpack.c.0.s8 %v6111
        %v6113 = vlaneseq
        %v6114 = vshrl.u32 %v6113, 7
        %v6115 = vsub.s32 %v6112, %v6114
        %v6116 = vrot.slane %v6108, %v6115
        %v6118 = vunpack.c.l.s4 1934713408
        %v6119 = vunpack.c.0.s8 %v6118
        %v6120 = vlaneseq
        %v6121 = vshrl.u32 %v6120, 7
        %v6122 = vsub.s32 %v6119, %v6121
        %v6123 = vrot.slane %v6109, %v6122
        %v6124 = vcombine.low %v6059, %v6075
        %v6125 = vcombine.high %v6059, %v6075
        %v6127 = vunpack.c.l.s4 1934713408
        %v6128 = vunpack.c.0.s8 %v6127
        %v6129 = vlaneseq
        %v6130 = vshrl.u32 %v6129, 7
        %v6131 = vsub.s32 %v6128, %v6130
        %v6132 = vrot.slane %v6124, %v6131
        %v6134 = vunpack.c.l.s4 1934713408
        %v6135 = vunpack.c.0.s8 %v6134
        %v6136 = vlaneseq
        %v6137 = vshrl.u32 %v6136, 7
        %v6138 = vsub.s32 %v6135, %v6137
        %v6139 = vrot.slane %v6125, %v6138
        %v6140 = vcombine.low %v6084, %v6116
        %v6141 = vcombine.high %v6084, %v6116
        %v6142 = vcombine.low %v6091, %v6123
        %v6143 = vcombine.high %v6091, %v6123
        %v6144 = vcombine.low %v6100, %v6132
        %v6145 = vcombine.high %v6100, %v6132
        %v6146 = vcombine.low %v6107, %v6139
        %v6147 = vcombine.high %v6107, %v6139
        %v6148 = vcombine.low %v4533, %v4541
        %v6149 = vcombine.high %v4533, %v4541
        %v6151 = vunpack.c.l.s4 1983009808
        %v6152 = vunpack.c.0.s8 %v6151
        %v6153 = vlaneseq
        %v6154 = vshrl.u32 %v6153, 7
        %v6155 = vsub.s32 %v6152, %v6154
        %v6156 = vrot.slane %v6148, %v6155
        %v6158 = vunpack.c.l.s4 1983009808
        %v6159 = vunpack.c.0.s8 %v6158
        %v6160 = vlaneseq
        %v6161 = vshrl.u32 %v6160, 7
        %v6162 = vsub.s32 %v6159, %v6161
        %v6163 = vrot.slane %v6149, %v6162
        %v6164 = vcombine.low %v4537, %v4545
        %v6165 = vcombine.high %v4537, %v4545
        %v6167 = vunpack.c.l.s4 1983009808
        %v6168 = vunpack.c.0.s8 %v6167
        %v6169 = vlaneseq
        %v6170 = vshrl.u32 %v6169, 7
        %v6171 = vsub.s32 %v6168, %v6170
        %v6172 = vrot.slane %v6164, %v6171
        %v6174 = vunpack.c.l.s4 1983009808
        %v6175 = vunpack.c.0.s8 %v6174
        %v6176 = vlaneseq
        %v6177 = vshrl.u32 %v6176, 7
        %v6178 = vsub.s32 %v6175, %v6177
        %v6179 = vrot.slane %v6165, %v6178
        %v6180 = vcombine.low %v4549, %v4557
        %v6181 = vcombine.high %v4549, %v4557
        %v6183 = vunpack.c.l.s4 1983009808
        %v6184 = vunpack.c.0.s8 %v6183
        %v6185 = vlaneseq
        %v6186 = vshrl.u32 %v6185, 7
        %v6187 = vsub.s32 %v6184, %v6186
        %v6188 = vrot.slane %v6180, %v6187
        %v6190 = vunpack.c.l.s4 1983009808
        %v6191 = vunpack.c.0.s8 %v6190
        %v6192 = vlaneseq
        %v6193 = vshrl.u32 %v6192, 7
        %v6194 = vsub.s32 %v6191, %v6193
        %v6195 = vrot.slane %v6181, %v6194
        %v6196 = vcombine.low %v4553, %v4561
        %v6197 = vcombine.high %v4553, %v4561
        %v6199 = vunpack.c.l.s4 1983009808
        %v6200 = vunpack.c.0.s8 %v6199
        %v6201 = vlaneseq
        %v6202 = vshrl.u32 %v6201, 7
        %v6203 = vsub.s32 %v6200, %v6202
        %v6204 = vrot.slane %v6196, %v6203
        %v6206 = vunpack.c.l.s4 1983009808
        %v6207 = vunpack.c.0.s8 %v6206
        %v6208 = vlaneseq
        %v6209 = vshrl.u32 %v6208, 7
        %v6210 = vsub.s32 %v6207, %v6209
        %v6211 = vrot.slane %v6197, %v6210
        %v6212 = vcombine.low %v6156, %v6172
        %v6213 = vcombine.high %v6156, %v6172
        %v6215 = vunpack.c.l.s4 1934713408
        %v6216 = vunpack.c.0.s8 %v6215
        %v6217 = vlaneseq
        %v6218 = vshrl.u32 %v6217, 7
        %v6219 = vsub.s32 %v6216, %v6218
        %v6220 = vrot.slane %v6212, %v6219
        %v6222 = vunpack.c.l.s4 1934713408
        %v6223 = vunpack.c.0.s8 %v6222
        %v6224 = vlaneseq
        %v6225 = vshrl.u32 %v6224, 7
        %v6226 = vsub.s32 %v6223, %v6225
        %v6227 = vrot.slane %v6213, %v6226
        %v6228 = vcombine.low %v6163, %v6179
        %v6229 = vcombine.high %v6163, %v6179
        %v6231 = vunpack.c.l.s4 1934713408
        %v6232 = vunpack.c.0.s8 %v6231
        %v6233 = vlaneseq
        %v6234 = vshrl.u32 %v6233, 7
        %v6235 = vsub.s32 %v6232, %v6234
        %v6236 = vrot.slane %v6228, %v6235
        %v6238 = vunpack.c.l.s4 1934713408
        %v6239 = vunpack.c.0.s8 %v6238
        %v6240 = vlaneseq
        %v6241 = vshrl.u32 %v6240, 7
        %v6242 = vsub.s32 %v6239, %v6241
        %v6243 = vrot.slane %v6229, %v6242
        %v6244 = vcombine.low %v6188, %v6204
        %v6245 = vcombine.high %v6188, %v6204
        %v6247 = vunpack.c.l.s4 1934713408
        %v6248 = vunpack.c.0.s8 %v6247
        %v6249 = vlaneseq
        %v6250 = vshrl.u32 %v6249, 7
        %v6251 = vsub.s32 %v6248, %v6250
        %v6252 = vrot.slane %v6244, %v6251
        %v6254 = vunpack.c.l.s4 1934713408
        %v6255 = vunpack.c.0.s8 %v6254
        %v6256 = vlaneseq
        %v6257 = vshrl.u32 %v6256, 7
        %v6258 = vsub.s32 %v6255, %v6257
        %v6259 = vrot.slane %v6245, %v6258
        %v6260 = vcombine.low %v6195, %v6211
        %v6261 = vcombine.high %v6195, %v6211
        %v6263 = vunpack.c.l.s4 1934713408
        %v6264 = vunpack.c.0.s8 %v6263
        %v6265 = vlaneseq
        %v6266 = vshrl.u32 %v6265, 7
        %v6267 = vsub.s32 %v6264, %v6266
        %v6268 = vrot.slane %v6260, %v6267
        %v6270 = vunpack.c.l.s4 1934713408
        %v6271 = vunpack.c.0.s8 %v6270
        %v6272 = vlaneseq
        %v6273 = vshrl.u32 %v6272, 7
        %v6274 = vsub.s32 %v6271, %v6273
        %v6275 = vrot.slane %v6261, %v6274
        %v6276 = vcombine.low %v6220, %v6252
        %v6277 = vcombine.high %v6220, %v6252
        %v6278 = vcombine.low %v6227, %v6259
        %v6279 = vcombine.high %v6227, %v6259
        %v6280 = vcombine.low %v6236, %v6268
        %v6281 = vcombine.high %v6236, %v6268
        %v6282 = vcombine.low %v6243, %v6275
        %v6283 = vcombine.high %v6243, %v6275
        %v6284 = vcombine.low %v4565, %v4573
        %v6285 = vcombine.high %v4565, %v4573
        %v6287 = vunpack.c.l.s4 1983009808
        %v6288 = vunpack.c.0.s8 %v6287
        %v6289 = vlaneseq
        %v6290 = vshrl.u32 %v6289, 7
        %v6291 = vsub.s32 %v6288, %v6290
        %v6292 = vrot.slane %v6284, %v6291
        %v6294 = vunpack.c.l.s4 1983009808
        %v6295 = vunpack.c.0.s8 %v6294
        %v6296 = vlaneseq
        %v6297 = vshrl.u32 %v6296, 7
        %v6298 = vsub.s32 %v6295, %v6297
        %v6299 = vrot.slane %v6285, %v6298
        %v6300 = vcombine.low %v4569, %v4577
        %v6301 = vcombine.high %v4569, %v4577
        %v6303 = vunpack.c.l.s4 1983009808
        %v6304 = vunpack.c.0.s8 %v6303
        %v6305 = vlaneseq
        %v6306 = vshrl.u32 %v6305, 7
        %v6307 = vsub.s32 %v6304, %v6306
        %v6308 = vrot.slane %v6300, %v6307
        %v6310 = vunpack.c.l.s4 1983009808
        %v6311 = vunpack.c.0.s8 %v6310
        %v6312 = vlaneseq
        %v6313 = vshrl.u32 %v6312, 7
        %v6314 = vsub.s32 %v6311, %v6313
        %v6315 = vrot.slane %v6301, %v6314
        %v6316 = vcombine.low %v6292, %v6308
        %v6317 = vcombine.high %v6292, %v6308
        %v6319 = vunpack.c.l.s4 1934713408
        %v6320 = vunpack.c.0.s8 %v6319
        %v6321 = vlaneseq
        %v6322 = vshrl.u32 %v6321, 7
        %v6323 = vsub.s32 %v6320, %v6322
        %v6324 = vrot.slane %v6316, %v6323
        %v6326 = vunpack.c.l.s4 1934713408
        %v6327 = vunpack.c.0.s8 %v6326
        %v6328 = vlaneseq
        %v6329 = vshrl.u32 %v6328, 7
        %v6330 = vsub.s32 %v6327, %v6329
        %v6331 = vrot.slane %v6317, %v6330
        %v6332 = vcombine.low %v6299, %v6315
        %v6333 = vcombine.high %v6299, %v6315
        %v6335 = vunpack.c.l.s4 1934713408
        %v6336 = vunpack.c.0.s8 %v6335
        %v6337 = vlaneseq
        %v6338 = vshrl.u32 %v6337, 7
        %v6339 = vsub.s32 %v6336, %v6338
        %v6340 = vrot.slane %v6332, %v6339
        %v6342 = vunpack.c.l.s4 1934713408
        %v6343 = vunpack.c.0.s8 %v6342
        %v6344 = vlaneseq
        %v6345 = vshrl.u32 %v6344, 7
        %v6346 = vsub.s32 %v6343, %v6345
        %v6347 = vrot.slane %v6333, %v6346
        %v6348 = vcombine.high %v6324, 0.0
        %v6349 = vcombine.high %v6331, 0.0
        %v6350 = vcombine.high %v6340, 0.0
        %v6351 = vcombine.high %v6347, 0.0
        %v6352 = vcombine.low %v3793, %v3799
        %v6353 = vcombine.high %v3793, %v3799
        %v6355 = vunpack.c.l.s4 1983009808
        %v6356 = vunpack.c.0.s8 %v6355
        %v6357 = vlaneseq
        %v6358 = vshrl.u32 %v6357, 7
        %v6359 = vsub.s32 %v6356, %v6358
        %v6360 = vrot.slane %v6352, %v6359
        %v6362 = vunpack.c.l.s4 1983009808
        %v6363 = vunpack.c.0.s8 %v6362
        %v6364 = vlaneseq
        %v6365 = vshrl.u32 %v6364, 7
        %v6366 = vsub.s32 %v6363, %v6365
        %v6367 = vrot.slane %v6353, %v6366
        %v6368 = vcombine.low %v3796, %v3802
        %v6369 = vcombine.high %v3796, %v3802
        %v6371 = vunpack.c.l.s4 1983009808
        %v6372 = vunpack.c.0.s8 %v6371
        %v6373 = vlaneseq
        %v6374 = vshrl.u32 %v6373, 7
        %v6375 = vsub.s32 %v6372, %v6374
        %v6376 = vrot.slane %v6368, %v6375
        %v6378 = vunpack.c.l.s4 1983009808
        %v6379 = vunpack.c.0.s8 %v6378
        %v6380 = vlaneseq
        %v6381 = vshrl.u32 %v6380, 7
        %v6382 = vsub.s32 %v6379, %v6381
        %v6383 = vrot.slane %v6369, %v6382
        %v6384 = vcombine.low %v3830, %v3838
        %v6385 = vcombine.high %v3830, %v3838
        %v6387 = vunpack.c.l.s4 1983009808
        %v6388 = vunpack.c.0.s8 %v6387
        %v6389 = vlaneseq
        %v6390 = vshrl.u32 %v6389, 7
        %v6391 = vsub.s32 %v6388, %v6390
        %v6392 = vrot.slane %v6384, %v6391
        %v6394 = vunpack.c.l.s4 1983009808
        %v6395 = vunpack.c.0.s8 %v6394
        %v6396 = vlaneseq
        %v6397 = vshrl.u32 %v6396, 7
        %v6398 = vsub.s32 %v6395, %v6397
        %v6399 = vrot.slane %v6385, %v6398
        %v6400 = vcombine.low %v3834, %v3842
        %v6401 = vcombine.high %v3834, %v3842
        %v6403 = vunpack.c.l.s4 1983009808
        %v6404 = vunpack.c.0.s8 %v6403
        %v6405 = vlaneseq
        %v6406 = vshrl.u32 %v6405, 7
        %v6407 = vsub.s32 %v6404, %v6406
        %v6408 = vrot.slane %v6400, %v6407
        %v6410 = vunpack.c.l.s4 1983009808
        %v6411 = vunpack.c.0.s8 %v6410
        %v6412 = vlaneseq
        %v6413 = vshrl.u32 %v6412, 7
        %v6414 = vsub.s32 %v6411, %v6413
        %v6415 = vrot.slane %v6401, %v6414
        %v6416 = vcombine.low %v6360, %v6376
        %v6417 = vcombine.high %v6360, %v6376
        %v6419 = vunpack.c.l.s4 1934713408
        %v6420 = vunpack.c.0.s8 %v6419
        %v6421 = vlaneseq
        %v6422 = vshrl.u32 %v6421, 7
        %v6423 = vsub.s32 %v6420, %v6422
        %v6424 = vrot.slane %v6416, %v6423
        %v6426 = vunpack.c.l.s4 1934713408
        %v6427 = vunpack.c.0.s8 %v6426
        %v6428 = vlaneseq
        %v6429 = vshrl.u32 %v6428, 7
        %v6430 = vsub.s32 %v6427, %v6429
        %v6431 = vrot.slane %v6417, %v6430
        %v6432 = vcombine.low %v6367, %v6383
        %v6433 = vcombine.high %v6367, %v6383
        %v6435 = vunpack.c.l.s4 1934713408
        %v6436 = vunpack.c.0.s8 %v6435
        %v6437 = vlaneseq
        %v6438 = vshrl.u32 %v6437, 7
        %v6439 = vsub.s32 %v6436, %v6438
        %v6440 = vrot.slane %v6432, %v6439
        %v6442 = vunpack.c.l.s4 1934713408
        %v6443 = vunpack.c.0.s8 %v6442
        %v6444 = vlaneseq
        %v6445 = vshrl.u32 %v6444, 7
        %v6446 = vsub.s32 %v6443, %v6445
        %v6447 = vrot.slane %v6433, %v6446
        %v6448 = vcombine.low %v6392, %v6408
        %v6449 = vcombine.high %v6392, %v6408
        %v6451 = vunpack.c.l.s4 1934713408
        %v6452 = vunpack.c.0.s8 %v6451
        %v6453 = vlaneseq
        %v6454 = vshrl.u32 %v6453, 7
        %v6455 = vsub.s32 %v6452, %v6454
        %v6456 = vrot.slane %v6448, %v6455
        %v6458 = vunpack.c.l.s4 1934713408
        %v6459 = vunpack.c.0.s8 %v6458
        %v6460 = vlaneseq
        %v6461 = vshrl.u32 %v6460, 7
        %v6462 = vsub.s32 %v6459, %v6461
        %v6463 = vrot.slane %v6449, %v6462
        %v6464 = vcombine.low %v6399, %v6415
        %v6465 = vcombine.high %v6399, %v6415
        %v6467 = vunpack.c.l.s4 1934713408
        %v6468 = vunpack.c.0.s8 %v6467
        %v6469 = vlaneseq
        %v6470 = vshrl.u32 %v6469, 7
        %v6471 = vsub.s32 %v6468, %v6470
        %v6472 = vrot.slane %v6464, %v6471
        %v6474 = vunpack.c.l.s4 1934713408
        %v6475 = vunpack.c.0.s8 %v6474
        %v6476 = vlaneseq
        %v6477 = vshrl.u32 %v6476, 7
        %v6478 = vsub.s32 %v6475, %v6477
        %v6479 = vrot.slane %v6465, %v6478
        %v6480 = vcombine.low %v6424, %v6456
        %v6481 = vcombine.high %v6424, %v6456
        %v6482 = vcombine.low %v6431, %v6463
        %v6483 = vcombine.high %v6431, %v6463
        %v6484 = vcombine.low %v6440, %v6472
        %v6485 = vcombine.high %v6440, %v6472
        %v6486 = vcombine.low %v6447, %v6479
        %v6487 = vcombine.high %v6447, %v6479
        %v6488 = vcombine.low %v3854, %v3862
        %v6489 = vcombine.high %v3854, %v3862
        %v6491 = vunpack.c.l.s4 1983009808
        %v6492 = vunpack.c.0.s8 %v6491
        %v6493 = vlaneseq
        %v6494 = vshrl.u32 %v6493, 7
        %v6495 = vsub.s32 %v6492, %v6494
        %v6496 = vrot.slane %v6488, %v6495
        %v6498 = vunpack.c.l.s4 1983009808
        %v6499 = vunpack.c.0.s8 %v6498
        %v6500 = vlaneseq
        %v6501 = vshrl.u32 %v6500, 7
        %v6502 = vsub.s32 %v6499, %v6501
        %v6503 = vrot.slane %v6489, %v6502
        %v6504 = vcombine.low %v3858, %v3866
        %v6505 = vcombine.high %v3858, %v3866
        %v6507 = vunpack.c.l.s4 1983009808
        %v6508 = vunpack.c.0.s8 %v6507
        %v6509 = vlaneseq
        %v6510 = vshrl.u32 %v6509, 7
        %v6511 = vsub.s32 %v6508, %v6510
        %v6512 = vrot.slane %v6504, %v6511
        %v6514 = vunpack.c.l.s4 1983009808
        %v6515 = vunpack.c.0.s8 %v6514
        %v6516 = vlaneseq
        %v6517 = vshrl.u32 %v6516, 7
        %v6518 = vsub.s32 %v6515, %v6517
        %v6519 = vrot.slane %v6505, %v6518
        %v6520 = vcombine.low %v3878, %v3886
        %v6521 = vcombine.high %v3878, %v3886
        %v6523 = vunpack.c.l.s4 1983009808
        %v6524 = vunpack.c.0.s8 %v6523
        %v6525 = vlaneseq
        %v6526 = vshrl.u32 %v6525, 7
        %v6527 = vsub.s32 %v6524, %v6526
        %v6528 = vrot.slane %v6520, %v6527
        %v6530 = vunpack.c.l.s4 1983009808
        %v6531 = vunpack.c.0.s8 %v6530
        %v6532 = vlaneseq
        %v6533 = vshrl.u32 %v6532, 7
        %v6534 = vsub.s32 %v6531, %v6533
        %v6535 = vrot.slane %v6521, %v6534
        %v6536 = vcombine.low %v3882, %v3890
        %v6537 = vcombine.high %v3882, %v3890
        %v6539 = vunpack.c.l.s4 1983009808
        %v6540 = vunpack.c.0.s8 %v6539
        %v6541 = vlaneseq
        %v6542 = vshrl.u32 %v6541, 7
        %v6543 = vsub.s32 %v6540, %v6542
        %v6544 = vrot.slane %v6536, %v6543
        %v6546 = vunpack.c.l.s4 1983009808
        %v6547 = vunpack.c.0.s8 %v6546
        %v6548 = vlaneseq
        %v6549 = vshrl.u32 %v6548, 7
        %v6550 = vsub.s32 %v6547, %v6549
        %v6551 = vrot.slane %v6537, %v6550
        %v6552 = vcombine.low %v6496, %v6512
        %v6553 = vcombine.high %v6496, %v6512
        %v6555 = vunpack.c.l.s4 1934713408
        %v6556 = vunpack.c.0.s8 %v6555
        %v6557 = vlaneseq
        %v6558 = vshrl.u32 %v6557, 7
        %v6559 = vsub.s32 %v6556, %v6558
        %v6560 = vrot.slane %v6552, %v6559
        %v6562 = vunpack.c.l.s4 1934713408
        %v6563 = vunpack.c.0.s8 %v6562
        %v6564 = vlaneseq
        %v6565 = vshrl.u32 %v6564, 7
        %v6566 = vsub.s32 %v6563, %v6565
        %v6567 = vrot.slane %v6553, %v6566
        %v6568 = vcombine.low %v6503, %v6519
        %v6569 = vcombine.high %v6503, %v6519
        %v6571 = vunpack.c.l.s4 1934713408
        %v6572 = vunpack.c.0.s8 %v6571
        %v6573 = vlaneseq
        %v6574 = vshrl.u32 %v6573, 7
        %v6575 = vsub.s32 %v6572, %v6574
        %v6576 = vrot.slane %v6568, %v6575
        %v6578 = vunpack.c.l.s4 1934713408
        %v6579 = vunpack.c.0.s8 %v6578
        %v6580 = vlaneseq
        %v6581 = vshrl.u32 %v6580, 7
        %v6582 = vsub.s32 %v6579, %v6581
        %v6583 = vrot.slane %v6569, %v6582
        %v6584 = vcombine.low %v6528, %v6544
        %v6585 = vcombine.high %v6528, %v6544
        %v6587 = vunpack.c.l.s4 1934713408
        %v6588 = vunpack.c.0.s8 %v6587
        %v6589 = vlaneseq
        %v6590 = vshrl.u32 %v6589, 7
        %v6591 = vsub.s32 %v6588, %v6590
        %v6592 = vrot.slane %v6584, %v6591
        %v6594 = vunpack.c.l.s4 1934713408
        %v6595 = vunpack.c.0.s8 %v6594
        %v6596 = vlaneseq
        %v6597 = vshrl.u32 %v6596, 7
        %v6598 = vsub.s32 %v6595, %v6597
        %v6599 = vrot.slane %v6585, %v6598
        %v6600 = vcombine.low %v6535, %v6551
        %v6601 = vcombine.high %v6535, %v6551
        %v6603 = vunpack.c.l.s4 1934713408
        %v6604 = vunpack.c.0.s8 %v6603
        %v6605 = vlaneseq
        %v6606 = vshrl.u32 %v6605, 7
        %v6607 = vsub.s32 %v6604, %v6606
        %v6608 = vrot.slane %v6600, %v6607
        %v6610 = vunpack.c.l.s4 1934713408
        %v6611 = vunpack.c.0.s8 %v6610
        %v6612 = vlaneseq
        %v6613 = vshrl.u32 %v6612, 7
        %v6614 = vsub.s32 %v6611, %v6613
        %v6615 = vrot.slane %v6601, %v6614
        %v6616 = vcombine.low %v6560, %v6592
        %v6617 = vcombine.high %v6560, %v6592
        %v6618 = vcombine.low %v6567, %v6599
        %v6619 = vcombine.high %v6567, %v6599
        %v6620 = vcombine.low %v6576, %v6608
        %v6621 = vcombine.high %v6576, %v6608
        %v6622 = vcombine.low %v6583, %v6615
        %v6623 = vcombine.high %v6583, %v6615
        %v6624 = vcombine.low %v3902, %v3910
        %v6625 = vcombine.high %v3902, %v3910
        %v6627 = vunpack.c.l.s4 1983009808
        %v6628 = vunpack.c.0.s8 %v6627
        %v6629 = vlaneseq
        %v6630 = vshrl.u32 %v6629, 7
        %v6631 = vsub.s32 %v6628, %v6630
        %v6632 = vrot.slane %v6624, %v6631
        %v6634 = vunpack.c.l.s4 1983009808
        %v6635 = vunpack.c.0.s8 %v6634
        %v6636 = vlaneseq
        %v6637 = vshrl.u32 %v6636, 7
        %v6638 = vsub.s32 %v6635, %v6637
        %v6639 = vrot.slane %v6625, %v6638
        %v6640 = vcombine.low %v3906, %v3914
        %v6641 = vcombine.high %v3906, %v3914
        %v6643 = vunpack.c.l.s4 1983009808
        %v6644 = vunpack.c.0.s8 %v6643
        %v6645 = vlaneseq
        %v6646 = vshrl.u32 %v6645, 7
        %v6647 = vsub.s32 %v6644, %v6646
        %v6648 = vrot.slane %v6640, %v6647
        %v6650 = vunpack.c.l.s4 1983009808
        %v6651 = vunpack.c.0.s8 %v6650
        %v6652 = vlaneseq
        %v6653 = vshrl.u32 %v6652, 7
        %v6654 = vsub.s32 %v6651, %v6653
        %v6655 = vrot.slane %v6641, %v6654
        %v6656 = vcombine.low %v3931, %v3941
        %v6657 = vcombine.high %v3931, %v3941
        %v6659 = vunpack.c.l.s4 1983009808
        %v6660 = vunpack.c.0.s8 %v6659
        %v6661 = vlaneseq
        %v6662 = vshrl.u32 %v6661, 7
        %v6663 = vsub.s32 %v6660, %v6662
        %v6664 = vrot.slane %v6656, %v6663
        %v6666 = vunpack.c.l.s4 1983009808
        %v6667 = vunpack.c.0.s8 %v6666
        %v6668 = vlaneseq
        %v6669 = vshrl.u32 %v6668, 7
        %v6670 = vsub.s32 %v6667, %v6669
        %v6671 = vrot.slane %v6657, %v6670
        %v6672 = vcombine.low %v3936, %v3946
        %v6673 = vcombine.high %v3936, %v3946
        %v6675 = vunpack.c.l.s4 1983009808
        %v6676 = vunpack.c.0.s8 %v6675
        %v6677 = vlaneseq
        %v6678 = vshrl.u32 %v6677, 7
        %v6679 = vsub.s32 %v6676, %v6678
        %v6680 = vrot.slane %v6672, %v6679
        %v6682 = vunpack.c.l.s4 1983009808
        %v6683 = vunpack.c.0.s8 %v6682
        %v6684 = vlaneseq
        %v6685 = vshrl.u32 %v6684, 7
        %v6686 = vsub.s32 %v6683, %v6685
        %v6687 = vrot.slane %v6673, %v6686
        %v6688 = vcombine.low %v6632, %v6648
        %v6689 = vcombine.high %v6632, %v6648
        %v6691 = vunpack.c.l.s4 1934713408
        %v6692 = vunpack.c.0.s8 %v6691
        %v6693 = vlaneseq
        %v6694 = vshrl.u32 %v6693, 7
        %v6695 = vsub.s32 %v6692, %v6694
        %v6696 = vrot.slane %v6688, %v6695
        %v6698 = vunpack.c.l.s4 1934713408
        %v6699 = vunpack.c.0.s8 %v6698
        %v6700 = vlaneseq
        %v6701 = vshrl.u32 %v6700, 7
        %v6702 = vsub.s32 %v6699, %v6701
        %v6703 = vrot.slane %v6689, %v6702
        %v6704 = vcombine.low %v6639, %v6655
        %v6705 = vcombine.high %v6639, %v6655
        %v6707 = vunpack.c.l.s4 1934713408
        %v6708 = vunpack.c.0.s8 %v6707
        %v6709 = vlaneseq
        %v6710 = vshrl.u32 %v6709, 7
        %v6711 = vsub.s32 %v6708, %v6710
        %v6712 = vrot.slane %v6704, %v6711
        %v6714 = vunpack.c.l.s4 1934713408
        %v6715 = vunpack.c.0.s8 %v6714
        %v6716 = vlaneseq
        %v6717 = vshrl.u32 %v6716, 7
        %v6718 = vsub.s32 %v6715, %v6717
        %v6719 = vrot.slane %v6705, %v6718
        %v6720 = vcombine.low %v6664, %v6680
        %v6721 = vcombine.high %v6664, %v6680
        %v6723 = vunpack.c.l.s4 1934713408
        %v6724 = vunpack.c.0.s8 %v6723
        %v6725 = vlaneseq
        %v6726 = vshrl.u32 %v6725, 7
        %v6727 = vsub.s32 %v6724, %v6726
        %v6728 = vrot.slane %v6720, %v6727
        %v6730 = vunpack.c.l.s4 1934713408
        %v6731 = vunpack.c.0.s8 %v6730
        %v6732 = vlaneseq
        %v6733 = vshrl.u32 %v6732, 7
        %v6734 = vsub.s32 %v6731, %v6733
        %v6735 = vrot.slane %v6721, %v6734
        %v6736 = vcombine.low %v6671, %v6687
        %v6737 = vcombine.high %v6671, %v6687
        %v6739 = vunpack.c.l.s4 1934713408
        %v6740 = vunpack.c.0.s8 %v6739
        %v6741 = vlaneseq
        %v6742 = vshrl.u32 %v6741, 7
        %v6743 = vsub.s32 %v6740, %v6742
        %v6744 = vrot.slane %v6736, %v6743
        %v6746 = vunpack.c.l.s4 1934713408
        %v6747 = vunpack.c.0.s8 %v6746
        %v6748 = vlaneseq
        %v6749 = vshrl.u32 %v6748, 7
        %v6750 = vsub.s32 %v6747, %v6749
        %v6751 = vrot.slane %v6737, %v6750
        %v6752 = vcombine.low %v6696, %v6728
        %v6753 = vcombine.high %v6696, %v6728
        %v6754 = vcombine.low %v6703, %v6735
        %v6755 = vcombine.high %v6703, %v6735
        %v6756 = vcombine.low %v6712, %v6744
        %v6757 = vcombine.high %v6712, %v6744
        %v6758 = vcombine.low %v6719, %v6751
        %v6759 = vcombine.high %v6719, %v6751
        %v6760 = vcombine.low %v3958, %v3966
        %v6761 = vcombine.high %v3958, %v3966
        %v6763 = vunpack.c.l.s4 1983009808
        %v6764 = vunpack.c.0.s8 %v6763
        %v6765 = vlaneseq
        %v6766 = vshrl.u32 %v6765, 7
        %v6767 = vsub.s32 %v6764, %v6766
        %v6768 = vrot.slane %v6760, %v6767
        %v6770 = vunpack.c.l.s4 1983009808
        %v6771 = vunpack.c.0.s8 %v6770
        %v6772 = vlaneseq
        %v6773 = vshrl.u32 %v6772, 7
        %v6774 = vsub.s32 %v6771, %v6773
        %v6775 = vrot.slane %v6761, %v6774
        %v6776 = vcombine.low %v3962, %v3970
        %v6777 = vcombine.high %v3962, %v3970
        %v6779 = vunpack.c.l.s4 1983009808
        %v6780 = vunpack.c.0.s8 %v6779
        %v6781 = vlaneseq
        %v6782 = vshrl.u32 %v6781, 7
        %v6783 = vsub.s32 %v6780, %v6782
        %v6784 = vrot.slane %v6776, %v6783
        %v6786 = vunpack.c.l.s4 1983009808
        %v6787 = vunpack.c.0.s8 %v6786
        %v6788 = vlaneseq
        %v6789 = vshrl.u32 %v6788, 7
        %v6790 = vsub.s32 %v6787, %v6789
        %v6791 = vrot.slane %v6777, %v6790
        %v6792 = vcombine.low %v3982, %v3990
        %v6793 = vcombine.high %v3982, %v3990
        %v6795 = vunpack.c.l.s4 1983009808
        %v6796 = vunpack.c.0.s8 %v6795
        %v6797 = vlaneseq
        %v6798 = vshrl.u32 %v6797, 7
        %v6799 = vsub.s32 %v6796, %v6798
        %v6800 = vrot.slane %v6792, %v6799
        %v6802 = vunpack.c.l.s4 1983009808
        %v6803 = vunpack.c.0.s8 %v6802
        %v6804 = vlaneseq
        %v6805 = vshrl.u32 %v6804, 7
        %v6806 = vsub.s32 %v6803, %v6805
        %v6807 = vrot.slane %v6793, %v6806
        %v6808 = vcombine.low %v3986, %v3994
        %v6809 = vcombine.high %v3986, %v3994
        %v6811 = vunpack.c.l.s4 1983009808
        %v6812 = vunpack.c.0.s8 %v6811
        %v6813 = vlaneseq
        %v6814 = vshrl.u32 %v6813, 7
        %v6815 = vsub.s32 %v6812, %v6814
        %v6816 = vrot.slane %v6808, %v6815
        %v6818 = vunpack.c.l.s4 1983009808
        %v6819 = vunpack.c.0.s8 %v6818
        %v6820 = vlaneseq
        %v6821 = vshrl.u32 %v6820, 7
        %v6822 = vsub.s32 %v6819, %v6821
        %v6823 = vrot.slane %v6809, %v6822
        %v6824 = vcombine.low %v6768, %v6784
        %v6825 = vcombine.high %v6768, %v6784
        %v6827 = vunpack.c.l.s4 1934713408
        %v6828 = vunpack.c.0.s8 %v6827
        %v6829 = vlaneseq
        %v6830 = vshrl.u32 %v6829, 7
        %v6831 = vsub.s32 %v6828, %v6830
        %v6832 = vrot.slane %v6824, %v6831
        %v6834 = vunpack.c.l.s4 1934713408
        %v6835 = vunpack.c.0.s8 %v6834
        %v6836 = vlaneseq
        %v6837 = vshrl.u32 %v6836, 7
        %v6838 = vsub.s32 %v6835, %v6837
        %v6839 = vrot.slane %v6825, %v6838
        %v6840 = vcombine.low %v6775, %v6791
        %v6841 = vcombine.high %v6775, %v6791
        %v6843 = vunpack.c.l.s4 1934713408
        %v6844 = vunpack.c.0.s8 %v6843
        %v6845 = vlaneseq
        %v6846 = vshrl.u32 %v6845, 7
        %v6847 = vsub.s32 %v6844, %v6846
        %v6848 = vrot.slane %v6840, %v6847
        %v6850 = vunpack.c.l.s4 1934713408
        %v6851 = vunpack.c.0.s8 %v6850
        %v6852 = vlaneseq
        %v6853 = vshrl.u32 %v6852, 7
        %v6854 = vsub.s32 %v6851, %v6853
        %v6855 = vrot.slane %v6841, %v6854
        %v6856 = vcombine.low %v6800, %v6816
        %v6857 = vcombine.high %v6800, %v6816
        %v6859 = vunpack.c.l.s4 1934713408
        %v6860 = vunpack.c.0.s8 %v6859
        %v6861 = vlaneseq
        %v6862 = vshrl.u32 %v6861, 7
        %v6863 = vsub.s32 %v6860, %v6862
        %v6864 = vrot.slane %v6856, %v6863
        %v6866 = vunpack.c.l.s4 1934713408
        %v6867 = vunpack.c.0.s8 %v6866
        %v6868 = vlaneseq
        %v6869 = vshrl.u32 %v6868, 7
        %v6870 = vsub.s32 %v6867, %v6869
        %v6871 = vrot.slane %v6857, %v6870
        %v6872 = vcombine.low %v6807, %v6823
        %v6873 = vcombine.high %v6807, %v6823
        %v6875 = vunpack.c.l.s4 1934713408
        %v6876 = vunpack.c.0.s8 %v6875
        %v6877 = vlaneseq
        %v6878 = vshrl.u32 %v6877, 7
        %v6879 = vsub.s32 %v6876, %v6878
        %v6880 = vrot.slane %v6872, %v6879
        %v6882 = vunpack.c.l.s4 1934713408
        %v6883 = vunpack.c.0.s8 %v6882
        %v6884 = vlaneseq
        %v6885 = vshrl.u32 %v6884, 7
        %v6886 = vsub.s32 %v6883, %v6885
        %v6887 = vrot.slane %v6873, %v6886
        %v6888 = vcombine.low %v6832, %v6864
        %v6889 = vcombine.high %v6832, %v6864
        %v6890 = vcombine.low %v6839, %v6871
        %v6891 = vcombine.high %v6839, %v6871
        %v6892 = vcombine.low %v6848, %v6880
        %v6893 = vcombine.high %v6848, %v6880
        %v6894 = vcombine.low %v6855, %v6887
        %v6895 = vcombine.high %v6855, %v6887
        %v6896 = vcombine.low %v4006, %v4014
        %v6897 = vcombine.high %v4006, %v4014
        %v6899 = vunpack.c.l.s4 1983009808
        %v6900 = vunpack.c.0.s8 %v6899
        %v6901 = vlaneseq
        %v6902 = vshrl.u32 %v6901, 7
        %v6903 = vsub.s32 %v6900, %v6902
        %v6904 = vrot.slane %v6896, %v6903
        %v6906 = vunpack.c.l.s4 1983009808
        %v6907 = vunpack.c.0.s8 %v6906
        %v6908 = vlaneseq
        %v6909 = vshrl.u32 %v6908, 7
        %v6910 = vsub.s32 %v6907, %v6909
        %v6911 = vrot.slane %v6897, %v6910
        %v6912 = vcombine.low %v4010, %v4018
        %v6913 = vcombine.high %v4010, %v4018
        %v6915 = vunpack.c.l.s4 1983009808
        %v6916 = vunpack.c.0.s8 %v6915
        %v6917 = vlaneseq
        %v6918 = vshrl.u32 %v6917, 7
        %v6919 = vsub.s32 %v6916, %v6918
        %v6920 = vrot.slane %v6912, %v6919
        %v6922 = vunpack.c.l.s4 1983009808
        %v6923 = vunpack.c.0.s8 %v6922
        %v6924 = vlaneseq
        %v6925 = vshrl.u32 %v6924, 7
        %v6926 = vsub.s32 %v6923, %v6925
        %v6927 = vrot.slane %v6913, %v6926
        %v6928 = vcombine.low %v4030, %v4038
        %v6929 = vcombine.high %v4030, %v4038
        %v6931 = vunpack.c.l.s4 1983009808
        %v6932 = vunpack.c.0.s8 %v6931
        %v6933 = vlaneseq
        %v6934 = vshrl.u32 %v6933, 7
        %v6935 = vsub.s32 %v6932, %v6934
        %v6936 = vrot.slane %v6928, %v6935
        %v6938 = vunpack.c.l.s4 1983009808
        %v6939 = vunpack.c.0.s8 %v6938
        %v6940 = vlaneseq
        %v6941 = vshrl.u32 %v6940, 7
        %v6942 = vsub.s32 %v6939, %v6941
        %v6943 = vrot.slane %v6929, %v6942
        %v6944 = vcombine.low %v4034, %v4042
        %v6945 = vcombine.high %v4034, %v4042
        %v6947 = vunpack.c.l.s4 1983009808
        %v6948 = vunpack.c.0.s8 %v6947
        %v6949 = vlaneseq
        %v6950 = vshrl.u32 %v6949, 7
        %v6951 = vsub.s32 %v6948, %v6950
        %v6952 = vrot.slane %v6944, %v6951
        %v6954 = vunpack.c.l.s4 1983009808
        %v6955 = vunpack.c.0.s8 %v6954
        %v6956 = vlaneseq
        %v6957 = vshrl.u32 %v6956, 7
        %v6958 = vsub.s32 %v6955, %v6957
        %v6959 = vrot.slane %v6945, %v6958
        %v6960 = vcombine.low %v6904, %v6920
        %v6961 = vcombine.high %v6904, %v6920
        %v6963 = vunpack.c.l.s4 1934713408
        %v6964 = vunpack.c.0.s8 %v6963
        %v6965 = vlaneseq
        %v6966 = vshrl.u32 %v6965, 7
        %v6967 = vsub.s32 %v6964, %v6966
        %v6968 = vrot.slane %v6960, %v6967
        %v6970 = vunpack.c.l.s4 1934713408
        %v6971 = vunpack.c.0.s8 %v6970
        %v6972 = vlaneseq
        %v6973 = vshrl.u32 %v6972, 7
        %v6974 = vsub.s32 %v6971, %v6973
        %v6975 = vrot.slane %v6961, %v6974
        %v6976 = vcombine.low %v6911, %v6927
        %v6977 = vcombine.high %v6911, %v6927
        %v6979 = vunpack.c.l.s4 1934713408
        %v6980 = vunpack.c.0.s8 %v6979
        %v6981 = vlaneseq
        %v6982 = vshrl.u32 %v6981, 7
        %v6983 = vsub.s32 %v6980, %v6982
        %v6984 = vrot.slane %v6976, %v6983
        %v6986 = vunpack.c.l.s4 1934713408
        %v6987 = vunpack.c.0.s8 %v6986
        %v6988 = vlaneseq
        %v6989 = vshrl.u32 %v6988, 7
        %v6990 = vsub.s32 %v6987, %v6989
        %v6991 = vrot.slane %v6977, %v6990
        %v6992 = vcombine.low %v6936, %v6952
        %v6993 = vcombine.high %v6936, %v6952
        %v6995 = vunpack.c.l.s4 1934713408
        %v6996 = vunpack.c.0.s8 %v6995
        %v6997 = vlaneseq
        %v6998 = vshrl.u32 %v6997, 7
        %v6999 = vsub.s32 %v6996, %v6998
        %v7000 = vrot.slane %v6992, %v6999
        %v7002 = vunpack.c.l.s4 1934713408
        %v7003 = vunpack.c.0.s8 %v7002
        %v7004 = vlaneseq
        %v7005 = vshrl.u32 %v7004, 7
        %v7006 = vsub.s32 %v7003, %v7005
        %v7007 = vrot.slane %v6993, %v7006
        %v7008 = vcombine.low %v6943, %v6959
        %v7009 = vcombine.high %v6943, %v6959
        %v7011 = vunpack.c.l.s4 1934713408
        %v7012 = vunpack.c.0.s8 %v7011
        %v7013 = vlaneseq
        %v7014 = vshrl.u32 %v7013, 7
        %v7015 = vsub.s32 %v7012, %v7014
        %v7016 = vrot.slane %v7008, %v7015
        %v7018 = vunpack.c.l.s4 1934713408
        %v7019 = vunpack.c.0.s8 %v7018
        %v7020 = vlaneseq
        %v7021 = vshrl.u32 %v7020, 7
        %v7022 = vsub.s32 %v7019, %v7021
        %v7023 = vrot.slane %v7009, %v7022
        %v7024 = vcombine.low %v6968, %v7000
        %v7025 = vcombine.high %v6968, %v7000
        %v7026 = vcombine.low %v6975, %v7007
        %v7027 = vcombine.high %v6975, %v7007
        %v7028 = vcombine.low %v6984, %v7016
        %v7029 = vcombine.high %v6984, %v7016
        %v7030 = vcombine.low %v6991, %v7023
        %v7031 = vcombine.high %v6991, %v7023
        %v7032 = vcombine.low %v4055, %v4065
        %v7033 = vcombine.high %v4055, %v4065
        %v7035 = vunpack.c.l.s4 1983009808
        %v7036 = vunpack.c.0.s8 %v7035
        %v7037 = vlaneseq
        %v7038 = vshrl.u32 %v7037, 7
        %v7039 = vsub.s32 %v7036, %v7038
        %v7040 = vrot.slane %v7032, %v7039
        %v7042 = vunpack.c.l.s4 1983009808
        %v7043 = vunpack.c.0.s8 %v7042
        %v7044 = vlaneseq
        %v7045 = vshrl.u32 %v7044, 7
        %v7046 = vsub.s32 %v7043, %v7045
        %v7047 = vrot.slane %v7033, %v7046
        %v7048 = vcombine.low %v4060, %v4070
        %v7049 = vcombine.high %v4060, %v4070
        %v7051 = vunpack.c.l.s4 1983009808
        %v7052 = vunpack.c.0.s8 %v7051
        %v7053 = vlaneseq
        %v7054 = vshrl.u32 %v7053, 7
        %v7055 = vsub.s32 %v7052, %v7054
        %v7056 = vrot.slane %v7048, %v7055
        %v7058 = vunpack.c.l.s4 1983009808
        %v7059 = vunpack.c.0.s8 %v7058
        %v7060 = vlaneseq
        %v7061 = vshrl.u32 %v7060, 7
        %v7062 = vsub.s32 %v7059, %v7061
        %v7063 = vrot.slane %v7049, %v7062
        %v7064 = vcombine.low %v4082, %v4090
        %v7065 = vcombine.high %v4082, %v4090
        %v7067 = vunpack.c.l.s4 1983009808
        %v7068 = vunpack.c.0.s8 %v7067
        %v7069 = vlaneseq
        %v7070 = vshrl.u32 %v7069, 7
        %v7071 = vsub.s32 %v7068, %v7070
        %v7072 = vrot.slane %v7064, %v7071
        %v7074 = vunpack.c.l.s4 1983009808
        %v7075 = vunpack.c.0.s8 %v7074
        %v7076 = vlaneseq
        %v7077 = vshrl.u32 %v7076, 7
        %v7078 = vsub.s32 %v7075, %v7077
        %v7079 = vrot.slane %v7065, %v7078
        %v7080 = vcombine.low %v4086, %v4094
        %v7081 = vcombine.high %v4086, %v4094
        %v7083 = vunpack.c.l.s4 1983009808
        %v7084 = vunpack.c.0.s8 %v7083
        %v7085 = vlaneseq
        %v7086 = vshrl.u32 %v7085, 7
        %v7087 = vsub.s32 %v7084, %v7086
        %v7088 = vrot.slane %v7080, %v7087
        %v7090 = vunpack.c.l.s4 1983009808
        %v7091 = vunpack.c.0.s8 %v7090
        %v7092 = vlaneseq
        %v7093 = vshrl.u32 %v7092, 7
        %v7094 = vsub.s32 %v7091, %v7093
        %v7095 = vrot.slane %v7081, %v7094
        %v7096 = vcombine.low %v7040, %v7056
        %v7097 = vcombine.high %v7040, %v7056
        %v7099 = vunpack.c.l.s4 1934713408
        %v7100 = vunpack.c.0.s8 %v7099
        %v7101 = vlaneseq
        %v7102 = vshrl.u32 %v7101, 7
        %v7103 = vsub.s32 %v7100, %v7102
        %v7104 = vrot.slane %v7096, %v7103
        %v7106 = vunpack.c.l.s4 1934713408
        %v7107 = vunpack.c.0.s8 %v7106
        %v7108 = vlaneseq
        %v7109 = vshrl.u32 %v7108, 7
        %v7110 = vsub.s32 %v7107, %v7109
        %v7111 = vrot.slane %v7097, %v7110
        %v7112 = vcombine.low %v7047, %v7063
        %v7113 = vcombine.high %v7047, %v7063
        %v7115 = vunpack.c.l.s4 1934713408
        %v7116 = vunpack.c.0.s8 %v7115
        %v7117 = vlaneseq
        %v7118 = vshrl.u32 %v7117, 7
        %v7119 = vsub.s32 %v7116, %v7118
        %v7120 = vrot.slane %v7112, %v7119
        %v7122 = vunpack.c.l.s4 1934713408
        %v7123 = vunpack.c.0.s8 %v7122
        %v7124 = vlaneseq
        %v7125 = vshrl.u32 %v7124, 7
        %v7126 = vsub.s32 %v7123, %v7125
        %v7127 = vrot.slane %v7113, %v7126
        %v7128 = vcombine.low %v7072, %v7088
        %v7129 = vcombine.high %v7072, %v7088
        %v7131 = vunpack.c.l.s4 1934713408
        %v7132 = vunpack.c.0.s8 %v7131
        %v7133 = vlaneseq
        %v7134 = vshrl.u32 %v7133, 7
        %v7135 = vsub.s32 %v7132, %v7134
        %v7136 = vrot.slane %v7128, %v7135
        %v7138 = vunpack.c.l.s4 1934713408
        %v7139 = vunpack.c.0.s8 %v7138
        %v7140 = vlaneseq
        %v7141 = vshrl.u32 %v7140, 7
        %v7142 = vsub.s32 %v7139, %v7141
        %v7143 = vrot.slane %v7129, %v7142
        %v7144 = vcombine.low %v7079, %v7095
        %v7145 = vcombine.high %v7079, %v7095
        %v7147 = vunpack.c.l.s4 1934713408
        %v7148 = vunpack.c.0.s8 %v7147
        %v7149 = vlaneseq
        %v7150 = vshrl.u32 %v7149, 7
        %v7151 = vsub.s32 %v7148, %v7150
        %v7152 = vrot.slane %v7144, %v7151
        %v7154 = vunpack.c.l.s4 1934713408
        %v7155 = vunpack.c.0.s8 %v7154
        %v7156 = vlaneseq
        %v7157 = vshrl.u32 %v7156, 7
        %v7158 = vsub.s32 %v7155, %v7157
        %v7159 = vrot.slane %v7145, %v7158
        %v7160 = vcombine.low %v7104, %v7136
        %v7161 = vcombine.high %v7104, %v7136
        %v7162 = vcombine.low %v7111, %v7143
        %v7163 = vcombine.high %v7111, %v7143
        %v7164 = vcombine.low %v7120, %v7152
        %v7165 = vcombine.high %v7120, %v7152
        %v7166 = vcombine.low %v7127, %v7159
        %v7167 = vcombine.high %v7127, %v7159
        %v7168 = vcombine.low %v4106, %v4114
        %v7169 = vcombine.high %v4106, %v4114
        %v7171 = vunpack.c.l.s4 1983009808
        %v7172 = vunpack.c.0.s8 %v7171
        %v7173 = vlaneseq
        %v7174 = vshrl.u32 %v7173, 7
        %v7175 = vsub.s32 %v7172, %v7174
        %v7176 = vrot.slane %v7168, %v7175
        %v7178 = vunpack.c.l.s4 1983009808
        %v7179 = vunpack.c.0.s8 %v7178
        %v7180 = vlaneseq
        %v7181 = vshrl.u32 %v7180, 7
        %v7182 = vsub.s32 %v7179, %v7181
        %v7183 = vrot.slane %v7169, %v7182
        %v7184 = vcombine.low %v4110, %v4118
        %v7185 = vcombine.high %v4110, %v4118
        %v7187 = vunpack.c.l.s4 1983009808
        %v7188 = vunpack.c.0.s8 %v7187
        %v7189 = vlaneseq
        %v7190 = vshrl.u32 %v7189, 7
        %v7191 = vsub.s32 %v7188, %v7190
        %v7192 = vrot.slane %v7184, %v7191
        %v7194 = vunpack.c.l.s4 1983009808
        %v7195 = vunpack.c.0.s8 %v7194
        %v7196 = vlaneseq
        %v7197 = vshrl.u32 %v7196, 7
        %v7198 = vsub.s32 %v7195, %v7197
        %v7199 = vrot.slane %v7185, %v7198
        %v7200 = vcombine.low %v4130, %v4138
        %v7201 = vcombine.high %v4130, %v4138
        %v7203 = vunpack.c.l.s4 1983009808
        %v7204 = vunpack.c.0.s8 %v7203
        %v7205 = vlaneseq
        %v7206 = vshrl.u32 %v7205, 7
        %v7207 = vsub.s32 %v7204, %v7206
        %v7208 = vrot.slane %v7200, %v7207
        %v7210 = vunpack.c.l.s4 1983009808
        %v7211 = vunpack.c.0.s8 %v7210
        %v7212 = vlaneseq
        %v7213 = vshrl.u32 %v7212, 7
        %v7214 = vsub.s32 %v7211, %v7213
        %v7215 = vrot.slane %v7201, %v7214
        %v7216 = vcombine.low %v4134, %v4142
        %v7217 = vcombine.high %v4134, %v4142
        %v7219 = vunpack.c.l.s4 1983009808
        %v7220 = vunpack.c.0.s8 %v7219
        %v7221 = vlaneseq
        %v7222 = vshrl.u32 %v7221, 7
        %v7223 = vsub.s32 %v7220, %v7222
        %v7224 = vrot.slane %v7216, %v7223
        %v7226 = vunpack.c.l.s4 1983009808
        %v7227 = vunpack.c.0.s8 %v7226
        %v7228 = vlaneseq
        %v7229 = vshrl.u32 %v7228, 7
        %v7230 = vsub.s32 %v7227, %v7229
        %v7231 = vrot.slane %v7217, %v7230
        %v7232 = vcombine.low %v7176, %v7192
        %v7233 = vcombine.high %v7176, %v7192
        %v7235 = vunpack.c.l.s4 1934713408
        %v7236 = vunpack.c.0.s8 %v7235
        %v7237 = vlaneseq
        %v7238 = vshrl.u32 %v7237, 7
        %v7239 = vsub.s32 %v7236, %v7238
        %v7240 = vrot.slane %v7232, %v7239
        %v7242 = vunpack.c.l.s4 1934713408
        %v7243 = vunpack.c.0.s8 %v7242
        %v7244 = vlaneseq
        %v7245 = vshrl.u32 %v7244, 7
        %v7246 = vsub.s32 %v7243, %v7245
        %v7247 = vrot.slane %v7233, %v7246
        %v7248 = vcombine.low %v7183, %v7199
        %v7249 = vcombine.high %v7183, %v7199
        %v7251 = vunpack.c.l.s4 1934713408
        %v7252 = vunpack.c.0.s8 %v7251
        %v7253 = vlaneseq
        %v7254 = vshrl.u32 %v7253, 7
        %v7255 = vsub.s32 %v7252, %v7254
        %v7256 = vrot.slane %v7248, %v7255
        %v7258 = vunpack.c.l.s4 1934713408
        %v7259 = vunpack.c.0.s8 %v7258
        %v7260 = vlaneseq
        %v7261 = vshrl.u32 %v7260, 7
        %v7262 = vsub.s32 %v7259, %v7261
        %v7263 = vrot.slane %v7249, %v7262
        %v7264 = vcombine.low %v7208, %v7224
        %v7265 = vcombine.high %v7208, %v7224
        %v7267 = vunpack.c.l.s4 1934713408
        %v7268 = vunpack.c.0.s8 %v7267
        %v7269 = vlaneseq
        %v7270 = vshrl.u32 %v7269, 7
        %v7271 = vsub.s32 %v7268, %v7270
        %v7272 = vrot.slane %v7264, %v7271
        %v7274 = vunpack.c.l.s4 1934713408
        %v7275 = vunpack.c.0.s8 %v7274
        %v7276 = vlaneseq
        %v7277 = vshrl.u32 %v7276, 7
        %v7278 = vsub.s32 %v7275, %v7277
        %v7279 = vrot.slane %v7265, %v7278
        %v7280 = vcombine.low %v7215, %v7231
        %v7281 = vcombine.high %v7215, %v7231
        %v7283 = vunpack.c.l.s4 1934713408
        %v7284 = vunpack.c.0.s8 %v7283
        %v7285 = vlaneseq
        %v7286 = vshrl.u32 %v7285, 7
        %v7287 = vsub.s32 %v7284, %v7286
        %v7288 = vrot.slane %v7280, %v7287
        %v7290 = vunpack.c.l.s4 1934713408
        %v7291 = vunpack.c.0.s8 %v7290
        %v7292 = vlaneseq
        %v7293 = vshrl.u32 %v7292, 7
        %v7294 = vsub.s32 %v7291, %v7293
        %v7295 = vrot.slane %v7281, %v7294
        %v7296 = vcombine.low %v7240, %v7272
        %v7297 = vcombine.high %v7240, %v7272
        %v7298 = vcombine.low %v7247, %v7279
        %v7299 = vcombine.high %v7247, %v7279
        %v7300 = vcombine.low %v7256, %v7288
        %v7301 = vcombine.high %v7256, %v7288
        %v7302 = vcombine.low %v7263, %v7295
        %v7303 = vcombine.high %v7263, %v7295
        %v7304 = vcombine.low %v4154, %v4162
        %v7305 = vcombine.high %v4154, %v4162
        %v7307 = vunpack.c.l.s4 1983009808
        %v7308 = vunpack.c.0.s8 %v7307
        %v7309 = vlaneseq
        %v7310 = vshrl.u32 %v7309, 7
        %v7311 = vsub.s32 %v7308, %v7310
        %v7312 = vrot.slane %v7304, %v7311
        %v7314 = vunpack.c.l.s4 1983009808
        %v7315 = vunpack.c.0.s8 %v7314
        %v7316 = vlaneseq
        %v7317 = vshrl.u32 %v7316, 7
        %v7318 = vsub.s32 %v7315, %v7317
        %v7319 = vrot.slane %v7305, %v7318
        %v7320 = vcombine.low %v4158, %v4166
        %v7321 = vcombine.high %v4158, %v4166
        %v7323 = vunpack.c.l.s4 1983009808
        %v7324 = vunpack.c.0.s8 %v7323
        %v7325 = vlaneseq
        %v7326 = vshrl.u32 %v7325, 7
        %v7327 = vsub.s32 %v7324, %v7326
        %v7328 = vrot.slane %v7320, %v7327
        %v7330 = vunpack.c.l.s4 1983009808
        %v7331 = vunpack.c.0.s8 %v7330
        %v7332 = vlaneseq
        %v7333 = vshrl.u32 %v7332, 7
        %v7334 = vsub.s32 %v7331, %v7333
        %v7335 = vrot.slane %v7321, %v7334
        %v7336 = vcombine.low %v4180, %v4190
        %v7337 = vcombine.high %v4180, %v4190
        %v7339 = vunpack.c.l.s4 1983009808
        %v7340 = vunpack.c.0.s8 %v7339
        %v7341 = vlaneseq
        %v7342 = vshrl.u32 %v7341, 7
        %v7343 = vsub.s32 %v7340, %v7342
        %v7344 = vrot.slane %v7336, %v7343
        %v7346 = vunpack.c.l.s4 1983009808
        %v7347 = vunpack.c.0.s8 %v7346
        %v7348 = vlaneseq
        %v7349 = vshrl.u32 %v7348, 7
        %v7350 = vsub.s32 %v7347, %v7349
        %v7351 = vrot.slane %v7337, %v7350
        %v7352 = vcombine.low %v4185, %v4195
        %v7353 = vcombine.high %v4185, %v4195
        %v7355 = vunpack.c.l.s4 1983009808
        %v7356 = vunpack.c.0.s8 %v7355
        %v7357 = vlaneseq
        %v7358 = vshrl.u32 %v7357, 7
        %v7359 = vsub.s32 %v7356, %v7358
        %v7360 = vrot.slane %v7352, %v7359
        %v7362 = vunpack.c.l.s4 1983009808
        %v7363 = vunpack.c.0.s8 %v7362
        %v7364 = vlaneseq
        %v7365 = vshrl.u32 %v7364, 7
        %v7366 = vsub.s32 %v7363, %v7365
        %v7367 = vrot.slane %v7353, %v7366
        %v7368 = vcombine.low %v7312, %v7328
        %v7369 = vcombine.high %v7312, %v7328
        %v7371 = vunpack.c.l.s4 1934713408
        %v7372 = vunpack.c.0.s8 %v7371
        %v7373 = vlaneseq
        %v7374 = vshrl.u32 %v7373, 7
        %v7375 = vsub.s32 %v7372, %v7374
        %v7376 = vrot.slane %v7368, %v7375
        %v7378 = vunpack.c.l.s4 1934713408
        %v7379 = vunpack.c.0.s8 %v7378
        %v7380 = vlaneseq
        %v7381 = vshrl.u32 %v7380, 7
        %v7382 = vsub.s32 %v7379, %v7381
        %v7383 = vrot.slane %v7369, %v7382
        %v7384 = vcombine.low %v7319, %v7335
        %v7385 = vcombine.high %v7319, %v7335
        %v7387 = vunpack.c.l.s4 1934713408
        %v7388 = vunpack.c.0.s8 %v7387
        %v7389 = vlaneseq
        %v7390 = vshrl.u32 %v7389, 7
        %v7391 = vsub.s32 %v7388, %v7390
        %v7392 = vrot.slane %v7384, %v7391
        %v7394 = vunpack.c.l.s4 1934713408
        %v7395 = vunpack.c.0.s8 %v7394
        %v7396 = vlaneseq
        %v7397 = vshrl.u32 %v7396, 7
        %v7398 = vsub.s32 %v7395, %v7397
        %v7399 = vrot.slane %v7385, %v7398
        %v7400 = vcombine.low %v7344, %v7360
        %v7401 = vcombine.high %v7344, %v7360
        %v7403 = vunpack.c.l.s4 1934713408
        %v7404 = vunpack.c.0.s8 %v7403
        %v7405 = vlaneseq
        %v7406 = vshrl.u32 %v7405, 7
        %v7407 = vsub.s32 %v7404, %v7406
        %v7408 = vrot.slane %v7400, %v7407
        %v7410 = vunpack.c.l.s4 1934713408
        %v7411 = vunpack.c.0.s8 %v7410
        %v7412 = vlaneseq
        %v7413 = vshrl.u32 %v7412, 7
        %v7414 = vsub.s32 %v7411, %v7413
        %v7415 = vrot.slane %v7401, %v7414
        %v7416 = vcombine.low %v7351, %v7367
        %v7417 = vcombine.high %v7351, %v7367
        %v7419 = vunpack.c.l.s4 1934713408
        %v7420 = vunpack.c.0.s8 %v7419
        %v7421 = vlaneseq
        %v7422 = vshrl.u32 %v7421, 7
        %v7423 = vsub.s32 %v7420, %v7422
        %v7424 = vrot.slane %v7416, %v7423
        %v7426 = vunpack.c.l.s4 1934713408
        %v7427 = vunpack.c.0.s8 %v7426
        %v7428 = vlaneseq
        %v7429 = vshrl.u32 %v7428, 7
        %v7430 = vsub.s32 %v7427, %v7429
        %v7431 = vrot.slane %v7417, %v7430
        %v7432 = vcombine.low %v7376, %v7408
        %v7433 = vcombine.high %v7376, %v7408
        %v7434 = vcombine.low %v7383, %v7415
        %v7435 = vcombine.high %v7383, %v7415
        %v7436 = vcombine.low %v7392, %v7424
        %v7437 = vcombine.high %v7392, %v7424
        %v7438 = vcombine.low %v7399, %v7431
        %v7439 = vcombine.high %v7399, %v7431
        %v7440 = vcombine.low %v4439, %v4447
        %v7441 = vcombine.high %v4439, %v4447
        %v7443 = vunpack.c.l.s4 1983009808
        %v7444 = vunpack.c.0.s8 %v7443
        %v7445 = vlaneseq
        %v7446 = vshrl.u32 %v7445, 7
        %v7447 = vsub.s32 %v7444, %v7446
        %v7448 = vrot.slane %v7440, %v7447
        %v7450 = vunpack.c.l.s4 1983009808
        %v7451 = vunpack.c.0.s8 %v7450
        %v7452 = vlaneseq
        %v7453 = vshrl.u32 %v7452, 7
        %v7454 = vsub.s32 %v7451, %v7453
        %v7455 = vrot.slane %v7441, %v7454
        %v7456 = vcombine.low %v4443, %v4451
        %v7457 = vcombine.high %v4443, %v4451
        %v7459 = vunpack.c.l.s4 1983009808
        %v7460 = vunpack.c.0.s8 %v7459
        %v7461 = vlaneseq
        %v7462 = vshrl.u32 %v7461, 7
        %v7463 = vsub.s32 %v7460, %v7462
        %v7464 = vrot.slane %v7456, %v7463
        %v7466 = vunpack.c.l.s4 1983009808
        %v7467 = vunpack.c.0.s8 %v7466
        %v7468 = vlaneseq
        %v7469 = vshrl.u32 %v7468, 7
        %v7470 = vsub.s32 %v7467, %v7469
        %v7471 = vrot.slane %v7457, %v7470
        %v7472 = vcombine.low %v4455, %v4463
        %v7473 = vcombine.high %v4455, %v4463
        %v7475 = vunpack.c.l.s4 1983009808
        %v7476 = vunpack.c.0.s8 %v7475
        %v7477 = vlaneseq
        %v7478 = vshrl.u32 %v7477, 7
        %v7479 = vsub.s32 %v7476, %v7478
        %v7480 = vrot.slane %v7472, %v7479
        %v7482 = vunpack.c.l.s4 1983009808
        %v7483 = vunpack.c.0.s8 %v7482
        %v7484 = vlaneseq
        %v7485 = vshrl.u32 %v7484, 7
        %v7486 = vsub.s32 %v7483, %v7485
        %v7487 = vrot.slane %v7473, %v7486
        %v7488 = vcombine.low %v4459, %v4467
        %v7489 = vcombine.high %v4459, %v4467
        %v7491 = vunpack.c.l.s4 1983009808
        %v7492 = vunpack.c.0.s8 %v7491
        %v7493 = vlaneseq
        %v7494 = vshrl.u32 %v7493, 7
        %v7495 = vsub.s32 %v7492, %v7494
        %v7496 = vrot.slane %v7488, %v7495
        %v7498 = vunpack.c.l.s4 1983009808
        %v7499 = vunpack.c.0.s8 %v7498
        %v7500 = vlaneseq
        %v7501 = vshrl.u32 %v7500, 7
        %v7502 = vsub.s32 %v7499, %v7501
        %v7503 = vrot.slane %v7489, %v7502
        %v7504 = vcombine.low %v7448, %v7464
        %v7505 = vcombine.high %v7448, %v7464
        %v7507 = vunpack.c.l.s4 1934713408
        %v7508 = vunpack.c.0.s8 %v7507
        %v7509 = vlaneseq
        %v7510 = vshrl.u32 %v7509, 7
        %v7511 = vsub.s32 %v7508, %v7510
        %v7512 = vrot.slane %v7504, %v7511
        %v7514 = vunpack.c.l.s4 1934713408
        %v7515 = vunpack.c.0.s8 %v7514
        %v7516 = vlaneseq
        %v7517 = vshrl.u32 %v7516, 7
        %v7518 = vsub.s32 %v7515, %v7517
        %v7519 = vrot.slane %v7505, %v7518
        %v7520 = vcombine.low %v7455, %v7471
        %v7521 = vcombine.high %v7455, %v7471
        %v7523 = vunpack.c.l.s4 1934713408
        %v7524 = vunpack.c.0.s8 %v7523
        %v7525 = vlaneseq
        %v7526 = vshrl.u32 %v7525, 7
        %v7527 = vsub.s32 %v7524, %v7526
        %v7528 = vrot.slane %v7520, %v7527
        %v7530 = vunpack.c.l.s4 1934713408
        %v7531 = vunpack.c.0.s8 %v7530
        %v7532 = vlaneseq
        %v7533 = vshrl.u32 %v7532, 7
        %v7534 = vsub.s32 %v7531, %v7533
        %v7535 = vrot.slane %v7521, %v7534
        %v7536 = vcombine.low %v7480, %v7496
        %v7537 = vcombine.high %v7480, %v7496
        %v7539 = vunpack.c.l.s4 1934713408
        %v7540 = vunpack.c.0.s8 %v7539
        %v7541 = vlaneseq
        %v7542 = vshrl.u32 %v7541, 7
        %v7543 = vsub.s32 %v7540, %v7542
        %v7544 = vrot.slane %v7536, %v7543
        %v7546 = vunpack.c.l.s4 1934713408
        %v7547 = vunpack.c.0.s8 %v7546
        %v7548 = vlaneseq
        %v7549 = vshrl.u32 %v7548, 7
        %v7550 = vsub.s32 %v7547, %v7549
        %v7551 = vrot.slane %v7537, %v7550
        %v7552 = vcombine.low %v7487, %v7503
        %v7553 = vcombine.high %v7487, %v7503
        %v7555 = vunpack.c.l.s4 1934713408
        %v7556 = vunpack.c.0.s8 %v7555
        %v7557 = vlaneseq
        %v7558 = vshrl.u32 %v7557, 7
        %v7559 = vsub.s32 %v7556, %v7558
        %v7560 = vrot.slane %v7552, %v7559
        %v7562 = vunpack.c.l.s4 1934713408
        %v7563 = vunpack.c.0.s8 %v7562
        %v7564 = vlaneseq
        %v7565 = vshrl.u32 %v7564, 7
        %v7566 = vsub.s32 %v7563, %v7565
        %v7567 = vrot.slane %v7553, %v7566
        %v7568 = vcombine.low %v7512, %v7544
        %v7569 = vcombine.high %v7512, %v7544
        %v7570 = vcombine.low %v7519, %v7551
        %v7571 = vcombine.high %v7519, %v7551
        %v7572 = vcombine.low %v7528, %v7560
        %v7573 = vcombine.high %v7528, %v7560
        %v7574 = vcombine.low %v7535, %v7567
        %v7575 = vcombine.high %v7535, %v7567
        %v7576 = vcombine.low %v4471, %v4479
        %v7577 = vcombine.high %v4471, %v4479
        %v7579 = vunpack.c.l.s4 1983009808
        %v7580 = vunpack.c.0.s8 %v7579
        %v7581 = vlaneseq
        %v7582 = vshrl.u32 %v7581, 7
        %v7583 = vsub.s32 %v7580, %v7582
        %v7584 = vrot.slane %v7576, %v7583
        %v7586 = vunpack.c.l.s4 1983009808
        %v7587 = vunpack.c.0.s8 %v7586
        %v7588 = vlaneseq
        %v7589 = vshrl.u32 %v7588, 7
        %v7590 = vsub.s32 %v7587, %v7589
        %v7591 = vrot.slane %v7577, %v7590
        %v7592 = vcombine.low %v4475, %v4483
        %v7593 = vcombine.high %v4475, %v4483
        %v7595 = vunpack.c.l.s4 1983009808
        %v7596 = vunpack.c.0.s8 %v7595
        %v7597 = vlaneseq
        %v7598 = vshrl.u32 %v7597, 7
        %v7599 = vsub.s32 %v7596, %v7598
        %v7600 = vrot.slane %v7592, %v7599
        %v7602 = vunpack.c.l.s4 1983009808
        %v7603 = vunpack.c.0.s8 %v7602
        %v7604 = vlaneseq
        %v7605 = vshrl.u32 %v7604, 7
        %v7606 = vsub.s32 %v7603, %v7605
        %v7607 = vrot.slane %v7593, %v7606
        %v7608 = vcombine.low %v4487, %v4495
        %v7609 = vcombine.high %v4487, %v4495
        %v7611 = vunpack.c.l.s4 1983009808
        %v7612 = vunpack.c.0.s8 %v7611
        %v7613 = vlaneseq
        %v7614 = vshrl.u32 %v7613, 7
        %v7615 = vsub.s32 %v7612, %v7614
        %v7616 = vrot.slane %v7608, %v7615
        %v7618 = vunpack.c.l.s4 1983009808
        %v7619 = vunpack.c.0.s8 %v7618
        %v7620 = vlaneseq
        %v7621 = vshrl.u32 %v7620, 7
        %v7622 = vsub.s32 %v7619, %v7621
        %v7623 = vrot.slane %v7609, %v7622
        %v7624 = vcombine.low %v4491, %v4499
        %v7625 = vcombine.high %v4491, %v4499
        %v7627 = vunpack.c.l.s4 1983009808
        %v7628 = vunpack.c.0.s8 %v7627
        %v7629 = vlaneseq
        %v7630 = vshrl.u32 %v7629, 7
        %v7631 = vsub.s32 %v7628, %v7630
        %v7632 = vrot.slane %v7624, %v7631
        %v7634 = vunpack.c.l.s4 1983009808
        %v7635 = vunpack.c.0.s8 %v7634
        %v7636 = vlaneseq
        %v7637 = vshrl.u32 %v7636, 7
        %v7638 = vsub.s32 %v7635, %v7637
        %v7639 = vrot.slane %v7625, %v7638
        %v7640 = vcombine.low %v7584, %v7600
        %v7641 = vcombine.high %v7584, %v7600
        %v7643 = vunpack.c.l.s4 1934713408
        %v7644 = vunpack.c.0.s8 %v7643
        %v7645 = vlaneseq
        %v7646 = vshrl.u32 %v7645, 7
        %v7647 = vsub.s32 %v7644, %v7646
        %v7648 = vrot.slane %v7640, %v7647
        %v7650 = vunpack.c.l.s4 1934713408
        %v7651 = vunpack.c.0.s8 %v7650
        %v7652 = vlaneseq
        %v7653 = vshrl.u32 %v7652, 7
        %v7654 = vsub.s32 %v7651, %v7653
        %v7655 = vrot.slane %v7641, %v7654
        %v7656 = vcombine.low %v7591, %v7607
        %v7657 = vcombine.high %v7591, %v7607
        %v7659 = vunpack.c.l.s4 1934713408
        %v7660 = vunpack.c.0.s8 %v7659
        %v7661 = vlaneseq
        %v7662 = vshrl.u32 %v7661, 7
        %v7663 = vsub.s32 %v7660, %v7662
        %v7664 = vrot.slane %v7656, %v7663
        %v7666 = vunpack.c.l.s4 1934713408
        %v7667 = vunpack.c.0.s8 %v7666
        %v7668 = vlaneseq
        %v7669 = vshrl.u32 %v7668, 7
        %v7670 = vsub.s32 %v7667, %v7669
        %v7671 = vrot.slane %v7657, %v7670
        %v7672 = vcombine.low %v7616, %v7632
        %v7673 = vcombine.high %v7616, %v7632
        %v7675 = vunpack.c.l.s4 1934713408
        %v7676 = vunpack.c.0.s8 %v7675
        %v7677 = vlaneseq
        %v7678 = vshrl.u32 %v7677, 7
        %v7679 = vsub.s32 %v7676, %v7678
        %v7680 = vrot.slane %v7672, %v7679
        %v7682 = vunpack.c.l.s4 1934713408
        %v7683 = vunpack.c.0.s8 %v7682
        %v7684 = vlaneseq
        %v7685 = vshrl.u32 %v7684, 7
        %v7686 = vsub.s32 %v7683, %v7685
        %v7687 = vrot.slane %v7673, %v7686
        %v7688 = vcombine.low %v7623, %v7639
        %v7689 = vcombine.high %v7623, %v7639
        %v7691 = vunpack.c.l.s4 1934713408
        %v7692 = vunpack.c.0.s8 %v7691
        %v7693 = vlaneseq
        %v7694 = vshrl.u32 %v7693, 7
        %v7695 = vsub.s32 %v7692, %v7694
        %v7696 = vrot.slane %v7688, %v7695
        %v7698 = vunpack.c.l.s4 1934713408
        %v7699 = vunpack.c.0.s8 %v7698
        %v7700 = vlaneseq
        %v7701 = vshrl.u32 %v7700, 7
        %v7702 = vsub.s32 %v7699, %v7701
        %v7703 = vrot.slane %v7689, %v7702
        %v7704 = vcombine.low %v7648, %v7680
        %v7705 = vcombine.high %v7648, %v7680
        %v7706 = vcombine.low %v7655, %v7687
        %v7707 = vcombine.high %v7655, %v7687
        %v7708 = vcombine.low %v7664, %v7696
        %v7709 = vcombine.high %v7664, %v7696
        %v7710 = vcombine.low %v7671, %v7703
        %v7711 = vcombine.high %v7671, %v7703
        %v7712 = vcombine.low %v4503, %v4511
        %v7713 = vcombine.high %v4503, %v4511
        %v7715 = vunpack.c.l.s4 1983009808
        %v7716 = vunpack.c.0.s8 %v7715
        %v7717 = vlaneseq
        %v7718 = vshrl.u32 %v7717, 7
        %v7719 = vsub.s32 %v7716, %v7718
        %v7720 = vrot.slane %v7712, %v7719
        %v7722 = vunpack.c.l.s4 1983009808
        %v7723 = vunpack.c.0.s8 %v7722
        %v7724 = vlaneseq
        %v7725 = vshrl.u32 %v7724, 7
        %v7726 = vsub.s32 %v7723, %v7725
        %v7727 = vrot.slane %v7713, %v7726
        %v7728 = vcombine.low %v4507, %v4515
        %v7729 = vcombine.high %v4507, %v4515
        %v7731 = vunpack.c.l.s4 1983009808
        %v7732 = vunpack.c.0.s8 %v7731
        %v7733 = vlaneseq
        %v7734 = vshrl.u32 %v7733, 7
        %v7735 = vsub.s32 %v7732, %v7734
        %v7736 = vrot.slane %v7728, %v7735
        %v7738 = vunpack.c.l.s4 1983009808
        %v7739 = vunpack.c.0.s8 %v7738
        %v7740 = vlaneseq
        %v7741 = vshrl.u32 %v7740, 7
        %v7742 = vsub.s32 %v7739, %v7741
        %v7743 = vrot.slane %v7729, %v7742
        %v7744 = vcombine.low %v4519, %v4527
        %v7745 = vcombine.high %v4519, %v4527
        %v7747 = vunpack.c.l.s4 1983009808
        %v7748 = vunpack.c.0.s8 %v7747
        %v7749 = vlaneseq
        %v7750 = vshrl.u32 %v7749, 7
        %v7751 = vsub.s32 %v7748, %v7750
        %v7752 = vrot.slane %v7744, %v7751
        %v7754 = vunpack.c.l.s4 1983009808
        %v7755 = vunpack.c.0.s8 %v7754
        %v7756 = vlaneseq
        %v7757 = vshrl.u32 %v7756, 7
        %v7758 = vsub.s32 %v7755, %v7757
        %v7759 = vrot.slane %v7745, %v7758
        %v7760 = vcombine.low %v4523, %v4531
        %v7761 = vcombine.high %v4523, %v4531
        %v7763 = vunpack.c.l.s4 1983009808
        %v7764 = vunpack.c.0.s8 %v7763
        %v7765 = vlaneseq
        %v7766 = vshrl.u32 %v7765, 7
        %v7767 = vsub.s32 %v7764, %v7766
        %v7768 = vrot.slane %v7760, %v7767
        %v7770 = vunpack.c.l.s4 1983009808
        %v7771 = vunpack.c.0.s8 %v7770
        %v7772 = vlaneseq
        %v7773 = vshrl.u32 %v7772, 7
        %v7774 = vsub.s32 %v7771, %v7773
        %v7775 = vrot.slane %v7761, %v7774
        %v7776 = vcombine.low %v7720, %v7736
        %v7777 = vcombine.high %v7720, %v7736
        %v7779 = vunpack.c.l.s4 1934713408
        %v7780 = vunpack.c.0.s8 %v7779
        %v7781 = vlaneseq
        %v7782 = vshrl.u32 %v7781, 7
        %v7783 = vsub.s32 %v7780, %v7782
        %v7784 = vrot.slane %v7776, %v7783
        %v7786 = vunpack.c.l.s4 1934713408
        %v7787 = vunpack.c.0.s8 %v7786
        %v7788 = vlaneseq
        %v7789 = vshrl.u32 %v7788, 7
        %v7790 = vsub.s32 %v7787, %v7789
        %v7791 = vrot.slane %v7777, %v7790
        %v7792 = vcombine.low %v7727, %v7743
        %v7793 = vcombine.high %v7727, %v7743
        %v7795 = vunpack.c.l.s4 1934713408
        %v7796 = vunpack.c.0.s8 %v7795
        %v7797 = vlaneseq
        %v7798 = vshrl.u32 %v7797, 7
        %v7799 = vsub.s32 %v7796, %v7798
        %v7800 = vrot.slane %v7792, %v7799
        %v7802 = vunpack.c.l.s4 1934713408
        %v7803 = vunpack.c.0.s8 %v7802
        %v7804 = vlaneseq
        %v7805 = vshrl.u32 %v7804, 7
        %v7806 = vsub.s32 %v7803, %v7805
        %v7807 = vrot.slane %v7793, %v7806
        %v7808 = vcombine.low %v7752, %v7768
        %v7809 = vcombine.high %v7752, %v7768
        %v7811 = vunpack.c.l.s4 1934713408
        %v7812 = vunpack.c.0.s8 %v7811
        %v7813 = vlaneseq
        %v7814 = vshrl.u32 %v7813, 7
        %v7815 = vsub.s32 %v7812, %v7814
        %v7816 = vrot.slane %v7808, %v7815
        %v7818 = vunpack.c.l.s4 1934713408
        %v7819 = vunpack.c.0.s8 %v7818
        %v7820 = vlaneseq
        %v7821 = vshrl.u32 %v7820, 7
        %v7822 = vsub.s32 %v7819, %v7821
        %v7823 = vrot.slane %v7809, %v7822
        %v7824 = vcombine.low %v7759, %v7775
        %v7825 = vcombine.high %v7759, %v7775
        %v7827 = vunpack.c.l.s4 1934713408
        %v7828 = vunpack.c.0.s8 %v7827
        %v7829 = vlaneseq
        %v7830 = vshrl.u32 %v7829, 7
        %v7831 = vsub.s32 %v7828, %v7830
        %v7832 = vrot.slane %v7824, %v7831
        %v7834 = vunpack.c.l.s4 1934713408
        %v7835 = vunpack.c.0.s8 %v7834
        %v7836 = vlaneseq
        %v7837 = vshrl.u32 %v7836, 7
        %v7838 = vsub.s32 %v7835, %v7837
        %v7839 = vrot.slane %v7825, %v7838
        %v7840 = vcombine.low %v7784, %v7816
        %v7841 = vcombine.high %v7784, %v7816
        %v7842 = vcombine.low %v7791, %v7823
        %v7843 = vcombine.high %v7791, %v7823
        %v7844 = vcombine.low %v7800, %v7832
        %v7845 = vcombine.high %v7800, %v7832
        %v7846 = vcombine.low %v7807, %v7839
        %v7847 = vcombine.high %v7807, %v7839
        %v7848 = vcombine.low %v4535, %v4543
        %v7849 = vcombine.high %v4535, %v4543
        %v7851 = vunpack.c.l.s4 1983009808
        %v7852 = vunpack.c.0.s8 %v7851
        %v7853 = vlaneseq
        %v7854 = vshrl.u32 %v7853, 7
        %v7855 = vsub.s32 %v7852, %v7854
        %v7856 = vrot.slane %v7848, %v7855
        %v7858 = vunpack.c.l.s4 1983009808
        %v7859 = vunpack.c.0.s8 %v7858
        %v7860 = vlaneseq
        %v7861 = vshrl.u32 %v7860, 7
        %v7862 = vsub.s32 %v7859, %v7861
        %v7863 = vrot.slane %v7849, %v7862
        %v7864 = vcombine.low %v4539, %v4547
        %v7865 = vcombine.high %v4539, %v4547
        %v7867 = vunpack.c.l.s4 1983009808
        %v7868 = vunpack.c.0.s8 %v7867
        %v7869 = vlaneseq
        %v7870 = vshrl.u32 %v7869, 7
        %v7871 = vsub.s32 %v7868, %v7870
        %v7872 = vrot.slane %v7864, %v7871
        %v7874 = vunpack.c.l.s4 1983009808
        %v7875 = vunpack.c.0.s8 %v7874
        %v7876 = vlaneseq
        %v7877 = vshrl.u32 %v7876, 7
        %v7878 = vsub.s32 %v7875, %v7877
        %v7879 = vrot.slane %v7865, %v7878
        %v7880 = vcombine.low %v4551, %v4559
        %v7881 = vcombine.high %v4551, %v4559
        %v7883 = vunpack.c.l.s4 1983009808
        %v7884 = vunpack.c.0.s8 %v7883
        %v7885 = vlaneseq
        %v7886 = vshrl.u32 %v7885, 7
        %v7887 = vsub.s32 %v7884, %v7886
        %v7888 = vrot.slane %v7880, %v7887
        %v7890 = vunpack.c.l.s4 1983009808
        %v7891 = vunpack.c.0.s8 %v7890
        %v7892 = vlaneseq
        %v7893 = vshrl.u32 %v7892, 7
        %v7894 = vsub.s32 %v7891, %v7893
        %v7895 = vrot.slane %v7881, %v7894
        %v7896 = vcombine.low %v4555, %v4563
        %v7897 = vcombine.high %v4555, %v4563
        %v7899 = vunpack.c.l.s4 1983009808
        %v7900 = vunpack.c.0.s8 %v7899
        %v7901 = vlaneseq
        %v7902 = vshrl.u32 %v7901, 7
        %v7903 = vsub.s32 %v7900, %v7902
        %v7904 = vrot.slane %v7896, %v7903
        %v7906 = vunpack.c.l.s4 1983009808
        %v7907 = vunpack.c.0.s8 %v7906
        %v7908 = vlaneseq
        %v7909 = vshrl.u32 %v7908, 7
        %v7910 = vsub.s32 %v7907, %v7909
        %v7911 = vrot.slane %v7897, %v7910
        %v7912 = vcombine.low %v7856, %v7872
        %v7913 = vcombine.high %v7856, %v7872
        %v7915 = vunpack.c.l.s4 1934713408
        %v7916 = vunpack.c.0.s8 %v7915
        %v7917 = vlaneseq
        %v7918 = vshrl.u32 %v7917, 7
        %v7919 = vsub.s32 %v7916, %v7918
        %v7920 = vrot.slane %v7912, %v7919
        %v7922 = vunpack.c.l.s4 1934713408
        %v7923 = vunpack.c.0.s8 %v7922
        %v7924 = vlaneseq
        %v7925 = vshrl.u32 %v7924, 7
        %v7926 = vsub.s32 %v7923, %v7925
        %v7927 = vrot.slane %v7913, %v7926
        %v7928 = vcombine.low %v7863, %v7879
        %v7929 = vcombine.high %v7863, %v7879
        %v7931 = vunpack.c.l.s4 1934713408
        %v7932 = vunpack.c.0.s8 %v7931
        %v7933 = vlaneseq
        %v7934 = vshrl.u32 %v7933, 7
        %v7935 = vsub.s32 %v7932, %v7934
        %v7936 = vrot.slane %v7928, %v7935
        %v7938 = vunpack.c.l.s4 1934713408
        %v7939 = vunpack.c.0.s8 %v7938
        %v7940 = vlaneseq
        %v7941 = vshrl.u32 %v7940, 7
        %v7942 = vsub.s32 %v7939, %v7941
        %v7943 = vrot.slane %v7929, %v7942
        %v7944 = vcombine.low %v7888, %v7904
        %v7945 = vcombine.high %v7888, %v7904
        %v7947 = vunpack.c.l.s4 1934713408
        %v7948 = vunpack.c.0.s8 %v7947
        %v7949 = vlaneseq
        %v7950 = vshrl.u32 %v7949, 7
        %v7951 = vsub.s32 %v7948, %v7950
        %v7952 = vrot.slane %v7944, %v7951
        %v7954 = vunpack.c.l.s4 1934713408
        %v7955 = vunpack.c.0.s8 %v7954
        %v7956 = vlaneseq
        %v7957 = vshrl.u32 %v7956, 7
        %v7958 = vsub.s32 %v7955, %v7957
        %v7959 = vrot.slane %v7945, %v7958
        %v7960 = vcombine.low %v7895, %v7911
        %v7961 = vcombine.high %v7895, %v7911
        %v7963 = vunpack.c.l.s4 1934713408
        %v7964 = vunpack.c.0.s8 %v7963
        %v7965 = vlaneseq
        %v7966 = vshrl.u32 %v7965, 7
        %v7967 = vsub.s32 %v7964, %v7966
        %v7968 = vrot.slane %v7960, %v7967
        %v7970 = vunpack.c.l.s4 1934713408
        %v7971 = vunpack.c.0.s8 %v7970
        %v7972 = vlaneseq
        %v7973 = vshrl.u32 %v7972, 7
        %v7974 = vsub.s32 %v7971, %v7973
        %v7975 = vrot.slane %v7961, %v7974
        %v7976 = vcombine.low %v7920, %v7952
        %v7977 = vcombine.high %v7920, %v7952
        %v7978 = vcombine.low %v7927, %v7959
        %v7979 = vcombine.high %v7927, %v7959
        %v7980 = vcombine.low %v7936, %v7968
        %v7981 = vcombine.high %v7936, %v7968
        %v7982 = vcombine.low %v7943, %v7975
        %v7983 = vcombine.high %v7943, %v7975
        %v7984 = vcombine.low %v4567, %v4575
        %v7985 = vcombine.high %v4567, %v4575
        %v7987 = vunpack.c.l.s4 1983009808
        %v7988 = vunpack.c.0.s8 %v7987
        %v7989 = vlaneseq
        %v7990 = vshrl.u32 %v7989, 7
        %v7991 = vsub.s32 %v7988, %v7990
        %v7992 = vrot.slane %v7984, %v7991
        %v7994 = vunpack.c.l.s4 1983009808
        %v7995 = vunpack.c.0.s8 %v7994
        %v7996 = vlaneseq
        %v7997 = vshrl.u32 %v7996, 7
        %v7998 = vsub.s32 %v7995, %v7997
        %v7999 = vrot.slane %v7985, %v7998
        %v8000 = vcombine.low %v4571, %v4579
        %v8001 = vcombine.high %v4571, %v4579
        %v8003 = vunpack.c.l.s4 1983009808
        %v8004 = vunpack.c.0.s8 %v8003
        %v8005 = vlaneseq
        %v8006 = vshrl.u32 %v8005, 7
        %v8007 = vsub.s32 %v8004, %v8006
        %v8008 = vrot.slane %v8000, %v8007
        %v8010 = vunpack.c.l.s4 1983009808
        %v8011 = vunpack.c.0.s8 %v8010
        %v8012 = vlaneseq
        %v8013 = vshrl.u32 %v8012, 7
        %v8014 = vsub.s32 %v8011, %v8013
        %v8015 = vrot.slane %v8001, %v8014
        %v8016 = vcombine.low %v7992, %v8008
        %v8017 = vcombine.high %v7992, %v8008
        %v8019 = vunpack.c.l.s4 1934713408
        %v8020 = vunpack.c.0.s8 %v8019
        %v8021 = vlaneseq
        %v8022 = vshrl.u32 %v8021, 7
        %v8023 = vsub.s32 %v8020, %v8022
        %v8024 = vrot.slane %v8016, %v8023
        %v8026 = vunpack.c.l.s4 1934713408
        %v8027 = vunpack.c.0.s8 %v8026
        %v8028 = vlaneseq
        %v8029 = vshrl.u32 %v8028, 7
        %v8030 = vsub.s32 %v8027, %v8029
        %v8031 = vrot.slane %v8017, %v8030
        %v8032 = vcombine.low %v7999, %v8015
        %v8033 = vcombine.high %v7999, %v8015
        %v8035 = vunpack.c.l.s4 1934713408
        %v8036 = vunpack.c.0.s8 %v8035
        %v8037 = vlaneseq
        %v8038 = vshrl.u32 %v8037, 7
        %v8039 = vsub.s32 %v8036, %v8038
        %v8040 = vrot.slane %v8032, %v8039
        %v8042 = vunpack.c.l.s4 1934713408
        %v8043 = vunpack.c.0.s8 %v8042
        %v8044 = vlaneseq
        %v8045 = vshrl.u32 %v8044, 7
        %v8046 = vsub.s32 %v8043, %v8045
        %v8047 = vrot.slane %v8033, %v8046
        %v8048 = vcombine.high %v8024, 0.0
        %v8049 = vcombine.high %v8031, 0.0
        %v8050 = vcombine.high %v8040, 0.0
        %v8051 = vcombine.high %v8047, 0.0
        %8065 = vrot.lane.b32.xlu0 %v4781, 16
        %v8066 = vpop.permute.xlu0 %8065
        %8067 = vrot.lane.b32.xlu0 %v4917, 16
        %v8068 = vpop.permute.xlu0 %8067
        %8069 = vrot.lane.b32.xlu0 %v5053, 16
        %v8070 = vpop.permute.xlu0 %8069
        %8071 = vrot.lane.b32.xlu0 %v5189, 16
        %v8072 = vpop.permute.xlu0 %8071
        %8073 = vrot.lane.b32.xlu0 %v5325, 16
        %v8074 = vpop.permute.xlu0 %8073
        %8075 = vrot.lane.b32.xlu0 %v5461, 16
        %v8076 = vpop.permute.xlu0 %8075
        %8077 = vrot.lane.b32.xlu0 %v5597, 16
        %v8078 = vpop.permute.xlu0 %8077
        %8079 = vrot.lane.b32.xlu0 %v5733, 16
        %v8080 = vpop.permute.xlu0 %8079
        %8081 = vrot.lane.b32.xlu0 %v5869, 16
        %v8082 = vpop.permute.xlu0 %8081
        %8083 = vrot.lane.b32.xlu0 %v6005, 16
        %v8084 = vpop.permute.xlu0 %8083
        %8085 = vrot.lane.b32.xlu0 %v6141, 16
        %v8086 = vpop.permute.xlu0 %8085
        %8087 = vrot.lane.b32.xlu0 %v6277, 16
        %v8088 = vpop.permute.xlu0 %8087
        %8089 = vrot.lane.b32.xlu0 %v6348, 16
        %v8090 = vpop.permute.xlu0 %8089
        %8117 = vrot.lane.b32.xlu0 %v4782, 32
        %v8118 = vpop.permute.xlu0 %8117
        %8119 = vrot.lane.b32.xlu0 %v4918, 32
        %v8120 = vpop.permute.xlu0 %8119
        %8121 = vrot.lane.b32.xlu0 %v5054, 32
        %v8122 = vpop.permute.xlu0 %8121
        %8123 = vrot.lane.b32.xlu0 %v5190, 32
        %v8124 = vpop.permute.xlu0 %8123
        %8125 = vrot.lane.b32.xlu0 %v5326, 32
        %v8126 = vpop.permute.xlu0 %8125
        %8127 = vrot.lane.b32.xlu0 %v5462, 32
        %v8128 = vpop.permute.xlu0 %8127
        %8129 = vrot.lane.b32.xlu0 %v5598, 32
        %v8130 = vpop.permute.xlu0 %8129
        %8131 = vrot.lane.b32.xlu0 %v5734, 32
        %v8132 = vpop.permute.xlu0 %8131
        %8133 = vrot.lane.b32.xlu0 %v5870, 32
        %v8134 = vpop.permute.xlu0 %8133
        %8135 = vrot.lane.b32.xlu0 %v6006, 32
        %v8136 = vpop.permute.xlu0 %8135
        %8137 = vrot.lane.b32.xlu0 %v6142, 32
        %v8138 = vpop.permute.xlu0 %8137
        %8139 = vrot.lane.b32.xlu0 %v6278, 32
        %v8140 = vpop.permute.xlu0 %8139
        %8141 = vrot.lane.b32.xlu0 %v6331, 32
        %v8142 = vpop.permute.xlu0 %8141
        %8169 = vrot.lane.b32.xlu0 %v4783, 48
        %v8170 = vpop.permute.xlu0 %8169
        %8171 = vrot.lane.b32.xlu0 %v4919, 48
        %v8172 = vpop.permute.xlu0 %8171
        %8173 = vrot.lane.b32.xlu0 %v5055, 48
        %v8174 = vpop.permute.xlu0 %8173
        %8175 = vrot.lane.b32.xlu0 %v5191, 48
        %v8176 = vpop.permute.xlu0 %8175
        %8177 = vrot.lane.b32.xlu0 %v5327, 48
        %v8178 = vpop.permute.xlu0 %8177
        %8179 = vrot.lane.b32.xlu0 %v5463, 48
        %v8180 = vpop.permute.xlu0 %8179
        %8181 = vrot.lane.b32.xlu0 %v5599, 48
        %v8182 = vpop.permute.xlu0 %8181
        %8183 = vrot.lane.b32.xlu0 %v5735, 48
        %v8184 = vpop.permute.xlu0 %8183
        %8185 = vrot.lane.b32.xlu0 %v5871, 48
        %v8186 = vpop.permute.xlu0 %8185
        %8187 = vrot.lane.b32.xlu0 %v6007, 48
        %v8188 = vpop.permute.xlu0 %8187
        %8189 = vrot.lane.b32.xlu0 %v6143, 48
        %v8190 = vpop.permute.xlu0 %8189
        %8191 = vrot.lane.b32.xlu0 %v6279, 48
        %v8192 = vpop.permute.xlu0 %8191
        %8193 = vrot.lane.b32.xlu0 %v6349, 48
        %v8194 = vpop.permute.xlu0 %8193
        %8221 = vrot.lane.b32.xlu0 %v4784, 64
        %v8222 = vpop.permute.xlu0 %8221
        %8223 = vrot.lane.b32.xlu0 %v4920, 64
        %v8224 = vpop.permute.xlu0 %8223
        %8225 = vrot.lane.b32.xlu0 %v5056, 64
        %v8226 = vpop.permute.xlu0 %8225
        %8227 = vrot.lane.b32.xlu0 %v5192, 64
        %v8228 = vpop.permute.xlu0 %8227
        %8229 = vrot.lane.b32.xlu0 %v5328, 64
        %v8230 = vpop.permute.xlu0 %8229
        %8231 = vrot.lane.b32.xlu0 %v5464, 64
        %v8232 = vpop.permute.xlu0 %8231
        %8233 = vrot.lane.b32.xlu0 %v5600, 64
        %v8234 = vpop.permute.xlu0 %8233
        %8235 = vrot.lane.b32.xlu0 %v5736, 64
        %v8236 = vpop.permute.xlu0 %8235
        %8237 = vrot.lane.b32.xlu0 %v5872, 64
        %v8238 = vpop.permute.xlu0 %8237
        %8239 = vrot.lane.b32.xlu0 %v6008, 64
        %v8240 = vpop.permute.xlu0 %8239
        %8241 = vrot.lane.b32.xlu0 %v6144, 64
        %v8242 = vpop.permute.xlu0 %8241
        %8243 = vrot.lane.b32.xlu0 %v6280, 64
        %v8244 = vpop.permute.xlu0 %8243
        %8245 = vrot.lane.b32.xlu0 %v6340, 64
        %v8246 = vpop.permute.xlu0 %8245
        %8273 = vrot.lane.b32.xlu0 %v4785, 80
        %v8274 = vpop.permute.xlu0 %8273
        %8275 = vrot.lane.b32.xlu0 %v4921, 80
        %v8276 = vpop.permute.xlu0 %8275
        %8277 = vrot.lane.b32.xlu0 %v5057, 80
        %v8278 = vpop.permute.xlu0 %8277
        %8279 = vrot.lane.b32.xlu0 %v5193, 80
        %v8280 = vpop.permute.xlu0 %8279
        %8281 = vrot.lane.b32.xlu0 %v5329, 80
        %v8282 = vpop.permute.xlu0 %8281
        %8283 = vrot.lane.b32.xlu0 %v5465, 80
        %v8284 = vpop.permute.xlu0 %8283
        %8285 = vrot.lane.b32.xlu0 %v5601, 80
        %v8286 = vpop.permute.xlu0 %8285
        %8287 = vrot.lane.b32.xlu0 %v5737, 80
        %v8288 = vpop.permute.xlu0 %8287
        %8289 = vrot.lane.b32.xlu0 %v5873, 80
        %v8290 = vpop.permute.xlu0 %8289
        %8291 = vrot.lane.b32.xlu0 %v6009, 80
        %v8292 = vpop.permute.xlu0 %8291
        %8293 = vrot.lane.b32.xlu0 %v6145, 80
        %v8294 = vpop.permute.xlu0 %8293
        %8295 = vrot.lane.b32.xlu0 %v6281, 80
        %v8296 = vpop.permute.xlu0 %8295
        %8297 = vrot.lane.b32.xlu0 %v6350, 80
        %v8298 = vpop.permute.xlu0 %8297
        %8325 = vrot.lane.b32.xlu0 %v4786, 96
        %v8326 = vpop.permute.xlu0 %8325
        %8327 = vrot.lane.b32.xlu0 %v4922, 96
        %v8328 = vpop.permute.xlu0 %8327
        %8329 = vrot.lane.b32.xlu0 %v5058, 96
        %v8330 = vpop.permute.xlu0 %8329
        %8331 = vrot.lane.b32.xlu0 %v5194, 96
        %v8332 = vpop.permute.xlu0 %8331
        %8333 = vrot.lane.b32.xlu0 %v5330, 96
        %v8334 = vpop.permute.xlu0 %8333
        %8335 = vrot.lane.b32.xlu0 %v5466, 96
        %v8336 = vpop.permute.xlu0 %8335
        %8337 = vrot.lane.b32.xlu0 %v5602, 96
        %v8338 = vpop.permute.xlu0 %8337
        %8339 = vrot.lane.b32.xlu0 %v5738, 96
        %v8340 = vpop.permute.xlu0 %8339
        %8341 = vrot.lane.b32.xlu0 %v5874, 96
        %v8342 = vpop.permute.xlu0 %8341
        %8343 = vrot.lane.b32.xlu0 %v6010, 96
        %v8344 = vpop.permute.xlu0 %8343
        %8345 = vrot.lane.b32.xlu0 %v6146, 96
        %v8346 = vpop.permute.xlu0 %8345
        %8347 = vrot.lane.b32.xlu0 %v6282, 96
        %v8348 = vpop.permute.xlu0 %8347
        %8349 = vrot.lane.b32.xlu0 %v6347, 96
        %v8350 = vpop.permute.xlu0 %8349
        %8377 = vrot.lane.b32.xlu0 %v4787, 112
        %v8378 = vpop.permute.xlu0 %8377
        %8379 = vrot.lane.b32.xlu0 %v4923, 112
        %v8380 = vpop.permute.xlu0 %8379
        %8381 = vrot.lane.b32.xlu0 %v5059, 112
        %v8382 = vpop.permute.xlu0 %8381
        %8383 = vrot.lane.b32.xlu0 %v5195, 112
        %v8384 = vpop.permute.xlu0 %8383
        %8385 = vrot.lane.b32.xlu0 %v5331, 112
        %v8386 = vpop.permute.xlu0 %8385
        %8387 = vrot.lane.b32.xlu0 %v5467, 112
        %v8388 = vpop.permute.xlu0 %8387
        %8389 = vrot.lane.b32.xlu0 %v5603, 112
        %v8390 = vpop.permute.xlu0 %8389
        %8391 = vrot.lane.b32.xlu0 %v5739, 112
        %v8392 = vpop.permute.xlu0 %8391
        %8393 = vrot.lane.b32.xlu0 %v5875, 112
        %v8394 = vpop.permute.xlu0 %8393
        %8395 = vrot.lane.b32.xlu0 %v6011, 112
        %v8396 = vpop.permute.xlu0 %8395
        %8397 = vrot.lane.b32.xlu0 %v6147, 112
        %v8398 = vpop.permute.xlu0 %8397
        %8399 = vrot.lane.b32.xlu0 %v6283, 112
        %v8400 = vpop.permute.xlu0 %8399
        %8401 = vrot.lane.b32.xlu0 %v6351, 112
        %v8402 = vpop.permute.xlu0 %8401
        %8429 = vrot.lane.b32.xlu0 %v6481, 16
        %v8430 = vpop.permute.xlu0 %8429
        %8431 = vrot.lane.b32.xlu0 %v6617, 16
        %v8432 = vpop.permute.xlu0 %8431
        %8433 = vrot.lane.b32.xlu0 %v6753, 16
        %v8434 = vpop.permute.xlu0 %8433
        %8435 = vrot.lane.b32.xlu0 %v6889, 16
        %v8436 = vpop.permute.xlu0 %8435
        %8437 = vrot.lane.b32.xlu0 %v7025, 16
        %v8438 = vpop.permute.xlu0 %8437
        %8439 = vrot.lane.b32.xlu0 %v7161, 16
        %v8440 = vpop.permute.xlu0 %8439
        %8441 = vrot.lane.b32.xlu0 %v7297, 16
        %v8442 = vpop.permute.xlu0 %8441
        %8443 = vrot.lane.b32.xlu0 %v7433, 16
        %v8444 = vpop.permute.xlu0 %8443
        %8445 = vrot.lane.b32.xlu0 %v7569, 16
        %v8446 = vpop.permute.xlu0 %8445
        %8447 = vrot.lane.b32.xlu0 %v7705, 16
        %v8448 = vpop.permute.xlu0 %8447
        %8449 = vrot.lane.b32.xlu0 %v7841, 16
        %v8450 = vpop.permute.xlu0 %8449
        %8451 = vrot.lane.b32.xlu0 %v7977, 16
        %v8452 = vpop.permute.xlu0 %8451
        %8453 = vrot.lane.b32.xlu0 %v8048, 16
        %v8454 = vpop.permute.xlu0 %8453
        %8481 = vrot.lane.b32.xlu0 %v6482, 32
        %v8482 = vpop.permute.xlu0 %8481
        %8483 = vrot.lane.b32.xlu0 %v6618, 32
        %v8484 = vpop.permute.xlu0 %8483
        %8485 = vrot.lane.b32.xlu0 %v6754, 32
        %v8486 = vpop.permute.xlu0 %8485
        %8487 = vrot.lane.b32.xlu0 %v6890, 32
        %v8488 = vpop.permute.xlu0 %8487
        %8489 = vrot.lane.b32.xlu0 %v7026, 32
        %v8490 = vpop.permute.xlu0 %8489
        %8491 = vrot.lane.b32.xlu0 %v7162, 32
        %v8492 = vpop.permute.xlu0 %8491
        %8493 = vrot.lane.b32.xlu0 %v7298, 32
        %v8494 = vpop.permute.xlu0 %8493
        %8495 = vrot.lane.b32.xlu0 %v7434, 32
        %v8496 = vpop.permute.xlu0 %8495
        %8497 = vrot.lane.b32.xlu0 %v7570, 32
        %v8498 = vpop.permute.xlu0 %8497
        %8499 = vrot.lane.b32.xlu0 %v7706, 32
        %v8500 = vpop.permute.xlu0 %8499
        %8501 = vrot.lane.b32.xlu0 %v7842, 32
        %v8502 = vpop.permute.xlu0 %8501
        %8503 = vrot.lane.b32.xlu0 %v7978, 32
        %v8504 = vpop.permute.xlu0 %8503
        %8505 = vrot.lane.b32.xlu0 %v8031, 32
        %v8506 = vpop.permute.xlu0 %8505
        %8533 = vrot.lane.b32.xlu0 %v6483, 48
        %v8534 = vpop.permute.xlu0 %8533
        %8535 = vrot.lane.b32.xlu0 %v6619, 48
        %v8536 = vpop.permute.xlu0 %8535
        %8537 = vrot.lane.b32.xlu0 %v6755, 48
        %v8538 = vpop.permute.xlu0 %8537
        %8539 = vrot.lane.b32.xlu0 %v6891, 48
        %v8540 = vpop.permute.xlu0 %8539
        %8541 = vrot.lane.b32.xlu0 %v7027, 48
        %v8542 = vpop.permute.xlu0 %8541
        %8543 = vrot.lane.b32.xlu0 %v7163, 48
        %v8544 = vpop.permute.xlu0 %8543
        %8545 = vrot.lane.b32.xlu0 %v7299, 48
        %v8546 = vpop.permute.xlu0 %8545
        %8547 = vrot.lane.b32.xlu0 %v7435, 48
        %v8548 = vpop.permute.xlu0 %8547
        %8549 = vrot.lane.b32.xlu0 %v7571, 48
        %v8550 = vpop.permute.xlu0 %8549
        %8551 = vrot.lane.b32.xlu0 %v7707, 48
        %v8552 = vpop.permute.xlu0 %8551
        %8553 = vrot.lane.b32.xlu0 %v7843, 48
        %v8554 = vpop.permute.xlu0 %8553
        %8555 = vrot.lane.b32.xlu0 %v7979, 48
        %v8556 = vpop.permute.xlu0 %8555
        %8557 = vrot.lane.b32.xlu0 %v8049, 48
        %v8558 = vpop.permute.xlu0 %8557
        %8585 = vrot.lane.b32.xlu0 %v6484, 64
        %v8586 = vpop.permute.xlu0 %8585
        %8587 = vrot.lane.b32.xlu0 %v6620, 64
        %v8588 = vpop.permute.xlu0 %8587
        %8589 = vrot.lane.b32.xlu0 %v6756, 64
        %v8590 = vpop.permute.xlu0 %8589
        %8591 = vrot.lane.b32.xlu0 %v6892, 64
        %v8592 = vpop.permute.xlu0 %8591
        %8593 = vrot.lane.b32.xlu0 %v7028, 64
        %v8594 = vpop.permute.xlu0 %8593
        %8595 = vrot.lane.b32.xlu0 %v7164, 64
        %v8596 = vpop.permute.xlu0 %8595
        %8597 = vrot.lane.b32.xlu0 %v7300, 64
        %v8598 = vpop.permute.xlu0 %8597
        %8599 = vrot.lane.b32.xlu0 %v7436, 64
        %v8600 = vpop.permute.xlu0 %8599
        %8601 = vrot.lane.b32.xlu0 %v7572, 64
        %v8602 = vpop.permute.xlu0 %8601
        %8603 = vrot.lane.b32.xlu0 %v7708, 64
        %v8604 = vpop.permute.xlu0 %8603
        %8605 = vrot.lane.b32.xlu0 %v7844, 64
        %v8606 = vpop.permute.xlu0 %8605
        %8607 = vrot.lane.b32.xlu0 %v7980, 64
        %v8608 = vpop.permute.xlu0 %8607
        %8609 = vrot.lane.b32.xlu0 %v8040, 64
        %v8610 = vpop.permute.xlu0 %8609
        %8637 = vrot.lane.b32.xlu0 %v6485, 80
        %v8638 = vpop.permute.xlu0 %8637
        %8639 = vrot.lane.b32.xlu0 %v6621, 80
        %v8640 = vpop.permute.xlu0 %8639
        %8641 = vrot.lane.b32.xlu0 %v6757, 80
        %v8642 = vpop.permute.xlu0 %8641
        %8643 = vrot.lane.b32.xlu0 %v6893, 80
        %v8644 = vpop.permute.xlu0 %8643
        %8645 = vrot.lane.b32.xlu0 %v7029, 80
        %v8646 = vpop.permute.xlu0 %8645
        %8647 = vrot.lane.b32.xlu0 %v7165, 80
        %v8648 = vpop.permute.xlu0 %8647
        %8649 = vrot.lane.b32.xlu0 %v7301, 80
        %v8650 = vpop.permute.xlu0 %8649
        %8651 = vrot.lane.b32.xlu0 %v7437, 80
        %v8652 = vpop.permute.xlu0 %8651
        %8653 = vrot.lane.b32.xlu0 %v7573, 80
        %v8654 = vpop.permute.xlu0 %8653
        %8655 = vrot.lane.b32.xlu0 %v7709, 80
        %v8656 = vpop.permute.xlu0 %8655
        %8657 = vrot.lane.b32.xlu0 %v7845, 80
        %v8658 = vpop.permute.xlu0 %8657
        %8659 = vrot.lane.b32.xlu0 %v7981, 80
        %v8660 = vpop.permute.xlu0 %8659
        %8661 = vrot.lane.b32.xlu0 %v8050, 80
        %v8662 = vpop.permute.xlu0 %8661
        %8689 = vrot.lane.b32.xlu0 %v6486, 96
        %v8690 = vpop.permute.xlu0 %8689
        %8691 = vrot.lane.b32.xlu0 %v6622, 96
        %v8692 = vpop.permute.xlu0 %8691
        %8693 = vrot.lane.b32.xlu0 %v6758, 96
        %v8694 = vpop.permute.xlu0 %8693
        %8695 = vrot.lane.b32.xlu0 %v6894, 96
        %v8696 = vpop.permute.xlu0 %8695
        %8697 = vrot.lane.b32.xlu0 %v7030, 96
        %v8698 = vpop.permute.xlu0 %8697
        %8699 = vrot.lane.b32.xlu0 %v7166, 96
        %v8700 = vpop.permute.xlu0 %8699
        %8701 = vrot.lane.b32.xlu0 %v7302, 96
        %v8702 = vpop.permute.xlu0 %8701
        %8703 = vrot.lane.b32.xlu0 %v7438, 96
        %v8704 = vpop.permute.xlu0 %8703
        %8705 = vrot.lane.b32.xlu0 %v7574, 96
        %v8706 = vpop.permute.xlu0 %8705
        %8707 = vrot.lane.b32.xlu0 %v7710, 96
        %v8708 = vpop.permute.xlu0 %8707
        %8709 = vrot.lane.b32.xlu0 %v7846, 96
        %v8710 = vpop.permute.xlu0 %8709
        %8711 = vrot.lane.b32.xlu0 %v7982, 96
        %v8712 = vpop.permute.xlu0 %8711
        %8713 = vrot.lane.b32.xlu0 %v8047, 96
        %v8714 = vpop.permute.xlu0 %8713
        %8741 = vrot.lane.b32.xlu0 %v6487, 112
        %v8742 = vpop.permute.xlu0 %8741
        %8743 = vrot.lane.b32.xlu0 %v6623, 112
        %v8744 = vpop.permute.xlu0 %8743
        %8745 = vrot.lane.b32.xlu0 %v6759, 112
        %v8746 = vpop.permute.xlu0 %8745
        %8747 = vrot.lane.b32.xlu0 %v6895, 112
        %v8748 = vpop.permute.xlu0 %8747
        %8749 = vrot.lane.b32.xlu0 %v7031, 112
        %v8750 = vpop.permute.xlu0 %8749
        %8751 = vrot.lane.b32.xlu0 %v7167, 112
        %v8752 = vpop.permute.xlu0 %8751
        %8753 = vrot.lane.b32.xlu0 %v7303, 112
        %v8754 = vpop.permute.xlu0 %8753
        %8755 = vrot.lane.b32.xlu0 %v7439, 112
        %v8756 = vpop.permute.xlu0 %8755
        %8757 = vrot.lane.b32.xlu0 %v7575, 112
        %v8758 = vpop.permute.xlu0 %8757
        %8759 = vrot.lane.b32.xlu0 %v7711, 112
        %v8760 = vpop.permute.xlu0 %8759
        %8761 = vrot.lane.b32.xlu0 %v7847, 112
        %v8762 = vpop.permute.xlu0 %8761
        %8763 = vrot.lane.b32.xlu0 %v7983, 112
        %v8764 = vpop.permute.xlu0 %8763
        %8765 = vrot.lane.b32.xlu0 %v8051, 112
        %v8766 = vpop.permute.xlu0 %8765
        %v8780 = vsel %vm632, %v4780, %v8066
        %v8781 = vsel %vm632, %v4916, %v8068
        %v8782 = vsel %vm632, %v5052, %v8070
        %v8783 = vsel %vm632, %v5188, %v8072
        %v8784 = vsel %vm632, %v5324, %v8074
        %v8785 = vsel %vm632, %v5460, %v8076
        %v8786 = vsel %vm632, %v5596, %v8078
        %v8787 = vsel %vm632, %v5732, %v8080
        %v8788 = vsel %vm632, %v5868, %v8082
        %v8789 = vsel %vm632, %v6004, %v8084
        %v8790 = vsel %vm632, %v6140, %v8086
        %v8791 = vsel %vm632, %v6276, %v8088
        %v8792 = vsel %vm632, %v6324, %v8090
        %v8793 = vsel %vm634, %v8780, %v8118
        %v8794 = vsel %vm634, %v8781, %v8120
        %v8795 = vsel %vm634, %v8782, %v8122
        %v8796 = vsel %vm634, %v8783, %v8124
        %v8797 = vsel %vm634, %v8784, %v8126
        %v8798 = vsel %vm634, %v8785, %v8128
        %v8799 = vsel %vm634, %v8786, %v8130
        %v8800 = vsel %vm634, %v8787, %v8132
        %v8801 = vsel %vm634, %v8788, %v8134
        %v8802 = vsel %vm634, %v8789, %v8136
        %v8803 = vsel %vm634, %v8790, %v8138
        %v8804 = vsel %vm634, %v8791, %v8140
        %v8805 = vsel %vm634, %v8792, %v8142
        %v8806 = vsel %vm636, %v8793, %v8170
        %v8807 = vsel %vm636, %v8794, %v8172
        %v8808 = vsel %vm636, %v8795, %v8174
        %v8809 = vsel %vm636, %v8796, %v8176
        %v8810 = vsel %vm636, %v8797, %v8178
        %v8811 = vsel %vm636, %v8798, %v8180
        %v8812 = vsel %vm636, %v8799, %v8182
        %v8813 = vsel %vm636, %v8800, %v8184
        %v8814 = vsel %vm636, %v8801, %v8186
        %v8815 = vsel %vm636, %v8802, %v8188
        %v8816 = vsel %vm636, %v8803, %v8190
        %v8817 = vsel %vm636, %v8804, %v8192
        %v8818 = vsel %vm636, %v8805, %v8194
        %v8819 = vsel %vm638, %v8806, %v8222
        %v8820 = vsel %vm638, %v8807, %v8224
        %v8821 = vsel %vm638, %v8808, %v8226
        %v8822 = vsel %vm638, %v8809, %v8228
        %v8823 = vsel %vm638, %v8810, %v8230
        %v8824 = vsel %vm638, %v8811, %v8232
        %v8825 = vsel %vm638, %v8812, %v8234
        %v8826 = vsel %vm638, %v8813, %v8236
        %v8827 = vsel %vm638, %v8814, %v8238
        %v8828 = vsel %vm638, %v8815, %v8240
        %v8829 = vsel %vm638, %v8816, %v8242
        %v8830 = vsel %vm638, %v8817, %v8244
        %v8831 = vsel %vm638, %v8818, %v8246
        %v8832 = vsel %vm640, %v8819, %v8274
        %v8833 = vsel %vm640, %v8820, %v8276
        %v8834 = vsel %vm640, %v8821, %v8278
        %v8835 = vsel %vm640, %v8822, %v8280
        %v8836 = vsel %vm640, %v8823, %v8282
        %v8837 = vsel %vm640, %v8824, %v8284
        %v8838 = vsel %vm640, %v8825, %v8286
        %v8839 = vsel %vm640, %v8826, %v8288
        %v8840 = vsel %vm640, %v8827, %v8290
        %v8841 = vsel %vm640, %v8828, %v8292
        %v8842 = vsel %vm640, %v8829, %v8294
        %v8843 = vsel %vm640, %v8830, %v8296
        %v8844 = vsel %vm640, %v8831, %v8298
        %v8845 = vsel %vm642, %v8832, %v8326
        %v8846 = vsel %vm642, %v8833, %v8328
        %v8847 = vsel %vm642, %v8834, %v8330
        %v8848 = vsel %vm642, %v8835, %v8332
        %v8849 = vsel %vm642, %v8836, %v8334
        %v8850 = vsel %vm642, %v8837, %v8336
        %v8851 = vsel %vm642, %v8838, %v8338
        %v8852 = vsel %vm642, %v8839, %v8340
        %v8853 = vsel %vm642, %v8840, %v8342
        %v8854 = vsel %vm642, %v8841, %v8344
        %v8855 = vsel %vm642, %v8842, %v8346
        %v8856 = vsel %vm642, %v8843, %v8348
        %v8857 = vsel %vm642, %v8844, %v8350
        %v8858 = vsel %vm644, %v8845, %v8378
        %v8859 = vsel %vm644, %v8846, %v8380
        %v8860 = vsel %vm644, %v8847, %v8382
        %v8861 = vsel %vm644, %v8848, %v8384
        %v8862 = vsel %vm644, %v8849, %v8386
        %v8863 = vsel %vm644, %v8850, %v8388
        %v8864 = vsel %vm644, %v8851, %v8390
        %v8865 = vsel %vm644, %v8852, %v8392
        %v8866 = vsel %vm644, %v8853, %v8394
        %v8867 = vsel %vm644, %v8854, %v8396
        %v8868 = vsel %vm644, %v8855, %v8398
        %v8869 = vsel %vm644, %v8856, %v8400
        %v8870 = vsel %vm644, %v8857, %v8402
        %v8871 = vsel %vm632, %v6480, %v8430
        %v8872 = vsel %vm632, %v6616, %v8432
        %v8873 = vsel %vm632, %v6752, %v8434
        %v8874 = vsel %vm632, %v6888, %v8436
        %v8875 = vsel %vm632, %v7024, %v8438
        %v8876 = vsel %vm632, %v7160, %v8440
        %v8877 = vsel %vm632, %v7296, %v8442
        %v8878 = vsel %vm632, %v7432, %v8444
        %v8879 = vsel %vm632, %v7568, %v8446
        %v8880 = vsel %vm632, %v7704, %v8448
        %v8881 = vsel %vm632, %v7840, %v8450
        %v8882 = vsel %vm632, %v7976, %v8452
        %v8883 = vsel %vm632, %v8024, %v8454
        %v8884 = vsel %vm634, %v8871, %v8482
        %v8885 = vsel %vm634, %v8872, %v8484
        %v8886 = vsel %vm634, %v8873, %v8486
        %v8887 = vsel %vm634, %v8874, %v8488
        %v8888 = vsel %vm634, %v8875, %v8490
        %v8889 = vsel %vm634, %v8876, %v8492
        %v8890 = vsel %vm634, %v8877, %v8494
        %v8891 = vsel %vm634, %v8878, %v8496
        %v8892 = vsel %vm634, %v8879, %v8498
        %v8893 = vsel %vm634, %v8880, %v8500
        %v8894 = vsel %vm634, %v8881, %v8502
        %v8895 = vsel %vm634, %v8882, %v8504
        %v8896 = vsel %vm634, %v8883, %v8506
        %v8897 = vsel %vm636, %v8884, %v8534
        %v8898 = vsel %vm636, %v8885, %v8536
        %v8899 = vsel %vm636, %v8886, %v8538
        %v8900 = vsel %vm636, %v8887, %v8540
        %v8901 = vsel %vm636, %v8888, %v8542
        %v8902 = vsel %vm636, %v8889, %v8544
        %v8903 = vsel %vm636, %v8890, %v8546
        %v8904 = vsel %vm636, %v8891, %v8548
        %v8905 = vsel %vm636, %v8892, %v8550
        %v8906 = vsel %vm636, %v8893, %v8552
        %v8907 = vsel %vm636, %v8894, %v8554
        %v8908 = vsel %vm636, %v8895, %v8556
        %v8909 = vsel %vm636, %v8896, %v8558
        %v8910 = vsel %vm638, %v8897, %v8586
        %v8911 = vsel %vm638, %v8898, %v8588
        %v8912 = vsel %vm638, %v8899, %v8590
        %v8913 = vsel %vm638, %v8900, %v8592
        %v8914 = vsel %vm638, %v8901, %v8594
        %v8915 = vsel %vm638, %v8902, %v8596
        %v8916 = vsel %vm638, %v8903, %v8598
        %v8917 = vsel %vm638, %v8904, %v8600
        %v8918 = vsel %vm638, %v8905, %v8602
        %v8919 = vsel %vm638, %v8906, %v8604
        %v8920 = vsel %vm638, %v8907, %v8606
        %v8921 = vsel %vm638, %v8908, %v8608
        %v8922 = vsel %vm638, %v8909, %v8610
        %v8923 = vsel %vm640, %v8910, %v8638
        %v8924 = vsel %vm640, %v8911, %v8640
        %v8925 = vsel %vm640, %v8912, %v8642
        %v8926 = vsel %vm640, %v8913, %v8644
        %v8927 = vsel %vm640, %v8914, %v8646
        %v8928 = vsel %vm640, %v8915, %v8648
        %v8929 = vsel %vm640, %v8916, %v8650
        %v8930 = vsel %vm640, %v8917, %v8652
        %v8931 = vsel %vm640, %v8918, %v8654
        %v8932 = vsel %vm640, %v8919, %v8656
        %v8933 = vsel %vm640, %v8920, %v8658
        %v8934 = vsel %vm640, %v8921, %v8660
        %v8935 = vsel %vm640, %v8922, %v8662
        %v8936 = vsel %vm642, %v8923, %v8690
        %v8937 = vsel %vm642, %v8924, %v8692
        %v8938 = vsel %vm642, %v8925, %v8694
        %v8939 = vsel %vm642, %v8926, %v8696
        %v8940 = vsel %vm642, %v8927, %v8698
        %v8941 = vsel %vm642, %v8928, %v8700
        %v8942 = vsel %vm642, %v8929, %v8702
        %v8943 = vsel %vm642, %v8930, %v8704
        %v8944 = vsel %vm642, %v8931, %v8706
        %v8945 = vsel %vm642, %v8932, %v8708
        %v8946 = vsel %vm642, %v8933, %v8710
        %v8947 = vsel %vm642, %v8934, %v8712
        %v8948 = vsel %vm642, %v8935, %v8714
        %v8949 = vsel %vm644, %v8936, %v8742
        %v8950 = vsel %vm644, %v8937, %v8744
        %v8951 = vsel %vm644, %v8938, %v8746
        %v8952 = vsel %vm644, %v8939, %v8748
        %v8953 = vsel %vm644, %v8940, %v8750
        %v8954 = vsel %vm644, %v8941, %v8752
        %v8955 = vsel %vm644, %v8942, %v8754
        %v8956 = vsel %vm644, %v8943, %v8756
        %v8957 = vsel %vm644, %v8944, %v8758
        %v8958 = vsel %vm644, %v8945, %v8760
        %v8959 = vsel %vm644, %v8946, %v8762
        %v8960 = vsel %vm644, %v8947, %v8764
        %v8961 = vsel %vm644, %v8948, %v8766
        %8963 = vset.pattern.permute.xlu0 0
        %8964 = vperm.xlu0 %8963, %v3731
        %v8965 = vpop.permute.xlu0 %8964
        %vm8967 = vcmask 818176
        %v8969 = vsel %vm8967, %v3730, 0
        %v8972 = vsel %vm674, %v8870, 0
        %v8975 = vsel %vm674, %v8961, 0
        %8977 = vmatprep.subr.mxu0 %v8949
        %8978 = vmatpush1.msra.mxu0 %v8858
        %8979 = vmatprep.subr.mxu0 %v8950
        %8980 = vmatpush1.msra.mxu0 %v8859
        %8981 = vmatprep.subr.mxu0 %v8951
        %8982 = vmatpush1.msra.mxu0 %v8860
        %8983 = vmatprep.subr.mxu0 %v8952
        %8984 = vmatpush1.msra.mxu0 %v8861
        %8985 = vmatprep.subr.mxu0 %v8953
        %8986 = vmatpush1.msra.mxu0 %v8862
        %8987 = vmatprep.subr.mxu0 %v8954
        %8988 = vmatpush1.msra.mxu0 %v8863
        %8989 = vmatprep.subr.mxu0 %v8955
        %8990 = vmatpush1.msra.mxu0 %v8864
        %8991 = vmatprep.subr.mxu0 %v8956
        %8992 = vmatpush1.msra.mxu0 %v8865
        %8993 = vmatprep.subr.mxu0 %v8957
        %8994 = vmatpush1.msra.mxu0 %v8866
        %8995 = vmatprep.subr.mxu0 %v8958
        %8996 = vmatpush1.msra.mxu0 %v8867
        %8997 = vmatprep.subr.mxu0 %v8959
        %8998 = vmatpush1.msra.mxu0 %v8868
        %8999 = vmatprep.subr.mxu0 %v8960
        %9000 = vmatpush1.msra.mxu0 %v8869
        %9001 = vmatprep.subr.mxu0 %v8975
        %9002 = vmatpush1.msra.mxu0 %v8972
        %9003 = vmatprep.subr.mxu0 0.0
        %9004 = vmatpush1.msra.mxu0 0.0
        %9005 = vmatprep.subr.mxu0 0.0
        %9006 = vmatpush1.msra.mxu0 0.0
        %9007 = vmatprep.subr.mxu0 0.0
        %9008 = vmatpush1.msra.mxu0 0.0
        %9009 = vmatprep.subr.mxu0 0.0
        %9010 = vmatpush1.msra.mxu0 0.0
        %9011 = vmatprep.subr.mxu0 0.0
        %9012 = vmatpush1.msra.mxu0 0.0
        %9013 = vmatprep.subr.mxu0 0.0
        %9014 = vmatpush1.msra.mxu0 0.0
        %9015 = vmatprep.subr.mxu0 0.0
        %9016 = vmatpush1.msra.mxu0 0.0
        %9017 = vmatprep.subr.mxu0 0.0
        %9018 = vmatpush1.msra.mxu0 0.0
        %9019 = vmatprep.subr.mxu0 0.0
        %9020 = vmatpush1.msra.mxu0 0.0
        %9021 = vmatprep.subr.mxu0 0.0
        %9022 = vmatpush1.msra.mxu0 0.0
        %9023 = vmatprep.subr.mxu0 0.0
        %9024 = vmatpush1.msra.mxu0 0.0
        %9025 = vmatprep.subr.mxu0 0.0
        %9026 = vmatpush1.msra.mxu0 0.0
        %9027 = vmatprep.subr.mxu0 0.0
        %9028 = vmatpush1.msra.mxu0 0.0
        %9029 = vmatprep.subr.mxu0 0.0
        %9030 = vmatpush1.msra.mxu0 0.0
        %9031 = vmatprep.subr.mxu0 0.0
        %9032 = vmatpush1.msra.mxu0 0.0
        %9033 = vmatprep.subr.mxu0 0.0
        %9034 = vmatpush1.msra.mxu0 0.0
        %9035 = vmatprep.subr.mxu0 0.0
        %9036 = vmatpush1.msra.mxu0 0.0
        %9037 = vmatprep.subr.mxu0 0.0
        %9038 = vmatpush1.msra.mxu0 0.0
        %9039 = vmatprep.subr.mxu0 0.0
        %9040 = vmatpush1.msra.mxu0 0.0
        %9041 = vmatprep.mubr.f32.mxu0 0.0
        %9042 = vmatmul.mubr.f32.gmra.mrb[0].mxu0 %v8969
        %v9043 = vpop.f32.mrb[0].mxu0
        %v9044 = vadd.f32 %v8965, %v9043
        %v9045 = vpop.f32.mrb[0].mxu0
        %v9046 = vadd.f32 %v8965, %v9045
        %9047 = vdwg.mxu0
        %v9048 = vmax.f32 %v9044, 0.0
        %v9049 = vmax.f32 %v9046, 0.0
        %9050 = vst [vmem:[%s431] sm:$0xff] %v758
        %9051 = vst [vmem:[%s431 + $0x8] sm:$0xff] %v759
        %9052 = vst [vmem:[%s431 + $0x10] sm:$0xff] %v3728
        %9053 = vst [vmem:[%s431 + $0x18] sm:$0xff] %v3729
        %9054 = vst [vmem:[%s431 + $0x20] sm:$0xff] %v9048
        %9055 = vst [vmem:[%s431 + $0x28] sm:$0xff] %v9049
        %9056 = vst [vmem:[%s431 + $0x30] sm:$0xff] %v1768
        %9057 = vst [vmem:[%s431 + $0x38] sm:$0xff] %v1769
        %p9058 = scmp.lt.s32.totalorder %s26, 1
        %s9059 = scalar_select %p9058, %s26, 1
        %s9060 = smul.addr %s9059, 8
        %s9061 = smul.addr %s9060, 8
        %s9062 = scalar_lea.vmem %s9, %s9061
        // Predicated region
        $region85: #{_lambda_.1} parent=55 // pred_check
          %p9063 = pneg %p238
        $region86: #{_lambda_.1} parent=55 // pred_check_branch
          %9065 = sbr.rel (%p9063) target = $region88
        $region87: #{_lambda_.1} parent=55 // pred_region
          _
        $region88: #{_lambda_.1} parent=55 // pred_fallthru
          _
      $region56: #{_lambda_.1} parent=5 // pred_fallthru
        _
      %p9066 = scmp.le.s32.totalorder 2, %s21
      // Predicated region
      $region89: #{_lambda_.1} parent=5 // pred_check
        %p9067 = pneg %p9066
      $region90: #{_lambda_.1} parent=5 // pred_check_branch
        %9069 = sbr.rel (%p9067) target = $region92
      $region91: #{_lambda_.1} parent=5 // pred_region
        %s9070 = ssub.s32 %s21, 2
        // Predicated region
        $region93: #{_lambda_.1} parent=91 // pred_check
          %p9071 = pneg %p244
        $region94: #{_lambda_.1} parent=91 // pred_check_branch
          %9073 = sbr.rel (%p9071) target = $region96
        $region95: #{_lambda_.1} parent=91 // pred_region
          %p9074 = scmp.lt.s32.totalorder %s27, 1
          %s9075 = scalar_select %p9074, %s27, 1
          %s9076 = smul.addr %s9075, 8
          %s9077 = smul.addr %s9076, 8
          %s9078 = scalar_lea.vmem %s9, %s9077
        $region96: #{_lambda_.1} parent=91 // pred_fallthru
          _
      $region92: #{_lambda_.1} parent=5 // pred_fallthru
        _
    $region6: #{_lambda_.1} parent=1 // loop_footer
      %s25 = sadd.s32 1, %s21
    $region7: #{_lambda_.1} parent=1 // loop_footer_branch
      %20 = sbr.rel target = $region3
    $region8: #{_lambda_.1} parent=1 // loop_exit
      _
    %9079 = vsyncpa [#allocation3], 1
    %s9080 = scalar_lea.sflag [#allocation3], 1
    %9081 = vsyncpa %s9080, 1
    %9082 = vsyncpa [#allocation5], 1
    %9083 = vsyncpa [#allocation8], 1
    %9084 = vsyncpa [#allocation11], 1

</llo_original>
